<compile_context>
chip_gen: v7x
topology: tpu7x:2x2x1
jax: 0.10.0
libtpu: 0.0.40
codegen_flags: <defaults>
</compile_context>

<pallas_src>
from functools import partial

import numpy as np
import jax
import jax.numpy as jnp
from jax import lax
from jax.experimental import pallas as pl
from jax.experimental.pallas import tpu as pltpu


# ---------------------------------------------------------------------------
# Shared kernel: 3x3 same-padding conv, NHWC, lane-dense Cout (multiple of 128)
#   per-tap accumulated bf16 matmuls, f32 accumulate, fused bias + ReLU.
# ---------------------------------------------------------------------------
def _conv3x3_tap_kernel(x_ref, w_ref, b_ref, o_ref, *, apply_relu):
    # x_ref: (Hp, Wp, Cin)   bf16  padded image of this batch element
    #                              (index map ignores the row-tile axis, so it
    #                               is DMA'd once per batch element and stays
    #                               resident across row tiles)
    # w_ref: (9, Cin, Cout)  bf16  tap-major weights, resident across the grid
    # b_ref: (1, Cout)       f32
    # o_ref: (TH, W, Cout)         output row tile (lane-dense Cout)
    th, w_out, cout = o_ref.shape
    cin = x_ref.shape[-1]
    t = pl.program_id(1)
    row0 = t * th

    acc = None  # initialized from the first tap instead of zeros
    for i in range(3):
        xi = x_ref[pl.ds(row0 + i, th), :, :]                 # (TH, Wp, Cin)
        for j in range(3):
            xt = xi[:, j:j + w_out, :].reshape(th * w_out, cin)
            part = jnp.dot(xt, w_ref[i * 3 + j],
                           preferred_element_type=jnp.float32)
            acc = part if acc is None else acc + part
    acc = acc + b_ref[...]                                     # f32 epilogue
    if apply_relu:
        acc = jnp.maximum(acc, 0.0)
    o_ref[...] = acc.reshape(th, w_out, cout).astype(o_ref.dtype)


def conv3x3_same_nhwc(x_nhwc, w_taps, bias, *, apply_relu, out_dtype,
                      rows_per_tile=8):
    """3x3 / stride 1 / same padding / bias (+ReLU).  NHWC -> NHWC.

    w_taps: (9, Cin, Cout) tap-major weights (tap index t = ki*3 + kj).
    Row tiles are sized so TH*W is a few hundred matmul rows; at very large
    H*W the whole-image-per-batch input block would be replaced by halo'd row
    blocks.
    """
    n, h, w, cin = x_nhwc.shape
    kk, cin_w, cout = w_taps.shape
    assert kk == 9 and cin_w == cin
    assert cout % 128 == 0, "outputs are kept lane-dense (Cout % 128 == 0)"

    th = min(rows_per_tile, h)
    while h % th:
        th -= 1

    # TODO(synk): the 1-pixel halo is still materialized with jnp.pad (one
    # extra XLA pass over the activation); in-kernel boundary masking would
    # remove it.
    xp = jnp.pad(x_nhwc.astype(jnp.bfloat16),
                 ((0, 0), (1, 1), (1, 1), (0, 0)))
    hp, wp = h + 2, w + 2

    kern = partial(_conv3x3_tap_kernel, apply_relu=apply_relu)
    return pl.pallas_call(
        kern,
        out_shape=jax.ShapeDtypeStruct((n, h, w, cout), out_dtype),
        grid=(n, h // th),
        in_specs=[
            pl.BlockSpec((None, hp, wp, cin), lambda b, t: (b, 0, 0, 0)),
            pl.BlockSpec((9, cin, cout), lambda b, t: (0, 0, 0)),
            pl.BlockSpec((1, cout), lambda b, t: (0, 0)),
        ],
        out_specs=pl.BlockSpec((None, th, w, cout), lambda b, t: (b, t, 0, 0)),
        compiler_params=pltpu.CompilerParams(
            dimension_semantics=("parallel", "parallel"),  # v7x megacore
            vmem_limit_bytes=32 * 1024 * 1024,  # re-derive per target (v7x 64MiB phys)
        ),
    )(xp, w_taps.astype(jnp.bfloat16),
      jnp.asarray(bias, jnp.float32).reshape(1, cout))


# ---------------------------------------------------------------------------
# Weight preparation (trace-time, host-side index math)
# ---------------------------------------------------------------------------
def oihw_to_taps(w_oihw):
    """(Cout, Cin, 3, 3) -> (9, Cin, Cout), tap order t = ki*3 + kj."""
    cout, cin, kh, kw = w_oihw.shape
    return jnp.transpose(w_oihw, (2, 3, 1, 0)).reshape(kh * kw, cin, cout)


def fold_pixelshuffle_into_conv(w3_oihw, b3, *, r=8, pad_cout_to=128):
    """Fold PixelShuffle(r) + Conv2d(C,1,3,pad=1) into one low-res 3x3 conv.

    Output channel oc = a*r + b is the sub-pixel position (a, b); the
    high-res 3x3 neighbourhood maps exactly onto a 3x3 low-res neighbourhood
    of the (C*r*r)-channel feature map, so the (N, C, rH, rW) shuffled
    intermediate never needs to exist.
    """
    c_hi = w3_oihw.shape[1]                       # 4
    cin, cout = c_hi * r * r, r * r               # 256, 64
    t_idx, ic_idx, oc_idx, src_idx = [], [], [], []
    for a in range(r):
        for b in range(r):
            for c in range(c_hi):
                for di in (-1, 0, 1):
                    for dj in (-1, 0, 1):
                        hoff, ap = divmod(a + di, r)
                        woff, bp = divmod(b + dj, r)
                        t_idx.append((hoff + 1) * 3 + (woff + 1))
                        ic_idx.append(c * r * r + ap * r + bp)
                        oc_idx.append(a * r + b)
                        src_idx.append(c * 9 + (di + 1) * 3 + (dj + 1))
    w_flat = w3_oihw.reshape(c_hi * 9)
    w_eff = jnp.zeros((9, cin, cout), w3_oihw.dtype).at[
        np.asarray(t_idx), np.asarray(ic_idx), np.asarray(oc_idx)
    ].set(w_flat[np.asarray(src_idx)])
    b_eff = jnp.full((cout,), b3[0], dtype=jnp.float32)
    if pad_cout_to and pad_cout_to > cout:        # lane-dense output (128)
        w_eff = jnp.pad(w_eff, ((0, 0), (0, 0), (0, pad_cout_to - cout)))
        b_eff = jnp.pad(b_eff, (0, pad_cout_to - cout))
    return w_eff, b_eff


# ---------------------------------------------------------------------------
# Full DensityRegressor forward
# ---------------------------------------------------------------------------
def density_regressor_forward(x_nchw, params):
    (w1, b1), (w2, b2), (w3, b3) = params
    n, _, h, w = x_nchw.shape
    r = 8

    # Single layout change at the model boundary: NCHW -> NHWC.
    x = jnp.transpose(x_nchw, (0, 2, 3, 1))
    x = conv3x3_same_nhwc(x, oihw_to_taps(w1), b1, apply_relu=True,
                          out_dtype=jnp.bfloat16)              # (N, H, W, 256)
    x = conv3x3_same_nhwc(x, oihw_to_taps(w2), b2, apply_relu=True,
                          out_dtype=jnp.bfloat16)              # (N, H, W, 256)

    # PixelShuffle(8) + Conv2d(4 -> 1) + ReLU as one low-res MXU conv.
    w3e, b3e = fold_pixelshuffle_into_conv(w3, b3, r=r, pad_cout_to=128)
    y = conv3x3_same_nhwc(x, w3e, b3e, apply_relu=True,
                          out_dtype=jnp.float32)               # (N, H, W, 128)

    # Cheap sub-pixel rearrangement of the final 1-channel map (XLA glue).
    y = y[..., :r * r]                                         # (N, H, W, 64)
    y = y.reshape(n, h, w, r, r)
    y = jnp.transpose(y, (0, 1, 3, 2, 4))                      # (N, H, r, W, r)
    return y.reshape(n, 1, h * r, w * r)                       # (N, 1, 8H, 8W)


if __name__ == "__main__":
    indim, batch, spatial = 4, 2, 16
    key = jax.random.PRNGKey(0)
    k1, k2, k3, kb1, kb2, kb3, kx = jax.random.split(key, 7)
    dev = 0.005  # DensityRegressor.weights_normal_init(dev=0.005)

    w1 = dev * jax.random.normal(k1, (256, indim, 3, 3), jnp.float32)
    w2 = dev * jax.random.normal(k2, (256, 256, 3, 3), jnp.float32)
    w3 = dev * jax.random.normal(k3, (1, 4, 3, 3), jnp.float32)
    # The module init zeroes conv biases; small nonzero values are used here
    # so the fused bias-add path is actually exercised by the check.
    b1 = dev * jax.random.normal(kb1, (256,), jnp.float32)
    b2 = dev * jax.random.normal(kb2, (256,), jnp.float32)
    b3 = dev * jax.random.normal(kb3, (1,), jnp.float32)

    x = jax.random.normal(kx, (batch, indim, spatial, spatial), jnp.float32)
    params = ((w1, b1), (w2, b2), (w3, b3))

    fwd = jax.jit(density_regressor_forward)
    out = jax.block_until_ready(fwd(x, params))
    assert out.shape == (batch, 1, spatial * 8, spatial * 8)

    # Reference with matched bf16 operand rounding (kernel uses bf16 MXU
    # operands with f32 accumulation and stores intermediates in bf16).
    def conv_ref(v, wt, bs):
        y = lax.conv_general_dilated(
            v, wt, (1, 1), ((1, 1), (1, 1)),
            dimension_numbers=("NCHW", "OIHW", "NCHW"),
            precision=lax.Precision.HIGHEST)
        return y + bs[None, :, None, None]

    bf = lambda a: a.astype(jnp.bfloat16).astype(jnp.float32)
    ref = bf(jnp.maximum(conv_ref(bf(x), bf(w1), b1), 0.0))
    ref = bf(jnp.maximum(conv_ref(ref, bf(w2), b2), 0.0))
    nb, cc, hh, ww = ref.shape
    r = 8
    ref = ref.reshape(nb, cc // (r * r), r, r, hh, ww)
    ref = jnp.transpose(ref, (0, 1, 4, 2, 5, 3)).reshape(
        nb, cc // (r * r), hh * r, ww * r)
    ref = jnp.maximum(conv_ref(ref, bf(w3), b3), 0.0)

    max_err = float(jnp.max(jnp.abs(out - ref)))
    assert jnp.allclose(out, ref, rtol=2e-2, atol=5e-6), max_err

    print("KERNEL_OK")
</pallas_src>

<mosaic_0001>
module attributes {stable_mosaic.version = 11 : i64} {
  func.func @_conv3x3_tap_kernel(%arg0: i32, %arg1: i32, %arg2: memref<1x18x18x4xbf16, #tpu.memory_space<vmem>>, %arg3: memref<9x4x256xbf16, #tpu.memory_space<vmem>>, %arg4: memref<1x256xf32, #tpu.memory_space<vmem>>, %arg5: memref<1x8x16x256xbf16, #tpu.memory_space<vmem>>) attributes {dimension_semantics = [#tpu.dimension_semantics<parallel>, #tpu.dimension_semantics<parallel>], iteration_bounds = array<i64: 2, 2>, scalar_prefetch = 0 : i64, scratch_operands = 0 : i64, tpu.core_type = #tpu.core_type<tc>, window_params = [{transform_indices = @transform_0, window_bounds = array<i64: 1, 18, 18, 4>}, {pipeline_mode = #tpu.pipeline_mode<synchronous>, transform_indices = @transform_1, window_bounds = array<i64: 9, 4, 256>}, {pipeline_mode = #tpu.pipeline_mode<synchronous>, transform_indices = @transform_2, window_bounds = array<i64: 1, 256>}, {transform_indices = @transform_3, window_bounds = array<i64: 1, 8, 16, 256>}]} {
    %c8_i32 = arith.constant 8 : i32
    %0 = arith.muli %arg1, %c8_i32 : i32
    %c0_i32 = arith.constant 0 : i32
    %1 = arith.addi %0, %c0_i32 : i32
    %c0 = arith.constant 0 : index
    %2 = arith.index_cast %1 : i32 to index
    %c0_0 = arith.constant 0 : index
    %c0_1 = arith.constant 0 : index
    %3 = vector.load %arg2[%c0, %2, %c0_0, %c0_1] : memref<1x18x18x4xbf16, #tpu.memory_space<vmem>>, vector<1x8x18x4xbf16>
    %4 = vector.shape_cast %3 : vector<1x8x18x4xbf16> to vector<8x18x4xbf16>
    %5 = vector.extract_strided_slice %4 {offsets = [0, 0, 0], sizes = [8, 16, 4], strides = [1, 1, 1]} : vector<8x18x4xbf16> to vector<8x16x4xbf16>
    %6 = vector.shape_cast %5 : vector<8x16x4xbf16> to vector<128x4xbf16>
    %c0_2 = arith.constant 0 : index
    %c0_3 = arith.constant 0 : index
    %c0_4 = arith.constant 0 : index
    %7 = vector.load %arg3[%c0_2, %c0_3, %c0_4] : memref<9x4x256xbf16, #tpu.memory_space<vmem>>, vector<1x4x256xbf16>
    %8 = vector.shape_cast %7 : vector<1x4x256xbf16> to vector<4x256xbf16>
    %cst = arith.constant dense<0.000000e+00> : vector<128x256xf32>
    %9 = tpu.matmul %6, %8, %cst {dimension_numbers = #tpu.dot_dimension_numbers<[1], [0], [0], [1], [0, 0, 1, 1], [], []>} : vector<128x4xbf16>, vector<4x256xbf16>, vector<128x256xf32> -> vector<128x256xf32>
    %10 = vector.extract_strided_slice %4 {offsets = [0, 1, 0], sizes = [8, 16, 4], strides = [1, 1, 1]} : vector<8x18x4xbf16> to vector<8x16x4xbf16>
    %11 = vector.shape_cast %10 : vector<8x16x4xbf16> to vector<128x4xbf16>
    %c1 = arith.constant 1 : index
    %c0_5 = arith.constant 0 : index
    %c0_6 = arith.constant 0 : index
    %12 = vector.load %arg3[%c1, %c0_5, %c0_6] : memref<9x4x256xbf16, #tpu.memory_space<vmem>>, vector<1x4x256xbf16>
    %13 = vector.shape_cast %12 : vector<1x4x256xbf16> to vector<4x256xbf16>
    %cst_7 = arith.constant dense<0.000000e+00> : vector<128x256xf32>
    %14 = tpu.matmul %11, %13, %cst_7 {dimension_numbers = #tpu.dot_dimension_numbers<[1], [0], [0], [1], [0, 0, 1, 1], [], []>} : vector<128x4xbf16>, vector<4x256xbf16>, vector<128x256xf32> -> vector<128x256xf32>
    %15 = arith.addf %9, %14 : vector<128x256xf32>
    %16 = vector.extract_strided_slice %4 {offsets = [0, 2, 0], sizes = [8, 16, 4], strides = [1, 1, 1]} : vector<8x18x4xbf16> to vector<8x16x4xbf16>
    %17 = vector.shape_cast %16 : vector<8x16x4xbf16> to vector<128x4xbf16>
    %c2 = arith.constant 2 : index
    %c0_8 = arith.constant 0 : index
    %c0_9 = arith.constant 0 : index
    %18 = vector.load %arg3[%c2, %c0_8, %c0_9] : memref<9x4x256xbf16, #tpu.memory_space<vmem>>, vector<1x4x256xbf16>
    %19 = vector.shape_cast %18 : vector<1x4x256xbf16> to vector<4x256xbf16>
    %cst_10 = arith.constant dense<0.000000e+00> : vector<128x256xf32>
    %20 = tpu.matmul %17, %19, %cst_10 {dimension_numbers = #tpu.dot_dimension_numbers<[1], [0], [0], [1], [0, 0, 1, 1], [], []>} : vector<128x4xbf16>, vector<4x256xbf16>, vector<128x256xf32> -> vector<128x256xf32>
    %21 = arith.addf %15, %20 : vector<128x256xf32>
    %c1_i32 = arith.constant 1 : i32
    %22 = arith.addi %0, %c1_i32 : i32
    %c0_11 = arith.constant 0 : index
    %23 = arith.index_cast %22 : i32 to index
    %c0_12 = arith.constant 0 : index
    %c0_13 = arith.constant 0 : index
    %24 = vector.load %arg2[%c0_11, %23, %c0_12, %c0_13] : memref<1x18x18x4xbf16, #tpu.memory_space<vmem>>, vector<1x8x18x4xbf16>
    %25 = vector.shape_cast %24 : vector<1x8x18x4xbf16> to vector<8x18x4xbf16>
    %26 = vector.extract_strided_slice %25 {offsets = [0, 0, 0], sizes = [8, 16, 4], strides = [1, 1, 1]} : vector<8x18x4xbf16> to vector<8x16x4xbf16>
    %27 = vector.shape_cast %26 : vector<8x16x4xbf16> to vector<128x4xbf16>
    %c3 = arith.constant 3 : index
    %c0_14 = arith.constant 0 : index
    %c0_15 = arith.constant 0 : index
    %28 = vector.load %arg3[%c3, %c0_14, %c0_15] : memref<9x4x256xbf16, #tpu.memory_space<vmem>>, vector<1x4x256xbf16>
    %29 = vector.shape_cast %28 : vector<1x4x256xbf16> to vector<4x256xbf16>
    %cst_16 = arith.constant dense<0.000000e+00> : vector<128x256xf32>
    %30 = tpu.matmul %27, %29, %cst_16 {dimension_numbers = #tpu.dot_dimension_numbers<[1], [0], [0], [1], [0, 0, 1, 1], [], []>} : vector<128x4xbf16>, vector<4x256xbf16>, vector<128x256xf32> -> vector<128x256xf32>
    %31 = arith.addf %21, %30 : vector<128x256xf32>
    %32 = vector.extract_strided_slice %25 {offsets = [0, 1, 0], sizes = [8, 16, 4], strides = [1, 1, 1]} : vector<8x18x4xbf16> to vector<8x16x4xbf16>
    %33 = vector.shape_cast %32 : vector<8x16x4xbf16> to vector<128x4xbf16>
    %c4 = arith.constant 4 : index
    %c0_17 = arith.constant 0 : index
    %c0_18 = arith.constant 0 : index
    %34 = vector.load %arg3[%c4, %c0_17, %c0_18] : memref<9x4x256xbf16, #tpu.memory_space<vmem>>, vector<1x4x256xbf16>
    %35 = vector.shape_cast %34 : vector<1x4x256xbf16> to vector<4x256xbf16>
    %cst_19 = arith.constant dense<0.000000e+00> : vector<128x256xf32>
    %36 = tpu.matmul %33, %35, %cst_19 {dimension_numbers = #tpu.dot_dimension_numbers<[1], [0], [0], [1], [0, 0, 1, 1], [], []>} : vector<128x4xbf16>, vector<4x256xbf16>, vector<128x256xf32> -> vector<128x256xf32>
    %37 = arith.addf %31, %36 : vector<128x256xf32>
    %38 = vector.extract_strided_slice %25 {offsets = [0, 2, 0], sizes = [8, 16, 4], strides = [1, 1, 1]} : vector<8x18x4xbf16> to vector<8x16x4xbf16>
    %39 = vector.shape_cast %38 : vector<8x16x4xbf16> to vector<128x4xbf16>
    %c5 = arith.constant 5 : index
    %c0_20 = arith.constant 0 : index
    %c0_21 = arith.constant 0 : index
    %40 = vector.load %arg3[%c5, %c0_20, %c0_21] : memref<9x4x256xbf16, #tpu.memory_space<vmem>>, vector<1x4x256xbf16>
    %41 = vector.shape_cast %40 : vector<1x4x256xbf16> to vector<4x256xbf16>
    %cst_22 = arith.constant dense<0.000000e+00> : vector<128x256xf32>
    %42 = tpu.matmul %39, %41, %cst_22 {dimension_numbers = #tpu.dot_dimension_numbers<[1], [0], [0], [1], [0, 0, 1, 1], [], []>} : vector<128x4xbf16>, vector<4x256xbf16>, vector<128x256xf32> -> vector<128x256xf32>
    %43 = arith.addf %37, %42 : vector<128x256xf32>
    %c2_i32 = arith.constant 2 : i32
    %44 = arith.addi %0, %c2_i32 : i32
    %c0_23 = arith.constant 0 : index
    %45 = arith.index_cast %44 : i32 to index
    %c0_24 = arith.constant 0 : index
    %c0_25 = arith.constant 0 : index
    %46 = vector.load %arg2[%c0_23, %45, %c0_24, %c0_25] : memref<1x18x18x4xbf16, #tpu.memory_space<vmem>>, vector<1x8x18x4xbf16>
    %47 = vector.shape_cast %46 : vector<1x8x18x4xbf16> to vector<8x18x4xbf16>
    %48 = vector.extract_strided_slice %47 {offsets = [0, 0, 0], sizes = [8, 16, 4], strides = [1, 1, 1]} : vector<8x18x4xbf16> to vector<8x16x4xbf16>
    %49 = vector.shape_cast %48 : vector<8x16x4xbf16> to vector<128x4xbf16>
    %c6 = arith.constant 6 : index
    %c0_26 = arith.constant 0 : index
    %c0_27 = arith.constant 0 : index
    %50 = vector.load %arg3[%c6, %c0_26, %c0_27] : memref<9x4x256xbf16, #tpu.memory_space<vmem>>, vector<1x4x256xbf16>
    %51 = vector.shape_cast %50 : vector<1x4x256xbf16> to vector<4x256xbf16>
    %cst_28 = arith.constant dense<0.000000e+00> : vector<128x256xf32>
    %52 = tpu.matmul %49, %51, %cst_28 {dimension_numbers = #tpu.dot_dimension_numbers<[1], [0], [0], [1], [0, 0, 1, 1], [], []>} : vector<128x4xbf16>, vector<4x256xbf16>, vector<128x256xf32> -> vector<128x256xf32>
    %53 = arith.addf %43, %52 : vector<128x256xf32>
    %54 = vector.extract_strided_slice %47 {offsets = [0, 1, 0], sizes = [8, 16, 4], strides = [1, 1, 1]} : vector<8x18x4xbf16> to vector<8x16x4xbf16>
    %55 = vector.shape_cast %54 : vector<8x16x4xbf16> to vector<128x4xbf16>
    %c7 = arith.constant 7 : index
    %c0_29 = arith.constant 0 : index
    %c0_30 = arith.constant 0 : index
    %56 = vector.load %arg3[%c7, %c0_29, %c0_30] : memref<9x4x256xbf16, #tpu.memory_space<vmem>>, vector<1x4x256xbf16>
    %57 = vector.shape_cast %56 : vector<1x4x256xbf16> to vector<4x256xbf16>
    %cst_31 = arith.constant dense<0.000000e+00> : vector<128x256xf32>
    %58 = tpu.matmul %55, %57, %cst_31 {dimension_numbers = #tpu.dot_dimension_numbers<[1], [0], [0], [1], [0, 0, 1, 1], [], []>} : vector<128x4xbf16>, vector<4x256xbf16>, vector<128x256xf32> -> vector<128x256xf32>
    %59 = arith.addf %53, %58 : vector<128x256xf32>
    %60 = vector.extract_strided_slice %47 {offsets = [0, 2, 0], sizes = [8, 16, 4], strides = [1, 1, 1]} : vector<8x18x4xbf16> to vector<8x16x4xbf16>
    %61 = vector.shape_cast %60 : vector<8x16x4xbf16> to vector<128x4xbf16>
    %c8 = arith.constant 8 : index
    %c0_32 = arith.constant 0 : index
    %c0_33 = arith.constant 0 : index
    %62 = vector.load %arg3[%c8, %c0_32, %c0_33] : memref<9x4x256xbf16, #tpu.memory_space<vmem>>, vector<1x4x256xbf16>
    %63 = vector.shape_cast %62 : vector<1x4x256xbf16> to vector<4x256xbf16>
    %cst_34 = arith.constant dense<0.000000e+00> : vector<128x256xf32>
    %64 = tpu.matmul %61, %63, %cst_34 {dimension_numbers = #tpu.dot_dimension_numbers<[1], [0], [0], [1], [0, 0, 1, 1], [], []>} : vector<128x4xbf16>, vector<4x256xbf16>, vector<128x256xf32> -> vector<128x256xf32>
    %65 = arith.addf %59, %64 : vector<128x256xf32>
    %c0_35 = arith.constant 0 : index
    %c0_36 = arith.constant 0 : index
    %66 = vector.load %arg4[%c0_35, %c0_36] : memref<1x256xf32, #tpu.memory_space<vmem>>, vector<1x256xf32>
    %67 = vector.broadcast %66 : vector<1x256xf32> to vector<128x256xf32>
    %68 = arith.addf %65, %67 : vector<128x256xf32>
    %cst_37 = arith.constant 0.000000e+00 : f32
    %69 = vector.broadcast %cst_37 : f32 to vector<128x256xf32>
    %70 = arith.maximumf %68, %69 : vector<128x256xf32>
    %71 = vector.shape_cast %70 : vector<128x256xf32> to vector<8x16x256xf32>
    %72 = arith.truncf %71 : vector<8x16x256xf32> to vector<8x16x256xbf16>
    %c0_38 = arith.constant 0 : index
    %c0_39 = arith.constant 0 : index
    %c0_40 = arith.constant 0 : index
    %c0_41 = arith.constant 0 : index
    %73 = vector.load %arg5[%c0_38, %c0_39, %c0_40, %c0_41] : memref<1x8x16x256xbf16, #tpu.memory_space<vmem>>, vector<1x8x16x256xbf16>
    %74 = vector.shape_cast %73 : vector<1x8x16x256xbf16> to vector<8x16x256xbf16>
    %75 = vector.shape_cast %72 : vector<8x16x256xbf16> to vector<1x8x16x256xbf16>
    tpu.vector_store %arg5[%c0_38, %c0_39, %c0_40, %c0_41], %75 {strides = array<i32>} : memref<1x8x16x256xbf16, #tpu.memory_space<vmem>>, vector<1x8x16x256xbf16>,
    return
  }
  func.func @transform_0(%arg0: i32, %arg1: i32) -> (i32, i32, i32, i32) {
    %c0_i32 = arith.constant 0 : i32
    %c0_i32_0 = arith.constant 0 : i32
    %c0_i32_1 = arith.constant 0 : i32
    %c0_i32_2 = arith.constant 0 : i32
    return %arg0, %c0_i32, %c0_i32_0, %c0_i32_1 : i32, i32, i32, i32
  }
  func.func @transform_1(%arg0: i32, %arg1: i32) -> (i32, i32, i32) {
    %c0_i32 = arith.constant 0 : i32
    %c0_i32_0 = arith.constant 0 : i32
    %c0_i32_1 = arith.constant 0 : i32
    %c0_i32_2 = arith.constant 0 : i32
    return %c0_i32, %c0_i32_0, %c0_i32_1 : i32, i32, i32
  }
  func.func @transform_2(%arg0: i32, %arg1: i32) -> (i32, i32) {
    %c0_i32 = arith.constant 0 : i32
    %c0_i32_0 = arith.constant 0 : i32
    %c0_i32_1 = arith.constant 0 : i32
    return %c0_i32, %c0_i32_0 : i32, i32
  }
  func.func @transform_3(%arg0: i32, %arg1: i32) -> (i32, i32, i32, i32) {
    %c0_i32 = arith.constant 0 : i32
    %c0_i32_0 = arith.constant 0 : i32
    %c0_i32_1 = arith.constant 0 : i32
    return %arg0, %arg1, %c0_i32, %c0_i32_0 : i32, i32, i32, i32
  }
}

module attributes {stable_mosaic.version = 11 : i64} {
  func.func @_conv3x3_tap_kernel(%arg0: i32, %arg1: i32, %arg2: memref<1x18x18x256xbf16, #tpu.memory_space<vmem>>, %arg3: memref<9x256x256xbf16, #tpu.memory_space<vmem>>, %arg4: memref<1x256xf32, #tpu.memory_space<vmem>>, %arg5: memref<1x8x16x256xbf16, #tpu.memory_space<vmem>>) attributes {dimension_semantics = [#tpu.dimension_semantics<parallel>, #tpu.dimension_semantics<parallel>], iteration_bounds = array<i64: 2, 2>, scalar_prefetch = 0 : i64, scratch_operands = 0 : i64, tpu.core_type = #tpu.core_type<tc>, window_params = [{transform_indices = @transform_0, window_bounds = array<i64: 1, 18, 18, 256>}, {pipeline_mode = #tpu.pipeline_mode<synchronous>, transform_indices = @transform_1, window_bounds = array<i64: 9, 256, 256>}, {pipeline_mode = #tpu.pipeline_mode<synchronous>, transform_indices = @transform_2, window_bounds = array<i64: 1, 256>}, {transform_indices = @transform_3, window_bounds = array<i64: 1, 8, 16, 256>}]} {
    %c8_i32 = arith.constant 8 : i32
    %0 = arith.muli %arg1, %c8_i32 : i32
    %c0_i32 = arith.constant 0 : i32
    %1 = arith.addi %0, %c0_i32 : i32
    %c0 = arith.constant 0 : index
    %2 = arith.index_cast %1 : i32 to index
    %c0_0 = arith.constant 0 : index
    %c0_1 = arith.constant 0 : index
    %3 = vector.load %arg2[%c0, %2, %c0_0, %c0_1] : memref<1x18x18x256xbf16, #tpu.memory_space<vmem>>, vector<1x8x18x256xbf16>
    %4 = vector.shape_cast %3 : vector<1x8x18x256xbf16> to vector<8x18x256xbf16>
    %5 = vector.extract_strided_slice %4 {offsets = [0, 0, 0], sizes = [8, 16, 256], strides = [1, 1, 1]} : vector<8x18x256xbf16> to vector<8x16x256xbf16>
    %6 = vector.shape_cast %5 : vector<8x16x256xbf16> to vector<128x256xbf16>
    %c0_2 = arith.constant 0 : index
    %c0_3 = arith.constant 0 : index
    %c0_4 = arith.constant 0 : index
    %7 = vector.load %arg3[%c0_2, %c0_3, %c0_4] : memref<9x256x256xbf16, #tpu.memory_space<vmem>>, vector<1x256x256xbf16>
    %8 = vector.shape_cast %7 : vector<1x256x256xbf16> to vector<256x256xbf16>
    %cst = arith.constant dense<0.000000e+00> : vector<128x256xf32>
    %9 = tpu.matmul %6, %8, %cst {dimension_numbers = #tpu.dot_dimension_numbers<[1], [0], [0], [1], [0, 0, 1, 1], [], []>} : vector<128x256xbf16>, vector<256x256xbf16>, vector<128x256xf32> -> vector<128x256xf32>
    %10 = vector.extract_strided_slice %4 {offsets = [0, 1, 0], sizes = [8, 16, 256], strides = [1, 1, 1]} : vector<8x18x256xbf16> to vector<8x16x256xbf16>
    %11 = vector.shape_cast %10 : vector<8x16x256xbf16> to vector<128x256xbf16>
    %c1 = arith.constant 1 : index
    %c0_5 = arith.constant 0 : index
    %c0_6 = arith.constant 0 : index
    %12 = vector.load %arg3[%c1, %c0_5, %c0_6] : memref<9x256x256xbf16, #tpu.memory_space<vmem>>, vector<1x256x256xbf16>
    %13 = vector.shape_cast %12 : vector<1x256x256xbf16> to vector<256x256xbf16>
    %cst_7 = arith.constant dense<0.000000e+00> : vector<128x256xf32>
    %14 = tpu.matmul %11, %13, %cst_7 {dimension_numbers = #tpu.dot_dimension_numbers<[1], [0], [0], [1], [0, 0, 1, 1], [], []>} : vector<128x256xbf16>, vector<256x256xbf16>, vector<128x256xf32> -> vector<128x256xf32>
    %15 = arith.addf %9, %14 : vector<128x256xf32>
    %16 = vector.extract_strided_slice %4 {offsets = [0, 2, 0], sizes = [8, 16, 256], strides = [1, 1, 1]} : vector<8x18x256xbf16> to vector<8x16x256xbf16>
    %17 = vector.shape_cast %16 : vector<8x16x256xbf16> to vector<128x256xbf16>
    %c2 = arith.constant 2 : index
    %c0_8 = arith.constant 0 : index
    %c0_9 = arith.constant 0 : index
    %18 = vector.load %arg3[%c2, %c0_8, %c0_9] : memref<9x256x256xbf16, #tpu.memory_space<vmem>>, vector<1x256x256xbf16>
    %19 = vector.shape_cast %18 : vector<1x256x256xbf16> to vector<256x256xbf16>
    %cst_10 = arith.constant dense<0.000000e+00> : vector<128x256xf32>
    %20 = tpu.matmul %17, %19, %cst_10 {dimension_numbers = #tpu.dot_dimension_numbers<[1], [0], [0], [1], [0, 0, 1, 1], [], []>} : vector<128x256xbf16>, vector<256x256xbf16>, vector<128x256xf32> -> vector<128x256xf32>
    %21 = arith.addf %15, %20 : vector<128x256xf32>
    %c1_i32 = arith.constant 1 : i32
    %22 = arith.addi %0, %c1_i32 : i32
    %c0_11 = arith.constant 0 : index
    %23 = arith.index_cast %22 : i32 to index
    %c0_12 = arith.constant 0 : index
    %c0_13 = arith.constant 0 : index
    %24 = vector.load %arg2[%c0_11, %23, %c0_12, %c0_13] : memref<1x18x18x256xbf16, #tpu.memory_space<vmem>>, vector<1x8x18x256xbf16>
    %25 = vector.shape_cast %24 : vector<1x8x18x256xbf16> to vector<8x18x256xbf16>
    %26 = vector.extract_strided_slice %25 {offsets = [0, 0, 0], sizes = [8, 16, 256], strides = [1, 1, 1]} : vector<8x18x256xbf16> to vector<8x16x256xbf16>
    %27 = vector.shape_cast %26 : vector<8x16x256xbf16> to vector<128x256xbf16>
    %c3 = arith.constant 3 : index
    %c0_14 = arith.constant 0 : index
    %c0_15 = arith.constant 0 : index
    %28 = vector.load %arg3[%c3, %c0_14, %c0_15] : memref<9x256x256xbf16, #tpu.memory_space<vmem>>, vector<1x256x256xbf16>
    %29 = vector.shape_cast %28 : vector<1x256x256xbf16> to vector<256x256xbf16>
    %cst_16 = arith.constant dense<0.000000e+00> : vector<128x256xf32>
    %30 = tpu.matmul %27, %29, %cst_16 {dimension_numbers = #tpu.dot_dimension_numbers<[1], [0], [0], [1], [0, 0, 1, 1], [], []>} : vector<128x256xbf16>, vector<256x256xbf16>, vector<128x256xf32> -> vector<128x256xf32>
    %31 = arith.addf %21, %30 : vector<128x256xf32>
    %32 = vector.extract_strided_slice %25 {offsets = [0, 1, 0], sizes = [8, 16, 256], strides = [1, 1, 1]} : vector<8x18x256xbf16> to vector<8x16x256xbf16>
    %33 = vector.shape_cast %32 : vector<8x16x256xbf16> to vector<128x256xbf16>
    %c4 = arith.constant 4 : index
    %c0_17 = arith.constant 0 : index
    %c0_18 = arith.constant 0 : index
    %34 = vector.load %arg3[%c4, %c0_17, %c0_18] : memref<9x256x256xbf16, #tpu.memory_space<vmem>>, vector<1x256x256xbf16>
    %35 = vector.shape_cast %34 : vector<1x256x256xbf16> to vector<256x256xbf16>
    %cst_19 = arith.constant dense<0.000000e+00> : vector<128x256xf32>
    %36 = tpu.matmul %33, %35, %cst_19 {dimension_numbers = #tpu.dot_dimension_numbers<[1], [0], [0], [1], [0, 0, 1, 1], [], []>} : vector<128x256xbf16>, vector<256x256xbf16>, vector<128x256xf32> -> vector<128x256xf32>
    %37 = arith.addf %31, %36 : vector<128x256xf32>
    %38 = vector.extract_strided_slice %25 {offsets = [0, 2, 0], sizes = [8, 16, 256], strides = [1, 1, 1]} : vector<8x18x256xbf16> to vector<8x16x256xbf16>
    %39 = vector.shape_cast %38 : vector<8x16x256xbf16> to vector<128x256xbf16>
    %c5 = arith.constant 5 : index
    %c0_20 = arith.constant 0 : index
    %c0_21 = arith.constant 0 : index
    %40 = vector.load %arg3[%c5, %c0_20, %c0_21] : memref<9x256x256xbf16, #tpu.memory_space<vmem>>, vector<1x256x256xbf16>
    %41 = vector.shape_cast %40 : vector<1x256x256xbf16> to vector<256x256xbf16>
    %cst_22 = arith.constant dense<0.000000e+00> : vector<128x256xf32>
    %42 = tpu.matmul %39, %41, %cst_22 {dimension_numbers = #tpu.dot_dimension_numbers<[1], [0], [0], [1], [0, 0, 1, 1], [], []>} : vector<128x256xbf16>, vector<256x256xbf16>, vector<128x256xf32> -> vector<128x256xf32>
    %43 = arith.addf %37, %42 : vector<128x256xf32>
    %c2_i32 = arith.constant 2 : i32
    %44 = arith.addi %0, %c2_i32 : i32
    %c0_23 = arith.constant 0 : index
    %45 = arith.index_cast %44 : i32 to index
    %c0_24 = arith.constant 0 : index
    %c0_25 = arith.constant 0 : index
    %46 = vector.load %arg2[%c0_23, %45, %c0_24, %c0_25] : memref<1x18x18x256xbf16, #tpu.memory_space<vmem>>, vector<1x8x18x256xbf16>
    %47 = vector.shape_cast %46 : vector<1x8x18x256xbf16> to vector<8x18x256xbf16>
    %48 = vector.extract_strided_slice %47 {offsets = [0, 0, 0], sizes = [8, 16, 256], strides = [1, 1, 1]} : vector<8x18x256xbf16> to vector<8x16x256xbf16>
    %49 = vector.shape_cast %48 : vector<8x16x256xbf16> to vector<128x256xbf16>
    %c6 = arith.constant 6 : index
    %c0_26 = arith.constant 0 : index
    %c0_27 = arith.constant 0 : index
    %50 = vector.load %arg3[%c6, %c0_26, %c0_27] : memref<9x256x256xbf16, #tpu.memory_space<vmem>>, vector<1x256x256xbf16>
    %51 = vector.shape_cast %50 : vector<1x256x256xbf16> to vector<256x256xbf16>
    %cst_28 = arith.constant dense<0.000000e+00> : vector<128x256xf32>
    %52 = tpu.matmul %49, %51, %cst_28 {dimension_numbers = #tpu.dot_dimension_numbers<[1], [0], [0], [1], [0, 0, 1, 1], [], []>} : vector<128x256xbf16>, vector<256x256xbf16>, vector<128x256xf32> -> vector<128x256xf32>
    %53 = arith.addf %43, %52 : vector<128x256xf32>
    %54 = vector.extract_strided_slice %47 {offsets = [0, 1, 0], sizes = [8, 16, 256], strides = [1, 1, 1]} : vector<8x18x256xbf16> to vector<8x16x256xbf16>
    %55 = vector.shape_cast %54 : vector<8x16x256xbf16> to vector<128x256xbf16>
    %c7 = arith.constant 7 : index
    %c0_29 = arith.constant 0 : index
    %c0_30 = arith.constant 0 : index
    %56 = vector.load %arg3[%c7, %c0_29, %c0_30] : memref<9x256x256xbf16, #tpu.memory_space<vmem>>, vector<1x256x256xbf16>
    %57 = vector.shape_cast %56 : vector<1x256x256xbf16> to vector<256x256xbf16>
    %cst_31 = arith.constant dense<0.000000e+00> : vector<128x256xf32>
    %58 = tpu.matmul %55, %57, %cst_31 {dimension_numbers = #tpu.dot_dimension_numbers<[1], [0], [0], [1], [0, 0, 1, 1], [], []>} : vector<128x256xbf16>, vector<256x256xbf16>, vector<128x256xf32> -> vector<128x256xf32>
    %59 = arith.addf %53, %58 : vector<128x256xf32>
    %60 = vector.extract_strided_slice %47 {offsets = [0, 2, 0], sizes = [8, 16, 256], strides = [1, 1, 1]} : vector<8x18x256xbf16> to vector<8x16x256xbf16>
    %61 = vector.shape_cast %60 : vector<8x16x256xbf16> to vector<128x256xbf16>
    %c8 = arith.constant 8 : index
    %c0_32 = arith.constant 0 : index
    %c0_33 = arith.constant 0 : index
    %62 = vector.load %arg3[%c8, %c0_32, %c0_33] : memref<9x256x256xbf16, #tpu.memory_space<vmem>>, vector<1x256x256xbf16>
    %63 = vector.shape_cast %62 : vector<1x256x256xbf16> to vector<256x256xbf16>
    %cst_34 = arith.constant dense<0.000000e+00> : vector<128x256xf32>
    %64 = tpu.matmul %61, %63, %cst_34 {dimension_numbers = #tpu.dot_dimension_numbers<[1], [0], [0], [1], [0, 0, 1, 1], [], []>} : vector<128x256xbf16>, vector<256x256xbf16>, vector<128x256xf32> -> vector<128x256xf32>
    %65 = arith.addf %59, %64 : vector<128x256xf32>
    %c0_35 = arith.constant 0 : index
    %c0_36 = arith.constant 0 : index
    %66 = vector.load %arg4[%c0_35, %c0_36] : memref<1x256xf32, #tpu.memory_space<vmem>>, vector<1x256xf32>
    %67 = vector.broadcast %66 : vector<1x256xf32> to vector<128x256xf32>
    %68 = arith.addf %65, %67 : vector<128x256xf32>
    %cst_37 = arith.constant 0.000000e+00 : f32
    %69 = vector.broadcast %cst_37 : f32 to vector<128x256xf32>
    %70 = arith.maximumf %68, %69 : vector<128x256xf32>
    %71 = vector.shape_cast %70 : vector<128x256xf32> to vector<8x16x256xf32>
    %72 = arith.truncf %71 : vector<8x16x256xf32> to vector<8x16x256xbf16>
    %c0_38 = arith.constant 0 : index
    %c0_39 = arith.constant 0 : index
    %c0_40 = arith.constant 0 : index
    %c0_41 = arith.constant 0 : index
    %73 = vector.load %arg5[%c0_38, %c0_39, %c0_40, %c0_41] : memref<1x8x16x256xbf16, #tpu.memory_space<vmem>>, vector<1x8x16x256xbf16>
    %74 = vector.shape_cast %73 : vector<1x8x16x256xbf16> to vector<8x16x256xbf16>
    %75 = vector.shape_cast %72 : vector<8x16x256xbf16> to vector<1x8x16x256xbf16>
    tpu.vector_store %arg5[%c0_38, %c0_39, %c0_40, %c0_41], %75 {strides = array<i32>} : memref<1x8x16x256xbf16, #tpu.memory_space<vmem>>, vector<1x8x16x256xbf16>,
    return
  }
  func.func @transform_0(%arg0: i32, %arg1: i32) -> (i32, i32, i32, i32) {
    %c0_i32 = arith.constant 0 : i32
    %c0_i32_0 = arith.constant 0 : i32
    %c0_i32_1 = arith.constant 0 : i32
    %c0_i32_2 = arith.constant 0 : i32
    return %arg0, %c0_i32, %c0_i32_0, %c0_i32_1 : i32, i32, i32, i32
  }
  func.func @transform_1(%arg0: i32, %arg1: i32) -> (i32, i32, i32) {
    %c0_i32 = arith.constant 0 : i32
    %c0_i32_0 = arith.constant 0 : i32
    %c0_i32_1 = arith.constant 0 : i32
    %c0_i32_2 = arith.constant 0 : i32
    return %c0_i32, %c0_i32_0, %c0_i32_1 : i32, i32, i32
  }
  func.func @transform_2(%arg0: i32, %arg1: i32) -> (i32, i32) {
    %c0_i32 = arith.constant 0 : i32
    %c0_i32_0 = arith.constant 0 : i32
    %c0_i32_1 = arith.constant 0 : i32
    return %c0_i32, %c0_i32_0 : i32, i32
  }
  func.func @transform_3(%arg0: i32, %arg1: i32) -> (i32, i32, i32, i32) {
    %c0_i32 = arith.constant 0 : i32
    %c0_i32_0 = arith.constant 0 : i32
    %c0_i32_1 = arith.constant 0 : i32
    return %arg0, %arg1, %c0_i32, %c0_i32_0 : i32, i32, i32, i32
  }
}

module attributes {stable_mosaic.version = 11 : i64} {
  func.func @_conv3x3_tap_kernel(%arg0: i32, %arg1: i32, %arg2: memref<1x18x18x256xbf16, #tpu.memory_space<vmem>>, %arg3: memref<9x256x128xbf16, #tpu.memory_space<vmem>>, %arg4: memref<1x128xf32, #tpu.memory_space<vmem>>, %arg5: memref<1x8x16x128xf32, #tpu.memory_space<vmem>>) attributes {dimension_semantics = [#tpu.dimension_semantics<parallel>, #tpu.dimension_semantics<parallel>], iteration_bounds = array<i64: 2, 2>, scalar_prefetch = 0 : i64, scratch_operands = 0 : i64, tpu.core_type = #tpu.core_type<tc>, window_params = [{transform_indices = @transform_0, window_bounds = array<i64: 1, 18, 18, 256>}, {pipeline_mode = #tpu.pipeline_mode<synchronous>, transform_indices = @transform_1, window_bounds = array<i64: 9, 256, 128>}, {pipeline_mode = #tpu.pipeline_mode<synchronous>, transform_indices = @transform_2, window_bounds = array<i64: 1, 128>}, {transform_indices = @transform_3, window_bounds = array<i64: 1, 8, 16, 128>}]} {
    %c8_i32 = arith.constant 8 : i32
    %0 = arith.muli %arg1, %c8_i32 : i32
    %c0_i32 = arith.constant 0 : i32
    %1 = arith.addi %0, %c0_i32 : i32
    %c0 = arith.constant 0 : index
    %2 = arith.index_cast %1 : i32 to index
    %c0_0 = arith.constant 0 : index
    %c0_1 = arith.constant 0 : index
    %3 = vector.load %arg2[%c0, %2, %c0_0, %c0_1] : memref<1x18x18x256xbf16, #tpu.memory_space<vmem>>, vector<1x8x18x256xbf16>
    %4 = vector.shape_cast %3 : vector<1x8x18x256xbf16> to vector<8x18x256xbf16>
    %5 = vector.extract_strided_slice %4 {offsets = [0, 0, 0], sizes = [8, 16, 256], strides = [1, 1, 1]} : vector<8x18x256xbf16> to vector<8x16x256xbf16>
    %6 = vector.shape_cast %5 : vector<8x16x256xbf16> to vector<128x256xbf16>
    %c0_2 = arith.constant 0 : index
    %c0_3 = arith.constant 0 : index
    %c0_4 = arith.constant 0 : index
    %7 = vector.load %arg3[%c0_2, %c0_3, %c0_4] : memref<9x256x128xbf16, #tpu.memory_space<vmem>>, vector<1x256x128xbf16>
    %8 = vector.shape_cast %7 : vector<1x256x128xbf16> to vector<256x128xbf16>
    %cst = arith.constant dense<0.000000e+00> : vector<128x128xf32>
    %9 = tpu.matmul %6, %8, %cst {dimension_numbers = #tpu.dot_dimension_numbers<[1], [0], [0], [1], [0, 0, 1, 1], [], []>} : vector<128x256xbf16>, vector<256x128xbf16>, vector<128x128xf32> -> vector<128x128xf32>
    %10 = vector.extract_strided_slice %4 {offsets = [0, 1, 0], sizes = [8, 16, 256], strides = [1, 1, 1]} : vector<8x18x256xbf16> to vector<8x16x256xbf16>
    %11 = vector.shape_cast %10 : vector<8x16x256xbf16> to vector<128x256xbf16>
    %c1 = arith.constant 1 : index
    %c0_5 = arith.constant 0 : index
    %c0_6 = arith.constant 0 : index
    %12 = vector.load %arg3[%c1, %c0_5, %c0_6] : memref<9x256x128xbf16, #tpu.memory_space<vmem>>, vector<1x256x128xbf16>
    %13 = vector.shape_cast %12 : vector<1x256x128xbf16> to vector<256x128xbf16>
    %cst_7 = arith.constant dense<0.000000e+00> : vector<128x128xf32>
    %14 = tpu.matmul %11, %13, %cst_7 {dimension_numbers = #tpu.dot_dimension_numbers<[1], [0], [0], [1], [0, 0, 1, 1], [], []>} : vector<128x256xbf16>, vector<256x128xbf16>, vector<128x128xf32> -> vector<128x128xf32>
    %15 = arith.addf %9, %14 : vector<128x128xf32>
    %16 = vector.extract_strided_slice %4 {offsets = [0, 2, 0], sizes = [8, 16, 256], strides = [1, 1, 1]} : vector<8x18x256xbf16> to vector<8x16x256xbf16>
    %17 = vector.shape_cast %16 : vector<8x16x256xbf16> to vector<128x256xbf16>
    %c2 = arith.constant 2 : index
    %c0_8 = arith.constant 0 : index
    %c0_9 = arith.constant 0 : index
    %18 = vector.load %arg3[%c2, %c0_8, %c0_9] : memref<9x256x128xbf16, #tpu.memory_space<vmem>>, vector<1x256x128xbf16>
    %19 = vector.shape_cast %18 : vector<1x256x128xbf16> to vector<256x128xbf16>
    %cst_10 = arith.constant dense<0.000000e+00> : vector<128x128xf32>
    %20 = tpu.matmul %17, %19, %cst_10 {dimension_numbers = #tpu.dot_dimension_numbers<[1], [0], [0], [1], [0, 0, 1, 1], [], []>} : vector<128x256xbf16>, vector<256x128xbf16>, vector<128x128xf32> -> vector<128x128xf32>
    %21 = arith.addf %15, %20 : vector<128x128xf32>
    %c1_i32 = arith.constant 1 : i32
    %22 = arith.addi %0, %c1_i32 : i32
    %c0_11 = arith.constant 0 : index
    %23 = arith.index_cast %22 : i32 to index
    %c0_12 = arith.constant 0 : index
    %c0_13 = arith.constant 0 : index
    %24 = vector.load %arg2[%c0_11, %23, %c0_12, %c0_13] : memref<1x18x18x256xbf16, #tpu.memory_space<vmem>>, vector<1x8x18x256xbf16>
    %25 = vector.shape_cast %24 : vector<1x8x18x256xbf16> to vector<8x18x256xbf16>
    %26 = vector.extract_strided_slice %25 {offsets = [0, 0, 0], sizes = [8, 16, 256], strides = [1, 1, 1]} : vector<8x18x256xbf16> to vector<8x16x256xbf16>
    %27 = vector.shape_cast %26 : vector<8x16x256xbf16> to vector<128x256xbf16>
    %c3 = arith.constant 3 : index
    %c0_14 = arith.constant 0 : index
    %c0_15 = arith.constant 0 : index
    %28 = vector.load %arg3[%c3, %c0_14, %c0_15] : memref<9x256x128xbf16, #tpu.memory_space<vmem>>, vector<1x256x128xbf16>
    %29 = vector.shape_cast %28 : vector<1x256x128xbf16> to vector<256x128xbf16>
    %cst_16 = arith.constant dense<0.000000e+00> : vector<128x128xf32>
    %30 = tpu.matmul %27, %29, %cst_16 {dimension_numbers = #tpu.dot_dimension_numbers<[1], [0], [0], [1], [0, 0, 1, 1], [], []>} : vector<128x256xbf16>, vector<256x128xbf16>, vector<128x128xf32> -> vector<128x128xf32>
    %31 = arith.addf %21, %30 : vector<128x128xf32>
    %32 = vector.extract_strided_slice %25 {offsets = [0, 1, 0], sizes = [8, 16, 256], strides = [1, 1, 1]} : vector<8x18x256xbf16> to vector<8x16x256xbf16>
    %33 = vector.shape_cast %32 : vector<8x16x256xbf16> to vector<128x256xbf16>
    %c4 = arith.constant 4 : index
    %c0_17 = arith.constant 0 : index
    %c0_18 = arith.constant 0 : index
    %34 = vector.load %arg3[%c4, %c0_17, %c0_18] : memref<9x256x128xbf16, #tpu.memory_space<vmem>>, vector<1x256x128xbf16>
    %35 = vector.shape_cast %34 : vector<1x256x128xbf16> to vector<256x128xbf16>
    %cst_19 = arith.constant dense<0.000000e+00> : vector<128x128xf32>
    %36 = tpu.matmul %33, %35, %cst_19 {dimension_numbers = #tpu.dot_dimension_numbers<[1], [0], [0], [1], [0, 0, 1, 1], [], []>} : vector<128x256xbf16>, vector<256x128xbf16>, vector<128x128xf32> -> vector<128x128xf32>
    %37 = arith.addf %31, %36 : vector<128x128xf32>
    %38 = vector.extract_strided_slice %25 {offsets = [0, 2, 0], sizes = [8, 16, 256], strides = [1, 1, 1]} : vector<8x18x256xbf16> to vector<8x16x256xbf16>
    %39 = vector.shape_cast %38 : vector<8x16x256xbf16> to vector<128x256xbf16>
    %c5 = arith.constant 5 : index
    %c0_20 = arith.constant 0 : index
    %c0_21 = arith.constant 0 : index
    %40 = vector.load %arg3[%c5, %c0_20, %c0_21] : memref<9x256x128xbf16, #tpu.memory_space<vmem>>, vector<1x256x128xbf16>
    %41 = vector.shape_cast %40 : vector<1x256x128xbf16> to vector<256x128xbf16>
    %cst_22 = arith.constant dense<0.000000e+00> : vector<128x128xf32>
    %42 = tpu.matmul %39, %41, %cst_22 {dimension_numbers = #tpu.dot_dimension_numbers<[1], [0], [0], [1], [0, 0, 1, 1], [], []>} : vector<128x256xbf16>, vector<256x128xbf16>, vector<128x128xf32> -> vector<128x128xf32>
    %43 = arith.addf %37, %42 : vector<128x128xf32>
    %c2_i32 = arith.constant 2 : i32
    %44 = arith.addi %0, %c2_i32 : i32
    %c0_23 = arith.constant 0 : index
    %45 = arith.index_cast %44 : i32 to index
    %c0_24 = arith.constant 0 : index
    %c0_25 = arith.constant 0 : index
    %46 = vector.load %arg2[%c0_23, %45, %c0_24, %c0_25] : memref<1x18x18x256xbf16, #tpu.memory_space<vmem>>, vector<1x8x18x256xbf16>
    %47 = vector.shape_cast %46 : vector<1x8x18x256xbf16> to vector<8x18x256xbf16>
    %48 = vector.extract_strided_slice %47 {offsets = [0, 0, 0], sizes = [8, 16, 256], strides = [1, 1, 1]} : vector<8x18x256xbf16> to vector<8x16x256xbf16>
    %49 = vector.shape_cast %48 : vector<8x16x256xbf16> to vector<128x256xbf16>
    %c6 = arith.constant 6 : index
    %c0_26 = arith.constant 0 : index
    %c0_27 = arith.constant 0 : index
    %50 = vector.load %arg3[%c6, %c0_26, %c0_27] : memref<9x256x128xbf16, #tpu.memory_space<vmem>>, vector<1x256x128xbf16>
    %51 = vector.shape_cast %50 : vector<1x256x128xbf16> to vector<256x128xbf16>
    %cst_28 = arith.constant dense<0.000000e+00> : vector<128x128xf32>
    %52 = tpu.matmul %49, %51, %cst_28 {dimension_numbers = #tpu.dot_dimension_numbers<[1], [0], [0], [1], [0, 0, 1, 1], [], []>} : vector<128x256xbf16>, vector<256x128xbf16>, vector<128x128xf32> -> vector<128x128xf32>
    %53 = arith.addf %43, %52 : vector<128x128xf32>
    %54 = vector.extract_strided_slice %47 {offsets = [0, 1, 0], sizes = [8, 16, 256], strides = [1, 1, 1]} : vector<8x18x256xbf16> to vector<8x16x256xbf16>
    %55 = vector.shape_cast %54 : vector<8x16x256xbf16> to vector<128x256xbf16>
    %c7 = arith.constant 7 : index
    %c0_29 = arith.constant 0 : index
    %c0_30 = arith.constant 0 : index
    %56 = vector.load %arg3[%c7, %c0_29, %c0_30] : memref<9x256x128xbf16, #tpu.memory_space<vmem>>, vector<1x256x128xbf16>
    %57 = vector.shape_cast %56 : vector<1x256x128xbf16> to vector<256x128xbf16>
    %cst_31 = arith.constant dense<0.000000e+00> : vector<128x128xf32>
    %58 = tpu.matmul %55, %57, %cst_31 {dimension_numbers = #tpu.dot_dimension_numbers<[1], [0], [0], [1], [0, 0, 1, 1], [], []>} : vector<128x256xbf16>, vector<256x128xbf16>, vector<128x128xf32> -> vector<128x128xf32>
    %59 = arith.addf %53, %58 : vector<128x128xf32>
    %60 = vector.extract_strided_slice %47 {offsets = [0, 2, 0], sizes = [8, 16, 256], strides = [1, 1, 1]} : vector<8x18x256xbf16> to vector<8x16x256xbf16>
    %61 = vector.shape_cast %60 : vector<8x16x256xbf16> to vector<128x256xbf16>
    %c8 = arith.constant 8 : index
    %c0_32 = arith.constant 0 : index
    %c0_33 = arith.constant 0 : index
    %62 = vector.load %arg3[%c8, %c0_32, %c0_33] : memref<9x256x128xbf16, #tpu.memory_space<vmem>>, vector<1x256x128xbf16>
    %63 = vector.shape_cast %62 : vector<1x256x128xbf16> to vector<256x128xbf16>
    %cst_34 = arith.constant dense<0.000000e+00> : vector<128x128xf32>
    %64 = tpu.matmul %61, %63, %cst_34 {dimension_numbers = #tpu.dot_dimension_numbers<[1], [0], [0], [1], [0, 0, 1, 1], [], []>} : vector<128x256xbf16>, vector<256x128xbf16>, vector<128x128xf32> -> vector<128x128xf32>
    %65 = arith.addf %59, %64 : vector<128x128xf32>
    %c0_35 = arith.constant 0 : index
    %c0_36 = arith.constant 0 : index
    %66 = vector.load %arg4[%c0_35, %c0_36] : memref<1x128xf32, #tpu.memory_space<vmem>>, vector<1x128xf32>
    %67 = vector.broadcast %66 : vector<1x128xf32> to vector<128x128xf32>
    %68 = arith.addf %65, %67 : vector<128x128xf32>
    %cst_37 = arith.constant 0.000000e+00 : f32
    %69 = vector.broadcast %cst_37 : f32 to vector<128x128xf32>
    %70 = arith.maximumf %68, %69 : vector<128x128xf32>
    %71 = vector.shape_cast %70 : vector<128x128xf32> to vector<8x16x128xf32>
    %c0_38 = arith.constant 0 : index
    %c0_39 = arith.constant 0 : index
    %c0_40 = arith.constant 0 : index
    %c0_41 = arith.constant 0 : index
    %72 = vector.load %arg5[%c0_38, %c0_39, %c0_40, %c0_41] : memref<1x8x16x128xf32, #tpu.memory_space<vmem>>, vector<1x8x16x128xf32>
    %73 = vector.shape_cast %72 : vector<1x8x16x128xf32> to vector<8x16x128xf32>
    %74 = vector.shape_cast %71 : vector<8x16x128xf32> to vector<1x8x16x128xf32>
    tpu.vector_store %arg5[%c0_38, %c0_39, %c0_40, %c0_41], %74 {strides = array<i32>} : memref<1x8x16x128xf32, #tpu.memory_space<vmem>>, vector<1x8x16x128xf32>,
    return
  }
  func.func @transform_0(%arg0: i32, %arg1: i32) -> (i32, i32, i32, i32) {
    %c0_i32 = arith.constant 0 : i32
    %c0_i32_0 = arith.constant 0 : i32
    %c0_i32_1 = arith.constant 0 : i32
    %c0_i32_2 = arith.constant 0 : i32
    return %arg0, %c0_i32, %c0_i32_0, %c0_i32_1 : i32, i32, i32, i32
  }
  func.func @transform_1(%arg0: i32, %arg1: i32) -> (i32, i32, i32) {
    %c0_i32 = arith.constant 0 : i32
    %c0_i32_0 = arith.constant 0 : i32
    %c0_i32_1 = arith.constant 0 : i32
    %c0_i32_2 = arith.constant 0 : i32
    return %c0_i32, %c0_i32_0, %c0_i32_1 : i32, i32, i32
  }
  func.func @transform_2(%arg0: i32, %arg1: i32) -> (i32, i32) {
    %c0_i32 = arith.constant 0 : i32
    %c0_i32_0 = arith.constant 0 : i32
    %c0_i32_1 = arith.constant 0 : i32
    return %c0_i32, %c0_i32_0 : i32, i32
  }
  func.func @transform_3(%arg0: i32, %arg1: i32) -> (i32, i32, i32, i32) {
    %c0_i32 = arith.constant 0 : i32
    %c0_i32_0 = arith.constant 0 : i32
    %c0_i32_1 = arith.constant 0 : i32
    return %arg0, %arg1, %c0_i32, %c0_i32_0 : i32, i32, i32, i32
  }
}

</mosaic_0001>

<llo_original>
// kernel: density_regressor_forward.3
$region0: #{density_regressor_forward.3}
  #allocation0 [shape = 'u32[]', space=smem, size = 0x4, offset = 0x4, fixed_abs, tag = 'smem constant byte address 0x4 - core index']
  #allocation1 [shape = 'u32[144,128]{1,0:T(1,128)}', space=vmem, size = 0x12000, scoped, tag = 'internal scratch']
  %s0 = inlined_call_operand.vmem [shape: bf16[2,18,18,4], index: 0, kind: input, shape index: {}]
  %s1 = inlined_call_operand.vmem [shape: bf16[9,4,256], index: 1, kind: input, shape index: {}]
  %s2 = inlined_call_operand.vmem [shape: f32[1,256], index: 2, kind: input, shape index: {}]
  %s3 = inlined_call_operand.vmem [shape: bf16[2,16,16,256], index: 3, kind: output, shape index: {}]
  %s4 = sld [smem:[#allocation0]]
  $region45: #{density_regressor_forward.3} parent=0
    _
  %s6 = ssub.s32 1, %s4
  %s7 = scalar_select 0, %s6, %s4
  loop: start=0, step=1, limit=6
  $region2: #{density_regressor_forward.3} parent=0 // loop_pre_header
    _
  $region3: #{density_regressor_forward.3} parent=0 // loop_header
    %s9 = sphi 0, %s13
    %p10 = scmp.ge.s32.totalorder %s9, 6
    %s16 = sphi 0, %s28
    %s17 = sphi 0, %s24
    %s18 = sphi 0, %s16
    %s19 = sphi 0, %s17
    %s20 = sphi 0, %s18
    %s21 = sphi 0, %s19
    %s31 = sphi 0, %s33
    %s34 = sphi 0, %s31
    %s35 = sphi 0, %s34
    %s51 = sphi 0, %s35
    %s55 = sphi 0, %s55
    %s57 = sphi 0, %s55
    %s58 = sphi 0, %s57
    %s72 = sphi 0, %s58
    %s76 = sphi 0, %s76
    %s78 = sphi 0, %s76
    %s79 = sphi 0, %s78
    %s93 = sphi 0, %s79
    %s101 = sphi 0, %s103
    %s104 = sphi 0, %s101
    %s105 = sphi 0, %s104
    %s121 = sphi 0, %s105
  $region4: #{density_regressor_forward.3} parent=0 // loop_header_branch
    %12 = sbr.rel (%p10) target = $region8
  $region5: #{density_regressor_forward.3} parent=0 // loop_body
    %s14 = ssub.s32 %s9, 1
    %s15 = ssub.s32 %s9, 2
    %s22 = sadd.s32 1, %s17
    %p23 = scmp.ge.s32.totalorder %s22, 2
    %s24 = scalar_select %p23, 0, %s22
    %s25 = sadd.s32 1, %s16
    %s26 = scalar_select %p23, %s25, %s16
    %p27 = scmp.ge.s32.totalorder %s26, 2
    %s28 = scalar_select %p27, 0, %s26
    %s29 = ssub.s32 %s16, %s28
    %p30 = scmp.eq.s32.totalorder %s29, 0
    %s32 = sadd.s32 %s31, 1
    %s33 = scalar_select %p30, %s31, %s32
    %p36 = pneg %p30
    %p37 = scmp.eq.s32.totalorder %s9, 3
    %p38 = por %p36, %p37
    %p39 = scmp.ne.s32.totalorder %s31, %s34
    %p40 = scmp.eq.s32.totalorder %s9, 0
    %p41 = por %p39, %p40
    %p42 = scmp.ne.s32.totalorder %s31, %s34
    %p43 = scmp.eq.s32.totalorder %s14, 3
    %p44 = por %p42, %p43
    %p45 = scmp.ne.s32.totalorder %s34, %s35
    %p46 = scmp.eq.s32.totalorder %s14, 0
    %p47 = por %p45, %p46
    %p48 = scmp.ne.s32.totalorder %s34, %s35
    %p49 = scmp.eq.s32.totalorder %s15, 3
    %p50 = por %p48, %p49
    %p52 = scmp.ne.s32.totalorder %s35, %s51
    %p53 = scmp.eq.s32.totalorder %s15, 0
    %p54 = por %p52, %p53
    %s56 = sadd.s32 %s55, 1
    %p59 = scmp.eq.s32.totalorder %s9, 3
    %p60 = scmp.ne.s32.totalorder %s55, %s57
    %p61 = scmp.eq.s32.totalorder %s9, 0
    %p62 = por %p60, %p61
    %p63 = scmp.ne.s32.totalorder %s55, %s57
    %p64 = scmp.eq.s32.totalorder %s14, 3
    %p65 = por %p63, %p64
    %p66 = scmp.ne.s32.totalorder %s57, %s58
    %p67 = scmp.eq.s32.totalorder %s14, 0
    %p68 = por %p66, %p67
    %p69 = scmp.ne.s32.totalorder %s57, %s58
    %p70 = scmp.eq.s32.totalorder %s15, 3
    %p71 = por %p69, %p70
    %p73 = scmp.ne.s32.totalorder %s58, %s72
    %p74 = scmp.eq.s32.totalorder %s15, 0
    %p75 = por %p73, %p74
    %s77 = sadd.s32 %s76, 1
    %p80 = scmp.eq.s32.totalorder %s9, 3
    %p81 = scmp.ne.s32.totalorder %s76, %s78
    %p82 = scmp.eq.s32.totalorder %s9, 0
    %p83 = por %p81, %p82
    %p84 = scmp.ne.s32.totalorder %s76, %s78
    %p85 = scmp.eq.s32.totalorder %s14, 3
    %p86 = por %p84, %p85
    %p87 = scmp.ne.s32.totalorder %s78, %s79
    %p88 = scmp.eq.s32.totalorder %s14, 0
    %p89 = por %p87, %p88
    %p90 = scmp.ne.s32.totalorder %s78, %s79
    %p91 = scmp.eq.s32.totalorder %s15, 3
    %p92 = por %p90, %p91
    %p94 = scmp.ne.s32.totalorder %s79, %s93
    %p95 = scmp.eq.s32.totalorder %s15, 0
    %p96 = por %p94, %p95
    %s97 = ssub.s32 %s16, %s28
    %s98 = ssub.s32 %s17, %s24
    %s99 = sor.u32 %s97, %s98
    %p100 = scmp.eq.s32.totalorder %s99, 0
    %s102 = sadd.s32 %s101, 1
    %s103 = scalar_select %p100, %s101, %s102
    %p106 = pneg %p100
    %p107 = scmp.eq.s32.totalorder %s9, 3
    %p108 = por %p106, %p107
    %p109 = scmp.ne.s32.totalorder %s101, %s104
    %p110 = scmp.eq.s32.totalorder %s9, 0
    %p111 = por %p109, %p110
    %p112 = scmp.ne.s32.totalorder %s101, %s104
    %p113 = scmp.eq.s32.totalorder %s14, 3
    %p114 = por %p112, %p113
    %p115 = scmp.ne.s32.totalorder %s104, %s105
    %p116 = scmp.eq.s32.totalorder %s14, 0
    %p117 = por %p115, %p116
    %p118 = scmp.ne.s32.totalorder %s104, %s105
    %p119 = scmp.eq.s32.totalorder %s15, 3
    %p120 = por %p118, %p119
    %p122 = scmp.ne.s32.totalorder %s105, %s121
    %p123 = scmp.eq.s32.totalorder %s15, 0
    %p124 = por %p122, %p123
    %p125 = scmp.le.s32.totalorder 1, %s9
    %p126 = scmp.lt.s32.totalorder %s9, 5
    %p127 = pnand %p125, %p126
    %p128 = pneg %p127
    // Predicated region
    $region9: #{density_regressor_forward.3} parent=5 // pred_check
      _
    $region10: #{density_regressor_forward.3} parent=5 // pred_check_branch
      %130 = sbr.rel (%p127) target = $region12
    $region11: #{density_regressor_forward.3} parent=5 // pred_region
      %s131 = ssub.s32 %s9, 1
      // Predicated region
      $region13: #{density_regressor_forward.3} parent=11 // pred_check
        %p132 = pneg %p68
      $region14: #{density_regressor_forward.3} parent=11 // pred_check_branch
        %134 = sbr.rel (%p132) target = $region16
      $region15: #{density_regressor_forward.3} parent=11 // pred_region
        _
      $region16: #{density_regressor_forward.3} parent=11 // pred_fallthru
        _
      // Predicated region
      $region17: #{density_regressor_forward.3} parent=11 // pred_check
        %p135 = pneg %p89
      $region18: #{density_regressor_forward.3} parent=11 // pred_check_branch
        %137 = sbr.rel (%p135) target = $region20
      $region19: #{density_regressor_forward.3} parent=11 // pred_region
        _
      $region20: #{density_regressor_forward.3} parent=11 // pred_fallthru
        _
    $region12: #{density_regressor_forward.3} parent=5 // pred_fallthru
      _
    %p138 = scmp.lt.s32.totalorder %s9, 4
    // Predicated region
    $region21: #{density_regressor_forward.3} parent=5 // pred_check
      %p139 = pneg %p138
    $region22: #{density_regressor_forward.3} parent=5 // pred_check_branch
      %141 = sbr.rel (%p139) target = $region24
    $region23: #{density_regressor_forward.3} parent=5 // pred_region
      // Predicated region
      $region25: #{density_regressor_forward.3} parent=23 // pred_check
        %p142 = pneg %p41
      $region26: #{density_regressor_forward.3} parent=23 // pred_check_branch
        %144 = sbr.rel (%p142) target = $region28
      $region27: #{density_regressor_forward.3} parent=23 // pred_region
        %p145 = scmp.lt.s32.totalorder %s16, 1
        %s146 = scalar_select %p145, %s16, 1
        %s147 = smul.addr %s146, 54
        %s148 = smul.addr %s147, 4
        %s149 = scalar_lea.vmem %s0, %s148
      $region28: #{density_regressor_forward.3} parent=23 // pred_fallthru
        _
    $region24: #{density_regressor_forward.3} parent=5 // pred_fallthru
      _
    %p150 = scmp.le.s32.totalorder 1, %s9
    %p151 = scmp.lt.s32.totalorder %s9, 5
    %p152 = pnand %p150, %p151
    %p153 = pneg %p152
    // Predicated region
    $region29: #{density_regressor_forward.3} parent=5 // pred_check
      _
    $region30: #{density_regressor_forward.3} parent=5 // pred_check_branch
      %155 = sbr.rel (%p152) target = $region32
    $region31: #{density_regressor_forward.3} parent=5 // pred_region
      %s156 = ssub.s32 %s9, 1
      %p157 = scmp.lt.s32.totalorder %s18, 1
      %s158 = scalar_select %p157, %s18, 1
      %s159 = smul.addr %s158, 54
      %s160 = smul.addr %s159, 4
      %s161 = scalar_lea.vmem %s0, %s160
      %p162 = pneg %p47
      %p163 = pneg %p44
      %p164 = pneg %p68
      %p165 = pneg %p65
      %p166 = pneg %p89
      %p167 = pneg %p86
      %p168 = pneg %p117
      %p169 = pneg %p114
      %s170 = smul.u32 8, %s19
      %p171 = scmp.lt.s32.totalorder %s18, 1
      %s172 = scalar_select %p171, %s18, 1
      %p173 = scmp.lt.s32.totalorder %s170, 15
      %s174 = scalar_select %p173, %s170, 15
      %s175 = smul.addr %s174, 4
      %s176 = smul.addr %s172, 64
      %s177 = sadd.s32 %s175, %s176
      %s178 = smul.addr %s177, 4
      %s179 = scalar_lea.vmem %s3, %s178
      %p180 = scmp.lt.s32.totalorder %s18, 1
      %s181 = scalar_select %p180, %s18, 1
      %s182 = smul.addr %s181, 54
      %s183 = smul.addr %s182, 4
      %s184 = scalar_lea.vmem %s0, %s183
      %s185 = smul.u32 8, %s19
      %p186 = scmp.lt.s32.totalorder %s18, 1
      %s187 = scalar_select %p186, %s18, 1
      %p188 = scmp.lt.s32.totalorder %s185, 15
      %s189 = scalar_select %p188, %s185, 15
      %s190 = smul.addr %s189, 4
      %s191 = smul.addr %s187, 64
      %s192 = sadd.s32 %s190, %s191
      %s193 = smul.addr %s192, 4
      %s194 = scalar_lea.vmem %s3, %s193
      %s195 = smul.u32 8, %s19
      %s197 = smul.u32 %s19, 8
      %s198 = smul.u32 %s197, 3
      %s199 = smul.addr %s198, 4
      %s200 = scalar_lea.vmem %s184, %s199
      %v201 = vld [vmem:[%s200] sm:$0xf]
      %v202 = vld [vmem:[%s200 + $0x4] sm:$0xf]
      %v203 = vld [vmem:[%s200 + $0x8] sm:$0x1]
      %v204 = vld [vmem:[%s200 + $0xc] sm:$0xf]
      %v205 = vld [vmem:[%s200 + $0x10] sm:$0xf]
      %v206 = vld [vmem:[%s200 + $0x14] sm:$0x1]
      %v207 = vld [vmem:[%s200 + $0x18] sm:$0xf]
      %v208 = vld [vmem:[%s200 + $0x1c] sm:$0xf]
      %v209 = vld [vmem:[%s200 + $0x20] sm:$0x1]
      %v210 = vld [vmem:[%s200 + $0x24] sm:$0xf]
      %v211 = vld [vmem:[%s200 + $0x28] sm:$0xf]
      %v212 = vld [vmem:[%s200 + $0x2c] sm:$0x1]
      %v213 = vld [vmem:[%s200 + $0x30] sm:$0xf]
      %v214 = vld [vmem:[%s200 + $0x34] sm:$0xf]
      %v215 = vld [vmem:[%s200 + $0x38] sm:$0x1]
      %v216 = vld [vmem:[%s200 + $0x3c] sm:$0xf]
      %v217 = vld [vmem:[%s200 + $0x40] sm:$0xf]
      %v218 = vld [vmem:[%s200 + $0x44] sm:$0x1]
      %v219 = vld [vmem:[%s200 + $0x48] sm:$0xf]
      %v220 = vld [vmem:[%s200 + $0x4c] sm:$0xf]
      %v221 = vld [vmem:[%s200 + $0x50] sm:$0x1]
      %v222 = vld [vmem:[%s200 + $0x54] sm:$0xf]
      %v223 = vld [vmem:[%s200 + $0x58] sm:$0xf]
      %v224 = vld [vmem:[%s200 + $0x5c] sm:$0x1]
      %v225 = vld [vmem:[%s1] sm:$0xf]
      %vm226 = vsmask.f32 3328
      %vm227 = vsmask.f32 7440
      %vm228 = vmor %vm226, %vm227
      %v230 = vshrl.u32 %v201, 16
      %v232 = vrot.slane %v230, 4
      %v233 = vshll.u32 %v201, 16
      %v235 = vrot.slane %v233, 5
      %v236 = vor.u32 %v232, %v235
      %v237 = vrot.slane %v236, 4
      %v239 = vshll.u32 %v202, 16
      %v241 = vrot.slane %v239, 5
      %v242 = vsel %vm228, %v237, %v241
      %v243 = vshrl.u32 %v202, 16
      %v245 = vrot.slane %v243, 4
      %v246 = vor.u32 %v245, %v241
      %v247 = vrot.slane %v246, 4
      %v249 = vshll.u32 %v203, 16
      %v251 = vrot.slane %v249, 5
      %v252 = vsel %vm228, %v247, %v251
      %v254 = vshrl.u32 %v204, 16
      %v256 = vrot.slane %v254, 4
      %v257 = vshll.u32 %v204, 16
      %v259 = vrot.slane %v257, 5
      %v260 = vor.u32 %v256, %v259
      %v261 = vrot.slane %v260, 4
      %v263 = vshll.u32 %v205, 16
      %v265 = vrot.slane %v263, 5
      %v266 = vsel %vm228, %v261, %v265
      %v267 = vshrl.u32 %v205, 16
      %v269 = vrot.slane %v267, 4
      %v270 = vor.u32 %v269, %v265
      %v271 = vrot.slane %v270, 4
      %v273 = vshll.u32 %v206, 16
      %v275 = vrot.slane %v273, 5
      %v276 = vsel %vm228, %v271, %v275
      %v278 = vshrl.u32 %v207, 16
      %v280 = vrot.slane %v278, 4
      %v281 = vshll.u32 %v207, 16
      %v283 = vrot.slane %v281, 5
      %v284 = vor.u32 %v280, %v283
      %v285 = vrot.slane %v284, 4
      %v287 = vshll.u32 %v208, 16
      %v289 = vrot.slane %v287, 5
      %v290 = vsel %vm228, %v285, %v289
      %v291 = vshrl.u32 %v208, 16
      %v293 = vrot.slane %v291, 4
      %v294 = vor.u32 %v293, %v289
      %v295 = vrot.slane %v294, 4
      %v297 = vshll.u32 %v209, 16
      %v299 = vrot.slane %v297, 5
      %v300 = vsel %vm228, %v295, %v299
      %v302 = vshrl.u32 %v210, 16
      %v304 = vrot.slane %v302, 4
      %v305 = vshll.u32 %v210, 16
      %v307 = vrot.slane %v305, 5
      %v308 = vor.u32 %v304, %v307
      %v309 = vrot.slane %v308, 4
      %v311 = vshll.u32 %v211, 16
      %v313 = vrot.slane %v311, 5
      %v314 = vsel %vm228, %v309, %v313
      %v315 = vshrl.u32 %v211, 16
      %v317 = vrot.slane %v315, 4
      %v318 = vor.u32 %v317, %v313
      %v319 = vrot.slane %v318, 4
      %v321 = vshll.u32 %v212, 16
      %v323 = vrot.slane %v321, 5
      %v324 = vsel %vm228, %v319, %v323
      %v326 = vshrl.u32 %v213, 16
      %v328 = vrot.slane %v326, 4
      %v329 = vshll.u32 %v213, 16
      %v331 = vrot.slane %v329, 5
      %v332 = vor.u32 %v328, %v331
      %v333 = vrot.slane %v332, 4
      %v335 = vshll.u32 %v214, 16
      %v337 = vrot.slane %v335, 5
      %v338 = vsel %vm228, %v333, %v337
      %v339 = vshrl.u32 %v214, 16
      %v341 = vrot.slane %v339, 4
      %v342 = vor.u32 %v341, %v337
      %v343 = vrot.slane %v342, 4
      %v345 = vshll.u32 %v215, 16
      %v347 = vrot.slane %v345, 5
      %v348 = vsel %vm228, %v343, %v347
      %v350 = vshrl.u32 %v216, 16
      %v352 = vrot.slane %v350, 4
      %v353 = vshll.u32 %v216, 16
      %v355 = vrot.slane %v353, 5
      %v356 = vor.u32 %v352, %v355
      %v357 = vrot.slane %v356, 4
      %v359 = vshll.u32 %v217, 16
      %v361 = vrot.slane %v359, 5
      %v362 = vsel %vm228, %v357, %v361
      %v363 = vshrl.u32 %v217, 16
      %v365 = vrot.slane %v363, 4
      %v366 = vor.u32 %v365, %v361
      %v367 = vrot.slane %v366, 4
      %v369 = vshll.u32 %v218, 16
      %v371 = vrot.slane %v369, 5
      %v372 = vsel %vm228, %v367, %v371
      %v374 = vshrl.u32 %v219, 16
      %v376 = vrot.slane %v374, 4
      %v377 = vshll.u32 %v219, 16
      %v379 = vrot.slane %v377, 5
      %v380 = vor.u32 %v376, %v379
      %v381 = vrot.slane %v380, 4
      %v383 = vshll.u32 %v220, 16
      %v385 = vrot.slane %v383, 5
      %v386 = vsel %vm228, %v381, %v385
      %v387 = vshrl.u32 %v220, 16
      %v389 = vrot.slane %v387, 4
      %v390 = vor.u32 %v389, %v385
      %v391 = vrot.slane %v390, 4
      %v393 = vshll.u32 %v221, 16
      %v395 = vrot.slane %v393, 5
      %v396 = vsel %vm228, %v391, %v395
      %v398 = vshrl.u32 %v222, 16
      %v400 = vrot.slane %v398, 4
      %v401 = vshll.u32 %v222, 16
      %v403 = vrot.slane %v401, 5
      %v404 = vor.u32 %v400, %v403
      %v405 = vrot.slane %v404, 4
      %v407 = vshll.u32 %v223, 16
      %v409 = vrot.slane %v407, 5
      %v410 = vsel %vm228, %v405, %v409
      %v411 = vshrl.u32 %v223, 16
      %v413 = vrot.slane %v411, 4
      %v414 = vor.u32 %v413, %v409
      %v415 = vrot.slane %v414, 4
      %v417 = vshll.u32 %v224, 16
      %v419 = vrot.slane %v417, 5
      %v420 = vsel %vm228, %v415, %v419
      %s421 = scalar_lea.vmem %s1, 4
      %v422 = vld [vmem:[%s421] sm:$0xf]
      %v423 = vunpack.c.l.b16 %v242
      %v424 = vunpack.c.l.b16 %v252
      %v425 = vunpack.c.l.b16 %v266
      %v426 = vunpack.c.l.b16 %v276
      %v427 = vunpack.c.l.b16 %v290
      %v428 = vunpack.c.l.b16 %v300
      %v429 = vunpack.c.l.b16 %v314
      %v430 = vunpack.c.l.b16 %v324
      %v431 = vunpack.c.l.b16 %v338
      %v432 = vunpack.c.l.b16 %v348
      %v433 = vunpack.c.l.b16 %v362
      %v434 = vunpack.c.l.b16 %v372
      %v435 = vunpack.c.l.b16 %v386
      %v436 = vunpack.c.l.b16 %v396
      %v437 = vunpack.c.l.b16 %v410
      %v438 = vunpack.c.l.b16 %v420
      %v439 = vpack.c.b16 %v424, %v423
      %v440 = vpack.c.b16 %v426, %v425
      %v441 = vpack.c.b16 %v428, %v427
      %v442 = vpack.c.b16 %v430, %v429
      %v443 = vpack.c.b16 %v432, %v431
      %v444 = vpack.c.b16 %v434, %v433
      %v445 = vpack.c.b16 %v436, %v435
      %v446 = vpack.c.b16 %v438, %v437
      %v449 = vunpack.c.l.s4 1983009808
      %v450 = vunpack.c.0.s8 %v449
      %v451 = vlaneseq
      %v452 = vshrl.u32 %v451, 7
      %v453 = vsub.s32 %v450, %v452
      %v454 = vrot.slane %v422, %v453
      %v455 = vcombine.high %v454, %v454
      %vm456 = vcmask 31744
      %v458 = vsel %vm456, %v439, 0
      %v461 = vsel %vm456, %v440, 0
      %v464 = vsel %vm456, %v441, 0
      %v467 = vsel %vm456, %v442, 0
      %v470 = vsel %vm456, %v443, 0
      %v473 = vsel %vm456, %v444, 0
      %v476 = vsel %vm456, %v445, 0
      %v479 = vsel %vm456, %v446, 0
      %vm481 = vcmask 1041408
      %v483 = vsel %vm481, %v454, 0
      %v486 = vsel %vm481, %v455, 0
      %488 = vmatprep.subr.bf16.mxu0 %v486
      %489 = vmatpush1.bf16.msra.mxu0 %v483
      %490 = vmatprep.subr.bf16.mxu0 0
      %491 = vmatpush1.bf16.msra.mxu0 0
      %492 = vmatprep.subr.bf16.mxu0 0
      %493 = vmatpush1.bf16.msra.mxu0 0
      %494 = vmatprep.subr.bf16.mxu0 0
      %495 = vmatpush1.bf16.msra.mxu0 0
      %496 = vmatprep.subr.bf16.mxu0 0
      %497 = vmatpush1.bf16.msra.mxu0 0
      %498 = vmatprep.subr.bf16.mxu0 0
      %499 = vmatpush1.bf16.msra.mxu0 0
      %500 = vmatprep.subr.bf16.mxu0 0
      %501 = vmatpush1.bf16.msra.mxu0 0
      %502 = vmatprep.subr.bf16.mxu0 0
      %503 = vmatpush1.bf16.msra.mxu0 0
      %504 = vmatprep.subr.bf16.mxu0 0
      %505 = vmatpush1.bf16.msra.mxu0 0
      %506 = vmatprep.subr.bf16.mxu0 0
      %507 = vmatpush1.bf16.msra.mxu0 0
      %508 = vmatprep.subr.bf16.mxu0 0
      %509 = vmatpush1.bf16.msra.mxu0 0
      %510 = vmatprep.subr.bf16.mxu0 0
      %511 = vmatpush1.bf16.msra.mxu0 0
      %512 = vmatprep.subr.bf16.mxu0 0
      %513 = vmatpush1.bf16.msra.mxu0 0
      %514 = vmatprep.subr.bf16.mxu0 0
      %515 = vmatpush1.bf16.msra.mxu0 0
      %516 = vmatprep.subr.bf16.mxu0 0
      %517 = vmatpush1.bf16.msra.mxu0 0
      %518 = vmatprep.subr.bf16.mxu0 0
      %519 = vmatpush1.bf16.msra.mxu0 0
      %520 = vmatprep.mubr.bf16.mxu0 0
      %521 = vmatmul.mubr.bf16.gmra.mrb[0].mxu0 %v458
      %v522 = vpop.f32.mrb[0].mxu0
      %v523 = vadd.f32 0.0, %v522
      %v524 = vpop.f32.mrb[0].mxu0
      %v525 = vadd.f32 0.0, %v524
      %v526 = vpop.f32.mrb[0].mxu0
      %v527 = vadd.f32 0.0, %v526
      %v528 = vpop.f32.mrb[0].mxu0
      %v529 = vadd.f32 0.0, %v528
      %530 = vmatprep.mubr.bf16.mxu0 0
      %531 = vmatmul.mubr.bf16.gmra.mrb[0].mxu0 %v461
      %v532 = vpop.f32.mrb[0].mxu0
      %v533 = vadd.f32 0.0, %v532
      %v534 = vpop.f32.mrb[0].mxu0
      %v535 = vadd.f32 0.0, %v534
      %v536 = vpop.f32.mrb[0].mxu0
      %v537 = vadd.f32 0.0, %v536
      %v538 = vpop.f32.mrb[0].mxu0
      %v539 = vadd.f32 0.0, %v538
      %540 = vmatprep.mubr.bf16.mxu0 0
      %541 = vmatmul.mubr.bf16.gmra.mrb[0].mxu0 %v464
      %v542 = vpop.f32.mrb[0].mxu0
      %v543 = vadd.f32 0.0, %v542
      %v544 = vpop.f32.mrb[0].mxu0
      %v545 = vadd.f32 0.0, %v544
      %v546 = vpop.f32.mrb[0].mxu0
      %v547 = vadd.f32 0.0, %v546
      %v548 = vpop.f32.mrb[0].mxu0
      %v549 = vadd.f32 0.0, %v548
      %550 = vmatprep.mubr.bf16.mxu0 0
      %551 = vmatmul.mubr.bf16.gmra.mrb[0].mxu0 %v467
      %v552 = vpop.f32.mrb[0].mxu0
      %v553 = vadd.f32 0.0, %v552
      %v554 = vpop.f32.mrb[0].mxu0
      %v555 = vadd.f32 0.0, %v554
      %v556 = vpop.f32.mrb[0].mxu0
      %v557 = vadd.f32 0.0, %v556
      %v558 = vpop.f32.mrb[0].mxu0
      %v559 = vadd.f32 0.0, %v558
      %560 = vmatprep.mubr.bf16.mxu0 0
      %561 = vmatmul.mubr.bf16.gmra.mrb[0].mxu0 %v470
      %v562 = vpop.f32.mrb[0].mxu0
      %v563 = vadd.f32 0.0, %v562
      %v564 = vpop.f32.mrb[0].mxu0
      %v565 = vadd.f32 0.0, %v564
      %v566 = vpop.f32.mrb[0].mxu0
      %v567 = vadd.f32 0.0, %v566
      %v568 = vpop.f32.mrb[0].mxu0
      %v569 = vadd.f32 0.0, %v568
      %570 = vmatprep.mubr.bf16.mxu0 0
      %571 = vmatmul.mubr.bf16.gmra.mrb[0].mxu0 %v473
      %v572 = vpop.f32.mrb[0].mxu0
      %v573 = vadd.f32 0.0, %v572
      %v574 = vpop.f32.mrb[0].mxu0
      %v575 = vadd.f32 0.0, %v574
      %v576 = vpop.f32.mrb[0].mxu0
      %v577 = vadd.f32 0.0, %v576
      %v578 = vpop.f32.mrb[0].mxu0
      %v579 = vadd.f32 0.0, %v578
      %580 = vmatprep.mubr.bf16.mxu0 0
      %581 = vmatmul.mubr.bf16.gmra.mrb[0].mxu0 %v476
      %v582 = vpop.f32.mrb[0].mxu0
      %v583 = vadd.f32 0.0, %v582
      %v584 = vpop.f32.mrb[0].mxu0
      %v585 = vadd.f32 0.0, %v584
      %v586 = vpop.f32.mrb[0].mxu0
      %v587 = vadd.f32 0.0, %v586
      %v588 = vpop.f32.mrb[0].mxu0
      %v589 = vadd.f32 0.0, %v588
      %590 = vmatprep.mubr.bf16.mxu0 0
      %591 = vmatmul.mubr.bf16.gmra.mrb[0].mxu0 %v479
      %v592 = vpop.f32.mrb[0].mxu0
      %v593 = vadd.f32 0.0, %v592
      %v594 = vpop.f32.mrb[0].mxu0
      %v595 = vadd.f32 0.0, %v594
      %v596 = vpop.f32.mrb[0].mxu0
      %v597 = vadd.f32 0.0, %v596
      %v598 = vpop.f32.mrb[0].mxu0
      %v599 = vadd.f32 0.0, %v598
      %600 = vdwg.mxu0
      %v617 = vunpack.c.l.b16 %v201
      %v618 = vunpack.c.l.b16 %v202
      %v619 = vunpack.c.l.b16 %v204
      %v620 = vunpack.c.l.b16 %v205
      %v621 = vunpack.c.l.b16 %v207
      %v622 = vunpack.c.l.b16 %v208
      %v623 = vunpack.c.l.b16 %v210
      %v624 = vunpack.c.l.b16 %v211
      %v625 = vunpack.c.l.b16 %v213
      %v626 = vunpack.c.l.b16 %v214
      %v627 = vunpack.c.l.b16 %v216
      %v628 = vunpack.c.l.b16 %v217
      %v629 = vunpack.c.l.b16 %v219
      %v630 = vunpack.c.l.b16 %v220
      %v631 = vunpack.c.l.b16 %v222
      %v632 = vunpack.c.l.b16 %v223
      %v633 = vpack.c.b16 %v618, %v617
      %v634 = vpack.c.b16 %v620, %v619
      %v635 = vpack.c.b16 %v622, %v621
      %v636 = vpack.c.b16 %v624, %v623
      %v637 = vpack.c.b16 %v626, %v625
      %v638 = vpack.c.b16 %v628, %v627
      %v639 = vpack.c.b16 %v630, %v629
      %v640 = vpack.c.b16 %v632, %v631
      %v643 = vunpack.c.l.s4 1983009808
      %v644 = vunpack.c.0.s8 %v643
      %v645 = vlaneseq
      %v646 = vshrl.u32 %v645, 7
      %v647 = vsub.s32 %v644, %v646
      %v648 = vrot.slane %v225, %v647
      %v649 = vcombine.high %v648, %v648
      %v651 = vsel %vm456, %v633, 0
      %v654 = vsel %vm456, %v634, 0
      %v657 = vsel %vm456, %v635, 0
      %v660 = vsel %vm456, %v636, 0
      %v663 = vsel %vm456, %v637, 0
      %v666 = vsel %vm456, %v638, 0
      %v669 = vsel %vm456, %v639, 0
      %v672 = vsel %vm456, %v640, 0
      %v675 = vsel %vm481, %v648, 0
      %v678 = vsel %vm481, %v649, 0
      %680 = vmatprep.subr.bf16.mxu0 %v678
      %681 = vmatpush1.bf16.msra.mxu0 %v675
      %682 = vmatprep.subr.bf16.mxu0 0
      %683 = vmatpush1.bf16.msra.mxu0 0
      %684 = vmatprep.subr.bf16.mxu0 0
      %685 = vmatpush1.bf16.msra.mxu0 0
      %686 = vmatprep.subr.bf16.mxu0 0
      %687 = vmatpush1.bf16.msra.mxu0 0
      %688 = vmatprep.subr.bf16.mxu0 0
      %689 = vmatpush1.bf16.msra.mxu0 0
      %690 = vmatprep.subr.bf16.mxu0 0
      %691 = vmatpush1.bf16.msra.mxu0 0
      %692 = vmatprep.subr.bf16.mxu0 0
      %693 = vmatpush1.bf16.msra.mxu0 0
      %694 = vmatprep.subr.bf16.mxu0 0
      %695 = vmatpush1.bf16.msra.mxu0 0
      %696 = vmatprep.subr.bf16.mxu0 0
      %697 = vmatpush1.bf16.msra.mxu0 0
      %698 = vmatprep.subr.bf16.mxu0 0
      %699 = vmatpush1.bf16.msra.mxu0 0
      %700 = vmatprep.subr.bf16.mxu0 0
      %701 = vmatpush1.bf16.msra.mxu0 0
      %702 = vmatprep.subr.bf16.mxu0 0
      %703 = vmatpush1.bf16.msra.mxu0 0
      %704 = vmatprep.subr.bf16.mxu0 0
      %705 = vmatpush1.bf16.msra.mxu0 0
      %706 = vmatprep.subr.bf16.mxu0 0
      %707 = vmatpush1.bf16.msra.mxu0 0
      %708 = vmatprep.subr.bf16.mxu0 0
      %709 = vmatpush1.bf16.msra.mxu0 0
      %710 = vmatprep.subr.bf16.mxu0 0
      %711 = vmatpush1.bf16.msra.mxu0 0
      %712 = vmatprep.mubr.bf16.mxu0 0
      %713 = vmatmul.mubr.bf16.gmra.mrb[0].mxu0 %v651
      %v714 = vpop.f32.mrb[0].mxu0
      %v715 = vadd.f32 %v523, %v714
      %v716 = vpop.f32.mrb[0].mxu0
      %v717 = vadd.f32 %v525, %v716
      %v718 = vpop.f32.mrb[0].mxu0
      %v719 = vadd.f32 %v527, %v718
      %v720 = vpop.f32.mrb[0].mxu0
      %v721 = vadd.f32 %v529, %v720
      %722 = vmatprep.mubr.bf16.mxu0 0
      %723 = vmatmul.mubr.bf16.gmra.mrb[0].mxu0 %v654
      %v724 = vpop.f32.mrb[0].mxu0
      %v725 = vadd.f32 %v533, %v724
      %v726 = vpop.f32.mrb[0].mxu0
      %v727 = vadd.f32 %v535, %v726
      %v728 = vpop.f32.mrb[0].mxu0
      %v729 = vadd.f32 %v537, %v728
      %v730 = vpop.f32.mrb[0].mxu0
      %v731 = vadd.f32 %v539, %v730
      %732 = vmatprep.mubr.bf16.mxu0 0
      %733 = vmatmul.mubr.bf16.gmra.mrb[0].mxu0 %v657
      %v734 = vpop.f32.mrb[0].mxu0
      %v735 = vadd.f32 %v543, %v734
      %v736 = vpop.f32.mrb[0].mxu0
      %v737 = vadd.f32 %v545, %v736
      %v738 = vpop.f32.mrb[0].mxu0
      %v739 = vadd.f32 %v547, %v738
      %v740 = vpop.f32.mrb[0].mxu0
      %v741 = vadd.f32 %v549, %v740
      %742 = vmatprep.mubr.bf16.mxu0 0
      %743 = vmatmul.mubr.bf16.gmra.mrb[0].mxu0 %v660
      %v744 = vpop.f32.mrb[0].mxu0
      %v745 = vadd.f32 %v553, %v744
      %v746 = vpop.f32.mrb[0].mxu0
      %v747 = vadd.f32 %v555, %v746
      %v748 = vpop.f32.mrb[0].mxu0
      %v749 = vadd.f32 %v557, %v748
      %v750 = vpop.f32.mrb[0].mxu0
      %v751 = vadd.f32 %v559, %v750
      %752 = vmatprep.mubr.bf16.mxu0 0
      %753 = vmatmul.mubr.bf16.gmra.mrb[0].mxu0 %v663
      %v754 = vpop.f32.mrb[0].mxu0
      %v755 = vadd.f32 %v563, %v754
      %v756 = vpop.f32.mrb[0].mxu0
      %v757 = vadd.f32 %v565, %v756
      %v758 = vpop.f32.mrb[0].mxu0
      %v759 = vadd.f32 %v567, %v758
      %v760 = vpop.f32.mrb[0].mxu0
      %v761 = vadd.f32 %v569, %v760
      %762 = vmatprep.mubr.bf16.mxu0 0
      %763 = vmatmul.mubr.bf16.gmra.mrb[0].mxu0 %v666
      %v764 = vpop.f32.mrb[0].mxu0
      %v765 = vadd.f32 %v573, %v764
      %v766 = vpop.f32.mrb[0].mxu0
      %v767 = vadd.f32 %v575, %v766
      %v768 = vpop.f32.mrb[0].mxu0
      %v769 = vadd.f32 %v577, %v768
      %v770 = vpop.f32.mrb[0].mxu0
      %v771 = vadd.f32 %v579, %v770
      %772 = vmatprep.mubr.bf16.mxu0 0
      %773 = vmatmul.mubr.bf16.gmra.mrb[0].mxu0 %v669
      %v774 = vpop.f32.mrb[0].mxu0
      %v775 = vadd.f32 %v583, %v774
      %v776 = vpop.f32.mrb[0].mxu0
      %v777 = vadd.f32 %v585, %v776
      %v778 = vpop.f32.mrb[0].mxu0
      %v779 = vadd.f32 %v587, %v778
      %v780 = vpop.f32.mrb[0].mxu0
      %v781 = vadd.f32 %v589, %v780
      %782 = vmatprep.mubr.bf16.mxu0 0
      %783 = vmatmul.mubr.bf16.gmra.mrb[0].mxu0 %v672
      %v784 = vpop.f32.mrb[0].mxu0
      %v785 = vadd.f32 %v593, %v784
      %v786 = vpop.f32.mrb[0].mxu0
      %v787 = vadd.f32 %v595, %v786
      %v788 = vpop.f32.mrb[0].mxu0
      %v789 = vadd.f32 %v597, %v788
      %v790 = vpop.f32.mrb[0].mxu0
      %v791 = vadd.f32 %v599, %v790
      %792 = vdwg.mxu0
      %vm801 = vcmask 1042432
      %vm802 = vcmask 1046532
      %vm803 = vmor %vm801, %vm802
      %v804 = vrot.slane %v201, 5
      %v805 = vrot.slane %v804, 4
      %v806 = vrot.slane %v202, 5
      %v807 = vsel %vm803, %v805, %v806
      %v808 = vrot.slane %v806, 4
      %v809 = vrot.slane %v203, 5
      %v810 = vsel %vm803, %v808, %v809
      %v811 = vrot.slane %v204, 5
      %v812 = vrot.slane %v811, 4
      %v813 = vrot.slane %v205, 5
      %v814 = vsel %vm803, %v812, %v813
      %v815 = vrot.slane %v813, 4
      %v816 = vrot.slane %v206, 5
      %v817 = vsel %vm803, %v815, %v816
      %v818 = vrot.slane %v207, 5
      %v819 = vrot.slane %v818, 4
      %v820 = vrot.slane %v208, 5
      %v821 = vsel %vm803, %v819, %v820
      %v822 = vrot.slane %v820, 4
      %v823 = vrot.slane %v209, 5
      %v824 = vsel %vm803, %v822, %v823
      %v825 = vrot.slane %v210, 5
      %v826 = vrot.slane %v825, 4
      %v827 = vrot.slane %v211, 5
      %v828 = vsel %vm803, %v826, %v827
      %v829 = vrot.slane %v827, 4
      %v830 = vrot.slane %v212, 5
      %v831 = vsel %vm803, %v829, %v830
      %v832 = vrot.slane %v213, 5
      %v833 = vrot.slane %v832, 4
      %v834 = vrot.slane %v214, 5
      %v835 = vsel %vm803, %v833, %v834
      %v836 = vrot.slane %v834, 4
      %v837 = vrot.slane %v215, 5
      %v838 = vsel %vm803, %v836, %v837
      %v839 = vrot.slane %v216, 5
      %v840 = vrot.slane %v839, 4
      %v841 = vrot.slane %v217, 5
      %v842 = vsel %vm803, %v840, %v841
      %v843 = vrot.slane %v841, 4
      %v844 = vrot.slane %v218, 5
      %v845 = vsel %vm803, %v843, %v844
      %v846 = vrot.slane %v219, 5
      %v847 = vrot.slane %v846, 4
      %v848 = vrot.slane %v220, 5
      %v849 = vsel %vm803, %v847, %v848
      %v850 = vrot.slane %v848, 4
      %v851 = vrot.slane %v221, 5
      %v852 = vsel %vm803, %v850, %v851
      %v853 = vrot.slane %v222, 5
      %v854 = vrot.slane %v853, 4
      %v855 = vrot.slane %v223, 5
      %v856 = vsel %vm803, %v854, %v855
      %v857 = vrot.slane %v855, 4
      %v858 = vrot.slane %v224, 5
      %v859 = vsel %vm803, %v857, %v858
      %s860 = scalar_lea.vmem %s1, 8
      %v861 = vld [vmem:[%s860] sm:$0xf]
      %v862 = vunpack.c.l.b16 %v807
      %v863 = vunpack.c.l.b16 %v810
      %v864 = vunpack.c.l.b16 %v814
      %v865 = vunpack.c.l.b16 %v817
      %v866 = vunpack.c.l.b16 %v821
      %v867 = vunpack.c.l.b16 %v824
      %v868 = vunpack.c.l.b16 %v828
      %v869 = vunpack.c.l.b16 %v831
      %v870 = vunpack.c.l.b16 %v835
      %v871 = vunpack.c.l.b16 %v838
      %v872 = vunpack.c.l.b16 %v842
      %v873 = vunpack.c.l.b16 %v845
      %v874 = vunpack.c.l.b16 %v849
      %v875 = vunpack.c.l.b16 %v852
      %v876 = vunpack.c.l.b16 %v856
      %v877 = vunpack.c.l.b16 %v859
      %v878 = vpack.c.b16 %v863, %v862
      %v879 = vpack.c.b16 %v865, %v864
      %v880 = vpack.c.b16 %v867, %v866
      %v881 = vpack.c.b16 %v869, %v868
      %v882 = vpack.c.b16 %v871, %v870
      %v883 = vpack.c.b16 %v873, %v872
      %v884 = vpack.c.b16 %v875, %v874
      %v885 = vpack.c.b16 %v877, %v876
      %v888 = vunpack.c.l.s4 1983009808
      %v889 = vunpack.c.0.s8 %v888
      %v890 = vlaneseq
      %v891 = vshrl.u32 %v890, 7
      %v892 = vsub.s32 %v889, %v891
      %v893 = vrot.slane %v861, %v892
      %v894 = vcombine.high %v893, %v893
      %v896 = vsel %vm456, %v878, 0
      %v899 = vsel %vm456, %v879, 0
      %v902 = vsel %vm456, %v880, 0
      %v905 = vsel %vm456, %v881, 0
      %v908 = vsel %vm456, %v882, 0
      %v911 = vsel %vm456, %v883, 0
      %v914 = vsel %vm456, %v884, 0
      %v917 = vsel %vm456, %v885, 0
      %v920 = vsel %vm481, %v893, 0
      %v923 = vsel %vm481, %v894, 0
      %925 = vmatprep.subr.bf16.mxu0 %v923
      %926 = vmatpush1.bf16.msra.mxu0 %v920
      %927 = vmatprep.subr.bf16.mxu0 0
      %928 = vmatpush1.bf16.msra.mxu0 0
      %929 = vmatprep.subr.bf16.mxu0 0
      %930 = vmatpush1.bf16.msra.mxu0 0
      %931 = vmatprep.subr.bf16.mxu0 0
      %932 = vmatpush1.bf16.msra.mxu0 0
      %933 = vmatprep.subr.bf16.mxu0 0
      %934 = vmatpush1.bf16.msra.mxu0 0
      %935 = vmatprep.subr.bf16.mxu0 0
      %936 = vmatpush1.bf16.msra.mxu0 0
      %937 = vmatprep.subr.bf16.mxu0 0
      %938 = vmatpush1.bf16.msra.mxu0 0
      %939 = vmatprep.subr.bf16.mxu0 0
      %940 = vmatpush1.bf16.msra.mxu0 0
      %941 = vmatprep.subr.bf16.mxu0 0
      %942 = vmatpush1.bf16.msra.mxu0 0
      %943 = vmatprep.subr.bf16.mxu0 0
      %944 = vmatpush1.bf16.msra.mxu0 0
      %945 = vmatprep.subr.bf16.mxu0 0
      %946 = vmatpush1.bf16.msra.mxu0 0
      %947 = vmatprep.subr.bf16.mxu0 0
      %948 = vmatpush1.bf16.msra.mxu0 0
      %949 = vmatprep.subr.bf16.mxu0 0
      %950 = vmatpush1.bf16.msra.mxu0 0
      %951 = vmatprep.subr.bf16.mxu0 0
      %952 = vmatpush1.bf16.msra.mxu0 0
      %953 = vmatprep.subr.bf16.mxu0 0
      %954 = vmatpush1.bf16.msra.mxu0 0
      %955 = vmatprep.subr.bf16.mxu0 0
      %956 = vmatpush1.bf16.msra.mxu0 0
      %957 = vmatprep.mubr.bf16.mxu0 0
      %958 = vmatmul.mubr.bf16.gmra.mrb[0].mxu0 %v896
      %v959 = vpop.f32.mrb[0].mxu0
      %v960 = vadd.f32 0.0, %v959
      %v961 = vpop.f32.mrb[0].mxu0
      %v962 = vadd.f32 0.0, %v961
      %v963 = vpop.f32.mrb[0].mxu0
      %v964 = vadd.f32 0.0, %v963
      %v965 = vpop.f32.mrb[0].mxu0
      %v966 = vadd.f32 0.0, %v965
      %967 = vmatprep.mubr.bf16.mxu0 0
      %968 = vmatmul.mubr.bf16.gmra.mrb[0].mxu0 %v899
      %v969 = vpop.f32.mrb[0].mxu0
      %v970 = vadd.f32 0.0, %v969
      %v971 = vpop.f32.mrb[0].mxu0
      %v972 = vadd.f32 0.0, %v971
      %v973 = vpop.f32.mrb[0].mxu0
      %v974 = vadd.f32 0.0, %v973
      %v975 = vpop.f32.mrb[0].mxu0
      %v976 = vadd.f32 0.0, %v975
      %977 = vmatprep.mubr.bf16.mxu0 0
      %978 = vmatmul.mubr.bf16.gmra.mrb[0].mxu0 %v902
      %v979 = vpop.f32.mrb[0].mxu0
      %v980 = vadd.f32 0.0, %v979
      %v981 = vpop.f32.mrb[0].mxu0
      %v982 = vadd.f32 0.0, %v981
      %v983 = vpop.f32.mrb[0].mxu0
      %v984 = vadd.f32 0.0, %v983
      %v985 = vpop.f32.mrb[0].mxu0
      %v986 = vadd.f32 0.0, %v985
      %987 = vmatprep.mubr.bf16.mxu0 0
      %988 = vmatmul.mubr.bf16.gmra.mrb[0].mxu0 %v905
      %v989 = vpop.f32.mrb[0].mxu0
      %v990 = vadd.f32 0.0, %v989
      %v991 = vpop.f32.mrb[0].mxu0
      %v992 = vadd.f32 0.0, %v991
      %v993 = vpop.f32.mrb[0].mxu0
      %v994 = vadd.f32 0.0, %v993
      %v995 = vpop.f32.mrb[0].mxu0
      %v996 = vadd.f32 0.0, %v995
      %997 = vmatprep.mubr.bf16.mxu0 0
      %998 = vmatmul.mubr.bf16.gmra.mrb[0].mxu0 %v908
      %v999 = vpop.f32.mrb[0].mxu0
      %v1000 = vadd.f32 0.0, %v999
      %v1001 = vpop.f32.mrb[0].mxu0
      %v1002 = vadd.f32 0.0, %v1001
      %v1003 = vpop.f32.mrb[0].mxu0
      %v1004 = vadd.f32 0.0, %v1003
      %v1005 = vpop.f32.mrb[0].mxu0
      %v1006 = vadd.f32 0.0, %v1005
      %1007 = vmatprep.mubr.bf16.mxu0 0
      %1008 = vmatmul.mubr.bf16.gmra.mrb[0].mxu0 %v911
      %v1009 = vpop.f32.mrb[0].mxu0
      %v1010 = vadd.f32 0.0, %v1009
      %v1011 = vpop.f32.mrb[0].mxu0
      %v1012 = vadd.f32 0.0, %v1011
      %v1013 = vpop.f32.mrb[0].mxu0
      %v1014 = vadd.f32 0.0, %v1013
      %v1015 = vpop.f32.mrb[0].mxu0
      %v1016 = vadd.f32 0.0, %v1015
      %1017 = vmatprep.mubr.bf16.mxu0 0
      %1018 = vmatmul.mubr.bf16.gmra.mrb[0].mxu0 %v914
      %v1019 = vpop.f32.mrb[0].mxu0
      %v1020 = vadd.f32 0.0, %v1019
      %v1021 = vpop.f32.mrb[0].mxu0
      %v1022 = vadd.f32 0.0, %v1021
      %v1023 = vpop.f32.mrb[0].mxu0
      %v1024 = vadd.f32 0.0, %v1023
      %v1025 = vpop.f32.mrb[0].mxu0
      %v1026 = vadd.f32 0.0, %v1025
      %1027 = vmatprep.mubr.bf16.mxu0 0
      %1028 = vmatmul.mubr.bf16.gmra.mrb[0].mxu0 %v917
      %v1029 = vpop.f32.mrb[0].mxu0
      %v1030 = vadd.f32 0.0, %v1029
      %v1031 = vpop.f32.mrb[0].mxu0
      %v1032 = vadd.f32 0.0, %v1031
      %v1033 = vpop.f32.mrb[0].mxu0
      %v1034 = vadd.f32 0.0, %v1033
      %v1035 = vpop.f32.mrb[0].mxu0
      %v1036 = vadd.f32 0.0, %v1035
      %1037 = vdwg.mxu0
      %v1038 = vadd.f32 %v715, %v960
      %v1039 = vadd.f32 %v717, %v962
      %v1040 = vadd.f32 %v719, %v964
      %v1041 = vadd.f32 %v721, %v966
      %v1042 = vadd.f32 %v725, %v970
      %v1043 = vadd.f32 %v727, %v972
      %v1044 = vadd.f32 %v729, %v974
      %v1045 = vadd.f32 %v731, %v976
      %v1046 = vadd.f32 %v735, %v980
      %v1047 = vadd.f32 %v737, %v982
      %v1048 = vadd.f32 %v739, %v984
      %v1049 = vadd.f32 %v741, %v986
      %v1050 = vadd.f32 %v745, %v990
      %v1051 = vadd.f32 %v747, %v992
      %v1052 = vadd.f32 %v749, %v994
      %v1053 = vadd.f32 %v751, %v996
      %v1054 = vadd.f32 %v755, %v1000
      %v1055 = vadd.f32 %v757, %v1002
      %v1056 = vadd.f32 %v759, %v1004
      %v1057 = vadd.f32 %v761, %v1006
      %v1058 = vadd.f32 %v765, %v1010
      %v1059 = vadd.f32 %v767, %v1012
      %v1060 = vadd.f32 %v769, %v1014
      %v1061 = vadd.f32 %v771, %v1016
      %v1062 = vadd.f32 %v775, %v1020
      %v1063 = vadd.f32 %v777, %v1022
      %v1064 = vadd.f32 %v779, %v1024
      %v1065 = vadd.f32 %v781, %v1026
      %v1066 = vadd.f32 %v785, %v1030
      %v1067 = vadd.f32 %v787, %v1032
      %v1068 = vadd.f32 %v789, %v1034
      %v1069 = vadd.f32 %v791, %v1036
      %s1070 = sadd.s32 %s197, 1
      %s1071 = smul.u32 %s1070, 3
      %s1072 = smul.addr %s1071, 4
      %s1073 = scalar_lea.vmem %s184, %s1072
      %v1074 = vld [vmem:[%s1073] sm:$0xf]
      %v1075 = vld [vmem:[%s1073 + $0x4] sm:$0xf]
      %v1076 = vld [vmem:[%s1073 + $0x8] sm:$0x1]
      %v1077 = vld [vmem:[%s1073 + $0xc] sm:$0xf]
      %v1078 = vld [vmem:[%s1073 + $0x10] sm:$0xf]
      %v1079 = vld [vmem:[%s1073 + $0x14] sm:$0x1]
      %v1080 = vld [vmem:[%s1073 + $0x18] sm:$0xf]
      %v1081 = vld [vmem:[%s1073 + $0x1c] sm:$0xf]
      %v1082 = vld [vmem:[%s1073 + $0x20] sm:$0x1]
      %v1083 = vld [vmem:[%s1073 + $0x24] sm:$0xf]
      %v1084 = vld [vmem:[%s1073 + $0x28] sm:$0xf]
      %v1085 = vld [vmem:[%s1073 + $0x2c] sm:$0x1]
      %v1086 = vld [vmem:[%s1073 + $0x30] sm:$0xf]
      %v1087 = vld [vmem:[%s1073 + $0x34] sm:$0xf]
      %v1088 = vld [vmem:[%s1073 + $0x38] sm:$0x1]
      %v1089 = vld [vmem:[%s1073 + $0x3c] sm:$0xf]
      %v1090 = vld [vmem:[%s1073 + $0x40] sm:$0xf]
      %v1091 = vld [vmem:[%s1073 + $0x44] sm:$0x1]
      %v1092 = vld [vmem:[%s1073 + $0x48] sm:$0xf]
      %v1093 = vld [vmem:[%s1073 + $0x4c] sm:$0xf]
      %v1094 = vld [vmem:[%s1073 + $0x50] sm:$0x1]
      %v1095 = vld [vmem:[%s1073 + $0x54] sm:$0xf]
      %v1096 = vld [vmem:[%s1073 + $0x58] sm:$0xf]
      %v1097 = vld [vmem:[%s1073 + $0x5c] sm:$0x1]
      %s1098 = scalar_lea.vmem %s1, 12
      %v1099 = vld [vmem:[%s1098] sm:$0xf]
      %v1116 = vunpack.c.l.b16 %v1074
      %v1117 = vunpack.c.l.b16 %v1075
      %v1118 = vunpack.c.l.b16 %v1077
      %v1119 = vunpack.c.l.b16 %v1078
      %v1120 = vunpack.c.l.b16 %v1080
      %v1121 = vunpack.c.l.b16 %v1081
      %v1122 = vunpack.c.l.b16 %v1083
      %v1123 = vunpack.c.l.b16 %v1084
      %v1124 = vunpack.c.l.b16 %v1086
      %v1125 = vunpack.c.l.b16 %v1087
      %v1126 = vunpack.c.l.b16 %v1089
      %v1127 = vunpack.c.l.b16 %v1090
      %v1128 = vunpack.c.l.b16 %v1092
      %v1129 = vunpack.c.l.b16 %v1093
      %v1130 = vunpack.c.l.b16 %v1095
      %v1131 = vunpack.c.l.b16 %v1096
      %v1132 = vpack.c.b16 %v1117, %v1116
      %v1133 = vpack.c.b16 %v1119, %v1118
      %v1134 = vpack.c.b16 %v1121, %v1120
      %v1135 = vpack.c.b16 %v1123, %v1122
      %v1136 = vpack.c.b16 %v1125, %v1124
      %v1137 = vpack.c.b16 %v1127, %v1126
      %v1138 = vpack.c.b16 %v1129, %v1128
      %v1139 = vpack.c.b16 %v1131, %v1130
      %v1142 = vunpack.c.l.s4 1983009808
      %v1143 = vunpack.c.0.s8 %v1142
      %v1144 = vlaneseq
      %v1145 = vshrl.u32 %v1144, 7
      %v1146 = vsub.s32 %v1143, %v1145
      %v1147 = vrot.slane %v1099, %v1146
      %v1148 = vcombine.high %v1147, %v1147
      %v1150 = vsel %vm456, %v1132, 0
      %v1153 = vsel %vm456, %v1133, 0
      %v1156 = vsel %vm456, %v1134, 0
      %v1159 = vsel %vm456, %v1135, 0
      %v1162 = vsel %vm456, %v1136, 0
      %v1165 = vsel %vm456, %v1137, 0
      %v1168 = vsel %vm456, %v1138, 0
      %v1171 = vsel %vm456, %v1139, 0
      %v1174 = vsel %vm481, %v1147, 0
      %v1177 = vsel %vm481, %v1148, 0
      %1179 = vmatprep.subr.bf16.mxu0 %v1177
      %1180 = vmatpush1.bf16.msra.mxu0 %v1174
      %1181 = vmatprep.subr.bf16.mxu0 0
      %1182 = vmatpush1.bf16.msra.mxu0 0
      %1183 = vmatprep.subr.bf16.mxu0 0
      %1184 = vmatpush1.bf16.msra.mxu0 0
      %1185 = vmatprep.subr.bf16.mxu0 0
      %1186 = vmatpush1.bf16.msra.mxu0 0
      %1187 = vmatprep.subr.bf16.mxu0 0
      %1188 = vmatpush1.bf16.msra.mxu0 0
      %1189 = vmatprep.subr.bf16.mxu0 0
      %1190 = vmatpush1.bf16.msra.mxu0 0
      %1191 = vmatprep.subr.bf16.mxu0 0
      %1192 = vmatpush1.bf16.msra.mxu0 0
      %1193 = vmatprep.subr.bf16.mxu0 0
      %1194 = vmatpush1.bf16.msra.mxu0 0
      %1195 = vmatprep.subr.bf16.mxu0 0
      %1196 = vmatpush1.bf16.msra.mxu0 0
      %1197 = vmatprep.subr.bf16.mxu0 0
      %1198 = vmatpush1.bf16.msra.mxu0 0
      %1199 = vmatprep.subr.bf16.mxu0 0
      %1200 = vmatpush1.bf16.msra.mxu0 0
      %1201 = vmatprep.subr.bf16.mxu0 0
      %1202 = vmatpush1.bf16.msra.mxu0 0
      %1203 = vmatprep.subr.bf16.mxu0 0
      %1204 = vmatpush1.bf16.msra.mxu0 0
      %1205 = vmatprep.subr.bf16.mxu0 0
      %1206 = vmatpush1.bf16.msra.mxu0 0
      %1207 = vmatprep.subr.bf16.mxu0 0
      %1208 = vmatpush1.bf16.msra.mxu0 0
      %1209 = vmatprep.subr.bf16.mxu0 0
      %1210 = vmatpush1.bf16.msra.mxu0 0
      %1211 = vmatprep.mubr.bf16.mxu0 0
      %1212 = vmatmul.mubr.bf16.gmra.mrb[0].mxu0 %v1150
      %v1213 = vpop.f32.mrb[0].mxu0
      %v1214 = vadd.f32 0.0, %v1213
      %v1215 = vpop.f32.mrb[0].mxu0
      %v1216 = vadd.f32 0.0, %v1215
      %v1217 = vpop.f32.mrb[0].mxu0
      %v1218 = vadd.f32 0.0, %v1217
      %v1219 = vpop.f32.mrb[0].mxu0
      %v1220 = vadd.f32 0.0, %v1219
      %1221 = vmatprep.mubr.bf16.mxu0 0
      %1222 = vmatmul.mubr.bf16.gmra.mrb[0].mxu0 %v1153
      %v1223 = vpop.f32.mrb[0].mxu0
      %v1224 = vadd.f32 0.0, %v1223
      %v1225 = vpop.f32.mrb[0].mxu0
      %v1226 = vadd.f32 0.0, %v1225
      %v1227 = vpop.f32.mrb[0].mxu0
      %v1228 = vadd.f32 0.0, %v1227
      %v1229 = vpop.f32.mrb[0].mxu0
      %v1230 = vadd.f32 0.0, %v1229
      %1231 = vmatprep.mubr.bf16.mxu0 0
      %1232 = vmatmul.mubr.bf16.gmra.mrb[0].mxu0 %v1156
      %v1233 = vpop.f32.mrb[0].mxu0
      %v1234 = vadd.f32 0.0, %v1233
      %v1235 = vpop.f32.mrb[0].mxu0
      %v1236 = vadd.f32 0.0, %v1235
      %v1237 = vpop.f32.mrb[0].mxu0
      %v1238 = vadd.f32 0.0, %v1237
      %v1239 = vpop.f32.mrb[0].mxu0
      %v1240 = vadd.f32 0.0, %v1239
      %1241 = vmatprep.mubr.bf16.mxu0 0
      %1242 = vmatmul.mubr.bf16.gmra.mrb[0].mxu0 %v1159
      %v1243 = vpop.f32.mrb[0].mxu0
      %v1244 = vadd.f32 0.0, %v1243
      %v1245 = vpop.f32.mrb[0].mxu0
      %v1246 = vadd.f32 0.0, %v1245
      %v1247 = vpop.f32.mrb[0].mxu0
      %v1248 = vadd.f32 0.0, %v1247
      %v1249 = vpop.f32.mrb[0].mxu0
      %v1250 = vadd.f32 0.0, %v1249
      %1251 = vmatprep.mubr.bf16.mxu0 0
      %1252 = vmatmul.mubr.bf16.gmra.mrb[0].mxu0 %v1162
      %v1253 = vpop.f32.mrb[0].mxu0
      %v1254 = vadd.f32 0.0, %v1253
      %v1255 = vpop.f32.mrb[0].mxu0
      %v1256 = vadd.f32 0.0, %v1255
      %v1257 = vpop.f32.mrb[0].mxu0
      %v1258 = vadd.f32 0.0, %v1257
      %v1259 = vpop.f32.mrb[0].mxu0
      %v1260 = vadd.f32 0.0, %v1259
      %1261 = vmatprep.mubr.bf16.mxu0 0
      %1262 = vmatmul.mubr.bf16.gmra.mrb[0].mxu0 %v1165
      %v1263 = vpop.f32.mrb[0].mxu0
      %v1264 = vadd.f32 0.0, %v1263
      %v1265 = vpop.f32.mrb[0].mxu0
      %v1266 = vadd.f32 0.0, %v1265
      %v1267 = vpop.f32.mrb[0].mxu0
      %v1268 = vadd.f32 0.0, %v1267
      %v1269 = vpop.f32.mrb[0].mxu0
      %v1270 = vadd.f32 0.0, %v1269
      %1271 = vmatprep.mubr.bf16.mxu0 0
      %1272 = vmatmul.mubr.bf16.gmra.mrb[0].mxu0 %v1168
      %v1273 = vpop.f32.mrb[0].mxu0
      %v1274 = vadd.f32 0.0, %v1273
      %v1275 = vpop.f32.mrb[0].mxu0
      %v1276 = vadd.f32 0.0, %v1275
      %v1277 = vpop.f32.mrb[0].mxu0
      %v1278 = vadd.f32 0.0, %v1277
      %v1279 = vpop.f32.mrb[0].mxu0
      %v1280 = vadd.f32 0.0, %v1279
      %1281 = vmatprep.mubr.bf16.mxu0 0
      %1282 = vmatmul.mubr.bf16.gmra.mrb[0].mxu0 %v1171
      %v1283 = vpop.f32.mrb[0].mxu0
      %v1284 = vadd.f32 0.0, %v1283
      %v1285 = vpop.f32.mrb[0].mxu0
      %v1286 = vadd.f32 0.0, %v1285
      %v1287 = vpop.f32.mrb[0].mxu0
      %v1288 = vadd.f32 0.0, %v1287
      %v1289 = vpop.f32.mrb[0].mxu0
      %v1290 = vadd.f32 0.0, %v1289
      %1291 = vdwg.mxu0
      %v1292 = vadd.f32 %v1038, %v1214
      %v1293 = vadd.f32 %v1039, %v1216
      %v1294 = vadd.f32 %v1040, %v1218
      %v1295 = vadd.f32 %v1041, %v1220
      %v1296 = vadd.f32 %v1042, %v1224
      %v1297 = vadd.f32 %v1043, %v1226
      %v1298 = vadd.f32 %v1044, %v1228
      %v1299 = vadd.f32 %v1045, %v1230
      %v1300 = vadd.f32 %v1046, %v1234
      %v1301 = vadd.f32 %v1047, %v1236
      %v1302 = vadd.f32 %v1048, %v1238
      %v1303 = vadd.f32 %v1049, %v1240
      %v1304 = vadd.f32 %v1050, %v1244
      %v1305 = vadd.f32 %v1051, %v1246
      %v1306 = vadd.f32 %v1052, %v1248
      %v1307 = vadd.f32 %v1053, %v1250
      %v1308 = vadd.f32 %v1054, %v1254
      %v1309 = vadd.f32 %v1055, %v1256
      %v1310 = vadd.f32 %v1056, %v1258
      %v1311 = vadd.f32 %v1057, %v1260
      %v1312 = vadd.f32 %v1058, %v1264
      %v1313 = vadd.f32 %v1059, %v1266
      %v1314 = vadd.f32 %v1060, %v1268
      %v1315 = vadd.f32 %v1061, %v1270
      %v1316 = vadd.f32 %v1062, %v1274
      %v1317 = vadd.f32 %v1063, %v1276
      %v1318 = vadd.f32 %v1064, %v1278
      %v1319 = vadd.f32 %v1065, %v1280
      %v1320 = vadd.f32 %v1066, %v1284
      %v1321 = vadd.f32 %v1067, %v1286
      %v1322 = vadd.f32 %v1068, %v1288
      %v1323 = vadd.f32 %v1069, %v1290
      %v1325 = vshrl.u32 %v1074, 16
      %v1327 = vrot.slane %v1325, 4
      %v1328 = vshll.u32 %v1074, 16
      %v1330 = vrot.slane %v1328, 5
      %v1331 = vor.u32 %v1327, %v1330
      %v1332 = vrot.slane %v1331, 4
      %v1334 = vshll.u32 %v1075, 16
      %v1336 = vrot.slane %v1334, 5
      %v1337 = vsel %vm228, %v1332, %v1336
      %v1338 = vshrl.u32 %v1075, 16
      %v1340 = vrot.slane %v1338, 4
      %v1341 = vor.u32 %v1340, %v1336
      %v1342 = vrot.slane %v1341, 4
      %v1344 = vshll.u32 %v1076, 16
      %v1346 = vrot.slane %v1344, 5
      %v1347 = vsel %vm228, %v1342, %v1346
      %v1349 = vshrl.u32 %v1077, 16
      %v1351 = vrot.slane %v1349, 4
      %v1352 = vshll.u32 %v1077, 16
      %v1354 = vrot.slane %v1352, 5
      %v1355 = vor.u32 %v1351, %v1354
      %v1356 = vrot.slane %v1355, 4
      %v1358 = vshll.u32 %v1078, 16
      %v1360 = vrot.slane %v1358, 5
      %v1361 = vsel %vm228, %v1356, %v1360
      %v1362 = vshrl.u32 %v1078, 16
      %v1364 = vrot.slane %v1362, 4
      %v1365 = vor.u32 %v1364, %v1360
      %v1366 = vrot.slane %v1365, 4
      %v1368 = vshll.u32 %v1079, 16
      %v1370 = vrot.slane %v1368, 5
      %v1371 = vsel %vm228, %v1366, %v1370
      %v1373 = vshrl.u32 %v1080, 16
      %v1375 = vrot.slane %v1373, 4
      %v1376 = vshll.u32 %v1080, 16
      %v1378 = vrot.slane %v1376, 5
      %v1379 = vor.u32 %v1375, %v1378
      %v1380 = vrot.slane %v1379, 4
      %v1382 = vshll.u32 %v1081, 16
      %v1384 = vrot.slane %v1382, 5
      %v1385 = vsel %vm228, %v1380, %v1384
      %v1386 = vshrl.u32 %v1081, 16
      %v1388 = vrot.slane %v1386, 4
      %v1389 = vor.u32 %v1388, %v1384
      %v1390 = vrot.slane %v1389, 4
      %v1392 = vshll.u32 %v1082, 16
      %v1394 = vrot.slane %v1392, 5
      %v1395 = vsel %vm228, %v1390, %v1394
      %v1397 = vshrl.u32 %v1083, 16
      %v1399 = vrot.slane %v1397, 4
      %v1400 = vshll.u32 %v1083, 16
      %v1402 = vrot.slane %v1400, 5
      %v1403 = vor.u32 %v1399, %v1402
      %v1404 = vrot.slane %v1403, 4
      %v1406 = vshll.u32 %v1084, 16
      %v1408 = vrot.slane %v1406, 5
      %v1409 = vsel %vm228, %v1404, %v1408
      %v1410 = vshrl.u32 %v1084, 16
      %v1412 = vrot.slane %v1410, 4
      %v1413 = vor.u32 %v1412, %v1408
      %v1414 = vrot.slane %v1413, 4
      %v1416 = vshll.u32 %v1085, 16
      %v1418 = vrot.slane %v1416, 5
      %v1419 = vsel %vm228, %v1414, %v1418
      %v1421 = vshrl.u32 %v1086, 16
      %v1423 = vrot.slane %v1421, 4
      %v1424 = vshll.u32 %v1086, 16
      %v1426 = vrot.slane %v1424, 5
      %v1427 = vor.u32 %v1423, %v1426
      %v1428 = vrot.slane %v1427, 4
      %v1430 = vshll.u32 %v1087, 16
      %v1432 = vrot.slane %v1430, 5
      %v1433 = vsel %vm228, %v1428, %v1432
      %v1434 = vshrl.u32 %v1087, 16
      %v1436 = vrot.slane %v1434, 4
      %v1437 = vor.u32 %v1436, %v1432
      %v1438 = vrot.slane %v1437, 4
      %v1440 = vshll.u32 %v1088, 16
      %v1442 = vrot.slane %v1440, 5
      %v1443 = vsel %vm228, %v1438, %v1442
      %v1445 = vshrl.u32 %v1089, 16
      %v1447 = vrot.slane %v1445, 4
      %v1448 = vshll.u32 %v1089, 16
      %v1450 = vrot.slane %v1448, 5
      %v1451 = vor.u32 %v1447, %v1450
      %v1452 = vrot.slane %v1451, 4
      %v1454 = vshll.u32 %v1090, 16
      %v1456 = vrot.slane %v1454, 5
      %v1457 = vsel %vm228, %v1452, %v1456
      %v1458 = vshrl.u32 %v1090, 16
      %v1460 = vrot.slane %v1458, 4
      %v1461 = vor.u32 %v1460, %v1456
      %v1462 = vrot.slane %v1461, 4
      %v1464 = vshll.u32 %v1091, 16
      %v1466 = vrot.slane %v1464, 5
      %v1467 = vsel %vm228, %v1462, %v1466
      %v1469 = vshrl.u32 %v1092, 16
      %v1471 = vrot.slane %v1469, 4
      %v1472 = vshll.u32 %v1092, 16
      %v1474 = vrot.slane %v1472, 5
      %v1475 = vor.u32 %v1471, %v1474
      %v1476 = vrot.slane %v1475, 4
      %v1478 = vshll.u32 %v1093, 16
      %v1480 = vrot.slane %v1478, 5
      %v1481 = vsel %vm228, %v1476, %v1480
      %v1482 = vshrl.u32 %v1093, 16
      %v1484 = vrot.slane %v1482, 4
      %v1485 = vor.u32 %v1484, %v1480
      %v1486 = vrot.slane %v1485, 4
      %v1488 = vshll.u32 %v1094, 16
      %v1490 = vrot.slane %v1488, 5
      %v1491 = vsel %vm228, %v1486, %v1490
      %v1493 = vshrl.u32 %v1095, 16
      %v1495 = vrot.slane %v1493, 4
      %v1496 = vshll.u32 %v1095, 16
      %v1498 = vrot.slane %v1496, 5
      %v1499 = vor.u32 %v1495, %v1498
      %v1500 = vrot.slane %v1499, 4
      %v1502 = vshll.u32 %v1096, 16
      %v1504 = vrot.slane %v1502, 5
      %v1505 = vsel %vm228, %v1500, %v1504
      %v1506 = vshrl.u32 %v1096, 16
      %v1508 = vrot.slane %v1506, 4
      %v1509 = vor.u32 %v1508, %v1504
      %v1510 = vrot.slane %v1509, 4
      %v1512 = vshll.u32 %v1097, 16
      %v1514 = vrot.slane %v1512, 5
      %v1515 = vsel %vm228, %v1510, %v1514
      %s1516 = scalar_lea.vmem %s1, 16
      %v1517 = vld [vmem:[%s1516] sm:$0xf]
      %v1518 = vunpack.c.l.b16 %v1337
      %v1519 = vunpack.c.l.b16 %v1347
      %v1520 = vunpack.c.l.b16 %v1361
      %v1521 = vunpack.c.l.b16 %v1371
      %v1522 = vunpack.c.l.b16 %v1385
      %v1523 = vunpack.c.l.b16 %v1395
      %v1524 = vunpack.c.l.b16 %v1409
      %v1525 = vunpack.c.l.b16 %v1419
      %v1526 = vunpack.c.l.b16 %v1433
      %v1527 = vunpack.c.l.b16 %v1443
      %v1528 = vunpack.c.l.b16 %v1457
      %v1529 = vunpack.c.l.b16 %v1467
      %v1530 = vunpack.c.l.b16 %v1481
      %v1531 = vunpack.c.l.b16 %v1491
      %v1532 = vunpack.c.l.b16 %v1505
      %v1533 = vunpack.c.l.b16 %v1515
      %v1534 = vpack.c.b16 %v1519, %v1518
      %v1535 = vpack.c.b16 %v1521, %v1520
      %v1536 = vpack.c.b16 %v1523, %v1522
      %v1537 = vpack.c.b16 %v1525, %v1524
      %v1538 = vpack.c.b16 %v1527, %v1526
      %v1539 = vpack.c.b16 %v1529, %v1528
      %v1540 = vpack.c.b16 %v1531, %v1530
      %v1541 = vpack.c.b16 %v1533, %v1532
      %v1544 = vunpack.c.l.s4 1983009808
      %v1545 = vunpack.c.0.s8 %v1544
      %v1546 = vlaneseq
      %v1547 = vshrl.u32 %v1546, 7
      %v1548 = vsub.s32 %v1545, %v1547
      %v1549 = vrot.slane %v1517, %v1548
      %v1550 = vcombine.high %v1549, %v1549
      %v1552 = vsel %vm456, %v1534, 0
      %v1555 = vsel %vm456, %v1535, 0
      %v1558 = vsel %vm456, %v1536, 0
      %v1561 = vsel %vm456, %v1537, 0
      %v1564 = vsel %vm456, %v1538, 0
      %v1567 = vsel %vm456, %v1539, 0
      %v1570 = vsel %vm456, %v1540, 0
      %v1573 = vsel %vm456, %v1541, 0
      %v1576 = vsel %vm481, %v1549, 0
      %v1579 = vsel %vm481, %v1550, 0
      %1581 = vmatprep.subr.bf16.mxu0 %v1579
      %1582 = vmatpush1.bf16.msra.mxu0 %v1576
      %1583 = vmatprep.subr.bf16.mxu0 0
      %1584 = vmatpush1.bf16.msra.mxu0 0
      %1585 = vmatprep.subr.bf16.mxu0 0
      %1586 = vmatpush1.bf16.msra.mxu0 0
      %1587 = vmatprep.subr.bf16.mxu0 0
      %1588 = vmatpush1.bf16.msra.mxu0 0
      %1589 = vmatprep.subr.bf16.mxu0 0
      %1590 = vmatpush1.bf16.msra.mxu0 0
      %1591 = vmatprep.subr.bf16.mxu0 0
      %1592 = vmatpush1.bf16.msra.mxu0 0
      %1593 = vmatprep.subr.bf16.mxu0 0
      %1594 = vmatpush1.bf16.msra.mxu0 0
      %1595 = vmatprep.subr.bf16.mxu0 0
      %1596 = vmatpush1.bf16.msra.mxu0 0
      %1597 = vmatprep.subr.bf16.mxu0 0
      %1598 = vmatpush1.bf16.msra.mxu0 0
      %1599 = vmatprep.subr.bf16.mxu0 0
      %1600 = vmatpush1.bf16.msra.mxu0 0
      %1601 = vmatprep.subr.bf16.mxu0 0
      %1602 = vmatpush1.bf16.msra.mxu0 0
      %1603 = vmatprep.subr.bf16.mxu0 0
      %1604 = vmatpush1.bf16.msra.mxu0 0
      %1605 = vmatprep.subr.bf16.mxu0 0
      %1606 = vmatpush1.bf16.msra.mxu0 0
      %1607 = vmatprep.subr.bf16.mxu0 0
      %1608 = vmatpush1.bf16.msra.mxu0 0
      %1609 = vmatprep.subr.bf16.mxu0 0
      %1610 = vmatpush1.bf16.msra.mxu0 0
      %1611 = vmatprep.subr.bf16.mxu0 0
      %1612 = vmatpush1.bf16.msra.mxu0 0
      %1613 = vmatprep.mubr.bf16.mxu0 0
      %1614 = vmatmul.mubr.bf16.gmra.mrb[0].mxu0 %v1552
      %v1615 = vpop.f32.mrb[0].mxu0
      %v1616 = vadd.f32 0.0, %v1615
      %v1617 = vpop.f32.mrb[0].mxu0
      %v1618 = vadd.f32 0.0, %v1617
      %v1619 = vpop.f32.mrb[0].mxu0
      %v1620 = vadd.f32 0.0, %v1619
      %v1621 = vpop.f32.mrb[0].mxu0
      %v1622 = vadd.f32 0.0, %v1621
      %1623 = vmatprep.mubr.bf16.mxu0 0
      %1624 = vmatmul.mubr.bf16.gmra.mrb[0].mxu0 %v1555
      %v1625 = vpop.f32.mrb[0].mxu0
      %v1626 = vadd.f32 0.0, %v1625
      %v1627 = vpop.f32.mrb[0].mxu0
      %v1628 = vadd.f32 0.0, %v1627
      %v1629 = vpop.f32.mrb[0].mxu0
      %v1630 = vadd.f32 0.0, %v1629
      %v1631 = vpop.f32.mrb[0].mxu0
      %v1632 = vadd.f32 0.0, %v1631
      %1633 = vmatprep.mubr.bf16.mxu0 0
      %1634 = vmatmul.mubr.bf16.gmra.mrb[0].mxu0 %v1558
      %v1635 = vpop.f32.mrb[0].mxu0
      %v1636 = vadd.f32 0.0, %v1635
      %v1637 = vpop.f32.mrb[0].mxu0
      %v1638 = vadd.f32 0.0, %v1637
      %v1639 = vpop.f32.mrb[0].mxu0
      %v1640 = vadd.f32 0.0, %v1639
      %v1641 = vpop.f32.mrb[0].mxu0
      %v1642 = vadd.f32 0.0, %v1641
      %1643 = vmatprep.mubr.bf16.mxu0 0
      %1644 = vmatmul.mubr.bf16.gmra.mrb[0].mxu0 %v1561
      %v1645 = vpop.f32.mrb[0].mxu0
      %v1646 = vadd.f32 0.0, %v1645
      %v1647 = vpop.f32.mrb[0].mxu0
      %v1648 = vadd.f32 0.0, %v1647
      %v1649 = vpop.f32.mrb[0].mxu0
      %v1650 = vadd.f32 0.0, %v1649
      %v1651 = vpop.f32.mrb[0].mxu0
      %v1652 = vadd.f32 0.0, %v1651
      %1653 = vmatprep.mubr.bf16.mxu0 0
      %1654 = vmatmul.mubr.bf16.gmra.mrb[0].mxu0 %v1564
      %v1655 = vpop.f32.mrb[0].mxu0
      %v1656 = vadd.f32 0.0, %v1655
      %v1657 = vpop.f32.mrb[0].mxu0
      %v1658 = vadd.f32 0.0, %v1657
      %v1659 = vpop.f32.mrb[0].mxu0
      %v1660 = vadd.f32 0.0, %v1659
      %v1661 = vpop.f32.mrb[0].mxu0
      %v1662 = vadd.f32 0.0, %v1661
      %1663 = vmatprep.mubr.bf16.mxu0 0
      %1664 = vmatmul.mubr.bf16.gmra.mrb[0].mxu0 %v1567
      %v1665 = vpop.f32.mrb[0].mxu0
      %v1666 = vadd.f32 0.0, %v1665
      %v1667 = vpop.f32.mrb[0].mxu0
      %v1668 = vadd.f32 0.0, %v1667
      %v1669 = vpop.f32.mrb[0].mxu0
      %v1670 = vadd.f32 0.0, %v1669
      %v1671 = vpop.f32.mrb[0].mxu0
      %v1672 = vadd.f32 0.0, %v1671
      %1673 = vmatprep.mubr.bf16.mxu0 0
      %1674 = vmatmul.mubr.bf16.gmra.mrb[0].mxu0 %v1570
      %v1675 = vpop.f32.mrb[0].mxu0
      %v1676 = vadd.f32 0.0, %v1675
      %v1677 = vpop.f32.mrb[0].mxu0
      %v1678 = vadd.f32 0.0, %v1677
      %v1679 = vpop.f32.mrb[0].mxu0
      %v1680 = vadd.f32 0.0, %v1679
      %v1681 = vpop.f32.mrb[0].mxu0
      %v1682 = vadd.f32 0.0, %v1681
      %1683 = vmatprep.mubr.bf16.mxu0 0
      %1684 = vmatmul.mubr.bf16.gmra.mrb[0].mxu0 %v1573
      %v1685 = vpop.f32.mrb[0].mxu0
      %v1686 = vadd.f32 0.0, %v1685
      %v1687 = vpop.f32.mrb[0].mxu0
      %v1688 = vadd.f32 0.0, %v1687
      %v1689 = vpop.f32.mrb[0].mxu0
      %v1690 = vadd.f32 0.0, %v1689
      %v1691 = vpop.f32.mrb[0].mxu0
      %v1692 = vadd.f32 0.0, %v1691
      %1693 = vdwg.mxu0
      %v1694 = vadd.f32 %v1292, %v1616
      %v1695 = vadd.f32 %v1293, %v1618
      %v1696 = vadd.f32 %v1294, %v1620
      %v1697 = vadd.f32 %v1295, %v1622
      %v1698 = vadd.f32 %v1296, %v1626
      %v1699 = vadd.f32 %v1297, %v1628
      %v1700 = vadd.f32 %v1298, %v1630
      %v1701 = vadd.f32 %v1299, %v1632
      %v1702 = vadd.f32 %v1300, %v1636
      %v1703 = vadd.f32 %v1301, %v1638
      %v1704 = vadd.f32 %v1302, %v1640
      %v1705 = vadd.f32 %v1303, %v1642
      %v1706 = vadd.f32 %v1304, %v1646
      %v1707 = vadd.f32 %v1305, %v1648
      %v1708 = vadd.f32 %v1306, %v1650
      %v1709 = vadd.f32 %v1307, %v1652
      %v1710 = vadd.f32 %v1308, %v1656
      %v1711 = vadd.f32 %v1309, %v1658
      %v1712 = vadd.f32 %v1310, %v1660
      %v1713 = vadd.f32 %v1311, %v1662
      %v1714 = vadd.f32 %v1312, %v1666
      %v1715 = vadd.f32 %v1313, %v1668
      %v1716 = vadd.f32 %v1314, %v1670
      %v1717 = vadd.f32 %v1315, %v1672
      %v1718 = vadd.f32 %v1316, %v1676
      %v1719 = vadd.f32 %v1317, %v1678
      %v1720 = vadd.f32 %v1318, %v1680
      %v1721 = vadd.f32 %v1319, %v1682
      %v1722 = vadd.f32 %v1320, %v1686
      %v1723 = vadd.f32 %v1321, %v1688
      %v1724 = vadd.f32 %v1322, %v1690
      %v1725 = vadd.f32 %v1323, %v1692
      %v1734 = vrot.slane %v1074, 5
      %v1735 = vrot.slane %v1734, 4
      %v1736 = vrot.slane %v1075, 5
      %v1737 = vsel %vm803, %v1735, %v1736
      %v1738 = vrot.slane %v1736, 4
      %v1739 = vrot.slane %v1076, 5
      %v1740 = vsel %vm803, %v1738, %v1739
      %v1741 = vrot.slane %v1077, 5
      %v1742 = vrot.slane %v1741, 4
      %v1743 = vrot.slane %v1078, 5
      %v1744 = vsel %vm803, %v1742, %v1743
      %v1745 = vrot.slane %v1743, 4
      %v1746 = vrot.slane %v1079, 5
      %v1747 = vsel %vm803, %v1745, %v1746
      %v1748 = vrot.slane %v1080, 5
      %v1749 = vrot.slane %v1748, 4
      %v1750 = vrot.slane %v1081, 5
      %v1751 = vsel %vm803, %v1749, %v1750
      %v1752 = vrot.slane %v1750, 4
      %v1753 = vrot.slane %v1082, 5
      %v1754 = vsel %vm803, %v1752, %v1753
      %v1755 = vrot.slane %v1083, 5
      %v1756 = vrot.slane %v1755, 4
      %v1757 = vrot.slane %v1084, 5
      %v1758 = vsel %vm803, %v1756, %v1757
      %v1759 = vrot.slane %v1757, 4
      %v1760 = vrot.slane %v1085, 5
      %v1761 = vsel %vm803, %v1759, %v1760
      %v1762 = vrot.slane %v1086, 5
      %v1763 = vrot.slane %v1762, 4
      %v1764 = vrot.slane %v1087, 5
      %v1765 = vsel %vm803, %v1763, %v1764
      %v1766 = vrot.slane %v1764, 4
      %v1767 = vrot.slane %v1088, 5
      %v1768 = vsel %vm803, %v1766, %v1767
      %v1769 = vrot.slane %v1089, 5
      %v1770 = vrot.slane %v1769, 4
      %v1771 = vrot.slane %v1090, 5
      %v1772 = vsel %vm803, %v1770, %v1771
      %v1773 = vrot.slane %v1771, 4
      %v1774 = vrot.slane %v1091, 5
      %v1775 = vsel %vm803, %v1773, %v1774
      %v1776 = vrot.slane %v1092, 5
      %v1777 = vrot.slane %v1776, 4
      %v1778 = vrot.slane %v1093, 5
      %v1779 = vsel %vm803, %v1777, %v1778
      %v1780 = vrot.slane %v1778, 4
      %v1781 = vrot.slane %v1094, 5
      %v1782 = vsel %vm803, %v1780, %v1781
      %v1783 = vrot.slane %v1095, 5
      %v1784 = vrot.slane %v1783, 4
      %v1785 = vrot.slane %v1096, 5
      %v1786 = vsel %vm803, %v1784, %v1785
      %v1787 = vrot.slane %v1785, 4
      %v1788 = vrot.slane %v1097, 5
      %v1789 = vsel %vm803, %v1787, %v1788
      %s1790 = scalar_lea.vmem %s1, 20
      %v1791 = vld [vmem:[%s1790] sm:$0xf]
      %v1792 = vunpack.c.l.b16 %v1737
      %v1793 = vunpack.c.l.b16 %v1740
      %v1794 = vunpack.c.l.b16 %v1744
      %v1795 = vunpack.c.l.b16 %v1747
      %v1796 = vunpack.c.l.b16 %v1751
      %v1797 = vunpack.c.l.b16 %v1754
      %v1798 = vunpack.c.l.b16 %v1758
      %v1799 = vunpack.c.l.b16 %v1761
      %v1800 = vunpack.c.l.b16 %v1765
      %v1801 = vunpack.c.l.b16 %v1768
      %v1802 = vunpack.c.l.b16 %v1772
      %v1803 = vunpack.c.l.b16 %v1775
      %v1804 = vunpack.c.l.b16 %v1779
      %v1805 = vunpack.c.l.b16 %v1782
      %v1806 = vunpack.c.l.b16 %v1786
      %v1807 = vunpack.c.l.b16 %v1789
      %v1808 = vpack.c.b16 %v1793, %v1792
      %v1809 = vpack.c.b16 %v1795, %v1794
      %v1810 = vpack.c.b16 %v1797, %v1796
      %v1811 = vpack.c.b16 %v1799, %v1798
      %v1812 = vpack.c.b16 %v1801, %v1800
      %v1813 = vpack.c.b16 %v1803, %v1802
      %v1814 = vpack.c.b16 %v1805, %v1804
      %v1815 = vpack.c.b16 %v1807, %v1806
      %v1818 = vunpack.c.l.s4 1983009808
      %v1819 = vunpack.c.0.s8 %v1818
      %v1820 = vlaneseq
      %v1821 = vshrl.u32 %v1820, 7
      %v1822 = vsub.s32 %v1819, %v1821
      %v1823 = vrot.slane %v1791, %v1822
      %v1824 = vcombine.high %v1823, %v1823
      %v1826 = vsel %vm456, %v1808, 0
      %v1829 = vsel %vm456, %v1809, 0
      %v1832 = vsel %vm456, %v1810, 0
      %v1835 = vsel %vm456, %v1811, 0
      %v1838 = vsel %vm456, %v1812, 0
      %v1841 = vsel %vm456, %v1813, 0
      %v1844 = vsel %vm456, %v1814, 0
      %v1847 = vsel %vm456, %v1815, 0
      %v1850 = vsel %vm481, %v1823, 0
      %v1853 = vsel %vm481, %v1824, 0
      %1855 = vmatprep.subr.bf16.mxu0 %v1853
      %1856 = vmatpush1.bf16.msra.mxu0 %v1850
      %1857 = vmatprep.subr.bf16.mxu0 0
      %1858 = vmatpush1.bf16.msra.mxu0 0
      %1859 = vmatprep.subr.bf16.mxu0 0
      %1860 = vmatpush1.bf16.msra.mxu0 0
      %1861 = vmatprep.subr.bf16.mxu0 0
      %1862 = vmatpush1.bf16.msra.mxu0 0
      %1863 = vmatprep.subr.bf16.mxu0 0
      %1864 = vmatpush1.bf16.msra.mxu0 0
      %1865 = vmatprep.subr.bf16.mxu0 0
      %1866 = vmatpush1.bf16.msra.mxu0 0
      %1867 = vmatprep.subr.bf16.mxu0 0
      %1868 = vmatpush1.bf16.msra.mxu0 0
      %1869 = vmatprep.subr.bf16.mxu0 0
      %1870 = vmatpush1.bf16.msra.mxu0 0
      %1871 = vmatprep.subr.bf16.mxu0 0
      %1872 = vmatpush1.bf16.msra.mxu0 0
      %1873 = vmatprep.subr.bf16.mxu0 0
      %1874 = vmatpush1.bf16.msra.mxu0 0
      %1875 = vmatprep.subr.bf16.mxu0 0
      %1876 = vmatpush1.bf16.msra.mxu0 0
      %1877 = vmatprep.subr.bf16.mxu0 0
      %1878 = vmatpush1.bf16.msra.mxu0 0
      %1879 = vmatprep.subr.bf16.mxu0 0
      %1880 = vmatpush1.bf16.msra.mxu0 0
      %1881 = vmatprep.subr.bf16.mxu0 0
      %1882 = vmatpush1.bf16.msra.mxu0 0
      %1883 = vmatprep.subr.bf16.mxu0 0
      %1884 = vmatpush1.bf16.msra.mxu0 0
      %1885 = vmatprep.subr.bf16.mxu0 0
      %1886 = vmatpush1.bf16.msra.mxu0 0
      %1887 = vmatprep.mubr.bf16.mxu0 0
      %1888 = vmatmul.mubr.bf16.gmra.mrb[0].mxu0 %v1826
      %v1889 = vpop.f32.mrb[0].mxu0
      %v1890 = vadd.f32 0.0, %v1889
      %v1891 = vpop.f32.mrb[0].mxu0
      %v1892 = vadd.f32 0.0, %v1891
      %v1893 = vpop.f32.mrb[0].mxu0
      %v1894 = vadd.f32 0.0, %v1893
      %v1895 = vpop.f32.mrb[0].mxu0
      %v1896 = vadd.f32 0.0, %v1895
      %1897 = vmatprep.mubr.bf16.mxu0 0
      %1898 = vmatmul.mubr.bf16.gmra.mrb[0].mxu0 %v1829
      %v1899 = vpop.f32.mrb[0].mxu0
      %v1900 = vadd.f32 0.0, %v1899
      %v1901 = vpop.f32.mrb[0].mxu0
      %v1902 = vadd.f32 0.0, %v1901
      %v1903 = vpop.f32.mrb[0].mxu0
      %v1904 = vadd.f32 0.0, %v1903
      %v1905 = vpop.f32.mrb[0].mxu0
      %v1906 = vadd.f32 0.0, %v1905
      %1907 = vmatprep.mubr.bf16.mxu0 0
      %1908 = vmatmul.mubr.bf16.gmra.mrb[0].mxu0 %v1832
      %v1909 = vpop.f32.mrb[0].mxu0
      %v1910 = vadd.f32 0.0, %v1909
      %v1911 = vpop.f32.mrb[0].mxu0
      %v1912 = vadd.f32 0.0, %v1911
      %v1913 = vpop.f32.mrb[0].mxu0
      %v1914 = vadd.f32 0.0, %v1913
      %v1915 = vpop.f32.mrb[0].mxu0
      %v1916 = vadd.f32 0.0, %v1915
      %1917 = vmatprep.mubr.bf16.mxu0 0
      %1918 = vmatmul.mubr.bf16.gmra.mrb[0].mxu0 %v1835
      %v1919 = vpop.f32.mrb[0].mxu0
      %v1920 = vadd.f32 0.0, %v1919
      %v1921 = vpop.f32.mrb[0].mxu0
      %v1922 = vadd.f32 0.0, %v1921
      %v1923 = vpop.f32.mrb[0].mxu0
      %v1924 = vadd.f32 0.0, %v1923
      %v1925 = vpop.f32.mrb[0].mxu0
      %v1926 = vadd.f32 0.0, %v1925
      %1927 = vmatprep.mubr.bf16.mxu0 0
      %1928 = vmatmul.mubr.bf16.gmra.mrb[0].mxu0 %v1838
      %v1929 = vpop.f32.mrb[0].mxu0
      %v1930 = vadd.f32 0.0, %v1929
      %v1931 = vpop.f32.mrb[0].mxu0
      %v1932 = vadd.f32 0.0, %v1931
      %v1933 = vpop.f32.mrb[0].mxu0
      %v1934 = vadd.f32 0.0, %v1933
      %v1935 = vpop.f32.mrb[0].mxu0
      %v1936 = vadd.f32 0.0, %v1935
      %1937 = vmatprep.mubr.bf16.mxu0 0
      %1938 = vmatmul.mubr.bf16.gmra.mrb[0].mxu0 %v1841
      %v1939 = vpop.f32.mrb[0].mxu0
      %v1940 = vadd.f32 0.0, %v1939
      %v1941 = vpop.f32.mrb[0].mxu0
      %v1942 = vadd.f32 0.0, %v1941
      %v1943 = vpop.f32.mrb[0].mxu0
      %v1944 = vadd.f32 0.0, %v1943
      %v1945 = vpop.f32.mrb[0].mxu0
      %v1946 = vadd.f32 0.0, %v1945
      %1947 = vmatprep.mubr.bf16.mxu0 0
      %1948 = vmatmul.mubr.bf16.gmra.mrb[0].mxu0 %v1844
      %v1949 = vpop.f32.mrb[0].mxu0
      %v1950 = vadd.f32 0.0, %v1949
      %v1951 = vpop.f32.mrb[0].mxu0
      %v1952 = vadd.f32 0.0, %v1951
      %v1953 = vpop.f32.mrb[0].mxu0
      %v1954 = vadd.f32 0.0, %v1953
      %v1955 = vpop.f32.mrb[0].mxu0
      %v1956 = vadd.f32 0.0, %v1955
      %1957 = vmatprep.mubr.bf16.mxu0 0
      %1958 = vmatmul.mubr.bf16.gmra.mrb[0].mxu0 %v1847
      %v1959 = vpop.f32.mrb[0].mxu0
      %v1960 = vadd.f32 0.0, %v1959
      %v1961 = vpop.f32.mrb[0].mxu0
      %v1962 = vadd.f32 0.0, %v1961
      %v1963 = vpop.f32.mrb[0].mxu0
      %v1964 = vadd.f32 0.0, %v1963
      %v1965 = vpop.f32.mrb[0].mxu0
      %v1966 = vadd.f32 0.0, %v1965
      %1967 = vdwg.mxu0
      %v1968 = vadd.f32 %v1694, %v1890
      %v1969 = vadd.f32 %v1695, %v1892
      %v1970 = vadd.f32 %v1696, %v1894
      %v1971 = vadd.f32 %v1697, %v1896
      %v1972 = vadd.f32 %v1698, %v1900
      %v1973 = vadd.f32 %v1699, %v1902
      %v1974 = vadd.f32 %v1700, %v1904
      %v1975 = vadd.f32 %v1701, %v1906
      %v1976 = vadd.f32 %v1702, %v1910
      %v1977 = vadd.f32 %v1703, %v1912
      %v1978 = vadd.f32 %v1704, %v1914
      %v1979 = vadd.f32 %v1705, %v1916
      %v1980 = vadd.f32 %v1706, %v1920
      %v1981 = vadd.f32 %v1707, %v1922
      %v1982 = vadd.f32 %v1708, %v1924
      %v1983 = vadd.f32 %v1709, %v1926
      %v1984 = vadd.f32 %v1710, %v1930
      %v1985 = vadd.f32 %v1711, %v1932
      %v1986 = vadd.f32 %v1712, %v1934
      %v1987 = vadd.f32 %v1713, %v1936
      %v1988 = vadd.f32 %v1714, %v1940
      %v1989 = vadd.f32 %v1715, %v1942
      %v1990 = vadd.f32 %v1716, %v1944
      %v1991 = vadd.f32 %v1717, %v1946
      %v1992 = vadd.f32 %v1718, %v1950
      %v1993 = vadd.f32 %v1719, %v1952
      %v1994 = vadd.f32 %v1720, %v1954
      %v1995 = vadd.f32 %v1721, %v1956
      %v1996 = vadd.f32 %v1722, %v1960
      %v1997 = vadd.f32 %v1723, %v1962
      %v1998 = vadd.f32 %v1724, %v1964
      %v1999 = vadd.f32 %v1725, %v1966
      %s2000 = sadd.s32 %s197, 2
      %s2001 = smul.u32 %s2000, 3
      %s2002 = smul.addr %s2001, 4
      %s2003 = scalar_lea.vmem %s184, %s2002
      %v2004 = vld [vmem:[%s2003] sm:$0xf]
      %v2005 = vld [vmem:[%s2003 + $0x4] sm:$0xf]
      %v2006 = vld [vmem:[%s2003 + $0x8] sm:$0x1]
      %v2007 = vld [vmem:[%s2003 + $0xc] sm:$0xf]
      %v2008 = vld [vmem:[%s2003 + $0x10] sm:$0xf]
      %v2009 = vld [vmem:[%s2003 + $0x14] sm:$0x1]
      %v2010 = vld [vmem:[%s2003 + $0x18] sm:$0xf]
      %v2011 = vld [vmem:[%s2003 + $0x1c] sm:$0xf]
      %v2012 = vld [vmem:[%s2003 + $0x20] sm:$0x1]
      %v2013 = vld [vmem:[%s2003 + $0x24] sm:$0xf]
      %v2014 = vld [vmem:[%s2003 + $0x28] sm:$0xf]
      %v2015 = vld [vmem:[%s2003 + $0x2c] sm:$0x1]
      %v2016 = vld [vmem:[%s2003 + $0x30] sm:$0xf]
      %v2017 = vld [vmem:[%s2003 + $0x34] sm:$0xf]
      %v2018 = vld [vmem:[%s2003 + $0x38] sm:$0x1]
      %v2019 = vld [vmem:[%s2003 + $0x3c] sm:$0xf]
      %v2020 = vld [vmem:[%s2003 + $0x40] sm:$0xf]
      %v2021 = vld [vmem:[%s2003 + $0x44] sm:$0x1]
      %v2022 = vld [vmem:[%s2003 + $0x48] sm:$0xf]
      %v2023 = vld [vmem:[%s2003 + $0x4c] sm:$0xf]
      %v2024 = vld [vmem:[%s2003 + $0x50] sm:$0x1]
      %v2025 = vld [vmem:[%s2003 + $0x54] sm:$0xf]
      %v2026 = vld [vmem:[%s2003 + $0x58] sm:$0xf]
      %v2027 = vld [vmem:[%s2003 + $0x5c] sm:$0x1]
      %s2028 = scalar_lea.vmem %s1, 24
      %v2029 = vld [vmem:[%s2028] sm:$0xf]
      %v2046 = vunpack.c.l.b16 %v2004
      %v2047 = vunpack.c.l.b16 %v2005
      %v2048 = vunpack.c.l.b16 %v2007
      %v2049 = vunpack.c.l.b16 %v2008
      %v2050 = vunpack.c.l.b16 %v2010
      %v2051 = vunpack.c.l.b16 %v2011
      %v2052 = vunpack.c.l.b16 %v2013
      %v2053 = vunpack.c.l.b16 %v2014
      %v2054 = vunpack.c.l.b16 %v2016
      %v2055 = vunpack.c.l.b16 %v2017
      %v2056 = vunpack.c.l.b16 %v2019
      %v2057 = vunpack.c.l.b16 %v2020
      %v2058 = vunpack.c.l.b16 %v2022
      %v2059 = vunpack.c.l.b16 %v2023
      %v2060 = vunpack.c.l.b16 %v2025
      %v2061 = vunpack.c.l.b16 %v2026
      %v2062 = vpack.c.b16 %v2047, %v2046
      %v2063 = vpack.c.b16 %v2049, %v2048
      %v2064 = vpack.c.b16 %v2051, %v2050
      %v2065 = vpack.c.b16 %v2053, %v2052
      %v2066 = vpack.c.b16 %v2055, %v2054
      %v2067 = vpack.c.b16 %v2057, %v2056
      %v2068 = vpack.c.b16 %v2059, %v2058
      %v2069 = vpack.c.b16 %v2061, %v2060
      %v2072 = vunpack.c.l.s4 1983009808
      %v2073 = vunpack.c.0.s8 %v2072
      %v2074 = vlaneseq
      %v2075 = vshrl.u32 %v2074, 7
      %v2076 = vsub.s32 %v2073, %v2075
      %v2077 = vrot.slane %v2029, %v2076
      %v2078 = vcombine.high %v2077, %v2077
      %v2080 = vsel %vm456, %v2062, 0
      %v2083 = vsel %vm456, %v2063, 0
      %v2086 = vsel %vm456, %v2064, 0
      %v2089 = vsel %vm456, %v2065, 0
      %v2092 = vsel %vm456, %v2066, 0
      %v2095 = vsel %vm456, %v2067, 0
      %v2098 = vsel %vm456, %v2068, 0
      %v2101 = vsel %vm456, %v2069, 0
      %v2104 = vsel %vm481, %v2077, 0
      %v2107 = vsel %vm481, %v2078, 0
      %2109 = vmatprep.subr.bf16.mxu0 %v2107
      %2110 = vmatpush1.bf16.msra.mxu0 %v2104
      %2111 = vmatprep.subr.bf16.mxu0 0
      %2112 = vmatpush1.bf16.msra.mxu0 0
      %2113 = vmatprep.subr.bf16.mxu0 0
      %2114 = vmatpush1.bf16.msra.mxu0 0
      %2115 = vmatprep.subr.bf16.mxu0 0
      %2116 = vmatpush1.bf16.msra.mxu0 0
      %2117 = vmatprep.subr.bf16.mxu0 0
      %2118 = vmatpush1.bf16.msra.mxu0 0
      %2119 = vmatprep.subr.bf16.mxu0 0
      %2120 = vmatpush1.bf16.msra.mxu0 0
      %2121 = vmatprep.subr.bf16.mxu0 0
      %2122 = vmatpush1.bf16.msra.mxu0 0
      %2123 = vmatprep.subr.bf16.mxu0 0
      %2124 = vmatpush1.bf16.msra.mxu0 0
      %2125 = vmatprep.subr.bf16.mxu0 0
      %2126 = vmatpush1.bf16.msra.mxu0 0
      %2127 = vmatprep.subr.bf16.mxu0 0
      %2128 = vmatpush1.bf16.msra.mxu0 0
      %2129 = vmatprep.subr.bf16.mxu0 0
      %2130 = vmatpush1.bf16.msra.mxu0 0
      %2131 = vmatprep.subr.bf16.mxu0 0
      %2132 = vmatpush1.bf16.msra.mxu0 0
      %2133 = vmatprep.subr.bf16.mxu0 0
      %2134 = vmatpush1.bf16.msra.mxu0 0
      %2135 = vmatprep.subr.bf16.mxu0 0
      %2136 = vmatpush1.bf16.msra.mxu0 0
      %2137 = vmatprep.subr.bf16.mxu0 0
      %2138 = vmatpush1.bf16.msra.mxu0 0
      %2139 = vmatprep.subr.bf16.mxu0 0
      %2140 = vmatpush1.bf16.msra.mxu0 0
      %2141 = vmatprep.mubr.bf16.mxu0 0
      %2142 = vmatmul.mubr.bf16.gmra.mrb[0].mxu0 %v2080
      %v2143 = vpop.f32.mrb[0].mxu0
      %v2144 = vadd.f32 0.0, %v2143
      %v2145 = vpop.f32.mrb[0].mxu0
      %v2146 = vadd.f32 0.0, %v2145
      %v2147 = vpop.f32.mrb[0].mxu0
      %v2148 = vadd.f32 0.0, %v2147
      %v2149 = vpop.f32.mrb[0].mxu0
      %v2150 = vadd.f32 0.0, %v2149
      %2151 = vmatprep.mubr.bf16.mxu0 0
      %2152 = vmatmul.mubr.bf16.gmra.mrb[0].mxu0 %v2083
      %v2153 = vpop.f32.mrb[0].mxu0
      %v2154 = vadd.f32 0.0, %v2153
      %v2155 = vpop.f32.mrb[0].mxu0
      %v2156 = vadd.f32 0.0, %v2155
      %v2157 = vpop.f32.mrb[0].mxu0
      %v2158 = vadd.f32 0.0, %v2157
      %v2159 = vpop.f32.mrb[0].mxu0
      %v2160 = vadd.f32 0.0, %v2159
      %2161 = vmatprep.mubr.bf16.mxu0 0
      %2162 = vmatmul.mubr.bf16.gmra.mrb[0].mxu0 %v2086
      %v2163 = vpop.f32.mrb[0].mxu0
      %v2164 = vadd.f32 0.0, %v2163
      %v2165 = vpop.f32.mrb[0].mxu0
      %v2166 = vadd.f32 0.0, %v2165
      %v2167 = vpop.f32.mrb[0].mxu0
      %v2168 = vadd.f32 0.0, %v2167
      %v2169 = vpop.f32.mrb[0].mxu0
      %v2170 = vadd.f32 0.0, %v2169
      %2171 = vmatprep.mubr.bf16.mxu0 0
      %2172 = vmatmul.mubr.bf16.gmra.mrb[0].mxu0 %v2089
      %v2173 = vpop.f32.mrb[0].mxu0
      %v2174 = vadd.f32 0.0, %v2173
      %v2175 = vpop.f32.mrb[0].mxu0
      %v2176 = vadd.f32 0.0, %v2175
      %v2177 = vpop.f32.mrb[0].mxu0
      %v2178 = vadd.f32 0.0, %v2177
      %v2179 = vpop.f32.mrb[0].mxu0
      %v2180 = vadd.f32 0.0, %v2179
      %2181 = vmatprep.mubr.bf16.mxu0 0
      %2182 = vmatmul.mubr.bf16.gmra.mrb[0].mxu0 %v2092
      %v2183 = vpop.f32.mrb[0].mxu0
      %v2184 = vadd.f32 0.0, %v2183
      %v2185 = vpop.f32.mrb[0].mxu0
      %v2186 = vadd.f32 0.0, %v2185
      %v2187 = vpop.f32.mrb[0].mxu0
      %v2188 = vadd.f32 0.0, %v2187
      %v2189 = vpop.f32.mrb[0].mxu0
      %v2190 = vadd.f32 0.0, %v2189
      %2191 = vmatprep.mubr.bf16.mxu0 0
      %2192 = vmatmul.mubr.bf16.gmra.mrb[0].mxu0 %v2095
      %v2193 = vpop.f32.mrb[0].mxu0
      %v2194 = vadd.f32 0.0, %v2193
      %v2195 = vpop.f32.mrb[0].mxu0
      %v2196 = vadd.f32 0.0, %v2195
      %v2197 = vpop.f32.mrb[0].mxu0
      %v2198 = vadd.f32 0.0, %v2197
      %v2199 = vpop.f32.mrb[0].mxu0
      %v2200 = vadd.f32 0.0, %v2199
      %2201 = vmatprep.mubr.bf16.mxu0 0
      %2202 = vmatmul.mubr.bf16.gmra.mrb[0].mxu0 %v2098
      %v2203 = vpop.f32.mrb[0].mxu0
      %v2204 = vadd.f32 0.0, %v2203
      %v2205 = vpop.f32.mrb[0].mxu0
      %v2206 = vadd.f32 0.0, %v2205
      %v2207 = vpop.f32.mrb[0].mxu0
      %v2208 = vadd.f32 0.0, %v2207
      %v2209 = vpop.f32.mrb[0].mxu0
      %v2210 = vadd.f32 0.0, %v2209
      %2211 = vmatprep.mubr.bf16.mxu0 0
      %2212 = vmatmul.mubr.bf16.gmra.mrb[0].mxu0 %v2101
      %v2213 = vpop.f32.mrb[0].mxu0
      %v2214 = vadd.f32 0.0, %v2213
      %v2215 = vpop.f32.mrb[0].mxu0
      %v2216 = vadd.f32 0.0, %v2215
      %v2217 = vpop.f32.mrb[0].mxu0
      %v2218 = vadd.f32 0.0, %v2217
      %v2219 = vpop.f32.mrb[0].mxu0
      %v2220 = vadd.f32 0.0, %v2219
      %2221 = vdwg.mxu0
      %v2222 = vadd.f32 %v1968, %v2144
      %v2223 = vadd.f32 %v1969, %v2146
      %v2224 = vadd.f32 %v1970, %v2148
      %v2225 = vadd.f32 %v1971, %v2150
      %v2226 = vadd.f32 %v1972, %v2154
      %v2227 = vadd.f32 %v1973, %v2156
      %v2228 = vadd.f32 %v1974, %v2158
      %v2229 = vadd.f32 %v1975, %v2160
      %v2230 = vadd.f32 %v1976, %v2164
      %v2231 = vadd.f32 %v1977, %v2166
      %v2232 = vadd.f32 %v1978, %v2168
      %v2233 = vadd.f32 %v1979, %v2170
      %v2234 = vadd.f32 %v1980, %v2174
      %v2235 = vadd.f32 %v1981, %v2176
      %v2236 = vadd.f32 %v1982, %v2178
      %v2237 = vadd.f32 %v1983, %v2180
      %v2238 = vadd.f32 %v1984, %v2184
      %v2239 = vadd.f32 %v1985, %v2186
      %v2240 = vadd.f32 %v1986, %v2188
      %v2241 = vadd.f32 %v1987, %v2190
      %v2242 = vadd.f32 %v1988, %v2194
      %v2243 = vadd.f32 %v1989, %v2196
      %v2244 = vadd.f32 %v1990, %v2198
      %v2245 = vadd.f32 %v1991, %v2200
      %v2246 = vadd.f32 %v1992, %v2204
      %v2247 = vadd.f32 %v1993, %v2206
      %v2248 = vadd.f32 %v1994, %v2208
      %v2249 = vadd.f32 %v1995, %v2210
      %v2250 = vadd.f32 %v1996, %v2214
      %v2251 = vadd.f32 %v1997, %v2216
      %v2252 = vadd.f32 %v1998, %v2218
      %v2253 = vadd.f32 %v1999, %v2220
      %v2255 = vshrl.u32 %v2004, 16
      %v2257 = vrot.slane %v2255, 4
      %v2258 = vshll.u32 %v2004, 16
      %v2260 = vrot.slane %v2258, 5
      %v2261 = vor.u32 %v2257, %v2260
      %v2262 = vrot.slane %v2261, 4
      %v2264 = vshll.u32 %v2005, 16
      %v2266 = vrot.slane %v2264, 5
      %v2267 = vsel %vm228, %v2262, %v2266
      %v2268 = vshrl.u32 %v2005, 16
      %v2270 = vrot.slane %v2268, 4
      %v2271 = vor.u32 %v2270, %v2266
      %v2272 = vrot.slane %v2271, 4
      %v2274 = vshll.u32 %v2006, 16
      %v2276 = vrot.slane %v2274, 5
      %v2277 = vsel %vm228, %v2272, %v2276
      %v2279 = vshrl.u32 %v2007, 16
      %v2281 = vrot.slane %v2279, 4
      %v2282 = vshll.u32 %v2007, 16
      %v2284 = vrot.slane %v2282, 5
      %v2285 = vor.u32 %v2281, %v2284
      %v2286 = vrot.slane %v2285, 4
      %v2288 = vshll.u32 %v2008, 16
      %v2290 = vrot.slane %v2288, 5
      %v2291 = vsel %vm228, %v2286, %v2290
      %v2292 = vshrl.u32 %v2008, 16
      %v2294 = vrot.slane %v2292, 4
      %v2295 = vor.u32 %v2294, %v2290
      %v2296 = vrot.slane %v2295, 4
      %v2298 = vshll.u32 %v2009, 16
      %v2300 = vrot.slane %v2298, 5
      %v2301 = vsel %vm228, %v2296, %v2300
      %v2303 = vshrl.u32 %v2010, 16
      %v2305 = vrot.slane %v2303, 4
      %v2306 = vshll.u32 %v2010, 16
      %v2308 = vrot.slane %v2306, 5
      %v2309 = vor.u32 %v2305, %v2308
      %v2310 = vrot.slane %v2309, 4
      %v2312 = vshll.u32 %v2011, 16
      %v2314 = vrot.slane %v2312, 5
      %v2315 = vsel %vm228, %v2310, %v2314
      %v2316 = vshrl.u32 %v2011, 16
      %v2318 = vrot.slane %v2316, 4
      %v2319 = vor.u32 %v2318, %v2314
      %v2320 = vrot.slane %v2319, 4
      %v2322 = vshll.u32 %v2012, 16
      %v2324 = vrot.slane %v2322, 5
      %v2325 = vsel %vm228, %v2320, %v2324
      %v2327 = vshrl.u32 %v2013, 16
      %v2329 = vrot.slane %v2327, 4
      %v2330 = vshll.u32 %v2013, 16
      %v2332 = vrot.slane %v2330, 5
      %v2333 = vor.u32 %v2329, %v2332
      %v2334 = vrot.slane %v2333, 4
      %v2336 = vshll.u32 %v2014, 16
      %v2338 = vrot.slane %v2336, 5
      %v2339 = vsel %vm228, %v2334, %v2338
      %v2340 = vshrl.u32 %v2014, 16
      %v2342 = vrot.slane %v2340, 4
      %v2343 = vor.u32 %v2342, %v2338
      %v2344 = vrot.slane %v2343, 4
      %v2346 = vshll.u32 %v2015, 16
      %v2348 = vrot.slane %v2346, 5
      %v2349 = vsel %vm228, %v2344, %v2348
      %v2351 = vshrl.u32 %v2016, 16
      %v2353 = vrot.slane %v2351, 4
      %v2354 = vshll.u32 %v2016, 16
      %v2356 = vrot.slane %v2354, 5
      %v2357 = vor.u32 %v2353, %v2356
      %v2358 = vrot.slane %v2357, 4
      %v2360 = vshll.u32 %v2017, 16
      %v2362 = vrot.slane %v2360, 5
      %v2363 = vsel %vm228, %v2358, %v2362
      %v2364 = vshrl.u32 %v2017, 16
      %v2366 = vrot.slane %v2364, 4
      %v2367 = vor.u32 %v2366, %v2362
      %v2368 = vrot.slane %v2367, 4
      %v2370 = vshll.u32 %v2018, 16
      %v2372 = vrot.slane %v2370, 5
      %v2373 = vsel %vm228, %v2368, %v2372
      %v2375 = vshrl.u32 %v2019, 16
      %v2377 = vrot.slane %v2375, 4
      %v2378 = vshll.u32 %v2019, 16
      %v2380 = vrot.slane %v2378, 5
      %v2381 = vor.u32 %v2377, %v2380
      %v2382 = vrot.slane %v2381, 4
      %v2384 = vshll.u32 %v2020, 16
      %v2386 = vrot.slane %v2384, 5
      %v2387 = vsel %vm228, %v2382, %v2386
      %v2388 = vshrl.u32 %v2020, 16
      %v2390 = vrot.slane %v2388, 4
      %v2391 = vor.u32 %v2390, %v2386
      %v2392 = vrot.slane %v2391, 4
      %v2394 = vshll.u32 %v2021, 16
      %v2396 = vrot.slane %v2394, 5
      %v2397 = vsel %vm228, %v2392, %v2396
      %v2399 = vshrl.u32 %v2022, 16
      %v2401 = vrot.slane %v2399, 4
      %v2402 = vshll.u32 %v2022, 16
      %v2404 = vrot.slane %v2402, 5
      %v2405 = vor.u32 %v2401, %v2404
      %v2406 = vrot.slane %v2405, 4
      %v2408 = vshll.u32 %v2023, 16
      %v2410 = vrot.slane %v2408, 5
      %v2411 = vsel %vm228, %v2406, %v2410
      %v2412 = vshrl.u32 %v2023, 16
      %v2414 = vrot.slane %v2412, 4
      %v2415 = vor.u32 %v2414, %v2410
      %v2416 = vrot.slane %v2415, 4
      %v2418 = vshll.u32 %v2024, 16
      %v2420 = vrot.slane %v2418, 5
      %v2421 = vsel %vm228, %v2416, %v2420
      %v2423 = vshrl.u32 %v2025, 16
      %v2425 = vrot.slane %v2423, 4
      %v2426 = vshll.u32 %v2025, 16
      %v2428 = vrot.slane %v2426, 5
      %v2429 = vor.u32 %v2425, %v2428
      %v2430 = vrot.slane %v2429, 4
      %v2432 = vshll.u32 %v2026, 16
      %v2434 = vrot.slane %v2432, 5
      %v2435 = vsel %vm228, %v2430, %v2434
      %v2436 = vshrl.u32 %v2026, 16
      %v2438 = vrot.slane %v2436, 4
      %v2439 = vor.u32 %v2438, %v2434
      %v2440 = vrot.slane %v2439, 4
      %v2442 = vshll.u32 %v2027, 16
      %v2444 = vrot.slane %v2442, 5
      %v2445 = vsel %vm228, %v2440, %v2444
      %s2446 = scalar_lea.vmem %s1, 28
      %v2447 = vld [vmem:[%s2446] sm:$0xf]
      %v2448 = vunpack.c.l.b16 %v2267
      %v2449 = vunpack.c.l.b16 %v2277
      %v2450 = vunpack.c.l.b16 %v2291
      %v2451 = vunpack.c.l.b16 %v2301
      %v2452 = vunpack.c.l.b16 %v2315
      %v2453 = vunpack.c.l.b16 %v2325
      %v2454 = vunpack.c.l.b16 %v2339
      %v2455 = vunpack.c.l.b16 %v2349
      %v2456 = vunpack.c.l.b16 %v2363
      %v2457 = vunpack.c.l.b16 %v2373
      %v2458 = vunpack.c.l.b16 %v2387
      %v2459 = vunpack.c.l.b16 %v2397
      %v2460 = vunpack.c.l.b16 %v2411
      %v2461 = vunpack.c.l.b16 %v2421
      %v2462 = vunpack.c.l.b16 %v2435
      %v2463 = vunpack.c.l.b16 %v2445
      %v2464 = vpack.c.b16 %v2449, %v2448
      %v2465 = vpack.c.b16 %v2451, %v2450
      %v2466 = vpack.c.b16 %v2453, %v2452
      %v2467 = vpack.c.b16 %v2455, %v2454
      %v2468 = vpack.c.b16 %v2457, %v2456
      %v2469 = vpack.c.b16 %v2459, %v2458
      %v2470 = vpack.c.b16 %v2461, %v2460
      %v2471 = vpack.c.b16 %v2463, %v2462
      %v2474 = vunpack.c.l.s4 1983009808
      %v2475 = vunpack.c.0.s8 %v2474
      %v2476 = vlaneseq
      %v2477 = vshrl.u32 %v2476, 7
      %v2478 = vsub.s32 %v2475, %v2477
      %v2479 = vrot.slane %v2447, %v2478
      %v2480 = vcombine.high %v2479, %v2479
      %v2482 = vsel %vm456, %v2464, 0
      %v2485 = vsel %vm456, %v2465, 0
      %v2488 = vsel %vm456, %v2466, 0
      %v2491 = vsel %vm456, %v2467, 0
      %v2494 = vsel %vm456, %v2468, 0
      %v2497 = vsel %vm456, %v2469, 0
      %v2500 = vsel %vm456, %v2470, 0
      %v2503 = vsel %vm456, %v2471, 0
      %v2506 = vsel %vm481, %v2479, 0
      %v2509 = vsel %vm481, %v2480, 0
      %2511 = vmatprep.subr.bf16.mxu0 %v2509
      %2512 = vmatpush1.bf16.msra.mxu0 %v2506
      %2513 = vmatprep.subr.bf16.mxu0 0
      %2514 = vmatpush1.bf16.msra.mxu0 0
      %2515 = vmatprep.subr.bf16.mxu0 0
      %2516 = vmatpush1.bf16.msra.mxu0 0
      %2517 = vmatprep.subr.bf16.mxu0 0
      %2518 = vmatpush1.bf16.msra.mxu0 0
      %2519 = vmatprep.subr.bf16.mxu0 0
      %2520 = vmatpush1.bf16.msra.mxu0 0
      %2521 = vmatprep.subr.bf16.mxu0 0
      %2522 = vmatpush1.bf16.msra.mxu0 0
      %2523 = vmatprep.subr.bf16.mxu0 0
      %2524 = vmatpush1.bf16.msra.mxu0 0
      %2525 = vmatprep.subr.bf16.mxu0 0
      %2526 = vmatpush1.bf16.msra.mxu0 0
      %2527 = vmatprep.subr.bf16.mxu0 0
      %2528 = vmatpush1.bf16.msra.mxu0 0
      %2529 = vmatprep.subr.bf16.mxu0 0
      %2530 = vmatpush1.bf16.msra.mxu0 0
      %2531 = vmatprep.subr.bf16.mxu0 0
      %2532 = vmatpush1.bf16.msra.mxu0 0
      %2533 = vmatprep.subr.bf16.mxu0 0
      %2534 = vmatpush1.bf16.msra.mxu0 0
      %2535 = vmatprep.subr.bf16.mxu0 0
      %2536 = vmatpush1.bf16.msra.mxu0 0
      %2537 = vmatprep.subr.bf16.mxu0 0
      %2538 = vmatpush1.bf16.msra.mxu0 0
      %2539 = vmatprep.subr.bf16.mxu0 0
      %2540 = vmatpush1.bf16.msra.mxu0 0
      %2541 = vmatprep.subr.bf16.mxu0 0
      %2542 = vmatpush1.bf16.msra.mxu0 0
      %2543 = vmatprep.mubr.bf16.mxu0 0
      %2544 = vmatmul.mubr.bf16.gmra.mrb[0].mxu0 %v2482
      %v2545 = vpop.f32.mrb[0].mxu0
      %v2546 = vadd.f32 0.0, %v2545
      %v2547 = vpop.f32.mrb[0].mxu0
      %v2548 = vadd.f32 0.0, %v2547
      %v2549 = vpop.f32.mrb[0].mxu0
      %v2550 = vadd.f32 0.0, %v2549
      %v2551 = vpop.f32.mrb[0].mxu0
      %v2552 = vadd.f32 0.0, %v2551
      %2553 = vmatprep.mubr.bf16.mxu0 0
      %2554 = vmatmul.mubr.bf16.gmra.mrb[0].mxu0 %v2485
      %v2555 = vpop.f32.mrb[0].mxu0
      %v2556 = vadd.f32 0.0, %v2555
      %v2557 = vpop.f32.mrb[0].mxu0
      %v2558 = vadd.f32 0.0, %v2557
      %v2559 = vpop.f32.mrb[0].mxu0
      %v2560 = vadd.f32 0.0, %v2559
      %v2561 = vpop.f32.mrb[0].mxu0
      %v2562 = vadd.f32 0.0, %v2561
      %2563 = vmatprep.mubr.bf16.mxu0 0
      %2564 = vmatmul.mubr.bf16.gmra.mrb[0].mxu0 %v2488
      %v2565 = vpop.f32.mrb[0].mxu0
      %v2566 = vadd.f32 0.0, %v2565
      %v2567 = vpop.f32.mrb[0].mxu0
      %v2568 = vadd.f32 0.0, %v2567
      %v2569 = vpop.f32.mrb[0].mxu0
      %v2570 = vadd.f32 0.0, %v2569
      %v2571 = vpop.f32.mrb[0].mxu0
      %v2572 = vadd.f32 0.0, %v2571
      %2573 = vmatprep.mubr.bf16.mxu0 0
      %2574 = vmatmul.mubr.bf16.gmra.mrb[0].mxu0 %v2491
      %v2575 = vpop.f32.mrb[0].mxu0
      %v2576 = vadd.f32 0.0, %v2575
      %v2577 = vpop.f32.mrb[0].mxu0
      %v2578 = vadd.f32 0.0, %v2577
      %v2579 = vpop.f32.mrb[0].mxu0
      %v2580 = vadd.f32 0.0, %v2579
      %v2581 = vpop.f32.mrb[0].mxu0
      %v2582 = vadd.f32 0.0, %v2581
      %2583 = vmatprep.mubr.bf16.mxu0 0
      %2584 = vmatmul.mubr.bf16.gmra.mrb[0].mxu0 %v2494
      %v2585 = vpop.f32.mrb[0].mxu0
      %v2586 = vadd.f32 0.0, %v2585
      %v2587 = vpop.f32.mrb[0].mxu0
      %v2588 = vadd.f32 0.0, %v2587
      %v2589 = vpop.f32.mrb[0].mxu0
      %v2590 = vadd.f32 0.0, %v2589
      %v2591 = vpop.f32.mrb[0].mxu0
      %v2592 = vadd.f32 0.0, %v2591
      %2593 = vmatprep.mubr.bf16.mxu0 0
      %2594 = vmatmul.mubr.bf16.gmra.mrb[0].mxu0 %v2497
      %v2595 = vpop.f32.mrb[0].mxu0
      %v2596 = vadd.f32 0.0, %v2595
      %v2597 = vpop.f32.mrb[0].mxu0
      %v2598 = vadd.f32 0.0, %v2597
      %v2599 = vpop.f32.mrb[0].mxu0
      %v2600 = vadd.f32 0.0, %v2599
      %v2601 = vpop.f32.mrb[0].mxu0
      %v2602 = vadd.f32 0.0, %v2601
      %2603 = vmatprep.mubr.bf16.mxu0 0
      %2604 = vmatmul.mubr.bf16.gmra.mrb[0].mxu0 %v2500
      %v2605 = vpop.f32.mrb[0].mxu0
      %v2606 = vadd.f32 0.0, %v2605
      %v2607 = vpop.f32.mrb[0].mxu0
      %v2608 = vadd.f32 0.0, %v2607
      %v2609 = vpop.f32.mrb[0].mxu0
      %v2610 = vadd.f32 0.0, %v2609
      %v2611 = vpop.f32.mrb[0].mxu0
      %v2612 = vadd.f32 0.0, %v2611
      %2613 = vmatprep.mubr.bf16.mxu0 0
      %2614 = vmatmul.mubr.bf16.gmra.mrb[0].mxu0 %v2503
      %v2615 = vpop.f32.mrb[0].mxu0
      %v2616 = vadd.f32 0.0, %v2615
      %v2617 = vpop.f32.mrb[0].mxu0
      %v2618 = vadd.f32 0.0, %v2617
      %v2619 = vpop.f32.mrb[0].mxu0
      %v2620 = vadd.f32 0.0, %v2619
      %v2621 = vpop.f32.mrb[0].mxu0
      %v2622 = vadd.f32 0.0, %v2621
      %2623 = vdwg.mxu0
      %v2624 = vadd.f32 %v2222, %v2546
      %v2625 = vadd.f32 %v2223, %v2548
      %v2626 = vadd.f32 %v2224, %v2550
      %v2627 = vadd.f32 %v2225, %v2552
      %v2628 = vadd.f32 %v2226, %v2556
      %v2629 = vadd.f32 %v2227, %v2558
      %v2630 = vadd.f32 %v2228, %v2560
      %v2631 = vadd.f32 %v2229, %v2562
      %v2632 = vadd.f32 %v2230, %v2566
      %v2633 = vadd.f32 %v2231, %v2568
      %v2634 = vadd.f32 %v2232, %v2570
      %v2635 = vadd.f32 %v2233, %v2572
      %v2636 = vadd.f32 %v2234, %v2576
      %v2637 = vadd.f32 %v2235, %v2578
      %v2638 = vadd.f32 %v2236, %v2580
      %v2639 = vadd.f32 %v2237, %v2582
      %v2640 = vadd.f32 %v2238, %v2586
      %v2641 = vadd.f32 %v2239, %v2588
      %v2642 = vadd.f32 %v2240, %v2590
      %v2643 = vadd.f32 %v2241, %v2592
      %v2644 = vadd.f32 %v2242, %v2596
      %v2645 = vadd.f32 %v2243, %v2598
      %v2646 = vadd.f32 %v2244, %v2600
      %v2647 = vadd.f32 %v2245, %v2602
      %v2648 = vadd.f32 %v2246, %v2606
      %v2649 = vadd.f32 %v2247, %v2608
      %v2650 = vadd.f32 %v2248, %v2610
      %v2651 = vadd.f32 %v2249, %v2612
      %v2652 = vadd.f32 %v2250, %v2616
      %v2653 = vadd.f32 %v2251, %v2618
      %v2654 = vadd.f32 %v2252, %v2620
      %v2655 = vadd.f32 %v2253, %v2622
      %v2664 = vrot.slane %v2004, 5
      %v2665 = vrot.slane %v2664, 4
      %v2666 = vrot.slane %v2005, 5
      %v2667 = vsel %vm803, %v2665, %v2666
      %v2668 = vrot.slane %v2666, 4
      %v2669 = vrot.slane %v2006, 5
      %v2670 = vsel %vm803, %v2668, %v2669
      %v2671 = vrot.slane %v2007, 5
      %v2672 = vrot.slane %v2671, 4
      %v2673 = vrot.slane %v2008, 5
      %v2674 = vsel %vm803, %v2672, %v2673
      %v2675 = vrot.slane %v2673, 4
      %v2676 = vrot.slane %v2009, 5
      %v2677 = vsel %vm803, %v2675, %v2676
      %v2678 = vrot.slane %v2010, 5
      %v2679 = vrot.slane %v2678, 4
      %v2680 = vrot.slane %v2011, 5
      %v2681 = vsel %vm803, %v2679, %v2680
      %v2682 = vrot.slane %v2680, 4
      %v2683 = vrot.slane %v2012, 5
      %v2684 = vsel %vm803, %v2682, %v2683
      %v2685 = vrot.slane %v2013, 5
      %v2686 = vrot.slane %v2685, 4
      %v2687 = vrot.slane %v2014, 5
      %v2688 = vsel %vm803, %v2686, %v2687
      %v2689 = vrot.slane %v2687, 4
      %v2690 = vrot.slane %v2015, 5
      %v2691 = vsel %vm803, %v2689, %v2690
      %v2692 = vrot.slane %v2016, 5
      %v2693 = vrot.slane %v2692, 4
      %v2694 = vrot.slane %v2017, 5
      %v2695 = vsel %vm803, %v2693, %v2694
      %v2696 = vrot.slane %v2694, 4
      %v2697 = vrot.slane %v2018, 5
      %v2698 = vsel %vm803, %v2696, %v2697
      %v2699 = vrot.slane %v2019, 5
      %v2700 = vrot.slane %v2699, 4
      %v2701 = vrot.slane %v2020, 5
      %v2702 = vsel %vm803, %v2700, %v2701
      %v2703 = vrot.slane %v2701, 4
      %v2704 = vrot.slane %v2021, 5
      %v2705 = vsel %vm803, %v2703, %v2704
      %v2706 = vrot.slane %v2022, 5
      %v2707 = vrot.slane %v2706, 4
      %v2708 = vrot.slane %v2023, 5
      %v2709 = vsel %vm803, %v2707, %v2708
      %v2710 = vrot.slane %v2708, 4
      %v2711 = vrot.slane %v2024, 5
      %v2712 = vsel %vm803, %v2710, %v2711
      %v2713 = vrot.slane %v2025, 5
      %v2714 = vrot.slane %v2713, 4
      %v2715 = vrot.slane %v2026, 5
      %v2716 = vsel %vm803, %v2714, %v2715
      %v2717 = vrot.slane %v2715, 4
      %v2718 = vrot.slane %v2027, 5
      %v2719 = vsel %vm803, %v2717, %v2718
      %s2720 = scalar_lea.vmem %s1, 32
      %v2721 = vld [vmem:[%s2720] sm:$0xf]
      %v2722 = vunpack.c.l.b16 %v2667
      %v2723 = vunpack.c.l.b16 %v2670
      %v2724 = vunpack.c.l.b16 %v2674
      %v2725 = vunpack.c.l.b16 %v2677
      %v2726 = vunpack.c.l.b16 %v2681
      %v2727 = vunpack.c.l.b16 %v2684
      %v2728 = vunpack.c.l.b16 %v2688
      %v2729 = vunpack.c.l.b16 %v2691
      %v2730 = vunpack.c.l.b16 %v2695
      %v2731 = vunpack.c.l.b16 %v2698
      %v2732 = vunpack.c.l.b16 %v2702
      %v2733 = vunpack.c.l.b16 %v2705
      %v2734 = vunpack.c.l.b16 %v2709
      %v2735 = vunpack.c.l.b16 %v2712
      %v2736 = vunpack.c.l.b16 %v2716
      %v2737 = vunpack.c.l.b16 %v2719
      %v2738 = vpack.c.b16 %v2723, %v2722
      %v2739 = vpack.c.b16 %v2725, %v2724
      %v2740 = vpack.c.b16 %v2727, %v2726
      %v2741 = vpack.c.b16 %v2729, %v2728
      %v2742 = vpack.c.b16 %v2731, %v2730
      %v2743 = vpack.c.b16 %v2733, %v2732
      %v2744 = vpack.c.b16 %v2735, %v2734
      %v2745 = vpack.c.b16 %v2737, %v2736
      %v2748 = vunpack.c.l.s4 1983009808
      %v2749 = vunpack.c.0.s8 %v2748
      %v2750 = vlaneseq
      %v2751 = vshrl.u32 %v2750, 7
      %v2752 = vsub.s32 %v2749, %v2751
      %v2753 = vrot.slane %v2721, %v2752
      %v2754 = vcombine.high %v2753, %v2753
      %v2756 = vsel %vm456, %v2738, 0
      %v2759 = vsel %vm456, %v2739, 0
      %v2762 = vsel %vm456, %v2740, 0
      %v2765 = vsel %vm456, %v2741, 0
      %v2768 = vsel %vm456, %v2742, 0
      %v2771 = vsel %vm456, %v2743, 0
      %v2774 = vsel %vm456, %v2744, 0
      %v2777 = vsel %vm456, %v2745, 0
      %v2780 = vsel %vm481, %v2753, 0
      %v2783 = vsel %vm481, %v2754, 0
      %2785 = vmatprep.subr.bf16.mxu0 %v2783
      %2786 = vmatpush1.bf16.msra.mxu0 %v2780
      %2787 = vmatprep.subr.bf16.mxu0 0
      %2788 = vmatpush1.bf16.msra.mxu0 0
      %2789 = vmatprep.subr.bf16.mxu0 0
      %2790 = vmatpush1.bf16.msra.mxu0 0
      %2791 = vmatprep.subr.bf16.mxu0 0
      %2792 = vmatpush1.bf16.msra.mxu0 0
      %2793 = vmatprep.subr.bf16.mxu0 0
      %2794 = vmatpush1.bf16.msra.mxu0 0
      %2795 = vmatprep.subr.bf16.mxu0 0
      %2796 = vmatpush1.bf16.msra.mxu0 0
      %2797 = vmatprep.subr.bf16.mxu0 0
      %2798 = vmatpush1.bf16.msra.mxu0 0
      %2799 = vmatprep.subr.bf16.mxu0 0
      %2800 = vmatpush1.bf16.msra.mxu0 0
      %2801 = vmatprep.subr.bf16.mxu0 0
      %2802 = vmatpush1.bf16.msra.mxu0 0
      %2803 = vmatprep.subr.bf16.mxu0 0
      %2804 = vmatpush1.bf16.msra.mxu0 0
      %2805 = vmatprep.subr.bf16.mxu0 0
      %2806 = vmatpush1.bf16.msra.mxu0 0
      %2807 = vmatprep.subr.bf16.mxu0 0
      %2808 = vmatpush1.bf16.msra.mxu0 0
      %2809 = vmatprep.subr.bf16.mxu0 0
      %2810 = vmatpush1.bf16.msra.mxu0 0
      %2811 = vmatprep.subr.bf16.mxu0 0
      %2812 = vmatpush1.bf16.msra.mxu0 0
      %2813 = vmatprep.subr.bf16.mxu0 0
      %2814 = vmatpush1.bf16.msra.mxu0 0
      %2815 = vmatprep.subr.bf16.mxu0 0
      %2816 = vmatpush1.bf16.msra.mxu0 0
      %2817 = vmatprep.mubr.bf16.mxu0 0
      %2818 = vmatmul.mubr.bf16.gmra.mrb[0].mxu0 %v2756
      %v2819 = vpop.f32.mrb[0].mxu0
      %v2820 = vadd.f32 0.0, %v2819
      %v2821 = vpop.f32.mrb[0].mxu0
      %v2822 = vadd.f32 0.0, %v2821
      %v2823 = vpop.f32.mrb[0].mxu0
      %v2824 = vadd.f32 0.0, %v2823
      %v2825 = vpop.f32.mrb[0].mxu0
      %v2826 = vadd.f32 0.0, %v2825
      %2827 = vmatprep.mubr.bf16.mxu0 0
      %2828 = vmatmul.mubr.bf16.gmra.mrb[0].mxu0 %v2759
      %v2829 = vpop.f32.mrb[0].mxu0
      %v2830 = vadd.f32 0.0, %v2829
      %v2831 = vpop.f32.mrb[0].mxu0
      %v2832 = vadd.f32 0.0, %v2831
      %v2833 = vpop.f32.mrb[0].mxu0
      %v2834 = vadd.f32 0.0, %v2833
      %v2835 = vpop.f32.mrb[0].mxu0
      %v2836 = vadd.f32 0.0, %v2835
      %2837 = vmatprep.mubr.bf16.mxu0 0
      %2838 = vmatmul.mubr.bf16.gmra.mrb[0].mxu0 %v2762
      %v2839 = vpop.f32.mrb[0].mxu0
      %v2840 = vadd.f32 0.0, %v2839
      %v2841 = vpop.f32.mrb[0].mxu0
      %v2842 = vadd.f32 0.0, %v2841
      %v2843 = vpop.f32.mrb[0].mxu0
      %v2844 = vadd.f32 0.0, %v2843
      %v2845 = vpop.f32.mrb[0].mxu0
      %v2846 = vadd.f32 0.0, %v2845
      %2847 = vmatprep.mubr.bf16.mxu0 0
      %2848 = vmatmul.mubr.bf16.gmra.mrb[0].mxu0 %v2765
      %v2849 = vpop.f32.mrb[0].mxu0
      %v2850 = vadd.f32 0.0, %v2849
      %v2851 = vpop.f32.mrb[0].mxu0
      %v2852 = vadd.f32 0.0, %v2851
      %v2853 = vpop.f32.mrb[0].mxu0
      %v2854 = vadd.f32 0.0, %v2853
      %v2855 = vpop.f32.mrb[0].mxu0
      %v2856 = vadd.f32 0.0, %v2855
      %2857 = vmatprep.mubr.bf16.mxu0 0
      %2858 = vmatmul.mubr.bf16.gmra.mrb[0].mxu0 %v2768
      %v2859 = vpop.f32.mrb[0].mxu0
      %v2860 = vadd.f32 0.0, %v2859
      %v2861 = vpop.f32.mrb[0].mxu0
      %v2862 = vadd.f32 0.0, %v2861
      %v2863 = vpop.f32.mrb[0].mxu0
      %v2864 = vadd.f32 0.0, %v2863
      %v2865 = vpop.f32.mrb[0].mxu0
      %v2866 = vadd.f32 0.0, %v2865
      %2867 = vmatprep.mubr.bf16.mxu0 0
      %2868 = vmatmul.mubr.bf16.gmra.mrb[0].mxu0 %v2771
      %v2869 = vpop.f32.mrb[0].mxu0
      %v2870 = vadd.f32 0.0, %v2869
      %v2871 = vpop.f32.mrb[0].mxu0
      %v2872 = vadd.f32 0.0, %v2871
      %v2873 = vpop.f32.mrb[0].mxu0
      %v2874 = vadd.f32 0.0, %v2873
      %v2875 = vpop.f32.mrb[0].mxu0
      %v2876 = vadd.f32 0.0, %v2875
      %2877 = vmatprep.mubr.bf16.mxu0 0
      %2878 = vmatmul.mubr.bf16.gmra.mrb[0].mxu0 %v2774
      %v2879 = vpop.f32.mrb[0].mxu0
      %v2880 = vadd.f32 0.0, %v2879
      %v2881 = vpop.f32.mrb[0].mxu0
      %v2882 = vadd.f32 0.0, %v2881
      %v2883 = vpop.f32.mrb[0].mxu0
      %v2884 = vadd.f32 0.0, %v2883
      %v2885 = vpop.f32.mrb[0].mxu0
      %v2886 = vadd.f32 0.0, %v2885
      %2887 = vmatprep.mubr.bf16.mxu0 0
      %2888 = vmatmul.mubr.bf16.gmra.mrb[0].mxu0 %v2777
      %v2889 = vpop.f32.mrb[0].mxu0
      %v2890 = vadd.f32 0.0, %v2889
      %v2891 = vpop.f32.mrb[0].mxu0
      %v2892 = vadd.f32 0.0, %v2891
      %v2893 = vpop.f32.mrb[0].mxu0
      %v2894 = vadd.f32 0.0, %v2893
      %v2895 = vpop.f32.mrb[0].mxu0
      %v2896 = vadd.f32 0.0, %v2895
      %2897 = vdwg.mxu0
      %v2898 = vadd.f32 %v2624, %v2820
      %v2899 = vadd.f32 %v2625, %v2822
      %v2900 = vadd.f32 %v2626, %v2824
      %v2901 = vadd.f32 %v2627, %v2826
      %v2902 = vadd.f32 %v2628, %v2830
      %v2903 = vadd.f32 %v2629, %v2832
      %v2904 = vadd.f32 %v2630, %v2834
      %v2905 = vadd.f32 %v2631, %v2836
      %v2906 = vadd.f32 %v2632, %v2840
      %v2907 = vadd.f32 %v2633, %v2842
      %v2908 = vadd.f32 %v2634, %v2844
      %v2909 = vadd.f32 %v2635, %v2846
      %v2910 = vadd.f32 %v2636, %v2850
      %v2911 = vadd.f32 %v2637, %v2852
      %v2912 = vadd.f32 %v2638, %v2854
      %v2913 = vadd.f32 %v2639, %v2856
      %v2914 = vadd.f32 %v2640, %v2860
      %v2915 = vadd.f32 %v2641, %v2862
      %v2916 = vadd.f32 %v2642, %v2864
      %v2917 = vadd.f32 %v2643, %v2866
      %v2918 = vadd.f32 %v2644, %v2870
      %v2919 = vadd.f32 %v2645, %v2872
      %v2920 = vadd.f32 %v2646, %v2874
      %v2921 = vadd.f32 %v2647, %v2876
      %v2922 = vadd.f32 %v2648, %v2880
      %v2923 = vadd.f32 %v2649, %v2882
      %v2924 = vadd.f32 %v2650, %v2884
      %v2925 = vadd.f32 %v2651, %v2886
      %v2926 = vadd.f32 %v2652, %v2890
      %v2927 = vadd.f32 %v2653, %v2892
      %v2928 = vadd.f32 %v2654, %v2894
      %v2929 = vadd.f32 %v2655, %v2896
      %v2930 = vld [vmem:[%s2] sm:$0x3]
      %v2932 = vlaneseq
      %v2933 = vshrl.u32 %v2932, 7
      %v2934 = vsub.s32 0, %v2933
      %v2935 = vrot.slane %v2930, %v2934
      %v2936 = vlaneseq
      %v2937 = vshrl.u32 %v2936, 7
      %v2938 = vsub.s32 1, %v2937
      %v2939 = vrot.slane %v2930, %v2938
      %v2942 = vadd.f32 %v2898, %v2935
      %v2943 = vadd.f32 %v2899, %v2939
      %v2944 = vadd.f32 %v2900, %v2935
      %v2945 = vadd.f32 %v2901, %v2939
      %v2946 = vadd.f32 %v2902, %v2935
      %v2947 = vadd.f32 %v2903, %v2939
      %v2948 = vadd.f32 %v2904, %v2935
      %v2949 = vadd.f32 %v2905, %v2939
      %v2950 = vadd.f32 %v2906, %v2935
      %v2951 = vadd.f32 %v2907, %v2939
      %v2952 = vadd.f32 %v2908, %v2935
      %v2953 = vadd.f32 %v2909, %v2939
      %v2954 = vadd.f32 %v2910, %v2935
      %v2955 = vadd.f32 %v2911, %v2939
      %v2956 = vadd.f32 %v2912, %v2935
      %v2957 = vadd.f32 %v2913, %v2939
      %v2958 = vadd.f32 %v2914, %v2935
      %v2959 = vadd.f32 %v2915, %v2939
      %v2960 = vadd.f32 %v2916, %v2935
      %v2961 = vadd.f32 %v2917, %v2939
      %v2962 = vadd.f32 %v2918, %v2935
      %v2963 = vadd.f32 %v2919, %v2939
      %v2964 = vadd.f32 %v2920, %v2935
      %v2965 = vadd.f32 %v2921, %v2939
      %v2966 = vadd.f32 %v2922, %v2935
      %v2967 = vadd.f32 %v2923, %v2939
      %v2968 = vadd.f32 %v2924, %v2935
      %v2969 = vadd.f32 %v2925, %v2939
      %v2970 = vadd.f32 %v2926, %v2935
      %v2971 = vadd.f32 %v2927, %v2939
      %v2972 = vadd.f32 %v2928, %v2935
      %v2973 = vadd.f32 %v2929, %v2939
      %v2974 = vmax.f32 %v2942, 0.0
      %v2975 = vmax.f32 %v2943, 0.0
      %v2976 = vmax.f32 %v2944, 0.0
      %v2977 = vmax.f32 %v2945, 0.0
      %v2978 = vmax.f32 %v2946, 0.0
      %v2979 = vmax.f32 %v2947, 0.0
      %v2980 = vmax.f32 %v2948, 0.0
      %v2981 = vmax.f32 %v2949, 0.0
      %v2982 = vmax.f32 %v2950, 0.0
      %v2983 = vmax.f32 %v2951, 0.0
      %v2984 = vmax.f32 %v2952, 0.0
      %v2985 = vmax.f32 %v2953, 0.0
      %v2986 = vmax.f32 %v2954, 0.0
      %v2987 = vmax.f32 %v2955, 0.0
      %v2988 = vmax.f32 %v2956, 0.0
      %v2989 = vmax.f32 %v2957, 0.0
      %v2990 = vmax.f32 %v2958, 0.0
      %v2991 = vmax.f32 %v2959, 0.0
      %v2992 = vmax.f32 %v2960, 0.0
      %v2993 = vmax.f32 %v2961, 0.0
      %v2994 = vmax.f32 %v2962, 0.0
      %v2995 = vmax.f32 %v2963, 0.0
      %v2996 = vmax.f32 %v2964, 0.0
      %v2997 = vmax.f32 %v2965, 0.0
      %v2998 = vmax.f32 %v2966, 0.0
      %v2999 = vmax.f32 %v2967, 0.0
      %v3000 = vmax.f32 %v2968, 0.0
      %v3001 = vmax.f32 %v2969, 0.0
      %v3002 = vmax.f32 %v2970, 0.0
      %v3003 = vmax.f32 %v2971, 0.0
      %v3004 = vmax.f32 %v2972, 0.0
      %v3005 = vmax.f32 %v2973, 0.0
      %v3006 = vpack.c.bf16 %v2976, %v2974
      %v3007 = vpack.c.bf16 %v2977, %v2975
      %v3008 = vpack.c.bf16 %v2980, %v2978
      %v3009 = vpack.c.bf16 %v2981, %v2979
      %v3010 = vpack.c.bf16 %v2984, %v2982
      %v3011 = vpack.c.bf16 %v2985, %v2983
      %v3012 = vpack.c.bf16 %v2988, %v2986
      %v3013 = vpack.c.bf16 %v2989, %v2987
      %v3014 = vpack.c.bf16 %v2992, %v2990
      %v3015 = vpack.c.bf16 %v2993, %v2991
      %v3016 = vpack.c.bf16 %v2996, %v2994
      %v3017 = vpack.c.bf16 %v2997, %v2995
      %v3018 = vpack.c.bf16 %v3000, %v2998
      %v3019 = vpack.c.bf16 %v3001, %v2999
      %v3020 = vpack.c.bf16 %v3004, %v3002
      %v3021 = vpack.c.bf16 %v3005, %v3003
      %v3038 = vunpack.c.l.b16 %v3006
      %v3039 = vunpack.c.l.b16 %v3007
      %v3040 = vunpack.c.h.b16 %v3006
      %v3041 = vunpack.c.h.b16 %v3007
      %v3042 = vunpack.c.l.b16 %v3008
      %v3043 = vunpack.c.l.b16 %v3009
      %v3044 = vunpack.c.h.b16 %v3008
      %v3045 = vunpack.c.h.b16 %v3009
      %v3046 = vunpack.c.l.b16 %v3010
      %v3047 = vunpack.c.l.b16 %v3011
      %v3048 = vunpack.c.h.b16 %v3010
      %v3049 = vunpack.c.h.b16 %v3011
      %v3050 = vunpack.c.l.b16 %v3012
      %v3051 = vunpack.c.l.b16 %v3013
      %v3052 = vunpack.c.h.b16 %v3012
      %v3053 = vunpack.c.h.b16 %v3013
      %v3054 = vunpack.c.l.b16 %v3014
      %v3055 = vunpack.c.l.b16 %v3015
      %v3056 = vunpack.c.h.b16 %v3014
      %v3057 = vunpack.c.h.b16 %v3015
      %v3058 = vunpack.c.l.b16 %v3016
      %v3059 = vunpack.c.l.b16 %v3017
      %v3060 = vunpack.c.h.b16 %v3016
      %v3061 = vunpack.c.h.b16 %v3017
      %v3062 = vunpack.c.l.b16 %v3018
      %v3063 = vunpack.c.l.b16 %v3019
      %v3064 = vunpack.c.h.b16 %v3018
      %v3065 = vunpack.c.h.b16 %v3019
      %v3066 = vunpack.c.l.b16 %v3020
      %v3067 = vunpack.c.l.b16 %v3021
      %v3068 = vunpack.c.h.b16 %v3020
      %v3069 = vunpack.c.h.b16 %v3021
      %v3070 = vpack.c.b16 %v3039, %v3038
      %v3071 = vpack.c.b16 %v3041, %v3040
      %v3072 = vpack.c.b16 %v3043, %v3042
      %v3073 = vpack.c.b16 %v3045, %v3044
      %v3074 = vpack.c.b16 %v3047, %v3046
      %v3075 = vpack.c.b16 %v3049, %v3048
      %v3076 = vpack.c.b16 %v3051, %v3050
      %v3077 = vpack.c.b16 %v3053, %v3052
      %v3078 = vpack.c.b16 %v3055, %v3054
      %v3079 = vpack.c.b16 %v3057, %v3056
      %v3080 = vpack.c.b16 %v3059, %v3058
      %v3081 = vpack.c.b16 %v3061, %v3060
      %v3082 = vpack.c.b16 %v3063, %v3062
      %v3083 = vpack.c.b16 %v3065, %v3064
      %v3084 = vpack.c.b16 %v3067, %v3066
      %v3085 = vpack.c.b16 %v3069, %v3068
      %3102 = vst [vmem:[%s194] sm:$0xff] %v3070
      %3103 = vst [vmem:[%s194 + $0x8] sm:$0xff] %v3071
      %3104 = vst [vmem:[%s194 + $0x10] sm:$0xff] %v3072
      %3105 = vst [vmem:[%s194 + $0x18] sm:$0xff] %v3073
      %3106 = vst [vmem:[%s194 + $0x20] sm:$0xff] %v3074
      %3107 = vst [vmem:[%s194 + $0x28] sm:$0xff] %v3075
      %3108 = vst [vmem:[%s194 + $0x30] sm:$0xff] %v3076
      %3109 = vst [vmem:[%s194 + $0x38] sm:$0xff] %v3077
      %3110 = vst [vmem:[%s194 + $0x40] sm:$0xff] %v3078
      %3111 = vst [vmem:[%s194 + $0x48] sm:$0xff] %v3079
      %3112 = vst [vmem:[%s194 + $0x50] sm:$0xff] %v3080
      %3113 = vst [vmem:[%s194 + $0x58] sm:$0xff] %v3081
      %3114 = vst [vmem:[%s194 + $0x60] sm:$0xff] %v3082
      %3115 = vst [vmem:[%s194 + $0x68] sm:$0xff] %v3083
      %3116 = vst [vmem:[%s194 + $0x70] sm:$0xff] %v3084
      %3117 = vst [vmem:[%s194 + $0x78] sm:$0xff] %v3085
      %s3118 = smul.u32 8, %s19
      %p3119 = scmp.lt.s32.totalorder %s18, 1
      %s3120 = scalar_select %p3119, %s18, 1
      %p3121 = scmp.lt.s32.totalorder %s3118, 15
      %s3122 = scalar_select %p3121, %s3118, 15
      %s3123 = smul.addr %s3122, 4
      %s3124 = smul.addr %s3120, 64
      %s3125 = sadd.s32 %s3123, %s3124
      %s3126 = smul.addr %s3125, 4
      %s3127 = scalar_lea.vmem %s3, %s3126
      // Predicated region
      $region33: #{density_regressor_forward.3} parent=31 // pred_check
        %p3128 = pneg %p114
      $region34: #{density_regressor_forward.3} parent=31 // pred_check_branch
        %3130 = sbr.rel (%p3128) target = $region36
      $region35: #{density_regressor_forward.3} parent=31 // pred_region
        %s3131 = smul.u32 8, %s19
      $region36: #{density_regressor_forward.3} parent=31 // pred_fallthru
        _
    $region32: #{density_regressor_forward.3} parent=5 // pred_fallthru
      _
    %p3132 = scmp.le.s32.totalorder 2, %s9
    // Predicated region
    $region37: #{density_regressor_forward.3} parent=5 // pred_check
      %p3133 = pneg %p3132
    $region38: #{density_regressor_forward.3} parent=5 // pred_check_branch
      %3135 = sbr.rel (%p3133) target = $region40
    $region39: #{density_regressor_forward.3} parent=5 // pred_region
      %s3136 = ssub.s32 %s9, 2
      // Predicated region
      $region41: #{density_regressor_forward.3} parent=39 // pred_check
        %p3137 = pneg %p120
      $region42: #{density_regressor_forward.3} parent=39 // pred_check_branch
        %3139 = sbr.rel (%p3137) target = $region44
      $region43: #{density_regressor_forward.3} parent=39 // pred_region
        %s3140 = smul.u32 8, %s21
        %p3141 = scmp.lt.s32.totalorder %s20, 1
        %s3142 = scalar_select %p3141, %s20, 1
        %p3143 = scmp.lt.s32.totalorder %s3140, 15
        %s3144 = scalar_select %p3143, %s3140, 15
        %s3145 = smul.addr %s3144, 4
        %s3146 = smul.addr %s3142, 64
        %s3147 = sadd.s32 %s3145, %s3146
        %s3148 = smul.addr %s3147, 4
        %s3149 = scalar_lea.vmem %s3, %s3148
      $region44: #{density_regressor_forward.3} parent=39 // pred_fallthru
        _
    $region40: #{density_regressor_forward.3} parent=5 // pred_fallthru
      _
  $region6: #{density_regressor_forward.3} parent=0 // loop_footer
    %s13 = sadd.s32 1, %s9
  $region7: #{density_regressor_forward.3} parent=0 // loop_footer_branch
    %8 = sbr.rel target = $region3
  $region8: #{density_regressor_forward.3} parent=0 // loop_exit
    _

// kernel: density_regressor_forward.4
$region0: #{density_regressor_forward.4}
  #allocation0 [shape = 'u32[]', space=smem, size = 0x4, offset = 0x4, fixed_abs, tag = 'smem constant byte address 0x4 - core index']
  #allocation1 [shape = 'u32[144,128]{1,0:T(1,128)}', space=vmem, size = 0x12000, scoped, tag = 'internal scratch']
  %s0 = inlined_call_operand.vmem [shape: bf16[2,18,18,256], index: 0, kind: input, shape index: {}]
  %s1 = inlined_call_operand.vmem [shape: bf16[9,256,256], index: 1, kind: input, shape index: {}]
  %s2 = inlined_call_operand.vmem [shape: f32[1,256], index: 2, kind: input, shape index: {}]
  %s3 = inlined_call_operand.vmem [shape: bf16[2,16,16,256], index: 3, kind: output, shape index: {}]
  %s4 = sld [smem:[#allocation0]]
  $region45: #{density_regressor_forward.4} parent=0
    _
  %s6 = ssub.s32 1, %s4
  %s7 = scalar_select 0, %s6, %s4
  loop: start=0, step=1, limit=6
  $region2: #{density_regressor_forward.4} parent=0 // loop_pre_header
    _
  $region3: #{density_regressor_forward.4} parent=0 // loop_header
    %s9 = sphi 0, %s13
    %p10 = scmp.ge.s32.totalorder %s9, 6
    %s16 = sphi 0, %s28
    %s17 = sphi 0, %s24
    %s18 = sphi 0, %s16
    %s19 = sphi 0, %s17
    %s20 = sphi 0, %s18
    %s21 = sphi 0, %s19
    %s31 = sphi 0, %s33
    %s34 = sphi 0, %s31
    %s35 = sphi 0, %s34
    %s51 = sphi 0, %s35
    %s55 = sphi 0, %s55
    %s57 = sphi 0, %s55
    %s58 = sphi 0, %s57
    %s72 = sphi 0, %s58
    %s76 = sphi 0, %s76
    %s78 = sphi 0, %s76
    %s79 = sphi 0, %s78
    %s93 = sphi 0, %s79
    %s101 = sphi 0, %s103
    %s104 = sphi 0, %s101
    %s105 = sphi 0, %s104
    %s121 = sphi 0, %s105
  $region4: #{density_regressor_forward.4} parent=0 // loop_header_branch
    %12 = sbr.rel (%p10) target = $region8
  $region5: #{density_regressor_forward.4} parent=0 // loop_body
    %s14 = ssub.s32 %s9, 1
    %s15 = ssub.s32 %s9, 2
    %s22 = sadd.s32 1, %s17
    %p23 = scmp.ge.s32.totalorder %s22, 2
    %s24 = scalar_select %p23, 0, %s22
    %s25 = sadd.s32 1, %s16
    %s26 = scalar_select %p23, %s25, %s16
    %p27 = scmp.ge.s32.totalorder %s26, 2
    %s28 = scalar_select %p27, 0, %s26
    %s29 = ssub.s32 %s16, %s28
    %p30 = scmp.eq.s32.totalorder %s29, 0
    %s32 = sadd.s32 %s31, 1
    %s33 = scalar_select %p30, %s31, %s32
    %p36 = pneg %p30
    %p37 = scmp.eq.s32.totalorder %s9, 3
    %p38 = por %p36, %p37
    %p39 = scmp.ne.s32.totalorder %s31, %s34
    %p40 = scmp.eq.s32.totalorder %s9, 0
    %p41 = por %p39, %p40
    %p42 = scmp.ne.s32.totalorder %s31, %s34
    %p43 = scmp.eq.s32.totalorder %s14, 3
    %p44 = por %p42, %p43
    %p45 = scmp.ne.s32.totalorder %s34, %s35
    %p46 = scmp.eq.s32.totalorder %s14, 0
    %p47 = por %p45, %p46
    %p48 = scmp.ne.s32.totalorder %s34, %s35
    %p49 = scmp.eq.s32.totalorder %s15, 3
    %p50 = por %p48, %p49
    %p52 = scmp.ne.s32.totalorder %s35, %s51
    %p53 = scmp.eq.s32.totalorder %s15, 0
    %p54 = por %p52, %p53
    %s56 = sadd.s32 %s55, 1
    %p59 = scmp.eq.s32.totalorder %s9, 3
    %p60 = scmp.ne.s32.totalorder %s55, %s57
    %p61 = scmp.eq.s32.totalorder %s9, 0
    %p62 = por %p60, %p61
    %p63 = scmp.ne.s32.totalorder %s55, %s57
    %p64 = scmp.eq.s32.totalorder %s14, 3
    %p65 = por %p63, %p64
    %p66 = scmp.ne.s32.totalorder %s57, %s58
    %p67 = scmp.eq.s32.totalorder %s14, 0
    %p68 = por %p66, %p67
    %p69 = scmp.ne.s32.totalorder %s57, %s58
    %p70 = scmp.eq.s32.totalorder %s15, 3
    %p71 = por %p69, %p70
    %p73 = scmp.ne.s32.totalorder %s58, %s72
    %p74 = scmp.eq.s32.totalorder %s15, 0
    %p75 = por %p73, %p74
    %s77 = sadd.s32 %s76, 1
    %p80 = scmp.eq.s32.totalorder %s9, 3
    %p81 = scmp.ne.s32.totalorder %s76, %s78
    %p82 = scmp.eq.s32.totalorder %s9, 0
    %p83 = por %p81, %p82
    %p84 = scmp.ne.s32.totalorder %s76, %s78
    %p85 = scmp.eq.s32.totalorder %s14, 3
    %p86 = por %p84, %p85
    %p87 = scmp.ne.s32.totalorder %s78, %s79
    %p88 = scmp.eq.s32.totalorder %s14, 0
    %p89 = por %p87, %p88
    %p90 = scmp.ne.s32.totalorder %s78, %s79
    %p91 = scmp.eq.s32.totalorder %s15, 3
    %p92 = por %p90, %p91
    %p94 = scmp.ne.s32.totalorder %s79, %s93
    %p95 = scmp.eq.s32.totalorder %s15, 0
    %p96 = por %p94, %p95
    %s97 = ssub.s32 %s16, %s28
    %s98 = ssub.s32 %s17, %s24
    %s99 = sor.u32 %s97, %s98
    %p100 = scmp.eq.s32.totalorder %s99, 0
    %s102 = sadd.s32 %s101, 1
    %s103 = scalar_select %p100, %s101, %s102
    %p106 = pneg %p100
    %p107 = scmp.eq.s32.totalorder %s9, 3
    %p108 = por %p106, %p107
    %p109 = scmp.ne.s32.totalorder %s101, %s104
    %p110 = scmp.eq.s32.totalorder %s9, 0
    %p111 = por %p109, %p110
    %p112 = scmp.ne.s32.totalorder %s101, %s104
    %p113 = scmp.eq.s32.totalorder %s14, 3
    %p114 = por %p112, %p113
    %p115 = scmp.ne.s32.totalorder %s104, %s105
    %p116 = scmp.eq.s32.totalorder %s14, 0
    %p117 = por %p115, %p116
    %p118 = scmp.ne.s32.totalorder %s104, %s105
    %p119 = scmp.eq.s32.totalorder %s15, 3
    %p120 = por %p118, %p119
    %p122 = scmp.ne.s32.totalorder %s105, %s121
    %p123 = scmp.eq.s32.totalorder %s15, 0
    %p124 = por %p122, %p123
    %p125 = scmp.le.s32.totalorder 1, %s9
    %p126 = scmp.lt.s32.totalorder %s9, 5
    %p127 = pnand %p125, %p126
    %p128 = pneg %p127
    // Predicated region
    $region9: #{density_regressor_forward.4} parent=5 // pred_check
      _
    $region10: #{density_regressor_forward.4} parent=5 // pred_check_branch
      %130 = sbr.rel (%p127) target = $region12
    $region11: #{density_regressor_forward.4} parent=5 // pred_region
      %s131 = ssub.s32 %s9, 1
      // Predicated region
      $region13: #{density_regressor_forward.4} parent=11 // pred_check
        %p132 = pneg %p68
      $region14: #{density_regressor_forward.4} parent=11 // pred_check_branch
        %134 = sbr.rel (%p132) target = $region16
      $region15: #{density_regressor_forward.4} parent=11 // pred_region
        _
      $region16: #{density_regressor_forward.4} parent=11 // pred_fallthru
        _
      // Predicated region
      $region17: #{density_regressor_forward.4} parent=11 // pred_check
        %p135 = pneg %p89
      $region18: #{density_regressor_forward.4} parent=11 // pred_check_branch
        %137 = sbr.rel (%p135) target = $region20
      $region19: #{density_regressor_forward.4} parent=11 // pred_region
        _
      $region20: #{density_regressor_forward.4} parent=11 // pred_fallthru
        _
    $region12: #{density_regressor_forward.4} parent=5 // pred_fallthru
      _
    %p138 = scmp.lt.s32.totalorder %s9, 4
    // Predicated region
    $region21: #{density_regressor_forward.4} parent=5 // pred_check
      %p139 = pneg %p138
    $region22: #{density_regressor_forward.4} parent=5 // pred_check_branch
      %141 = sbr.rel (%p139) target = $region24
    $region23: #{density_regressor_forward.4} parent=5 // pred_region
      // Predicated region
      $region25: #{density_regressor_forward.4} parent=23 // pred_check
        %p142 = pneg %p41
      $region26: #{density_regressor_forward.4} parent=23 // pred_check_branch
        %144 = sbr.rel (%p142) target = $region28
      $region27: #{density_regressor_forward.4} parent=23 // pred_region
        %p145 = scmp.lt.s32.totalorder %s16, 1
        %s146 = scalar_select %p145, %s16, 1
        %s147 = smul.addr %s146, 108
        %s148 = smul.addr %s147, 4
        %s149 = scalar_lea.vmem %s0, %s148
      $region28: #{density_regressor_forward.4} parent=23 // pred_fallthru
        _
    $region24: #{density_regressor_forward.4} parent=5 // pred_fallthru
      _
    %p150 = scmp.le.s32.totalorder 1, %s9
    %p151 = scmp.lt.s32.totalorder %s9, 5
    %p152 = pnand %p150, %p151
    %p153 = pneg %p152
    // Predicated region
    $region29: #{density_regressor_forward.4} parent=5 // pred_check
      _
    $region30: #{density_regressor_forward.4} parent=5 // pred_check_branch
      %155 = sbr.rel (%p152) target = $region32
    $region31: #{density_regressor_forward.4} parent=5 // pred_region
      %s156 = ssub.s32 %s9, 1
      %p157 = scmp.lt.s32.totalorder %s18, 1
      %s158 = scalar_select %p157, %s18, 1
      %s159 = smul.addr %s158, 108
      %s160 = smul.addr %s159, 4
      %s161 = scalar_lea.vmem %s0, %s160
      %p162 = pneg %p47
      %p163 = pneg %p44
      %p164 = pneg %p68
      %p165 = pneg %p65
      %p166 = pneg %p89
      %p167 = pneg %p86
      %p168 = pneg %p117
      %p169 = pneg %p114
      %s170 = smul.u32 8, %s19
      %p171 = scmp.lt.s32.totalorder %s18, 1
      %s172 = scalar_select %p171, %s18, 1
      %p173 = scmp.lt.s32.totalorder %s170, 15
      %s174 = scalar_select %p173, %s170, 15
      %s175 = smul.addr %s174, 4
      %s176 = smul.addr %s172, 64
      %s177 = sadd.s32 %s175, %s176
      %s178 = smul.addr %s177, 4
      %s179 = scalar_lea.vmem %s3, %s178
      %p180 = scmp.lt.s32.totalorder %s18, 1
      %s181 = scalar_select %p180, %s18, 1
      %s182 = smul.addr %s181, 108
      %s183 = smul.addr %s182, 4
      %s184 = scalar_lea.vmem %s0, %s183
      %s185 = smul.u32 8, %s19
      %p186 = scmp.lt.s32.totalorder %s18, 1
      %s187 = scalar_select %p186, %s18, 1
      %p188 = scmp.lt.s32.totalorder %s185, 15
      %s189 = scalar_select %p188, %s185, 15
      %s190 = smul.addr %s189, 4
      %s191 = smul.addr %s187, 64
      %s192 = sadd.s32 %s190, %s191
      %s193 = smul.addr %s192, 4
      %s194 = scalar_lea.vmem %s3, %s193
      %s195 = smul.u32 8, %s19
      %s196 = smul.u32 %s19, 8
      %s197 = smul.u32 %s196, 6
      %s198 = smul.addr %s197, 4
      %s199 = scalar_lea.vmem %s184, %s198
      %v200 = vld [vmem:[%s199] sm:$0xff]
      %v201 = vld [vmem:[%s199 + $0x8] sm:$0xff]
      %v202 = vld [vmem:[%s199 + $0x10] sm:$0x11]
      %v203 = vld [vmem:[%s199 + $0x18] sm:$0xff]
      %v204 = vld [vmem:[%s199 + $0x20] sm:$0xff]
      %v205 = vld [vmem:[%s199 + $0x28] sm:$0x11]
      %v206 = vld [vmem:[%s199 + $0x30] sm:$0xff]
      %v207 = vld [vmem:[%s199 + $0x38] sm:$0xff]
      %v208 = vld [vmem:[%s199 + $0x40] sm:$0x11]
      %v209 = vld [vmem:[%s199 + $0x48] sm:$0xff]
      %v210 = vld [vmem:[%s199 + $0x50] sm:$0xff]
      %v211 = vld [vmem:[%s199 + $0x58] sm:$0x11]
      %v212 = vld [vmem:[%s199 + $0x60] sm:$0xff]
      %v213 = vld [vmem:[%s199 + $0x68] sm:$0xff]
      %v214 = vld [vmem:[%s199 + $0x70] sm:$0x11]
      %v215 = vld [vmem:[%s199 + $0x78] sm:$0xff]
      %v216 = vld [vmem:[%s199 + $0x80] sm:$0xff]
      %v217 = vld [vmem:[%s199 + $0x88] sm:$0x11]
      %v218 = vld [vmem:[%s199 + $0x90] sm:$0xff]
      %v219 = vld [vmem:[%s199 + $0x98] sm:$0xff]
      %v220 = vld [vmem:[%s199 + $0xa0] sm:$0x11]
      %v221 = vld [vmem:[%s199 + $0xa8] sm:$0xff]
      %v222 = vld [vmem:[%s199 + $0xb0] sm:$0xff]
      %v223 = vld [vmem:[%s199 + $0xb8] sm:$0x11]
      %v224 = vld [vmem:[%s1] sm:$0xff]
      %v225 = vld [vmem:[%s1 + $0x8] sm:$0xff]
      %v226 = vld [vmem:[%s1 + $0x10] sm:$0xff]
      %v227 = vld [vmem:[%s1 + $0x18] sm:$0xff]
      %v228 = vld [vmem:[%s1 + $0x20] sm:$0xff]
      %v229 = vld [vmem:[%s1 + $0x28] sm:$0xff]
      %v230 = vld [vmem:[%s1 + $0x30] sm:$0xff]
      %v231 = vld [vmem:[%s1 + $0x38] sm:$0xff]
      %v232 = vld [vmem:[%s1 + $0x40] sm:$0xff]
      %v233 = vld [vmem:[%s1 + $0x48] sm:$0xff]
      %v234 = vld [vmem:[%s1 + $0x50] sm:$0xff]
      %v235 = vld [vmem:[%s1 + $0x58] sm:$0xff]
      %v236 = vld [vmem:[%s1 + $0x60] sm:$0xff]
      %v237 = vld [vmem:[%s1 + $0x68] sm:$0xff]
      %v238 = vld [vmem:[%s1 + $0x70] sm:$0xff]
      %v239 = vld [vmem:[%s1 + $0x78] sm:$0xff]
      %v240 = vld [vmem:[%s1 + $0x80] sm:$0xff]
      %v241 = vld [vmem:[%s1 + $0x88] sm:$0xff]
      %v242 = vld [vmem:[%s1 + $0x90] sm:$0xff]
      %v243 = vld [vmem:[%s1 + $0x98] sm:$0xff]
      %v244 = vld [vmem:[%s1 + $0xa0] sm:$0xff]
      %v245 = vld [vmem:[%s1 + $0xa8] sm:$0xff]
      %v246 = vld [vmem:[%s1 + $0xb0] sm:$0xff]
      %v247 = vld [vmem:[%s1 + $0xb8] sm:$0xff]
      %v248 = vld [vmem:[%s1 + $0xc0] sm:$0xff]
      %v249 = vld [vmem:[%s1 + $0xc8] sm:$0xff]
      %v250 = vld [vmem:[%s1 + $0xd0] sm:$0xff]
      %v251 = vld [vmem:[%s1 + $0xd8] sm:$0xff]
      %v252 = vld [vmem:[%s1 + $0xe0] sm:$0xff]
      %v253 = vld [vmem:[%s1 + $0xe8] sm:$0xff]
      %v254 = vld [vmem:[%s1 + $0xf0] sm:$0xff]
      %v255 = vld [vmem:[%s1 + $0xf8] sm:$0xff]
      %vm256 = vsmask.f32 3328
      %vm257 = vsmask.f32 7440
      %vm258 = vmor %vm256, %vm257
      %v260 = vshrl.u32 %v200, 16
      %v262 = vrot.slane %v260, 4
      %v263 = vshll.u32 %v200, 16
      %v265 = vrot.slane %v263, 5
      %v266 = vor.u32 %v262, %v265
      %v267 = vrot.slane %v266, 4
      %v269 = vshll.u32 %v201, 16
      %v271 = vrot.slane %v269, 5
      %v272 = vsel %vm258, %v267, %v271
      %v273 = vshrl.u32 %v201, 16
      %v275 = vrot.slane %v273, 4
      %v276 = vor.u32 %v275, %v271
      %v277 = vrot.slane %v276, 4
      %v279 = vshll.u32 %v202, 16
      %v281 = vrot.slane %v279, 5
      %v282 = vsel %vm258, %v277, %v281
      %v284 = vshrl.u32 %v203, 16
      %v286 = vrot.slane %v284, 4
      %v287 = vshll.u32 %v203, 16
      %v289 = vrot.slane %v287, 5
      %v290 = vor.u32 %v286, %v289
      %v291 = vrot.slane %v290, 4
      %v293 = vshll.u32 %v204, 16
      %v295 = vrot.slane %v293, 5
      %v296 = vsel %vm258, %v291, %v295
      %v297 = vshrl.u32 %v204, 16
      %v299 = vrot.slane %v297, 4
      %v300 = vor.u32 %v299, %v295
      %v301 = vrot.slane %v300, 4
      %v303 = vshll.u32 %v205, 16
      %v305 = vrot.slane %v303, 5
      %v306 = vsel %vm258, %v301, %v305
      %v308 = vshrl.u32 %v206, 16
      %v310 = vrot.slane %v308, 4
      %v311 = vshll.u32 %v206, 16
      %v313 = vrot.slane %v311, 5
      %v314 = vor.u32 %v310, %v313
      %v315 = vrot.slane %v314, 4
      %v317 = vshll.u32 %v207, 16
      %v319 = vrot.slane %v317, 5
      %v320 = vsel %vm258, %v315, %v319
      %v321 = vshrl.u32 %v207, 16
      %v323 = vrot.slane %v321, 4
      %v324 = vor.u32 %v323, %v319
      %v325 = vrot.slane %v324, 4
      %v327 = vshll.u32 %v208, 16
      %v329 = vrot.slane %v327, 5
      %v330 = vsel %vm258, %v325, %v329
      %v332 = vshrl.u32 %v209, 16
      %v334 = vrot.slane %v332, 4
      %v335 = vshll.u32 %v209, 16
      %v337 = vrot.slane %v335, 5
      %v338 = vor.u32 %v334, %v337
      %v339 = vrot.slane %v338, 4
      %v341 = vshll.u32 %v210, 16
      %v343 = vrot.slane %v341, 5
      %v344 = vsel %vm258, %v339, %v343
      %v345 = vshrl.u32 %v210, 16
      %v347 = vrot.slane %v345, 4
      %v348 = vor.u32 %v347, %v343
      %v349 = vrot.slane %v348, 4
      %v351 = vshll.u32 %v211, 16
      %v353 = vrot.slane %v351, 5
      %v354 = vsel %vm258, %v349, %v353
      %v356 = vshrl.u32 %v212, 16
      %v358 = vrot.slane %v356, 4
      %v359 = vshll.u32 %v212, 16
      %v361 = vrot.slane %v359, 5
      %v362 = vor.u32 %v358, %v361
      %v363 = vrot.slane %v362, 4
      %v365 = vshll.u32 %v213, 16
      %v367 = vrot.slane %v365, 5
      %v368 = vsel %vm258, %v363, %v367
      %v369 = vshrl.u32 %v213, 16
      %v371 = vrot.slane %v369, 4
      %v372 = vor.u32 %v371, %v367
      %v373 = vrot.slane %v372, 4
      %v375 = vshll.u32 %v214, 16
      %v377 = vrot.slane %v375, 5
      %v378 = vsel %vm258, %v373, %v377
      %v380 = vshrl.u32 %v215, 16
      %v382 = vrot.slane %v380, 4
      %v383 = vshll.u32 %v215, 16
      %v385 = vrot.slane %v383, 5
      %v386 = vor.u32 %v382, %v385
      %v387 = vrot.slane %v386, 4
      %v389 = vshll.u32 %v216, 16
      %v391 = vrot.slane %v389, 5
      %v392 = vsel %vm258, %v387, %v391
      %v393 = vshrl.u32 %v216, 16
      %v395 = vrot.slane %v393, 4
      %v396 = vor.u32 %v395, %v391
      %v397 = vrot.slane %v396, 4
      %v399 = vshll.u32 %v217, 16
      %v401 = vrot.slane %v399, 5
      %v402 = vsel %vm258, %v397, %v401
      %v404 = vshrl.u32 %v218, 16
      %v406 = vrot.slane %v404, 4
      %v407 = vshll.u32 %v218, 16
      %v409 = vrot.slane %v407, 5
      %v410 = vor.u32 %v406, %v409
      %v411 = vrot.slane %v410, 4
      %v413 = vshll.u32 %v219, 16
      %v415 = vrot.slane %v413, 5
      %v416 = vsel %vm258, %v411, %v415
      %v417 = vshrl.u32 %v219, 16
      %v419 = vrot.slane %v417, 4
      %v420 = vor.u32 %v419, %v415
      %v421 = vrot.slane %v420, 4
      %v423 = vshll.u32 %v220, 16
      %v425 = vrot.slane %v423, 5
      %v426 = vsel %vm258, %v421, %v425
      %v428 = vshrl.u32 %v221, 16
      %v430 = vrot.slane %v428, 4
      %v431 = vshll.u32 %v221, 16
      %v433 = vrot.slane %v431, 5
      %v434 = vor.u32 %v430, %v433
      %v435 = vrot.slane %v434, 4
      %v437 = vshll.u32 %v222, 16
      %v439 = vrot.slane %v437, 5
      %v440 = vsel %vm258, %v435, %v439
      %v441 = vshrl.u32 %v222, 16
      %v443 = vrot.slane %v441, 4
      %v444 = vor.u32 %v443, %v439
      %v445 = vrot.slane %v444, 4
      %v447 = vshll.u32 %v223, 16
      %v449 = vrot.slane %v447, 5
      %v450 = vsel %vm258, %v445, %v449
      %s451 = scalar_lea.vmem %s1, 256
      %v452 = vld [vmem:[%s451] sm:$0xff]
      %v453 = vld [vmem:[%s451 + $0x8] sm:$0xff]
      %v454 = vld [vmem:[%s451 + $0x10] sm:$0xff]
      %v455 = vld [vmem:[%s451 + $0x18] sm:$0xff]
      %v456 = vld [vmem:[%s451 + $0x20] sm:$0xff]
      %v457 = vld [vmem:[%s451 + $0x28] sm:$0xff]
      %v458 = vld [vmem:[%s451 + $0x30] sm:$0xff]
      %v459 = vld [vmem:[%s451 + $0x38] sm:$0xff]
      %v460 = vld [vmem:[%s451 + $0x40] sm:$0xff]
      %v461 = vld [vmem:[%s451 + $0x48] sm:$0xff]
      %v462 = vld [vmem:[%s451 + $0x50] sm:$0xff]
      %v463 = vld [vmem:[%s451 + $0x58] sm:$0xff]
      %v464 = vld [vmem:[%s451 + $0x60] sm:$0xff]
      %v465 = vld [vmem:[%s451 + $0x68] sm:$0xff]
      %v466 = vld [vmem:[%s451 + $0x70] sm:$0xff]
      %v467 = vld [vmem:[%s451 + $0x78] sm:$0xff]
      %v468 = vld [vmem:[%s451 + $0x80] sm:$0xff]
      %v469 = vld [vmem:[%s451 + $0x88] sm:$0xff]
      %v470 = vld [vmem:[%s451 + $0x90] sm:$0xff]
      %v471 = vld [vmem:[%s451 + $0x98] sm:$0xff]
      %v472 = vld [vmem:[%s451 + $0xa0] sm:$0xff]
      %v473 = vld [vmem:[%s451 + $0xa8] sm:$0xff]
      %v474 = vld [vmem:[%s451 + $0xb0] sm:$0xff]
      %v475 = vld [vmem:[%s451 + $0xb8] sm:$0xff]
      %v476 = vld [vmem:[%s451 + $0xc0] sm:$0xff]
      %v477 = vld [vmem:[%s451 + $0xc8] sm:$0xff]
      %v478 = vld [vmem:[%s451 + $0xd0] sm:$0xff]
      %v479 = vld [vmem:[%s451 + $0xd8] sm:$0xff]
      %v480 = vld [vmem:[%s451 + $0xe0] sm:$0xff]
      %v481 = vld [vmem:[%s451 + $0xe8] sm:$0xff]
      %v482 = vld [vmem:[%s451 + $0xf0] sm:$0xff]
      %v483 = vld [vmem:[%s451 + $0xf8] sm:$0xff]
      %v484 = vunpack.c.l.b16 %v272
      %v485 = vunpack.c.h.b16 %v272
      %v486 = vunpack.c.l.b16 %v282
      %v487 = vunpack.c.h.b16 %v282
      %v488 = vunpack.c.l.b16 %v296
      %v489 = vunpack.c.h.b16 %v296
      %v490 = vunpack.c.l.b16 %v306
      %v491 = vunpack.c.h.b16 %v306
      %v492 = vunpack.c.l.b16 %v320
      %v493 = vunpack.c.h.b16 %v320
      %v494 = vunpack.c.l.b16 %v330
      %v495 = vunpack.c.h.b16 %v330
      %v496 = vunpack.c.l.b16 %v344
      %v497 = vunpack.c.h.b16 %v344
      %v498 = vunpack.c.l.b16 %v354
      %v499 = vunpack.c.h.b16 %v354
      %v500 = vunpack.c.l.b16 %v368
      %v501 = vunpack.c.h.b16 %v368
      %v502 = vunpack.c.l.b16 %v378
      %v503 = vunpack.c.h.b16 %v378
      %v504 = vunpack.c.l.b16 %v392
      %v505 = vunpack.c.h.b16 %v392
      %v506 = vunpack.c.l.b16 %v402
      %v507 = vunpack.c.h.b16 %v402
      %v508 = vunpack.c.l.b16 %v416
      %v509 = vunpack.c.h.b16 %v416
      %v510 = vunpack.c.l.b16 %v426
      %v511 = vunpack.c.h.b16 %v426
      %v512 = vunpack.c.l.b16 %v440
      %v513 = vunpack.c.h.b16 %v440
      %v514 = vunpack.c.l.b16 %v450
      %v515 = vunpack.c.h.b16 %v450
      %v516 = vpack.c.b16 %v486, %v484
      %v517 = vpack.c.b16 %v487, %v485
      %v518 = vpack.c.b16 %v490, %v488
      %v519 = vpack.c.b16 %v491, %v489
      %v520 = vpack.c.b16 %v494, %v492
      %v521 = vpack.c.b16 %v495, %v493
      %v522 = vpack.c.b16 %v498, %v496
      %v523 = vpack.c.b16 %v499, %v497
      %v524 = vpack.c.b16 %v502, %v500
      %v525 = vpack.c.b16 %v503, %v501
      %v526 = vpack.c.b16 %v506, %v504
      %v527 = vpack.c.b16 %v507, %v505
      %v528 = vpack.c.b16 %v510, %v508
      %v529 = vpack.c.b16 %v511, %v509
      %v530 = vpack.c.b16 %v514, %v512
      %v531 = vpack.c.b16 %v515, %v513
      %v580 = vunpack.c.l.b16 %v452
      %v581 = vunpack.c.h.b16 %v452
      %v582 = vunpack.c.l.b16 %v453
      %v583 = vunpack.c.h.b16 %v453
      %v584 = vunpack.c.l.b16 %v454
      %v585 = vunpack.c.h.b16 %v454
      %v586 = vunpack.c.l.b16 %v455
      %v587 = vunpack.c.h.b16 %v455
      %v588 = vunpack.c.l.b16 %v456
      %v589 = vunpack.c.h.b16 %v456
      %v590 = vunpack.c.l.b16 %v457
      %v591 = vunpack.c.h.b16 %v457
      %v592 = vunpack.c.l.b16 %v458
      %v593 = vunpack.c.h.b16 %v458
      %v594 = vunpack.c.l.b16 %v459
      %v595 = vunpack.c.h.b16 %v459
      %v596 = vunpack.c.l.b16 %v460
      %v597 = vunpack.c.h.b16 %v460
      %v598 = vunpack.c.l.b16 %v461
      %v599 = vunpack.c.h.b16 %v461
      %v600 = vunpack.c.l.b16 %v462
      %v601 = vunpack.c.h.b16 %v462
      %v602 = vunpack.c.l.b16 %v463
      %v603 = vunpack.c.h.b16 %v463
      %v604 = vunpack.c.l.b16 %v464
      %v605 = vunpack.c.h.b16 %v464
      %v606 = vunpack.c.l.b16 %v465
      %v607 = vunpack.c.h.b16 %v465
      %v608 = vunpack.c.l.b16 %v466
      %v609 = vunpack.c.h.b16 %v466
      %v610 = vunpack.c.l.b16 %v467
      %v611 = vunpack.c.h.b16 %v467
      %v612 = vunpack.c.l.b16 %v468
      %v613 = vunpack.c.h.b16 %v468
      %v614 = vunpack.c.l.b16 %v469
      %v615 = vunpack.c.h.b16 %v469
      %v616 = vunpack.c.l.b16 %v470
      %v617 = vunpack.c.h.b16 %v470
      %v618 = vunpack.c.l.b16 %v471
      %v619 = vunpack.c.h.b16 %v471
      %v620 = vunpack.c.l.b16 %v472
      %v621 = vunpack.c.h.b16 %v472
      %v622 = vunpack.c.l.b16 %v473
      %v623 = vunpack.c.h.b16 %v473
      %v624 = vunpack.c.l.b16 %v474
      %v625 = vunpack.c.h.b16 %v474
      %v626 = vunpack.c.l.b16 %v475
      %v627 = vunpack.c.h.b16 %v475
      %v628 = vunpack.c.l.b16 %v476
      %v629 = vunpack.c.h.b16 %v476
      %v630 = vunpack.c.l.b16 %v477
      %v631 = vunpack.c.h.b16 %v477
      %v632 = vunpack.c.l.b16 %v478
      %v633 = vunpack.c.h.b16 %v478
      %v634 = vunpack.c.l.b16 %v479
      %v635 = vunpack.c.h.b16 %v479
      %v636 = vunpack.c.l.b16 %v480
      %v637 = vunpack.c.h.b16 %v480
      %v638 = vunpack.c.l.b16 %v481
      %v639 = vunpack.c.h.b16 %v481
      %v640 = vunpack.c.l.b16 %v482
      %v641 = vunpack.c.h.b16 %v482
      %v642 = vunpack.c.l.b16 %v483
      %v643 = vunpack.c.h.b16 %v483
      %v644 = vpack.c.b16 %v582, %v580
      %v645 = vpack.c.b16 %v583, %v581
      %v646 = vpack.c.b16 %v586, %v584
      %v647 = vpack.c.b16 %v587, %v585
      %v648 = vpack.c.b16 %v590, %v588
      %v649 = vpack.c.b16 %v591, %v589
      %v650 = vpack.c.b16 %v594, %v592
      %v651 = vpack.c.b16 %v595, %v593
      %v652 = vpack.c.b16 %v598, %v596
      %v653 = vpack.c.b16 %v599, %v597
      %v654 = vpack.c.b16 %v602, %v600
      %v655 = vpack.c.b16 %v603, %v601
      %v656 = vpack.c.b16 %v606, %v604
      %v657 = vpack.c.b16 %v607, %v605
      %v658 = vpack.c.b16 %v610, %v608
      %v659 = vpack.c.b16 %v611, %v609
      %v660 = vpack.c.b16 %v614, %v612
      %v661 = vpack.c.b16 %v615, %v613
      %v662 = vpack.c.b16 %v618, %v616
      %v663 = vpack.c.b16 %v619, %v617
      %v664 = vpack.c.b16 %v622, %v620
      %v665 = vpack.c.b16 %v623, %v621
      %v666 = vpack.c.b16 %v626, %v624
      %v667 = vpack.c.b16 %v627, %v625
      %v668 = vpack.c.b16 %v630, %v628
      %v669 = vpack.c.b16 %v631, %v629
      %v670 = vpack.c.b16 %v634, %v632
      %v671 = vpack.c.b16 %v635, %v633
      %v672 = vpack.c.b16 %v638, %v636
      %v673 = vpack.c.b16 %v639, %v637
      %v674 = vpack.c.b16 %v642, %v640
      %v675 = vpack.c.b16 %v643, %v641
      %708 = vmatprep.subr.bf16.mxu0 %v645
      %709 = vmatpush1.bf16.msra.mxu0 %v644
      %710 = vmatprep.subr.bf16.mxu0 %v647
      %711 = vmatpush1.bf16.msra.mxu0 %v646
      %712 = vmatprep.subr.bf16.mxu0 %v649
      %713 = vmatpush1.bf16.msra.mxu0 %v648
      %714 = vmatprep.subr.bf16.mxu0 %v651
      %715 = vmatpush1.bf16.msra.mxu0 %v650
      %716 = vmatprep.subr.bf16.mxu0 %v653
      %717 = vmatpush1.bf16.msra.mxu0 %v652
      %718 = vmatprep.subr.bf16.mxu0 %v655
      %719 = vmatpush1.bf16.msra.mxu0 %v654
      %720 = vmatprep.subr.bf16.mxu0 %v657
      %721 = vmatpush1.bf16.msra.mxu0 %v656
      %722 = vmatprep.subr.bf16.mxu0 %v659
      %723 = vmatpush1.bf16.msra.mxu0 %v658
      %724 = vmatprep.subr.bf16.mxu0 %v661
      %725 = vmatpush1.bf16.msra.mxu0 %v660
      %726 = vmatprep.subr.bf16.mxu0 %v663
      %727 = vmatpush1.bf16.msra.mxu0 %v662
      %728 = vmatprep.subr.bf16.mxu0 %v665
      %729 = vmatpush1.bf16.msra.mxu0 %v664
      %730 = vmatprep.subr.bf16.mxu0 %v667
      %731 = vmatpush1.bf16.msra.mxu0 %v666
      %732 = vmatprep.subr.bf16.mxu0 %v669
      %733 = vmatpush1.bf16.msra.mxu0 %v668
      %734 = vmatprep.subr.bf16.mxu0 %v671
      %735 = vmatpush1.bf16.msra.mxu0 %v670
      %736 = vmatprep.subr.bf16.mxu0 %v673
      %737 = vmatpush1.bf16.msra.mxu0 %v672
      %738 = vmatprep.subr.bf16.mxu0 %v675
      %739 = vmatpush1.bf16.msra.mxu0 %v674
      %740 = vmatprep.mubr.bf16.mxu0 %v517
      %741 = vmatmul.mubr.bf16.gmra.mrb[0].mxu0 %v516
      %v742 = vpop.f32.mrb[0].mxu0
      %v743 = vadd.f32 0.0, %v742
      %v744 = vpop.f32.mrb[0].mxu0
      %v745 = vadd.f32 0.0, %v744
      %v746 = vpop.f32.mrb[0].mxu0
      %v747 = vadd.f32 0.0, %v746
      %v748 = vpop.f32.mrb[0].mxu0
      %v749 = vadd.f32 0.0, %v748
      %750 = vmatprep.mubr.bf16.mxu0 %v519
      %751 = vmatmul.mubr.bf16.gmra.mrb[0].mxu0 %v518
      %v752 = vpop.f32.mrb[0].mxu0
      %v753 = vadd.f32 0.0, %v752
      %v754 = vpop.f32.mrb[0].mxu0
      %v755 = vadd.f32 0.0, %v754
      %v756 = vpop.f32.mrb[0].mxu0
      %v757 = vadd.f32 0.0, %v756
      %v758 = vpop.f32.mrb[0].mxu0
      %v759 = vadd.f32 0.0, %v758
      %760 = vmatprep.mubr.bf16.mxu0 %v521
      %761 = vmatmul.mubr.bf16.gmra.mrb[0].mxu0 %v520
      %v762 = vpop.f32.mrb[0].mxu0
      %v763 = vadd.f32 0.0, %v762
      %v764 = vpop.f32.mrb[0].mxu0
      %v765 = vadd.f32 0.0, %v764
      %v766 = vpop.f32.mrb[0].mxu0
      %v767 = vadd.f32 0.0, %v766
      %v768 = vpop.f32.mrb[0].mxu0
      %v769 = vadd.f32 0.0, %v768
      %770 = vmatprep.mubr.bf16.mxu0 %v523
      %771 = vmatmul.mubr.bf16.gmra.mrb[0].mxu0 %v522
      %v772 = vpop.f32.mrb[0].mxu0
      %v773 = vadd.f32 0.0, %v772
      %v774 = vpop.f32.mrb[0].mxu0
      %v775 = vadd.f32 0.0, %v774
      %v776 = vpop.f32.mrb[0].mxu0
      %v777 = vadd.f32 0.0, %v776
      %v778 = vpop.f32.mrb[0].mxu0
      %v779 = vadd.f32 0.0, %v778
      %780 = vmatprep.mubr.bf16.mxu0 %v525
      %781 = vmatmul.mubr.bf16.gmra.mrb[0].mxu0 %v524
      %v782 = vpop.f32.mrb[0].mxu0
      %v783 = vadd.f32 0.0, %v782
      %v784 = vpop.f32.mrb[0].mxu0
      %v785 = vadd.f32 0.0, %v784
      %v786 = vpop.f32.mrb[0].mxu0
      %v787 = vadd.f32 0.0, %v786
      %v788 = vpop.f32.mrb[0].mxu0
      %v789 = vadd.f32 0.0, %v788
      %790 = vmatprep.mubr.bf16.mxu0 %v527
      %791 = vmatmul.mubr.bf16.gmra.mrb[0].mxu0 %v526
      %v792 = vpop.f32.mrb[0].mxu0
      %v793 = vadd.f32 0.0, %v792
      %v794 = vpop.f32.mrb[0].mxu0
      %v795 = vadd.f32 0.0, %v794
      %v796 = vpop.f32.mrb[0].mxu0
      %v797 = vadd.f32 0.0, %v796
      %v798 = vpop.f32.mrb[0].mxu0
      %v799 = vadd.f32 0.0, %v798
      %800 = vmatprep.mubr.bf16.mxu0 %v529
      %801 = vmatmul.mubr.bf16.gmra.mrb[0].mxu0 %v528
      %v802 = vpop.f32.mrb[0].mxu0
      %v803 = vadd.f32 0.0, %v802
      %v804 = vpop.f32.mrb[0].mxu0
      %v805 = vadd.f32 0.0, %v804
      %v806 = vpop.f32.mrb[0].mxu0
      %v807 = vadd.f32 0.0, %v806
      %v808 = vpop.f32.mrb[0].mxu0
      %v809 = vadd.f32 0.0, %v808
      %810 = vmatprep.mubr.bf16.mxu0 %v531
      %811 = vmatmul.mubr.bf16.gmra.mrb[0].mxu0 %v530
      %v812 = vpop.f32.mrb[0].mxu0
      %v813 = vadd.f32 0.0, %v812
      %v814 = vpop.f32.mrb[0].mxu0
      %v815 = vadd.f32 0.0, %v814
      %v816 = vpop.f32.mrb[0].mxu0
      %v817 = vadd.f32 0.0, %v816
      %v818 = vpop.f32.mrb[0].mxu0
      %v819 = vadd.f32 0.0, %v818
      %820 = vdwg.mxu0
      %v837 = vunpack.c.l.b16 %v200
      %v838 = vunpack.c.h.b16 %v200
      %v839 = vunpack.c.l.b16 %v201
      %v840 = vunpack.c.h.b16 %v201
      %v841 = vunpack.c.l.b16 %v203
      %v842 = vunpack.c.h.b16 %v203
      %v843 = vunpack.c.l.b16 %v204
      %v844 = vunpack.c.h.b16 %v204
      %v845 = vunpack.c.l.b16 %v206
      %v846 = vunpack.c.h.b16 %v206
      %v847 = vunpack.c.l.b16 %v207
      %v848 = vunpack.c.h.b16 %v207
      %v849 = vunpack.c.l.b16 %v209
      %v850 = vunpack.c.h.b16 %v209
      %v851 = vunpack.c.l.b16 %v210
      %v852 = vunpack.c.h.b16 %v210
      %v853 = vunpack.c.l.b16 %v212
      %v854 = vunpack.c.h.b16 %v212
      %v855 = vunpack.c.l.b16 %v213
      %v856 = vunpack.c.h.b16 %v213
      %v857 = vunpack.c.l.b16 %v215
      %v858 = vunpack.c.h.b16 %v215
      %v859 = vunpack.c.l.b16 %v216
      %v860 = vunpack.c.h.b16 %v216
      %v861 = vunpack.c.l.b16 %v218
      %v862 = vunpack.c.h.b16 %v218
      %v863 = vunpack.c.l.b16 %v219
      %v864 = vunpack.c.h.b16 %v219
      %v865 = vunpack.c.l.b16 %v221
      %v866 = vunpack.c.h.b16 %v221
      %v867 = vunpack.c.l.b16 %v222
      %v868 = vunpack.c.h.b16 %v222
      %v869 = vpack.c.b16 %v839, %v837
      %v870 = vpack.c.b16 %v840, %v838
      %v871 = vpack.c.b16 %v843, %v841
      %v872 = vpack.c.b16 %v844, %v842
      %v873 = vpack.c.b16 %v847, %v845
      %v874 = vpack.c.b16 %v848, %v846
      %v875 = vpack.c.b16 %v851, %v849
      %v876 = vpack.c.b16 %v852, %v850
      %v877 = vpack.c.b16 %v855, %v853
      %v878 = vpack.c.b16 %v856, %v854
      %v879 = vpack.c.b16 %v859, %v857
      %v880 = vpack.c.b16 %v860, %v858
      %v881 = vpack.c.b16 %v863, %v861
      %v882 = vpack.c.b16 %v864, %v862
      %v883 = vpack.c.b16 %v867, %v865
      %v884 = vpack.c.b16 %v868, %v866
      %v933 = vunpack.c.l.b16 %v224
      %v934 = vunpack.c.h.b16 %v224
      %v935 = vunpack.c.l.b16 %v225
      %v936 = vunpack.c.h.b16 %v225
      %v937 = vunpack.c.l.b16 %v226
      %v938 = vunpack.c.h.b16 %v226
      %v939 = vunpack.c.l.b16 %v227
      %v940 = vunpack.c.h.b16 %v227
      %v941 = vunpack.c.l.b16 %v228
      %v942 = vunpack.c.h.b16 %v228
      %v943 = vunpack.c.l.b16 %v229
      %v944 = vunpack.c.h.b16 %v229
      %v945 = vunpack.c.l.b16 %v230
      %v946 = vunpack.c.h.b16 %v230
      %v947 = vunpack.c.l.b16 %v231
      %v948 = vunpack.c.h.b16 %v231
      %v949 = vunpack.c.l.b16 %v232
      %v950 = vunpack.c.h.b16 %v232
      %v951 = vunpack.c.l.b16 %v233
      %v952 = vunpack.c.h.b16 %v233
      %v953 = vunpack.c.l.b16 %v234
      %v954 = vunpack.c.h.b16 %v234
      %v955 = vunpack.c.l.b16 %v235
      %v956 = vunpack.c.h.b16 %v235
      %v957 = vunpack.c.l.b16 %v236
      %v958 = vunpack.c.h.b16 %v236
      %v959 = vunpack.c.l.b16 %v237
      %v960 = vunpack.c.h.b16 %v237
      %v961 = vunpack.c.l.b16 %v238
      %v962 = vunpack.c.h.b16 %v238
      %v963 = vunpack.c.l.b16 %v239
      %v964 = vunpack.c.h.b16 %v239
      %v965 = vunpack.c.l.b16 %v240
      %v966 = vunpack.c.h.b16 %v240
      %v967 = vunpack.c.l.b16 %v241
      %v968 = vunpack.c.h.b16 %v241
      %v969 = vunpack.c.l.b16 %v242
      %v970 = vunpack.c.h.b16 %v242
      %v971 = vunpack.c.l.b16 %v243
      %v972 = vunpack.c.h.b16 %v243
      %v973 = vunpack.c.l.b16 %v244
      %v974 = vunpack.c.h.b16 %v244
      %v975 = vunpack.c.l.b16 %v245
      %v976 = vunpack.c.h.b16 %v245
      %v977 = vunpack.c.l.b16 %v246
      %v978 = vunpack.c.h.b16 %v246
      %v979 = vunpack.c.l.b16 %v247
      %v980 = vunpack.c.h.b16 %v247
      %v981 = vunpack.c.l.b16 %v248
      %v982 = vunpack.c.h.b16 %v248
      %v983 = vunpack.c.l.b16 %v249
      %v984 = vunpack.c.h.b16 %v249
      %v985 = vunpack.c.l.b16 %v250
      %v986 = vunpack.c.h.b16 %v250
      %v987 = vunpack.c.l.b16 %v251
      %v988 = vunpack.c.h.b16 %v251
      %v989 = vunpack.c.l.b16 %v252
      %v990 = vunpack.c.h.b16 %v252
      %v991 = vunpack.c.l.b16 %v253
      %v992 = vunpack.c.h.b16 %v253
      %v993 = vunpack.c.l.b16 %v254
      %v994 = vunpack.c.h.b16 %v254
      %v995 = vunpack.c.l.b16 %v255
      %v996 = vunpack.c.h.b16 %v255
      %v997 = vpack.c.b16 %v935, %v933
      %v998 = vpack.c.b16 %v936, %v934
      %v999 = vpack.c.b16 %v939, %v937
      %v1000 = vpack.c.b16 %v940, %v938
      %v1001 = vpack.c.b16 %v943, %v941
      %v1002 = vpack.c.b16 %v944, %v942
      %v1003 = vpack.c.b16 %v947, %v945
      %v1004 = vpack.c.b16 %v948, %v946
      %v1005 = vpack.c.b16 %v951, %v949
      %v1006 = vpack.c.b16 %v952, %v950
      %v1007 = vpack.c.b16 %v955, %v953
      %v1008 = vpack.c.b16 %v956, %v954
      %v1009 = vpack.c.b16 %v959, %v957
      %v1010 = vpack.c.b16 %v960, %v958
      %v1011 = vpack.c.b16 %v963, %v961
      %v1012 = vpack.c.b16 %v964, %v962
      %v1013 = vpack.c.b16 %v967, %v965
      %v1014 = vpack.c.b16 %v968, %v966
      %v1015 = vpack.c.b16 %v971, %v969
      %v1016 = vpack.c.b16 %v972, %v970
      %v1017 = vpack.c.b16 %v975, %v973
      %v1018 = vpack.c.b16 %v976, %v974
      %v1019 = vpack.c.b16 %v979, %v977
      %v1020 = vpack.c.b16 %v980, %v978
      %v1021 = vpack.c.b16 %v983, %v981
      %v1022 = vpack.c.b16 %v984, %v982
      %v1023 = vpack.c.b16 %v987, %v985
      %v1024 = vpack.c.b16 %v988, %v986
      %v1025 = vpack.c.b16 %v991, %v989
      %v1026 = vpack.c.b16 %v992, %v990
      %v1027 = vpack.c.b16 %v995, %v993
      %v1028 = vpack.c.b16 %v996, %v994
      %1061 = vmatprep.subr.bf16.mxu0 %v998
      %1062 = vmatpush1.bf16.msra.mxu0 %v997
      %1063 = vmatprep.subr.bf16.mxu0 %v1000
      %1064 = vmatpush1.bf16.msra.mxu0 %v999
      %1065 = vmatprep.subr.bf16.mxu0 %v1002
      %1066 = vmatpush1.bf16.msra.mxu0 %v1001
      %1067 = vmatprep.subr.bf16.mxu0 %v1004
      %1068 = vmatpush1.bf16.msra.mxu0 %v1003
      %1069 = vmatprep.subr.bf16.mxu0 %v1006
      %1070 = vmatpush1.bf16.msra.mxu0 %v1005
      %1071 = vmatprep.subr.bf16.mxu0 %v1008
      %1072 = vmatpush1.bf16.msra.mxu0 %v1007
      %1073 = vmatprep.subr.bf16.mxu0 %v1010
      %1074 = vmatpush1.bf16.msra.mxu0 %v1009
      %1075 = vmatprep.subr.bf16.mxu0 %v1012
      %1076 = vmatpush1.bf16.msra.mxu0 %v1011
      %1077 = vmatprep.subr.bf16.mxu0 %v1014
      %1078 = vmatpush1.bf16.msra.mxu0 %v1013
      %1079 = vmatprep.subr.bf16.mxu0 %v1016
      %1080 = vmatpush1.bf16.msra.mxu0 %v1015
      %1081 = vmatprep.subr.bf16.mxu0 %v1018
      %1082 = vmatpush1.bf16.msra.mxu0 %v1017
      %1083 = vmatprep.subr.bf16.mxu0 %v1020
      %1084 = vmatpush1.bf16.msra.mxu0 %v1019
      %1085 = vmatprep.subr.bf16.mxu0 %v1022
      %1086 = vmatpush1.bf16.msra.mxu0 %v1021
      %1087 = vmatprep.subr.bf16.mxu0 %v1024
      %1088 = vmatpush1.bf16.msra.mxu0 %v1023
      %1089 = vmatprep.subr.bf16.mxu0 %v1026
      %1090 = vmatpush1.bf16.msra.mxu0 %v1025
      %1091 = vmatprep.subr.bf16.mxu0 %v1028
      %1092 = vmatpush1.bf16.msra.mxu0 %v1027
      %1093 = vmatprep.mubr.bf16.mxu0 %v870
      %1094 = vmatmul.mubr.bf16.gmra.mrb[0].mxu0 %v869
      %v1095 = vpop.f32.mrb[0].mxu0
      %v1096 = vadd.f32 %v743, %v1095
      %v1097 = vpop.f32.mrb[0].mxu0
      %v1098 = vadd.f32 %v745, %v1097
      %v1099 = vpop.f32.mrb[0].mxu0
      %v1100 = vadd.f32 %v747, %v1099
      %v1101 = vpop.f32.mrb[0].mxu0
      %v1102 = vadd.f32 %v749, %v1101
      %1103 = vmatprep.mubr.bf16.mxu0 %v872
      %1104 = vmatmul.mubr.bf16.gmra.mrb[0].mxu0 %v871
      %v1105 = vpop.f32.mrb[0].mxu0
      %v1106 = vadd.f32 %v753, %v1105
      %v1107 = vpop.f32.mrb[0].mxu0
      %v1108 = vadd.f32 %v755, %v1107
      %v1109 = vpop.f32.mrb[0].mxu0
      %v1110 = vadd.f32 %v757, %v1109
      %v1111 = vpop.f32.mrb[0].mxu0
      %v1112 = vadd.f32 %v759, %v1111
      %1113 = vmatprep.mubr.bf16.mxu0 %v874
      %1114 = vmatmul.mubr.bf16.gmra.mrb[0].mxu0 %v873
      %v1115 = vpop.f32.mrb[0].mxu0
      %v1116 = vadd.f32 %v763, %v1115
      %v1117 = vpop.f32.mrb[0].mxu0
      %v1118 = vadd.f32 %v765, %v1117
      %v1119 = vpop.f32.mrb[0].mxu0
      %v1120 = vadd.f32 %v767, %v1119
      %v1121 = vpop.f32.mrb[0].mxu0
      %v1122 = vadd.f32 %v769, %v1121
      %1123 = vmatprep.mubr.bf16.mxu0 %v876
      %1124 = vmatmul.mubr.bf16.gmra.mrb[0].mxu0 %v875
      %v1125 = vpop.f32.mrb[0].mxu0
      %v1126 = vadd.f32 %v773, %v1125
      %v1127 = vpop.f32.mrb[0].mxu0
      %v1128 = vadd.f32 %v775, %v1127
      %v1129 = vpop.f32.mrb[0].mxu0
      %v1130 = vadd.f32 %v777, %v1129
      %v1131 = vpop.f32.mrb[0].mxu0
      %v1132 = vadd.f32 %v779, %v1131
      %1133 = vmatprep.mubr.bf16.mxu0 %v878
      %1134 = vmatmul.mubr.bf16.gmra.mrb[0].mxu0 %v877
      %v1135 = vpop.f32.mrb[0].mxu0
      %v1136 = vadd.f32 %v783, %v1135
      %v1137 = vpop.f32.mrb[0].mxu0
      %v1138 = vadd.f32 %v785, %v1137
      %v1139 = vpop.f32.mrb[0].mxu0
      %v1140 = vadd.f32 %v787, %v1139
      %v1141 = vpop.f32.mrb[0].mxu0
      %v1142 = vadd.f32 %v789, %v1141
      %1143 = vmatprep.mubr.bf16.mxu0 %v880
      %1144 = vmatmul.mubr.bf16.gmra.mrb[0].mxu0 %v879
      %v1145 = vpop.f32.mrb[0].mxu0
      %v1146 = vadd.f32 %v793, %v1145
      %v1147 = vpop.f32.mrb[0].mxu0
      %v1148 = vadd.f32 %v795, %v1147
      %v1149 = vpop.f32.mrb[0].mxu0
      %v1150 = vadd.f32 %v797, %v1149
      %v1151 = vpop.f32.mrb[0].mxu0
      %v1152 = vadd.f32 %v799, %v1151
      %1153 = vmatprep.mubr.bf16.mxu0 %v882
      %1154 = vmatmul.mubr.bf16.gmra.mrb[0].mxu0 %v881
      %v1155 = vpop.f32.mrb[0].mxu0
      %v1156 = vadd.f32 %v803, %v1155
      %v1157 = vpop.f32.mrb[0].mxu0
      %v1158 = vadd.f32 %v805, %v1157
      %v1159 = vpop.f32.mrb[0].mxu0
      %v1160 = vadd.f32 %v807, %v1159
      %v1161 = vpop.f32.mrb[0].mxu0
      %v1162 = vadd.f32 %v809, %v1161
      %1163 = vmatprep.mubr.bf16.mxu0 %v884
      %1164 = vmatmul.mubr.bf16.gmra.mrb[0].mxu0 %v883
      %v1165 = vpop.f32.mrb[0].mxu0
      %v1166 = vadd.f32 %v813, %v1165
      %v1167 = vpop.f32.mrb[0].mxu0
      %v1168 = vadd.f32 %v815, %v1167
      %v1169 = vpop.f32.mrb[0].mxu0
      %v1170 = vadd.f32 %v817, %v1169
      %v1171 = vpop.f32.mrb[0].mxu0
      %v1172 = vadd.f32 %v819, %v1171
      %1173 = vdwg.mxu0
      %vm1182 = vcmask 1042432
      %vm1183 = vcmask 1046532
      %vm1184 = vmor %vm1182, %vm1183
      %v1185 = vrot.slane %v200, 5
      %v1186 = vrot.slane %v1185, 4
      %v1187 = vrot.slane %v201, 5
      %v1188 = vsel %vm1184, %v1186, %v1187
      %v1189 = vrot.slane %v1187, 4
      %v1190 = vrot.slane %v202, 5
      %v1191 = vsel %vm1184, %v1189, %v1190
      %v1192 = vrot.slane %v203, 5
      %v1193 = vrot.slane %v1192, 4
      %v1194 = vrot.slane %v204, 5
      %v1195 = vsel %vm1184, %v1193, %v1194
      %v1196 = vrot.slane %v1194, 4
      %v1197 = vrot.slane %v205, 5
      %v1198 = vsel %vm1184, %v1196, %v1197
      %v1199 = vrot.slane %v206, 5
      %v1200 = vrot.slane %v1199, 4
      %v1201 = vrot.slane %v207, 5
      %v1202 = vsel %vm1184, %v1200, %v1201
      %v1203 = vrot.slane %v1201, 4
      %v1204 = vrot.slane %v208, 5
      %v1205 = vsel %vm1184, %v1203, %v1204
      %v1206 = vrot.slane %v209, 5
      %v1207 = vrot.slane %v1206, 4
      %v1208 = vrot.slane %v210, 5
      %v1209 = vsel %vm1184, %v1207, %v1208
      %v1210 = vrot.slane %v1208, 4
      %v1211 = vrot.slane %v211, 5
      %v1212 = vsel %vm1184, %v1210, %v1211
      %v1213 = vrot.slane %v212, 5
      %v1214 = vrot.slane %v1213, 4
      %v1215 = vrot.slane %v213, 5
      %v1216 = vsel %vm1184, %v1214, %v1215
      %v1217 = vrot.slane %v1215, 4
      %v1218 = vrot.slane %v214, 5
      %v1219 = vsel %vm1184, %v1217, %v1218
      %v1220 = vrot.slane %v215, 5
      %v1221 = vrot.slane %v1220, 4
      %v1222 = vrot.slane %v216, 5
      %v1223 = vsel %vm1184, %v1221, %v1222
      %v1224 = vrot.slane %v1222, 4
      %v1225 = vrot.slane %v217, 5
      %v1226 = vsel %vm1184, %v1224, %v1225
      %v1227 = vrot.slane %v218, 5
      %v1228 = vrot.slane %v1227, 4
      %v1229 = vrot.slane %v219, 5
      %v1230 = vsel %vm1184, %v1228, %v1229
      %v1231 = vrot.slane %v1229, 4
      %v1232 = vrot.slane %v220, 5
      %v1233 = vsel %vm1184, %v1231, %v1232
      %v1234 = vrot.slane %v221, 5
      %v1235 = vrot.slane %v1234, 4
      %v1236 = vrot.slane %v222, 5
      %v1237 = vsel %vm1184, %v1235, %v1236
      %v1238 = vrot.slane %v1236, 4
      %v1239 = vrot.slane %v223, 5
      %v1240 = vsel %vm1184, %v1238, %v1239
      %s1241 = scalar_lea.vmem %s1, 512
      %v1242 = vld [vmem:[%s1241] sm:$0xff]
      %v1243 = vld [vmem:[%s1241 + $0x8] sm:$0xff]
      %v1244 = vld [vmem:[%s1241 + $0x10] sm:$0xff]
      %v1245 = vld [vmem:[%s1241 + $0x18] sm:$0xff]
      %v1246 = vld [vmem:[%s1241 + $0x20] sm:$0xff]
      %v1247 = vld [vmem:[%s1241 + $0x28] sm:$0xff]
      %v1248 = vld [vmem:[%s1241 + $0x30] sm:$0xff]
      %v1249 = vld [vmem:[%s1241 + $0x38] sm:$0xff]
      %v1250 = vld [vmem:[%s1241 + $0x40] sm:$0xff]
      %v1251 = vld [vmem:[%s1241 + $0x48] sm:$0xff]
      %v1252 = vld [vmem:[%s1241 + $0x50] sm:$0xff]
      %v1253 = vld [vmem:[%s1241 + $0x58] sm:$0xff]
      %v1254 = vld [vmem:[%s1241 + $0x60] sm:$0xff]
      %v1255 = vld [vmem:[%s1241 + $0x68] sm:$0xff]
      %v1256 = vld [vmem:[%s1241 + $0x70] sm:$0xff]
      %v1257 = vld [vmem:[%s1241 + $0x78] sm:$0xff]
      %v1258 = vld [vmem:[%s1241 + $0x80] sm:$0xff]
      %v1259 = vld [vmem:[%s1241 + $0x88] sm:$0xff]
      %v1260 = vld [vmem:[%s1241 + $0x90] sm:$0xff]
      %v1261 = vld [vmem:[%s1241 + $0x98] sm:$0xff]
      %v1262 = vld [vmem:[%s1241 + $0xa0] sm:$0xff]
      %v1263 = vld [vmem:[%s1241 + $0xa8] sm:$0xff]
      %v1264 = vld [vmem:[%s1241 + $0xb0] sm:$0xff]
      %v1265 = vld [vmem:[%s1241 + $0xb8] sm:$0xff]
      %v1266 = vld [vmem:[%s1241 + $0xc0] sm:$0xff]
      %v1267 = vld [vmem:[%s1241 + $0xc8] sm:$0xff]
      %v1268 = vld [vmem:[%s1241 + $0xd0] sm:$0xff]
      %v1269 = vld [vmem:[%s1241 + $0xd8] sm:$0xff]
      %v1270 = vld [vmem:[%s1241 + $0xe0] sm:$0xff]
      %v1271 = vld [vmem:[%s1241 + $0xe8] sm:$0xff]
      %v1272 = vld [vmem:[%s1241 + $0xf0] sm:$0xff]
      %v1273 = vld [vmem:[%s1241 + $0xf8] sm:$0xff]
      %v1274 = vunpack.c.l.b16 %v1188
      %v1275 = vunpack.c.h.b16 %v1188
      %v1276 = vunpack.c.l.b16 %v1191
      %v1277 = vunpack.c.h.b16 %v1191
      %v1278 = vunpack.c.l.b16 %v1195
      %v1279 = vunpack.c.h.b16 %v1195
      %v1280 = vunpack.c.l.b16 %v1198
      %v1281 = vunpack.c.h.b16 %v1198
      %v1282 = vunpack.c.l.b16 %v1202
      %v1283 = vunpack.c.h.b16 %v1202
      %v1284 = vunpack.c.l.b16 %v1205
      %v1285 = vunpack.c.h.b16 %v1205
      %v1286 = vunpack.c.l.b16 %v1209
      %v1287 = vunpack.c.h.b16 %v1209
      %v1288 = vunpack.c.l.b16 %v1212
      %v1289 = vunpack.c.h.b16 %v1212
      %v1290 = vunpack.c.l.b16 %v1216
      %v1291 = vunpack.c.h.b16 %v1216
      %v1292 = vunpack.c.l.b16 %v1219
      %v1293 = vunpack.c.h.b16 %v1219
      %v1294 = vunpack.c.l.b16 %v1223
      %v1295 = vunpack.c.h.b16 %v1223
      %v1296 = vunpack.c.l.b16 %v1226
      %v1297 = vunpack.c.h.b16 %v1226
      %v1298 = vunpack.c.l.b16 %v1230
      %v1299 = vunpack.c.h.b16 %v1230
      %v1300 = vunpack.c.l.b16 %v1233
      %v1301 = vunpack.c.h.b16 %v1233
      %v1302 = vunpack.c.l.b16 %v1237
      %v1303 = vunpack.c.h.b16 %v1237
      %v1304 = vunpack.c.l.b16 %v1240
      %v1305 = vunpack.c.h.b16 %v1240
      %v1306 = vpack.c.b16 %v1276, %v1274
      %v1307 = vpack.c.b16 %v1277, %v1275
      %v1308 = vpack.c.b16 %v1280, %v1278
      %v1309 = vpack.c.b16 %v1281, %v1279
      %v1310 = vpack.c.b16 %v1284, %v1282
      %v1311 = vpack.c.b16 %v1285, %v1283
      %v1312 = vpack.c.b16 %v1288, %v1286
      %v1313 = vpack.c.b16 %v1289, %v1287
      %v1314 = vpack.c.b16 %v1292, %v1290
      %v1315 = vpack.c.b16 %v1293, %v1291
      %v1316 = vpack.c.b16 %v1296, %v1294
      %v1317 = vpack.c.b16 %v1297, %v1295
      %v1318 = vpack.c.b16 %v1300, %v1298
      %v1319 = vpack.c.b16 %v1301, %v1299
      %v1320 = vpack.c.b16 %v1304, %v1302
      %v1321 = vpack.c.b16 %v1305, %v1303
      %v1370 = vunpack.c.l.b16 %v1242
      %v1371 = vunpack.c.h.b16 %v1242
      %v1372 = vunpack.c.l.b16 %v1243
      %v1373 = vunpack.c.h.b16 %v1243
      %v1374 = vunpack.c.l.b16 %v1244
      %v1375 = vunpack.c.h.b16 %v1244
      %v1376 = vunpack.c.l.b16 %v1245
      %v1377 = vunpack.c.h.b16 %v1245
      %v1378 = vunpack.c.l.b16 %v1246
      %v1379 = vunpack.c.h.b16 %v1246
      %v1380 = vunpack.c.l.b16 %v1247
      %v1381 = vunpack.c.h.b16 %v1247
      %v1382 = vunpack.c.l.b16 %v1248
      %v1383 = vunpack.c.h.b16 %v1248
      %v1384 = vunpack.c.l.b16 %v1249
      %v1385 = vunpack.c.h.b16 %v1249
      %v1386 = vunpack.c.l.b16 %v1250
      %v1387 = vunpack.c.h.b16 %v1250
      %v1388 = vunpack.c.l.b16 %v1251
      %v1389 = vunpack.c.h.b16 %v1251
      %v1390 = vunpack.c.l.b16 %v1252
      %v1391 = vunpack.c.h.b16 %v1252
      %v1392 = vunpack.c.l.b16 %v1253
      %v1393 = vunpack.c.h.b16 %v1253
      %v1394 = vunpack.c.l.b16 %v1254
      %v1395 = vunpack.c.h.b16 %v1254
      %v1396 = vunpack.c.l.b16 %v1255
      %v1397 = vunpack.c.h.b16 %v1255
      %v1398 = vunpack.c.l.b16 %v1256
      %v1399 = vunpack.c.h.b16 %v1256
      %v1400 = vunpack.c.l.b16 %v1257
      %v1401 = vunpack.c.h.b16 %v1257
      %v1402 = vunpack.c.l.b16 %v1258
      %v1403 = vunpack.c.h.b16 %v1258
      %v1404 = vunpack.c.l.b16 %v1259
      %v1405 = vunpack.c.h.b16 %v1259
      %v1406 = vunpack.c.l.b16 %v1260
      %v1407 = vunpack.c.h.b16 %v1260
      %v1408 = vunpack.c.l.b16 %v1261
      %v1409 = vunpack.c.h.b16 %v1261
      %v1410 = vunpack.c.l.b16 %v1262
      %v1411 = vunpack.c.h.b16 %v1262
      %v1412 = vunpack.c.l.b16 %v1263
      %v1413 = vunpack.c.h.b16 %v1263
      %v1414 = vunpack.c.l.b16 %v1264
      %v1415 = vunpack.c.h.b16 %v1264
      %v1416 = vunpack.c.l.b16 %v1265
      %v1417 = vunpack.c.h.b16 %v1265
      %v1418 = vunpack.c.l.b16 %v1266
      %v1419 = vunpack.c.h.b16 %v1266
      %v1420 = vunpack.c.l.b16 %v1267
      %v1421 = vunpack.c.h.b16 %v1267
      %v1422 = vunpack.c.l.b16 %v1268
      %v1423 = vunpack.c.h.b16 %v1268
      %v1424 = vunpack.c.l.b16 %v1269
      %v1425 = vunpack.c.h.b16 %v1269
      %v1426 = vunpack.c.l.b16 %v1270
      %v1427 = vunpack.c.h.b16 %v1270
      %v1428 = vunpack.c.l.b16 %v1271
      %v1429 = vunpack.c.h.b16 %v1271
      %v1430 = vunpack.c.l.b16 %v1272
      %v1431 = vunpack.c.h.b16 %v1272
      %v1432 = vunpack.c.l.b16 %v1273
      %v1433 = vunpack.c.h.b16 %v1273
      %v1434 = vpack.c.b16 %v1372, %v1370
      %v1435 = vpack.c.b16 %v1373, %v1371
      %v1436 = vpack.c.b16 %v1376, %v1374
      %v1437 = vpack.c.b16 %v1377, %v1375
      %v1438 = vpack.c.b16 %v1380, %v1378
      %v1439 = vpack.c.b16 %v1381, %v1379
      %v1440 = vpack.c.b16 %v1384, %v1382
      %v1441 = vpack.c.b16 %v1385, %v1383
      %v1442 = vpack.c.b16 %v1388, %v1386
      %v1443 = vpack.c.b16 %v1389, %v1387
      %v1444 = vpack.c.b16 %v1392, %v1390
      %v1445 = vpack.c.b16 %v1393, %v1391
      %v1446 = vpack.c.b16 %v1396, %v1394
      %v1447 = vpack.c.b16 %v1397, %v1395
      %v1448 = vpack.c.b16 %v1400, %v1398
      %v1449 = vpack.c.b16 %v1401, %v1399
      %v1450 = vpack.c.b16 %v1404, %v1402
      %v1451 = vpack.c.b16 %v1405, %v1403
      %v1452 = vpack.c.b16 %v1408, %v1406
      %v1453 = vpack.c.b16 %v1409, %v1407
      %v1454 = vpack.c.b16 %v1412, %v1410
      %v1455 = vpack.c.b16 %v1413, %v1411
      %v1456 = vpack.c.b16 %v1416, %v1414
      %v1457 = vpack.c.b16 %v1417, %v1415
      %v1458 = vpack.c.b16 %v1420, %v1418
      %v1459 = vpack.c.b16 %v1421, %v1419
      %v1460 = vpack.c.b16 %v1424, %v1422
      %v1461 = vpack.c.b16 %v1425, %v1423
      %v1462 = vpack.c.b16 %v1428, %v1426
      %v1463 = vpack.c.b16 %v1429, %v1427
      %v1464 = vpack.c.b16 %v1432, %v1430
      %v1465 = vpack.c.b16 %v1433, %v1431
      %1498 = vmatprep.subr.bf16.mxu0 %v1435
      %1499 = vmatpush1.bf16.msra.mxu0 %v1434
      %1500 = vmatprep.subr.bf16.mxu0 %v1437
      %1501 = vmatpush1.bf16.msra.mxu0 %v1436
      %1502 = vmatprep.subr.bf16.mxu0 %v1439
      %1503 = vmatpush1.bf16.msra.mxu0 %v1438
      %1504 = vmatprep.subr.bf16.mxu0 %v1441
      %1505 = vmatpush1.bf16.msra.mxu0 %v1440
      %1506 = vmatprep.subr.bf16.mxu0 %v1443
      %1507 = vmatpush1.bf16.msra.mxu0 %v1442
      %1508 = vmatprep.subr.bf16.mxu0 %v1445
      %1509 = vmatpush1.bf16.msra.mxu0 %v1444
      %1510 = vmatprep.subr.bf16.mxu0 %v1447
      %1511 = vmatpush1.bf16.msra.mxu0 %v1446
      %1512 = vmatprep.subr.bf16.mxu0 %v1449
      %1513 = vmatpush1.bf16.msra.mxu0 %v1448
      %1514 = vmatprep.subr.bf16.mxu0 %v1451
      %1515 = vmatpush1.bf16.msra.mxu0 %v1450
      %1516 = vmatprep.subr.bf16.mxu0 %v1453
      %1517 = vmatpush1.bf16.msra.mxu0 %v1452
      %1518 = vmatprep.subr.bf16.mxu0 %v1455
      %1519 = vmatpush1.bf16.msra.mxu0 %v1454
      %1520 = vmatprep.subr.bf16.mxu0 %v1457
      %1521 = vmatpush1.bf16.msra.mxu0 %v1456
      %1522 = vmatprep.subr.bf16.mxu0 %v1459
      %1523 = vmatpush1.bf16.msra.mxu0 %v1458
      %1524 = vmatprep.subr.bf16.mxu0 %v1461
      %1525 = vmatpush1.bf16.msra.mxu0 %v1460
      %1526 = vmatprep.subr.bf16.mxu0 %v1463
      %1527 = vmatpush1.bf16.msra.mxu0 %v1462
      %1528 = vmatprep.subr.bf16.mxu0 %v1465
      %1529 = vmatpush1.bf16.msra.mxu0 %v1464
      %1530 = vmatprep.mubr.bf16.mxu0 %v1307
      %1531 = vmatmul.mubr.bf16.gmra.mrb[0].mxu0 %v1306
      %v1532 = vpop.f32.mrb[0].mxu0
      %v1533 = vadd.f32 0.0, %v1532
      %v1534 = vpop.f32.mrb[0].mxu0
      %v1535 = vadd.f32 0.0, %v1534
      %v1536 = vpop.f32.mrb[0].mxu0
      %v1537 = vadd.f32 0.0, %v1536
      %v1538 = vpop.f32.mrb[0].mxu0
      %v1539 = vadd.f32 0.0, %v1538
      %1540 = vmatprep.mubr.bf16.mxu0 %v1309
      %1541 = vmatmul.mubr.bf16.gmra.mrb[0].mxu0 %v1308
      %v1542 = vpop.f32.mrb[0].mxu0
      %v1543 = vadd.f32 0.0, %v1542
      %v1544 = vpop.f32.mrb[0].mxu0
      %v1545 = vadd.f32 0.0, %v1544
      %v1546 = vpop.f32.mrb[0].mxu0
      %v1547 = vadd.f32 0.0, %v1546
      %v1548 = vpop.f32.mrb[0].mxu0
      %v1549 = vadd.f32 0.0, %v1548
      %1550 = vmatprep.mubr.bf16.mxu0 %v1311
      %1551 = vmatmul.mubr.bf16.gmra.mrb[0].mxu0 %v1310
      %v1552 = vpop.f32.mrb[0].mxu0
      %v1553 = vadd.f32 0.0, %v1552
      %v1554 = vpop.f32.mrb[0].mxu0
      %v1555 = vadd.f32 0.0, %v1554
      %v1556 = vpop.f32.mrb[0].mxu0
      %v1557 = vadd.f32 0.0, %v1556
      %v1558 = vpop.f32.mrb[0].mxu0
      %v1559 = vadd.f32 0.0, %v1558
      %1560 = vmatprep.mubr.bf16.mxu0 %v1313
      %1561 = vmatmul.mubr.bf16.gmra.mrb[0].mxu0 %v1312
      %v1562 = vpop.f32.mrb[0].mxu0
      %v1563 = vadd.f32 0.0, %v1562
      %v1564 = vpop.f32.mrb[0].mxu0
      %v1565 = vadd.f32 0.0, %v1564
      %v1566 = vpop.f32.mrb[0].mxu0
      %v1567 = vadd.f32 0.0, %v1566
      %v1568 = vpop.f32.mrb[0].mxu0
      %v1569 = vadd.f32 0.0, %v1568
      %1570 = vmatprep.mubr.bf16.mxu0 %v1315
      %1571 = vmatmul.mubr.bf16.gmra.mrb[0].mxu0 %v1314
      %v1572 = vpop.f32.mrb[0].mxu0
      %v1573 = vadd.f32 0.0, %v1572
      %v1574 = vpop.f32.mrb[0].mxu0
      %v1575 = vadd.f32 0.0, %v1574
      %v1576 = vpop.f32.mrb[0].mxu0
      %v1577 = vadd.f32 0.0, %v1576
      %v1578 = vpop.f32.mrb[0].mxu0
      %v1579 = vadd.f32 0.0, %v1578
      %1580 = vmatprep.mubr.bf16.mxu0 %v1317
      %1581 = vmatmul.mubr.bf16.gmra.mrb[0].mxu0 %v1316
      %v1582 = vpop.f32.mrb[0].mxu0
      %v1583 = vadd.f32 0.0, %v1582
      %v1584 = vpop.f32.mrb[0].mxu0
      %v1585 = vadd.f32 0.0, %v1584
      %v1586 = vpop.f32.mrb[0].mxu0
      %v1587 = vadd.f32 0.0, %v1586
      %v1588 = vpop.f32.mrb[0].mxu0
      %v1589 = vadd.f32 0.0, %v1588
      %1590 = vmatprep.mubr.bf16.mxu0 %v1319
      %1591 = vmatmul.mubr.bf16.gmra.mrb[0].mxu0 %v1318
      %v1592 = vpop.f32.mrb[0].mxu0
      %v1593 = vadd.f32 0.0, %v1592
      %v1594 = vpop.f32.mrb[0].mxu0
      %v1595 = vadd.f32 0.0, %v1594
      %v1596 = vpop.f32.mrb[0].mxu0
      %v1597 = vadd.f32 0.0, %v1596
      %v1598 = vpop.f32.mrb[0].mxu0
      %v1599 = vadd.f32 0.0, %v1598
      %1600 = vmatprep.mubr.bf16.mxu0 %v1321
      %1601 = vmatmul.mubr.bf16.gmra.mrb[0].mxu0 %v1320
      %v1602 = vpop.f32.mrb[0].mxu0
      %v1603 = vadd.f32 0.0, %v1602
      %v1604 = vpop.f32.mrb[0].mxu0
      %v1605 = vadd.f32 0.0, %v1604
      %v1606 = vpop.f32.mrb[0].mxu0
      %v1607 = vadd.f32 0.0, %v1606
      %v1608 = vpop.f32.mrb[0].mxu0
      %v1609 = vadd.f32 0.0, %v1608
      %1610 = vdwg.mxu0
      %v1611 = vadd.f32 %v1096, %v1533
      %v1612 = vadd.f32 %v1098, %v1535
      %v1613 = vadd.f32 %v1100, %v1537
      %v1614 = vadd.f32 %v1102, %v1539
      %v1615 = vadd.f32 %v1106, %v1543
      %v1616 = vadd.f32 %v1108, %v1545
      %v1617 = vadd.f32 %v1110, %v1547
      %v1618 = vadd.f32 %v1112, %v1549
      %v1619 = vadd.f32 %v1116, %v1553
      %v1620 = vadd.f32 %v1118, %v1555
      %v1621 = vadd.f32 %v1120, %v1557
      %v1622 = vadd.f32 %v1122, %v1559
      %v1623 = vadd.f32 %v1126, %v1563
      %v1624 = vadd.f32 %v1128, %v1565
      %v1625 = vadd.f32 %v1130, %v1567
      %v1626 = vadd.f32 %v1132, %v1569
      %v1627 = vadd.f32 %v1136, %v1573
      %v1628 = vadd.f32 %v1138, %v1575
      %v1629 = vadd.f32 %v1140, %v1577
      %v1630 = vadd.f32 %v1142, %v1579
      %v1631 = vadd.f32 %v1146, %v1583
      %v1632 = vadd.f32 %v1148, %v1585
      %v1633 = vadd.f32 %v1150, %v1587
      %v1634 = vadd.f32 %v1152, %v1589
      %v1635 = vadd.f32 %v1156, %v1593
      %v1636 = vadd.f32 %v1158, %v1595
      %v1637 = vadd.f32 %v1160, %v1597
      %v1638 = vadd.f32 %v1162, %v1599
      %v1639 = vadd.f32 %v1166, %v1603
      %v1640 = vadd.f32 %v1168, %v1605
      %v1641 = vadd.f32 %v1170, %v1607
      %v1642 = vadd.f32 %v1172, %v1609
      %s1643 = sadd.s32 %s196, 1
      %s1644 = smul.u32 %s1643, 6
      %s1645 = smul.addr %s1644, 4
      %s1646 = scalar_lea.vmem %s184, %s1645
      %v1647 = vld [vmem:[%s1646] sm:$0xff]
      %v1648 = vld [vmem:[%s1646 + $0x8] sm:$0xff]
      %v1649 = vld [vmem:[%s1646 + $0x10] sm:$0x11]
      %v1650 = vld [vmem:[%s1646 + $0x18] sm:$0xff]
      %v1651 = vld [vmem:[%s1646 + $0x20] sm:$0xff]
      %v1652 = vld [vmem:[%s1646 + $0x28] sm:$0x11]
      %v1653 = vld [vmem:[%s1646 + $0x30] sm:$0xff]
      %v1654 = vld [vmem:[%s1646 + $0x38] sm:$0xff]
      %v1655 = vld [vmem:[%s1646 + $0x40] sm:$0x11]
      %v1656 = vld [vmem:[%s1646 + $0x48] sm:$0xff]
      %v1657 = vld [vmem:[%s1646 + $0x50] sm:$0xff]
      %v1658 = vld [vmem:[%s1646 + $0x58] sm:$0x11]
      %v1659 = vld [vmem:[%s1646 + $0x60] sm:$0xff]
      %v1660 = vld [vmem:[%s1646 + $0x68] sm:$0xff]
      %v1661 = vld [vmem:[%s1646 + $0x70] sm:$0x11]
      %v1662 = vld [vmem:[%s1646 + $0x78] sm:$0xff]
      %v1663 = vld [vmem:[%s1646 + $0x80] sm:$0xff]
      %v1664 = vld [vmem:[%s1646 + $0x88] sm:$0x11]
      %v1665 = vld [vmem:[%s1646 + $0x90] sm:$0xff]
      %v1666 = vld [vmem:[%s1646 + $0x98] sm:$0xff]
      %v1667 = vld [vmem:[%s1646 + $0xa0] sm:$0x11]
      %v1668 = vld [vmem:[%s1646 + $0xa8] sm:$0xff]
      %v1669 = vld [vmem:[%s1646 + $0xb0] sm:$0xff]
      %v1670 = vld [vmem:[%s1646 + $0xb8] sm:$0x11]
      %s1671 = scalar_lea.vmem %s1, 768
      %v1672 = vld [vmem:[%s1671] sm:$0xff]
      %v1673 = vld [vmem:[%s1671 + $0x8] sm:$0xff]
      %v1674 = vld [vmem:[%s1671 + $0x10] sm:$0xff]
      %v1675 = vld [vmem:[%s1671 + $0x18] sm:$0xff]
      %v1676 = vld [vmem:[%s1671 + $0x20] sm:$0xff]
      %v1677 = vld [vmem:[%s1671 + $0x28] sm:$0xff]
      %v1678 = vld [vmem:[%s1671 + $0x30] sm:$0xff]
      %v1679 = vld [vmem:[%s1671 + $0x38] sm:$0xff]
      %v1680 = vld [vmem:[%s1671 + $0x40] sm:$0xff]
      %v1681 = vld [vmem:[%s1671 + $0x48] sm:$0xff]
      %v1682 = vld [vmem:[%s1671 + $0x50] sm:$0xff]
      %v1683 = vld [vmem:[%s1671 + $0x58] sm:$0xff]
      %v1684 = vld [vmem:[%s1671 + $0x60] sm:$0xff]
      %v1685 = vld [vmem:[%s1671 + $0x68] sm:$0xff]
      %v1686 = vld [vmem:[%s1671 + $0x70] sm:$0xff]
      %v1687 = vld [vmem:[%s1671 + $0x78] sm:$0xff]
      %v1688 = vld [vmem:[%s1671 + $0x80] sm:$0xff]
      %v1689 = vld [vmem:[%s1671 + $0x88] sm:$0xff]
      %v1690 = vld [vmem:[%s1671 + $0x90] sm:$0xff]
      %v1691 = vld [vmem:[%s1671 + $0x98] sm:$0xff]
      %v1692 = vld [vmem:[%s1671 + $0xa0] sm:$0xff]
      %v1693 = vld [vmem:[%s1671 + $0xa8] sm:$0xff]
      %v1694 = vld [vmem:[%s1671 + $0xb0] sm:$0xff]
      %v1695 = vld [vmem:[%s1671 + $0xb8] sm:$0xff]
      %v1696 = vld [vmem:[%s1671 + $0xc0] sm:$0xff]
      %v1697 = vld [vmem:[%s1671 + $0xc8] sm:$0xff]
      %v1698 = vld [vmem:[%s1671 + $0xd0] sm:$0xff]
      %v1699 = vld [vmem:[%s1671 + $0xd8] sm:$0xff]
      %v1700 = vld [vmem:[%s1671 + $0xe0] sm:$0xff]
      %v1701 = vld [vmem:[%s1671 + $0xe8] sm:$0xff]
      %v1702 = vld [vmem:[%s1671 + $0xf0] sm:$0xff]
      %v1703 = vld [vmem:[%s1671 + $0xf8] sm:$0xff]
      %v1720 = vunpack.c.l.b16 %v1647
      %v1721 = vunpack.c.h.b16 %v1647
      %v1722 = vunpack.c.l.b16 %v1648
      %v1723 = vunpack.c.h.b16 %v1648
      %v1724 = vunpack.c.l.b16 %v1650
      %v1725 = vunpack.c.h.b16 %v1650
      %v1726 = vunpack.c.l.b16 %v1651
      %v1727 = vunpack.c.h.b16 %v1651
      %v1728 = vunpack.c.l.b16 %v1653
      %v1729 = vunpack.c.h.b16 %v1653
      %v1730 = vunpack.c.l.b16 %v1654
      %v1731 = vunpack.c.h.b16 %v1654
      %v1732 = vunpack.c.l.b16 %v1656
      %v1733 = vunpack.c.h.b16 %v1656
      %v1734 = vunpack.c.l.b16 %v1657
      %v1735 = vunpack.c.h.b16 %v1657
      %v1736 = vunpack.c.l.b16 %v1659
      %v1737 = vunpack.c.h.b16 %v1659
      %v1738 = vunpack.c.l.b16 %v1660
      %v1739 = vunpack.c.h.b16 %v1660
      %v1740 = vunpack.c.l.b16 %v1662
      %v1741 = vunpack.c.h.b16 %v1662
      %v1742 = vunpack.c.l.b16 %v1663
      %v1743 = vunpack.c.h.b16 %v1663
      %v1744 = vunpack.c.l.b16 %v1665
      %v1745 = vunpack.c.h.b16 %v1665
      %v1746 = vunpack.c.l.b16 %v1666
      %v1747 = vunpack.c.h.b16 %v1666
      %v1748 = vunpack.c.l.b16 %v1668
      %v1749 = vunpack.c.h.b16 %v1668
      %v1750 = vunpack.c.l.b16 %v1669
      %v1751 = vunpack.c.h.b16 %v1669
      %v1752 = vpack.c.b16 %v1722, %v1720
      %v1753 = vpack.c.b16 %v1723, %v1721
      %v1754 = vpack.c.b16 %v1726, %v1724
      %v1755 = vpack.c.b16 %v1727, %v1725
      %v1756 = vpack.c.b16 %v1730, %v1728
      %v1757 = vpack.c.b16 %v1731, %v1729
      %v1758 = vpack.c.b16 %v1734, %v1732
      %v1759 = vpack.c.b16 %v1735, %v1733
      %v1760 = vpack.c.b16 %v1738, %v1736
      %v1761 = vpack.c.b16 %v1739, %v1737
      %v1762 = vpack.c.b16 %v1742, %v1740
      %v1763 = vpack.c.b16 %v1743, %v1741
      %v1764 = vpack.c.b16 %v1746, %v1744
      %v1765 = vpack.c.b16 %v1747, %v1745
      %v1766 = vpack.c.b16 %v1750, %v1748
      %v1767 = vpack.c.b16 %v1751, %v1749
      %v1816 = vunpack.c.l.b16 %v1672
      %v1817 = vunpack.c.h.b16 %v1672
      %v1818 = vunpack.c.l.b16 %v1673
      %v1819 = vunpack.c.h.b16 %v1673
      %v1820 = vunpack.c.l.b16 %v1674
      %v1821 = vunpack.c.h.b16 %v1674
      %v1822 = vunpack.c.l.b16 %v1675
      %v1823 = vunpack.c.h.b16 %v1675
      %v1824 = vunpack.c.l.b16 %v1676
      %v1825 = vunpack.c.h.b16 %v1676
      %v1826 = vunpack.c.l.b16 %v1677
      %v1827 = vunpack.c.h.b16 %v1677
      %v1828 = vunpack.c.l.b16 %v1678
      %v1829 = vunpack.c.h.b16 %v1678
      %v1830 = vunpack.c.l.b16 %v1679
      %v1831 = vunpack.c.h.b16 %v1679
      %v1832 = vunpack.c.l.b16 %v1680
      %v1833 = vunpack.c.h.b16 %v1680
      %v1834 = vunpack.c.l.b16 %v1681
      %v1835 = vunpack.c.h.b16 %v1681
      %v1836 = vunpack.c.l.b16 %v1682
      %v1837 = vunpack.c.h.b16 %v1682
      %v1838 = vunpack.c.l.b16 %v1683
      %v1839 = vunpack.c.h.b16 %v1683
      %v1840 = vunpack.c.l.b16 %v1684
      %v1841 = vunpack.c.h.b16 %v1684
      %v1842 = vunpack.c.l.b16 %v1685
      %v1843 = vunpack.c.h.b16 %v1685
      %v1844 = vunpack.c.l.b16 %v1686
      %v1845 = vunpack.c.h.b16 %v1686
      %v1846 = vunpack.c.l.b16 %v1687
      %v1847 = vunpack.c.h.b16 %v1687
      %v1848 = vunpack.c.l.b16 %v1688
      %v1849 = vunpack.c.h.b16 %v1688
      %v1850 = vunpack.c.l.b16 %v1689
      %v1851 = vunpack.c.h.b16 %v1689
      %v1852 = vunpack.c.l.b16 %v1690
      %v1853 = vunpack.c.h.b16 %v1690
      %v1854 = vunpack.c.l.b16 %v1691
      %v1855 = vunpack.c.h.b16 %v1691
      %v1856 = vunpack.c.l.b16 %v1692
      %v1857 = vunpack.c.h.b16 %v1692
      %v1858 = vunpack.c.l.b16 %v1693
      %v1859 = vunpack.c.h.b16 %v1693
      %v1860 = vunpack.c.l.b16 %v1694
      %v1861 = vunpack.c.h.b16 %v1694
      %v1862 = vunpack.c.l.b16 %v1695
      %v1863 = vunpack.c.h.b16 %v1695
      %v1864 = vunpack.c.l.b16 %v1696
      %v1865 = vunpack.c.h.b16 %v1696
      %v1866 = vunpack.c.l.b16 %v1697
      %v1867 = vunpack.c.h.b16 %v1697
      %v1868 = vunpack.c.l.b16 %v1698
      %v1869 = vunpack.c.h.b16 %v1698
      %v1870 = vunpack.c.l.b16 %v1699
      %v1871 = vunpack.c.h.b16 %v1699
      %v1872 = vunpack.c.l.b16 %v1700
      %v1873 = vunpack.c.h.b16 %v1700
      %v1874 = vunpack.c.l.b16 %v1701
      %v1875 = vunpack.c.h.b16 %v1701
      %v1876 = vunpack.c.l.b16 %v1702
      %v1877 = vunpack.c.h.b16 %v1702
      %v1878 = vunpack.c.l.b16 %v1703
      %v1879 = vunpack.c.h.b16 %v1703
      %v1880 = vpack.c.b16 %v1818, %v1816
      %v1881 = vpack.c.b16 %v1819, %v1817
      %v1882 = vpack.c.b16 %v1822, %v1820
      %v1883 = vpack.c.b16 %v1823, %v1821
      %v1884 = vpack.c.b16 %v1826, %v1824
      %v1885 = vpack.c.b16 %v1827, %v1825
      %v1886 = vpack.c.b16 %v1830, %v1828
      %v1887 = vpack.c.b16 %v1831, %v1829
      %v1888 = vpack.c.b16 %v1834, %v1832
      %v1889 = vpack.c.b16 %v1835, %v1833
      %v1890 = vpack.c.b16 %v1838, %v1836
      %v1891 = vpack.c.b16 %v1839, %v1837
      %v1892 = vpack.c.b16 %v1842, %v1840
      %v1893 = vpack.c.b16 %v1843, %v1841
      %v1894 = vpack.c.b16 %v1846, %v1844
      %v1895 = vpack.c.b16 %v1847, %v1845
      %v1896 = vpack.c.b16 %v1850, %v1848
      %v1897 = vpack.c.b16 %v1851, %v1849
      %v1898 = vpack.c.b16 %v1854, %v1852
      %v1899 = vpack.c.b16 %v1855, %v1853
      %v1900 = vpack.c.b16 %v1858, %v1856
      %v1901 = vpack.c.b16 %v1859, %v1857
      %v1902 = vpack.c.b16 %v1862, %v1860
      %v1903 = vpack.c.b16 %v1863, %v1861
      %v1904 = vpack.c.b16 %v1866, %v1864
      %v1905 = vpack.c.b16 %v1867, %v1865
      %v1906 = vpack.c.b16 %v1870, %v1868
      %v1907 = vpack.c.b16 %v1871, %v1869
      %v1908 = vpack.c.b16 %v1874, %v1872
      %v1909 = vpack.c.b16 %v1875, %v1873
      %v1910 = vpack.c.b16 %v1878, %v1876
      %v1911 = vpack.c.b16 %v1879, %v1877
      %1944 = vmatprep.subr.bf16.mxu0 %v1881
      %1945 = vmatpush1.bf16.msra.mxu0 %v1880
      %1946 = vmatprep.subr.bf16.mxu0 %v1883
      %1947 = vmatpush1.bf16.msra.mxu0 %v1882
      %1948 = vmatprep.subr.bf16.mxu0 %v1885
      %1949 = vmatpush1.bf16.msra.mxu0 %v1884
      %1950 = vmatprep.subr.bf16.mxu0 %v1887
      %1951 = vmatpush1.bf16.msra.mxu0 %v1886
      %1952 = vmatprep.subr.bf16.mxu0 %v1889
      %1953 = vmatpush1.bf16.msra.mxu0 %v1888
      %1954 = vmatprep.subr.bf16.mxu0 %v1891
      %1955 = vmatpush1.bf16.msra.mxu0 %v1890
      %1956 = vmatprep.subr.bf16.mxu0 %v1893
      %1957 = vmatpush1.bf16.msra.mxu0 %v1892
      %1958 = vmatprep.subr.bf16.mxu0 %v1895
      %1959 = vmatpush1.bf16.msra.mxu0 %v1894
      %1960 = vmatprep.subr.bf16.mxu0 %v1897
      %1961 = vmatpush1.bf16.msra.mxu0 %v1896
      %1962 = vmatprep.subr.bf16.mxu0 %v1899
      %1963 = vmatpush1.bf16.msra.mxu0 %v1898
      %1964 = vmatprep.subr.bf16.mxu0 %v1901
      %1965 = vmatpush1.bf16.msra.mxu0 %v1900
      %1966 = vmatprep.subr.bf16.mxu0 %v1903
      %1967 = vmatpush1.bf16.msra.mxu0 %v1902
      %1968 = vmatprep.subr.bf16.mxu0 %v1905
      %1969 = vmatpush1.bf16.msra.mxu0 %v1904
      %1970 = vmatprep.subr.bf16.mxu0 %v1907
      %1971 = vmatpush1.bf16.msra.mxu0 %v1906
      %1972 = vmatprep.subr.bf16.mxu0 %v1909
      %1973 = vmatpush1.bf16.msra.mxu0 %v1908
      %1974 = vmatprep.subr.bf16.mxu0 %v1911
      %1975 = vmatpush1.bf16.msra.mxu0 %v1910
      %1976 = vmatprep.mubr.bf16.mxu0 %v1753
      %1977 = vmatmul.mubr.bf16.gmra.mrb[0].mxu0 %v1752
      %v1978 = vpop.f32.mrb[0].mxu0
      %v1979 = vadd.f32 0.0, %v1978
      %v1980 = vpop.f32.mrb[0].mxu0
      %v1981 = vadd.f32 0.0, %v1980
      %v1982 = vpop.f32.mrb[0].mxu0
      %v1983 = vadd.f32 0.0, %v1982
      %v1984 = vpop.f32.mrb[0].mxu0
      %v1985 = vadd.f32 0.0, %v1984
      %1986 = vmatprep.mubr.bf16.mxu0 %v1755
      %1987 = vmatmul.mubr.bf16.gmra.mrb[0].mxu0 %v1754
      %v1988 = vpop.f32.mrb[0].mxu0
      %v1989 = vadd.f32 0.0, %v1988
      %v1990 = vpop.f32.mrb[0].mxu0
      %v1991 = vadd.f32 0.0, %v1990
      %v1992 = vpop.f32.mrb[0].mxu0
      %v1993 = vadd.f32 0.0, %v1992
      %v1994 = vpop.f32.mrb[0].mxu0
      %v1995 = vadd.f32 0.0, %v1994
      %1996 = vmatprep.mubr.bf16.mxu0 %v1757
      %1997 = vmatmul.mubr.bf16.gmra.mrb[0].mxu0 %v1756
      %v1998 = vpop.f32.mrb[0].mxu0
      %v1999 = vadd.f32 0.0, %v1998
      %v2000 = vpop.f32.mrb[0].mxu0
      %v2001 = vadd.f32 0.0, %v2000
      %v2002 = vpop.f32.mrb[0].mxu0
      %v2003 = vadd.f32 0.0, %v2002
      %v2004 = vpop.f32.mrb[0].mxu0
      %v2005 = vadd.f32 0.0, %v2004
      %2006 = vmatprep.mubr.bf16.mxu0 %v1759
      %2007 = vmatmul.mubr.bf16.gmra.mrb[0].mxu0 %v1758
      %v2008 = vpop.f32.mrb[0].mxu0
      %v2009 = vadd.f32 0.0, %v2008
      %v2010 = vpop.f32.mrb[0].mxu0
      %v2011 = vadd.f32 0.0, %v2010
      %v2012 = vpop.f32.mrb[0].mxu0
      %v2013 = vadd.f32 0.0, %v2012
      %v2014 = vpop.f32.mrb[0].mxu0
      %v2015 = vadd.f32 0.0, %v2014
      %2016 = vmatprep.mubr.bf16.mxu0 %v1761
      %2017 = vmatmul.mubr.bf16.gmra.mrb[0].mxu0 %v1760
      %v2018 = vpop.f32.mrb[0].mxu0
      %v2019 = vadd.f32 0.0, %v2018
      %v2020 = vpop.f32.mrb[0].mxu0
      %v2021 = vadd.f32 0.0, %v2020
      %v2022 = vpop.f32.mrb[0].mxu0
      %v2023 = vadd.f32 0.0, %v2022
      %v2024 = vpop.f32.mrb[0].mxu0
      %v2025 = vadd.f32 0.0, %v2024
      %2026 = vmatprep.mubr.bf16.mxu0 %v1763
      %2027 = vmatmul.mubr.bf16.gmra.mrb[0].mxu0 %v1762
      %v2028 = vpop.f32.mrb[0].mxu0
      %v2029 = vadd.f32 0.0, %v2028
      %v2030 = vpop.f32.mrb[0].mxu0
      %v2031 = vadd.f32 0.0, %v2030
      %v2032 = vpop.f32.mrb[0].mxu0
      %v2033 = vadd.f32 0.0, %v2032
      %v2034 = vpop.f32.mrb[0].mxu0
      %v2035 = vadd.f32 0.0, %v2034
      %2036 = vmatprep.mubr.bf16.mxu0 %v1765
      %2037 = vmatmul.mubr.bf16.gmra.mrb[0].mxu0 %v1764
      %v2038 = vpop.f32.mrb[0].mxu0
      %v2039 = vadd.f32 0.0, %v2038
      %v2040 = vpop.f32.mrb[0].mxu0
      %v2041 = vadd.f32 0.0, %v2040
      %v2042 = vpop.f32.mrb[0].mxu0
      %v2043 = vadd.f32 0.0, %v2042
      %v2044 = vpop.f32.mrb[0].mxu0
      %v2045 = vadd.f32 0.0, %v2044
      %2046 = vmatprep.mubr.bf16.mxu0 %v1767
      %2047 = vmatmul.mubr.bf16.gmra.mrb[0].mxu0 %v1766
      %v2048 = vpop.f32.mrb[0].mxu0
      %v2049 = vadd.f32 0.0, %v2048
      %v2050 = vpop.f32.mrb[0].mxu0
      %v2051 = vadd.f32 0.0, %v2050
      %v2052 = vpop.f32.mrb[0].mxu0
      %v2053 = vadd.f32 0.0, %v2052
      %v2054 = vpop.f32.mrb[0].mxu0
      %v2055 = vadd.f32 0.0, %v2054
      %2056 = vdwg.mxu0
      %v2057 = vadd.f32 %v1611, %v1979
      %v2058 = vadd.f32 %v1612, %v1981
      %v2059 = vadd.f32 %v1613, %v1983
      %v2060 = vadd.f32 %v1614, %v1985
      %v2061 = vadd.f32 %v1615, %v1989
      %v2062 = vadd.f32 %v1616, %v1991
      %v2063 = vadd.f32 %v1617, %v1993
      %v2064 = vadd.f32 %v1618, %v1995
      %v2065 = vadd.f32 %v1619, %v1999
      %v2066 = vadd.f32 %v1620, %v2001
      %v2067 = vadd.f32 %v1621, %v2003
      %v2068 = vadd.f32 %v1622, %v2005
      %v2069 = vadd.f32 %v1623, %v2009
      %v2070 = vadd.f32 %v1624, %v2011
      %v2071 = vadd.f32 %v1625, %v2013
      %v2072 = vadd.f32 %v1626, %v2015
      %v2073 = vadd.f32 %v1627, %v2019
      %v2074 = vadd.f32 %v1628, %v2021
      %v2075 = vadd.f32 %v1629, %v2023
      %v2076 = vadd.f32 %v1630, %v2025
      %v2077 = vadd.f32 %v1631, %v2029
      %v2078 = vadd.f32 %v1632, %v2031
      %v2079 = vadd.f32 %v1633, %v2033
      %v2080 = vadd.f32 %v1634, %v2035
      %v2081 = vadd.f32 %v1635, %v2039
      %v2082 = vadd.f32 %v1636, %v2041
      %v2083 = vadd.f32 %v1637, %v2043
      %v2084 = vadd.f32 %v1638, %v2045
      %v2085 = vadd.f32 %v1639, %v2049
      %v2086 = vadd.f32 %v1640, %v2051
      %v2087 = vadd.f32 %v1641, %v2053
      %v2088 = vadd.f32 %v1642, %v2055
      %v2090 = vshrl.u32 %v1647, 16
      %v2092 = vrot.slane %v2090, 4
      %v2093 = vshll.u32 %v1647, 16
      %v2095 = vrot.slane %v2093, 5
      %v2096 = vor.u32 %v2092, %v2095
      %v2097 = vrot.slane %v2096, 4
      %v2099 = vshll.u32 %v1648, 16
      %v2101 = vrot.slane %v2099, 5
      %v2102 = vsel %vm258, %v2097, %v2101
      %v2103 = vshrl.u32 %v1648, 16
      %v2105 = vrot.slane %v2103, 4
      %v2106 = vor.u32 %v2105, %v2101
      %v2107 = vrot.slane %v2106, 4
      %v2109 = vshll.u32 %v1649, 16
      %v2111 = vrot.slane %v2109, 5
      %v2112 = vsel %vm258, %v2107, %v2111
      %v2114 = vshrl.u32 %v1650, 16
      %v2116 = vrot.slane %v2114, 4
      %v2117 = vshll.u32 %v1650, 16
      %v2119 = vrot.slane %v2117, 5
      %v2120 = vor.u32 %v2116, %v2119
      %v2121 = vrot.slane %v2120, 4
      %v2123 = vshll.u32 %v1651, 16
      %v2125 = vrot.slane %v2123, 5
      %v2126 = vsel %vm258, %v2121, %v2125
      %v2127 = vshrl.u32 %v1651, 16
      %v2129 = vrot.slane %v2127, 4
      %v2130 = vor.u32 %v2129, %v2125
      %v2131 = vrot.slane %v2130, 4
      %v2133 = vshll.u32 %v1652, 16
      %v2135 = vrot.slane %v2133, 5
      %v2136 = vsel %vm258, %v2131, %v2135
      %v2138 = vshrl.u32 %v1653, 16
      %v2140 = vrot.slane %v2138, 4
      %v2141 = vshll.u32 %v1653, 16
      %v2143 = vrot.slane %v2141, 5
      %v2144 = vor.u32 %v2140, %v2143
      %v2145 = vrot.slane %v2144, 4
      %v2147 = vshll.u32 %v1654, 16
      %v2149 = vrot.slane %v2147, 5
      %v2150 = vsel %vm258, %v2145, %v2149
      %v2151 = vshrl.u32 %v1654, 16
      %v2153 = vrot.slane %v2151, 4
      %v2154 = vor.u32 %v2153, %v2149
      %v2155 = vrot.slane %v2154, 4
      %v2157 = vshll.u32 %v1655, 16
      %v2159 = vrot.slane %v2157, 5
      %v2160 = vsel %vm258, %v2155, %v2159
      %v2162 = vshrl.u32 %v1656, 16
      %v2164 = vrot.slane %v2162, 4
      %v2165 = vshll.u32 %v1656, 16
      %v2167 = vrot.slane %v2165, 5
      %v2168 = vor.u32 %v2164, %v2167
      %v2169 = vrot.slane %v2168, 4
      %v2171 = vshll.u32 %v1657, 16
      %v2173 = vrot.slane %v2171, 5
      %v2174 = vsel %vm258, %v2169, %v2173
      %v2175 = vshrl.u32 %v1657, 16
      %v2177 = vrot.slane %v2175, 4
      %v2178 = vor.u32 %v2177, %v2173
      %v2179 = vrot.slane %v2178, 4
      %v2181 = vshll.u32 %v1658, 16
      %v2183 = vrot.slane %v2181, 5
      %v2184 = vsel %vm258, %v2179, %v2183
      %v2186 = vshrl.u32 %v1659, 16
      %v2188 = vrot.slane %v2186, 4
      %v2189 = vshll.u32 %v1659, 16
      %v2191 = vrot.slane %v2189, 5
      %v2192 = vor.u32 %v2188, %v2191
      %v2193 = vrot.slane %v2192, 4
      %v2195 = vshll.u32 %v1660, 16
      %v2197 = vrot.slane %v2195, 5
      %v2198 = vsel %vm258, %v2193, %v2197
      %v2199 = vshrl.u32 %v1660, 16
      %v2201 = vrot.slane %v2199, 4
      %v2202 = vor.u32 %v2201, %v2197
      %v2203 = vrot.slane %v2202, 4
      %v2205 = vshll.u32 %v1661, 16
      %v2207 = vrot.slane %v2205, 5
      %v2208 = vsel %vm258, %v2203, %v2207
      %v2210 = vshrl.u32 %v1662, 16
      %v2212 = vrot.slane %v2210, 4
      %v2213 = vshll.u32 %v1662, 16
      %v2215 = vrot.slane %v2213, 5
      %v2216 = vor.u32 %v2212, %v2215
      %v2217 = vrot.slane %v2216, 4
      %v2219 = vshll.u32 %v1663, 16
      %v2221 = vrot.slane %v2219, 5
      %v2222 = vsel %vm258, %v2217, %v2221
      %v2223 = vshrl.u32 %v1663, 16
      %v2225 = vrot.slane %v2223, 4
      %v2226 = vor.u32 %v2225, %v2221
      %v2227 = vrot.slane %v2226, 4
      %v2229 = vshll.u32 %v1664, 16
      %v2231 = vrot.slane %v2229, 5
      %v2232 = vsel %vm258, %v2227, %v2231
      %v2234 = vshrl.u32 %v1665, 16
      %v2236 = vrot.slane %v2234, 4
      %v2237 = vshll.u32 %v1665, 16
      %v2239 = vrot.slane %v2237, 5
      %v2240 = vor.u32 %v2236, %v2239
      %v2241 = vrot.slane %v2240, 4
      %v2243 = vshll.u32 %v1666, 16
      %v2245 = vrot.slane %v2243, 5
      %v2246 = vsel %vm258, %v2241, %v2245
      %v2247 = vshrl.u32 %v1666, 16
      %v2249 = vrot.slane %v2247, 4
      %v2250 = vor.u32 %v2249, %v2245
      %v2251 = vrot.slane %v2250, 4
      %v2253 = vshll.u32 %v1667, 16
      %v2255 = vrot.slane %v2253, 5
      %v2256 = vsel %vm258, %v2251, %v2255
      %v2258 = vshrl.u32 %v1668, 16
      %v2260 = vrot.slane %v2258, 4
      %v2261 = vshll.u32 %v1668, 16
      %v2263 = vrot.slane %v2261, 5
      %v2264 = vor.u32 %v2260, %v2263
      %v2265 = vrot.slane %v2264, 4
      %v2267 = vshll.u32 %v1669, 16
      %v2269 = vrot.slane %v2267, 5
      %v2270 = vsel %vm258, %v2265, %v2269
      %v2271 = vshrl.u32 %v1669, 16
      %v2273 = vrot.slane %v2271, 4
      %v2274 = vor.u32 %v2273, %v2269
      %v2275 = vrot.slane %v2274, 4
      %v2277 = vshll.u32 %v1670, 16
      %v2279 = vrot.slane %v2277, 5
      %v2280 = vsel %vm258, %v2275, %v2279
      %s2281 = scalar_lea.vmem %s1, 1024
      %v2282 = vld [vmem:[%s2281] sm:$0xff]
      %v2283 = vld [vmem:[%s2281 + $0x8] sm:$0xff]
      %v2284 = vld [vmem:[%s2281 + $0x10] sm:$0xff]
      %v2285 = vld [vmem:[%s2281 + $0x18] sm:$0xff]
      %v2286 = vld [vmem:[%s2281 + $0x20] sm:$0xff]
      %v2287 = vld [vmem:[%s2281 + $0x28] sm:$0xff]
      %v2288 = vld [vmem:[%s2281 + $0x30] sm:$0xff]
      %v2289 = vld [vmem:[%s2281 + $0x38] sm:$0xff]
      %v2290 = vld [vmem:[%s2281 + $0x40] sm:$0xff]
      %v2291 = vld [vmem:[%s2281 + $0x48] sm:$0xff]
      %v2292 = vld [vmem:[%s2281 + $0x50] sm:$0xff]
      %v2293 = vld [vmem:[%s2281 + $0x58] sm:$0xff]
      %v2294 = vld [vmem:[%s2281 + $0x60] sm:$0xff]
      %v2295 = vld [vmem:[%s2281 + $0x68] sm:$0xff]
      %v2296 = vld [vmem:[%s2281 + $0x70] sm:$0xff]
      %v2297 = vld [vmem:[%s2281 + $0x78] sm:$0xff]
      %v2298 = vld [vmem:[%s2281 + $0x80] sm:$0xff]
      %v2299 = vld [vmem:[%s2281 + $0x88] sm:$0xff]
      %v2300 = vld [vmem:[%s2281 + $0x90] sm:$0xff]
      %v2301 = vld [vmem:[%s2281 + $0x98] sm:$0xff]
      %v2302 = vld [vmem:[%s2281 + $0xa0] sm:$0xff]
      %v2303 = vld [vmem:[%s2281 + $0xa8] sm:$0xff]
      %v2304 = vld [vmem:[%s2281 + $0xb0] sm:$0xff]
      %v2305 = vld [vmem:[%s2281 + $0xb8] sm:$0xff]
      %v2306 = vld [vmem:[%s2281 + $0xc0] sm:$0xff]
      %v2307 = vld [vmem:[%s2281 + $0xc8] sm:$0xff]
      %v2308 = vld [vmem:[%s2281 + $0xd0] sm:$0xff]
      %v2309 = vld [vmem:[%s2281 + $0xd8] sm:$0xff]
      %v2310 = vld [vmem:[%s2281 + $0xe0] sm:$0xff]
      %v2311 = vld [vmem:[%s2281 + $0xe8] sm:$0xff]
      %v2312 = vld [vmem:[%s2281 + $0xf0] sm:$0xff]
      %v2313 = vld [vmem:[%s2281 + $0xf8] sm:$0xff]
      %v2314 = vunpack.c.l.b16 %v2102
      %v2315 = vunpack.c.h.b16 %v2102
      %v2316 = vunpack.c.l.b16 %v2112
      %v2317 = vunpack.c.h.b16 %v2112
      %v2318 = vunpack.c.l.b16 %v2126
      %v2319 = vunpack.c.h.b16 %v2126
      %v2320 = vunpack.c.l.b16 %v2136
      %v2321 = vunpack.c.h.b16 %v2136
      %v2322 = vunpack.c.l.b16 %v2150
      %v2323 = vunpack.c.h.b16 %v2150
      %v2324 = vunpack.c.l.b16 %v2160
      %v2325 = vunpack.c.h.b16 %v2160
      %v2326 = vunpack.c.l.b16 %v2174
      %v2327 = vunpack.c.h.b16 %v2174
      %v2328 = vunpack.c.l.b16 %v2184
      %v2329 = vunpack.c.h.b16 %v2184
      %v2330 = vunpack.c.l.b16 %v2198
      %v2331 = vunpack.c.h.b16 %v2198
      %v2332 = vunpack.c.l.b16 %v2208
      %v2333 = vunpack.c.h.b16 %v2208
      %v2334 = vunpack.c.l.b16 %v2222
      %v2335 = vunpack.c.h.b16 %v2222
      %v2336 = vunpack.c.l.b16 %v2232
      %v2337 = vunpack.c.h.b16 %v2232
      %v2338 = vunpack.c.l.b16 %v2246
      %v2339 = vunpack.c.h.b16 %v2246
      %v2340 = vunpack.c.l.b16 %v2256
      %v2341 = vunpack.c.h.b16 %v2256
      %v2342 = vunpack.c.l.b16 %v2270
      %v2343 = vunpack.c.h.b16 %v2270
      %v2344 = vunpack.c.l.b16 %v2280
      %v2345 = vunpack.c.h.b16 %v2280
      %v2346 = vpack.c.b16 %v2316, %v2314
      %v2347 = vpack.c.b16 %v2317, %v2315
      %v2348 = vpack.c.b16 %v2320, %v2318
      %v2349 = vpack.c.b16 %v2321, %v2319
      %v2350 = vpack.c.b16 %v2324, %v2322
      %v2351 = vpack.c.b16 %v2325, %v2323
      %v2352 = vpack.c.b16 %v2328, %v2326
      %v2353 = vpack.c.b16 %v2329, %v2327
      %v2354 = vpack.c.b16 %v2332, %v2330
      %v2355 = vpack.c.b16 %v2333, %v2331
      %v2356 = vpack.c.b16 %v2336, %v2334
      %v2357 = vpack.c.b16 %v2337, %v2335
      %v2358 = vpack.c.b16 %v2340, %v2338
      %v2359 = vpack.c.b16 %v2341, %v2339
      %v2360 = vpack.c.b16 %v2344, %v2342
      %v2361 = vpack.c.b16 %v2345, %v2343
      %v2410 = vunpack.c.l.b16 %v2282
      %v2411 = vunpack.c.h.b16 %v2282
      %v2412 = vunpack.c.l.b16 %v2283
      %v2413 = vunpack.c.h.b16 %v2283
      %v2414 = vunpack.c.l.b16 %v2284
      %v2415 = vunpack.c.h.b16 %v2284
      %v2416 = vunpack.c.l.b16 %v2285
      %v2417 = vunpack.c.h.b16 %v2285
      %v2418 = vunpack.c.l.b16 %v2286
      %v2419 = vunpack.c.h.b16 %v2286
      %v2420 = vunpack.c.l.b16 %v2287
      %v2421 = vunpack.c.h.b16 %v2287
      %v2422 = vunpack.c.l.b16 %v2288
      %v2423 = vunpack.c.h.b16 %v2288
      %v2424 = vunpack.c.l.b16 %v2289
      %v2425 = vunpack.c.h.b16 %v2289
      %v2426 = vunpack.c.l.b16 %v2290
      %v2427 = vunpack.c.h.b16 %v2290
      %v2428 = vunpack.c.l.b16 %v2291
      %v2429 = vunpack.c.h.b16 %v2291
      %v2430 = vunpack.c.l.b16 %v2292
      %v2431 = vunpack.c.h.b16 %v2292
      %v2432 = vunpack.c.l.b16 %v2293
      %v2433 = vunpack.c.h.b16 %v2293
      %v2434 = vunpack.c.l.b16 %v2294
      %v2435 = vunpack.c.h.b16 %v2294
      %v2436 = vunpack.c.l.b16 %v2295
      %v2437 = vunpack.c.h.b16 %v2295
      %v2438 = vunpack.c.l.b16 %v2296
      %v2439 = vunpack.c.h.b16 %v2296
      %v2440 = vunpack.c.l.b16 %v2297
      %v2441 = vunpack.c.h.b16 %v2297
      %v2442 = vunpack.c.l.b16 %v2298
      %v2443 = vunpack.c.h.b16 %v2298
      %v2444 = vunpack.c.l.b16 %v2299
      %v2445 = vunpack.c.h.b16 %v2299
      %v2446 = vunpack.c.l.b16 %v2300
      %v2447 = vunpack.c.h.b16 %v2300
      %v2448 = vunpack.c.l.b16 %v2301
      %v2449 = vunpack.c.h.b16 %v2301
      %v2450 = vunpack.c.l.b16 %v2302
      %v2451 = vunpack.c.h.b16 %v2302
      %v2452 = vunpack.c.l.b16 %v2303
      %v2453 = vunpack.c.h.b16 %v2303
      %v2454 = vunpack.c.l.b16 %v2304
      %v2455 = vunpack.c.h.b16 %v2304
      %v2456 = vunpack.c.l.b16 %v2305
      %v2457 = vunpack.c.h.b16 %v2305
      %v2458 = vunpack.c.l.b16 %v2306
      %v2459 = vunpack.c.h.b16 %v2306
      %v2460 = vunpack.c.l.b16 %v2307
      %v2461 = vunpack.c.h.b16 %v2307
      %v2462 = vunpack.c.l.b16 %v2308
      %v2463 = vunpack.c.h.b16 %v2308
      %v2464 = vunpack.c.l.b16 %v2309
      %v2465 = vunpack.c.h.b16 %v2309
      %v2466 = vunpack.c.l.b16 %v2310
      %v2467 = vunpack.c.h.b16 %v2310
      %v2468 = vunpack.c.l.b16 %v2311
      %v2469 = vunpack.c.h.b16 %v2311
      %v2470 = vunpack.c.l.b16 %v2312
      %v2471 = vunpack.c.h.b16 %v2312
      %v2472 = vunpack.c.l.b16 %v2313
      %v2473 = vunpack.c.h.b16 %v2313
      %v2474 = vpack.c.b16 %v2412, %v2410
      %v2475 = vpack.c.b16 %v2413, %v2411
      %v2476 = vpack.c.b16 %v2416, %v2414
      %v2477 = vpack.c.b16 %v2417, %v2415
      %v2478 = vpack.c.b16 %v2420, %v2418
      %v2479 = vpack.c.b16 %v2421, %v2419
      %v2480 = vpack.c.b16 %v2424, %v2422
      %v2481 = vpack.c.b16 %v2425, %v2423
      %v2482 = vpack.c.b16 %v2428, %v2426
      %v2483 = vpack.c.b16 %v2429, %v2427
      %v2484 = vpack.c.b16 %v2432, %v2430
      %v2485 = vpack.c.b16 %v2433, %v2431
      %v2486 = vpack.c.b16 %v2436, %v2434
      %v2487 = vpack.c.b16 %v2437, %v2435
      %v2488 = vpack.c.b16 %v2440, %v2438
      %v2489 = vpack.c.b16 %v2441, %v2439
      %v2490 = vpack.c.b16 %v2444, %v2442
      %v2491 = vpack.c.b16 %v2445, %v2443
      %v2492 = vpack.c.b16 %v2448, %v2446
      %v2493 = vpack.c.b16 %v2449, %v2447
      %v2494 = vpack.c.b16 %v2452, %v2450
      %v2495 = vpack.c.b16 %v2453, %v2451
      %v2496 = vpack.c.b16 %v2456, %v2454
      %v2497 = vpack.c.b16 %v2457, %v2455
      %v2498 = vpack.c.b16 %v2460, %v2458
      %v2499 = vpack.c.b16 %v2461, %v2459
      %v2500 = vpack.c.b16 %v2464, %v2462
      %v2501 = vpack.c.b16 %v2465, %v2463
      %v2502 = vpack.c.b16 %v2468, %v2466
      %v2503 = vpack.c.b16 %v2469, %v2467
      %v2504 = vpack.c.b16 %v2472, %v2470
      %v2505 = vpack.c.b16 %v2473, %v2471
      %2538 = vmatprep.subr.bf16.mxu0 %v2475
      %2539 = vmatpush1.bf16.msra.mxu0 %v2474
      %2540 = vmatprep.subr.bf16.mxu0 %v2477
      %2541 = vmatpush1.bf16.msra.mxu0 %v2476
      %2542 = vmatprep.subr.bf16.mxu0 %v2479
      %2543 = vmatpush1.bf16.msra.mxu0 %v2478
      %2544 = vmatprep.subr.bf16.mxu0 %v2481
      %2545 = vmatpush1.bf16.msra.mxu0 %v2480
      %2546 = vmatprep.subr.bf16.mxu0 %v2483
      %2547 = vmatpush1.bf16.msra.mxu0 %v2482
      %2548 = vmatprep.subr.bf16.mxu0 %v2485
      %2549 = vmatpush1.bf16.msra.mxu0 %v2484
      %2550 = vmatprep.subr.bf16.mxu0 %v2487
      %2551 = vmatpush1.bf16.msra.mxu0 %v2486
      %2552 = vmatprep.subr.bf16.mxu0 %v2489
      %2553 = vmatpush1.bf16.msra.mxu0 %v2488
      %2554 = vmatprep.subr.bf16.mxu0 %v2491
      %2555 = vmatpush1.bf16.msra.mxu0 %v2490
      %2556 = vmatprep.subr.bf16.mxu0 %v2493
      %2557 = vmatpush1.bf16.msra.mxu0 %v2492
      %2558 = vmatprep.subr.bf16.mxu0 %v2495
      %2559 = vmatpush1.bf16.msra.mxu0 %v2494
      %2560 = vmatprep.subr.bf16.mxu0 %v2497
      %2561 = vmatpush1.bf16.msra.mxu0 %v2496
      %2562 = vmatprep.subr.bf16.mxu0 %v2499
      %2563 = vmatpush1.bf16.msra.mxu0 %v2498
      %2564 = vmatprep.subr.bf16.mxu0 %v2501
      %2565 = vmatpush1.bf16.msra.mxu0 %v2500
      %2566 = vmatprep.subr.bf16.mxu0 %v2503
      %2567 = vmatpush1.bf16.msra.mxu0 %v2502
      %2568 = vmatprep.subr.bf16.mxu0 %v2505
      %2569 = vmatpush1.bf16.msra.mxu0 %v2504
      %2570 = vmatprep.mubr.bf16.mxu0 %v2347
      %2571 = vmatmul.mubr.bf16.gmra.mrb[0].mxu0 %v2346
      %v2572 = vpop.f32.mrb[0].mxu0
      %v2573 = vadd.f32 0.0, %v2572
      %v2574 = vpop.f32.mrb[0].mxu0
      %v2575 = vadd.f32 0.0, %v2574
      %v2576 = vpop.f32.mrb[0].mxu0
      %v2577 = vadd.f32 0.0, %v2576
      %v2578 = vpop.f32.mrb[0].mxu0
      %v2579 = vadd.f32 0.0, %v2578
      %2580 = vmatprep.mubr.bf16.mxu0 %v2349
      %2581 = vmatmul.mubr.bf16.gmra.mrb[0].mxu0 %v2348
      %v2582 = vpop.f32.mrb[0].mxu0
      %v2583 = vadd.f32 0.0, %v2582
      %v2584 = vpop.f32.mrb[0].mxu0
      %v2585 = vadd.f32 0.0, %v2584
      %v2586 = vpop.f32.mrb[0].mxu0
      %v2587 = vadd.f32 0.0, %v2586
      %v2588 = vpop.f32.mrb[0].mxu0
      %v2589 = vadd.f32 0.0, %v2588
      %2590 = vmatprep.mubr.bf16.mxu0 %v2351
      %2591 = vmatmul.mubr.bf16.gmra.mrb[0].mxu0 %v2350
      %v2592 = vpop.f32.mrb[0].mxu0
      %v2593 = vadd.f32 0.0, %v2592
      %v2594 = vpop.f32.mrb[0].mxu0
      %v2595 = vadd.f32 0.0, %v2594
      %v2596 = vpop.f32.mrb[0].mxu0
      %v2597 = vadd.f32 0.0, %v2596
      %v2598 = vpop.f32.mrb[0].mxu0
      %v2599 = vadd.f32 0.0, %v2598
      %2600 = vmatprep.mubr.bf16.mxu0 %v2353
      %2601 = vmatmul.mubr.bf16.gmra.mrb[0].mxu0 %v2352
      %v2602 = vpop.f32.mrb[0].mxu0
      %v2603 = vadd.f32 0.0, %v2602
      %v2604 = vpop.f32.mrb[0].mxu0
      %v2605 = vadd.f32 0.0, %v2604
      %v2606 = vpop.f32.mrb[0].mxu0
      %v2607 = vadd.f32 0.0, %v2606
      %v2608 = vpop.f32.mrb[0].mxu0
      %v2609 = vadd.f32 0.0, %v2608
      %2610 = vmatprep.mubr.bf16.mxu0 %v2355
      %2611 = vmatmul.mubr.bf16.gmra.mrb[0].mxu0 %v2354
      %v2612 = vpop.f32.mrb[0].mxu0
      %v2613 = vadd.f32 0.0, %v2612
      %v2614 = vpop.f32.mrb[0].mxu0
      %v2615 = vadd.f32 0.0, %v2614
      %v2616 = vpop.f32.mrb[0].mxu0
      %v2617 = vadd.f32 0.0, %v2616
      %v2618 = vpop.f32.mrb[0].mxu0
      %v2619 = vadd.f32 0.0, %v2618
      %2620 = vmatprep.mubr.bf16.mxu0 %v2357
      %2621 = vmatmul.mubr.bf16.gmra.mrb[0].mxu0 %v2356
      %v2622 = vpop.f32.mrb[0].mxu0
      %v2623 = vadd.f32 0.0, %v2622
      %v2624 = vpop.f32.mrb[0].mxu0
      %v2625 = vadd.f32 0.0, %v2624
      %v2626 = vpop.f32.mrb[0].mxu0
      %v2627 = vadd.f32 0.0, %v2626
      %v2628 = vpop.f32.mrb[0].mxu0
      %v2629 = vadd.f32 0.0, %v2628
      %2630 = vmatprep.mubr.bf16.mxu0 %v2359
      %2631 = vmatmul.mubr.bf16.gmra.mrb[0].mxu0 %v2358
      %v2632 = vpop.f32.mrb[0].mxu0
      %v2633 = vadd.f32 0.0, %v2632
      %v2634 = vpop.f32.mrb[0].mxu0
      %v2635 = vadd.f32 0.0, %v2634
      %v2636 = vpop.f32.mrb[0].mxu0
      %v2637 = vadd.f32 0.0, %v2636
      %v2638 = vpop.f32.mrb[0].mxu0
      %v2639 = vadd.f32 0.0, %v2638
      %2640 = vmatprep.mubr.bf16.mxu0 %v2361
      %2641 = vmatmul.mubr.bf16.gmra.mrb[0].mxu0 %v2360
      %v2642 = vpop.f32.mrb[0].mxu0
      %v2643 = vadd.f32 0.0, %v2642
      %v2644 = vpop.f32.mrb[0].mxu0
      %v2645 = vadd.f32 0.0, %v2644
      %v2646 = vpop.f32.mrb[0].mxu0
      %v2647 = vadd.f32 0.0, %v2646
      %v2648 = vpop.f32.mrb[0].mxu0
      %v2649 = vadd.f32 0.0, %v2648
      %2650 = vdwg.mxu0
      %v2651 = vadd.f32 %v2057, %v2573
      %v2652 = vadd.f32 %v2058, %v2575
      %v2653 = vadd.f32 %v2059, %v2577
      %v2654 = vadd.f32 %v2060, %v2579
      %v2655 = vadd.f32 %v2061, %v2583
      %v2656 = vadd.f32 %v2062, %v2585
      %v2657 = vadd.f32 %v2063, %v2587
      %v2658 = vadd.f32 %v2064, %v2589
      %v2659 = vadd.f32 %v2065, %v2593
      %v2660 = vadd.f32 %v2066, %v2595
      %v2661 = vadd.f32 %v2067, %v2597
      %v2662 = vadd.f32 %v2068, %v2599
      %v2663 = vadd.f32 %v2069, %v2603
      %v2664 = vadd.f32 %v2070, %v2605
      %v2665 = vadd.f32 %v2071, %v2607
      %v2666 = vadd.f32 %v2072, %v2609
      %v2667 = vadd.f32 %v2073, %v2613
      %v2668 = vadd.f32 %v2074, %v2615
      %v2669 = vadd.f32 %v2075, %v2617
      %v2670 = vadd.f32 %v2076, %v2619
      %v2671 = vadd.f32 %v2077, %v2623
      %v2672 = vadd.f32 %v2078, %v2625
      %v2673 = vadd.f32 %v2079, %v2627
      %v2674 = vadd.f32 %v2080, %v2629
      %v2675 = vadd.f32 %v2081, %v2633
      %v2676 = vadd.f32 %v2082, %v2635
      %v2677 = vadd.f32 %v2083, %v2637
      %v2678 = vadd.f32 %v2084, %v2639
      %v2679 = vadd.f32 %v2085, %v2643
      %v2680 = vadd.f32 %v2086, %v2645
      %v2681 = vadd.f32 %v2087, %v2647
      %v2682 = vadd.f32 %v2088, %v2649
      %v2691 = vrot.slane %v1647, 5
      %v2692 = vrot.slane %v2691, 4
      %v2693 = vrot.slane %v1648, 5
      %v2694 = vsel %vm1184, %v2692, %v2693
      %v2695 = vrot.slane %v2693, 4
      %v2696 = vrot.slane %v1649, 5
      %v2697 = vsel %vm1184, %v2695, %v2696
      %v2698 = vrot.slane %v1650, 5
      %v2699 = vrot.slane %v2698, 4
      %v2700 = vrot.slane %v1651, 5
      %v2701 = vsel %vm1184, %v2699, %v2700
      %v2702 = vrot.slane %v2700, 4
      %v2703 = vrot.slane %v1652, 5
      %v2704 = vsel %vm1184, %v2702, %v2703
      %v2705 = vrot.slane %v1653, 5
      %v2706 = vrot.slane %v2705, 4
      %v2707 = vrot.slane %v1654, 5
      %v2708 = vsel %vm1184, %v2706, %v2707
      %v2709 = vrot.slane %v2707, 4
      %v2710 = vrot.slane %v1655, 5
      %v2711 = vsel %vm1184, %v2709, %v2710
      %v2712 = vrot.slane %v1656, 5
      %v2713 = vrot.slane %v2712, 4
      %v2714 = vrot.slane %v1657, 5
      %v2715 = vsel %vm1184, %v2713, %v2714
      %v2716 = vrot.slane %v2714, 4
      %v2717 = vrot.slane %v1658, 5
      %v2718 = vsel %vm1184, %v2716, %v2717
      %v2719 = vrot.slane %v1659, 5
      %v2720 = vrot.slane %v2719, 4
      %v2721 = vrot.slane %v1660, 5
      %v2722 = vsel %vm1184, %v2720, %v2721
      %v2723 = vrot.slane %v2721, 4
      %v2724 = vrot.slane %v1661, 5
      %v2725 = vsel %vm1184, %v2723, %v2724
      %v2726 = vrot.slane %v1662, 5
      %v2727 = vrot.slane %v2726, 4
      %v2728 = vrot.slane %v1663, 5
      %v2729 = vsel %vm1184, %v2727, %v2728
      %v2730 = vrot.slane %v2728, 4
      %v2731 = vrot.slane %v1664, 5
      %v2732 = vsel %vm1184, %v2730, %v2731
      %v2733 = vrot.slane %v1665, 5
      %v2734 = vrot.slane %v2733, 4
      %v2735 = vrot.slane %v1666, 5
      %v2736 = vsel %vm1184, %v2734, %v2735
      %v2737 = vrot.slane %v2735, 4
      %v2738 = vrot.slane %v1667, 5
      %v2739 = vsel %vm1184, %v2737, %v2738
      %v2740 = vrot.slane %v1668, 5
      %v2741 = vrot.slane %v2740, 4
      %v2742 = vrot.slane %v1669, 5
      %v2743 = vsel %vm1184, %v2741, %v2742
      %v2744 = vrot.slane %v2742, 4
      %v2745 = vrot.slane %v1670, 5
      %v2746 = vsel %vm1184, %v2744, %v2745
      %s2747 = scalar_lea.vmem %s1, 1280
      %v2748 = vld [vmem:[%s2747] sm:$0xff]
      %v2749 = vld [vmem:[%s2747 + $0x8] sm:$0xff]
      %v2750 = vld [vmem:[%s2747 + $0x10] sm:$0xff]
      %v2751 = vld [vmem:[%s2747 + $0x18] sm:$0xff]
      %v2752 = vld [vmem:[%s2747 + $0x20] sm:$0xff]
      %v2753 = vld [vmem:[%s2747 + $0x28] sm:$0xff]
      %v2754 = vld [vmem:[%s2747 + $0x30] sm:$0xff]
      %v2755 = vld [vmem:[%s2747 + $0x38] sm:$0xff]
      %v2756 = vld [vmem:[%s2747 + $0x40] sm:$0xff]
      %v2757 = vld [vmem:[%s2747 + $0x48] sm:$0xff]
      %v2758 = vld [vmem:[%s2747 + $0x50] sm:$0xff]
      %v2759 = vld [vmem:[%s2747 + $0x58] sm:$0xff]
      %v2760 = vld [vmem:[%s2747 + $0x60] sm:$0xff]
      %v2761 = vld [vmem:[%s2747 + $0x68] sm:$0xff]
      %v2762 = vld [vmem:[%s2747 + $0x70] sm:$0xff]
      %v2763 = vld [vmem:[%s2747 + $0x78] sm:$0xff]
      %v2764 = vld [vmem:[%s2747 + $0x80] sm:$0xff]
      %v2765 = vld [vmem:[%s2747 + $0x88] sm:$0xff]
      %v2766 = vld [vmem:[%s2747 + $0x90] sm:$0xff]
      %v2767 = vld [vmem:[%s2747 + $0x98] sm:$0xff]
      %v2768 = vld [vmem:[%s2747 + $0xa0] sm:$0xff]
      %v2769 = vld [vmem:[%s2747 + $0xa8] sm:$0xff]
      %v2770 = vld [vmem:[%s2747 + $0xb0] sm:$0xff]
      %v2771 = vld [vmem:[%s2747 + $0xb8] sm:$0xff]
      %v2772 = vld [vmem:[%s2747 + $0xc0] sm:$0xff]
      %v2773 = vld [vmem:[%s2747 + $0xc8] sm:$0xff]
      %v2774 = vld [vmem:[%s2747 + $0xd0] sm:$0xff]
      %v2775 = vld [vmem:[%s2747 + $0xd8] sm:$0xff]
      %v2776 = vld [vmem:[%s2747 + $0xe0] sm:$0xff]
      %v2777 = vld [vmem:[%s2747 + $0xe8] sm:$0xff]
      %v2778 = vld [vmem:[%s2747 + $0xf0] sm:$0xff]
      %v2779 = vld [vmem:[%s2747 + $0xf8] sm:$0xff]
      %v2780 = vunpack.c.l.b16 %v2694
      %v2781 = vunpack.c.h.b16 %v2694
      %v2782 = vunpack.c.l.b16 %v2697
      %v2783 = vunpack.c.h.b16 %v2697
      %v2784 = vunpack.c.l.b16 %v2701
      %v2785 = vunpack.c.h.b16 %v2701
      %v2786 = vunpack.c.l.b16 %v2704
      %v2787 = vunpack.c.h.b16 %v2704
      %v2788 = vunpack.c.l.b16 %v2708
      %v2789 = vunpack.c.h.b16 %v2708
      %v2790 = vunpack.c.l.b16 %v2711
      %v2791 = vunpack.c.h.b16 %v2711
      %v2792 = vunpack.c.l.b16 %v2715
      %v2793 = vunpack.c.h.b16 %v2715
      %v2794 = vunpack.c.l.b16 %v2718
      %v2795 = vunpack.c.h.b16 %v2718
      %v2796 = vunpack.c.l.b16 %v2722
      %v2797 = vunpack.c.h.b16 %v2722
      %v2798 = vunpack.c.l.b16 %v2725
      %v2799 = vunpack.c.h.b16 %v2725
      %v2800 = vunpack.c.l.b16 %v2729
      %v2801 = vunpack.c.h.b16 %v2729
      %v2802 = vunpack.c.l.b16 %v2732
      %v2803 = vunpack.c.h.b16 %v2732
      %v2804 = vunpack.c.l.b16 %v2736
      %v2805 = vunpack.c.h.b16 %v2736
      %v2806 = vunpack.c.l.b16 %v2739
      %v2807 = vunpack.c.h.b16 %v2739
      %v2808 = vunpack.c.l.b16 %v2743
      %v2809 = vunpack.c.h.b16 %v2743
      %v2810 = vunpack.c.l.b16 %v2746
      %v2811 = vunpack.c.h.b16 %v2746
      %v2812 = vpack.c.b16 %v2782, %v2780
      %v2813 = vpack.c.b16 %v2783, %v2781
      %v2814 = vpack.c.b16 %v2786, %v2784
      %v2815 = vpack.c.b16 %v2787, %v2785
      %v2816 = vpack.c.b16 %v2790, %v2788
      %v2817 = vpack.c.b16 %v2791, %v2789
      %v2818 = vpack.c.b16 %v2794, %v2792
      %v2819 = vpack.c.b16 %v2795, %v2793
      %v2820 = vpack.c.b16 %v2798, %v2796
      %v2821 = vpack.c.b16 %v2799, %v2797
      %v2822 = vpack.c.b16 %v2802, %v2800
      %v2823 = vpack.c.b16 %v2803, %v2801
      %v2824 = vpack.c.b16 %v2806, %v2804
      %v2825 = vpack.c.b16 %v2807, %v2805
      %v2826 = vpack.c.b16 %v2810, %v2808
      %v2827 = vpack.c.b16 %v2811, %v2809
      %v2876 = vunpack.c.l.b16 %v2748
      %v2877 = vunpack.c.h.b16 %v2748
      %v2878 = vunpack.c.l.b16 %v2749
      %v2879 = vunpack.c.h.b16 %v2749
      %v2880 = vunpack.c.l.b16 %v2750
      %v2881 = vunpack.c.h.b16 %v2750
      %v2882 = vunpack.c.l.b16 %v2751
      %v2883 = vunpack.c.h.b16 %v2751
      %v2884 = vunpack.c.l.b16 %v2752
      %v2885 = vunpack.c.h.b16 %v2752
      %v2886 = vunpack.c.l.b16 %v2753
      %v2887 = vunpack.c.h.b16 %v2753
      %v2888 = vunpack.c.l.b16 %v2754
      %v2889 = vunpack.c.h.b16 %v2754
      %v2890 = vunpack.c.l.b16 %v2755
      %v2891 = vunpack.c.h.b16 %v2755
      %v2892 = vunpack.c.l.b16 %v2756
      %v2893 = vunpack.c.h.b16 %v2756
      %v2894 = vunpack.c.l.b16 %v2757
      %v2895 = vunpack.c.h.b16 %v2757
      %v2896 = vunpack.c.l.b16 %v2758
      %v2897 = vunpack.c.h.b16 %v2758
      %v2898 = vunpack.c.l.b16 %v2759
      %v2899 = vunpack.c.h.b16 %v2759
      %v2900 = vunpack.c.l.b16 %v2760
      %v2901 = vunpack.c.h.b16 %v2760
      %v2902 = vunpack.c.l.b16 %v2761
      %v2903 = vunpack.c.h.b16 %v2761
      %v2904 = vunpack.c.l.b16 %v2762
      %v2905 = vunpack.c.h.b16 %v2762
      %v2906 = vunpack.c.l.b16 %v2763
      %v2907 = vunpack.c.h.b16 %v2763
      %v2908 = vunpack.c.l.b16 %v2764
      %v2909 = vunpack.c.h.b16 %v2764
      %v2910 = vunpack.c.l.b16 %v2765
      %v2911 = vunpack.c.h.b16 %v2765
      %v2912 = vunpack.c.l.b16 %v2766
      %v2913 = vunpack.c.h.b16 %v2766
      %v2914 = vunpack.c.l.b16 %v2767
      %v2915 = vunpack.c.h.b16 %v2767
      %v2916 = vunpack.c.l.b16 %v2768
      %v2917 = vunpack.c.h.b16 %v2768
      %v2918 = vunpack.c.l.b16 %v2769
      %v2919 = vunpack.c.h.b16 %v2769
      %v2920 = vunpack.c.l.b16 %v2770
      %v2921 = vunpack.c.h.b16 %v2770
      %v2922 = vunpack.c.l.b16 %v2771
      %v2923 = vunpack.c.h.b16 %v2771
      %v2924 = vunpack.c.l.b16 %v2772
      %v2925 = vunpack.c.h.b16 %v2772
      %v2926 = vunpack.c.l.b16 %v2773
      %v2927 = vunpack.c.h.b16 %v2773
      %v2928 = vunpack.c.l.b16 %v2774
      %v2929 = vunpack.c.h.b16 %v2774
      %v2930 = vunpack.c.l.b16 %v2775
      %v2931 = vunpack.c.h.b16 %v2775
      %v2932 = vunpack.c.l.b16 %v2776
      %v2933 = vunpack.c.h.b16 %v2776
      %v2934 = vunpack.c.l.b16 %v2777
      %v2935 = vunpack.c.h.b16 %v2777
      %v2936 = vunpack.c.l.b16 %v2778
      %v2937 = vunpack.c.h.b16 %v2778
      %v2938 = vunpack.c.l.b16 %v2779
      %v2939 = vunpack.c.h.b16 %v2779
      %v2940 = vpack.c.b16 %v2878, %v2876
      %v2941 = vpack.c.b16 %v2879, %v2877
      %v2942 = vpack.c.b16 %v2882, %v2880
      %v2943 = vpack.c.b16 %v2883, %v2881
      %v2944 = vpack.c.b16 %v2886, %v2884
      %v2945 = vpack.c.b16 %v2887, %v2885
      %v2946 = vpack.c.b16 %v2890, %v2888
      %v2947 = vpack.c.b16 %v2891, %v2889
      %v2948 = vpack.c.b16 %v2894, %v2892
      %v2949 = vpack.c.b16 %v2895, %v2893
      %v2950 = vpack.c.b16 %v2898, %v2896
      %v2951 = vpack.c.b16 %v2899, %v2897
      %v2952 = vpack.c.b16 %v2902, %v2900
      %v2953 = vpack.c.b16 %v2903, %v2901
      %v2954 = vpack.c.b16 %v2906, %v2904
      %v2955 = vpack.c.b16 %v2907, %v2905
      %v2956 = vpack.c.b16 %v2910, %v2908
      %v2957 = vpack.c.b16 %v2911, %v2909
      %v2958 = vpack.c.b16 %v2914, %v2912
      %v2959 = vpack.c.b16 %v2915, %v2913
      %v2960 = vpack.c.b16 %v2918, %v2916
      %v2961 = vpack.c.b16 %v2919, %v2917
      %v2962 = vpack.c.b16 %v2922, %v2920
      %v2963 = vpack.c.b16 %v2923, %v2921
      %v2964 = vpack.c.b16 %v2926, %v2924
      %v2965 = vpack.c.b16 %v2927, %v2925
      %v2966 = vpack.c.b16 %v2930, %v2928
      %v2967 = vpack.c.b16 %v2931, %v2929
      %v2968 = vpack.c.b16 %v2934, %v2932
      %v2969 = vpack.c.b16 %v2935, %v2933
      %v2970 = vpack.c.b16 %v2938, %v2936
      %v2971 = vpack.c.b16 %v2939, %v2937
      %3004 = vmatprep.subr.bf16.mxu0 %v2941
      %3005 = vmatpush1.bf16.msra.mxu0 %v2940
      %3006 = vmatprep.subr.bf16.mxu0 %v2943
      %3007 = vmatpush1.bf16.msra.mxu0 %v2942
      %3008 = vmatprep.subr.bf16.mxu0 %v2945
      %3009 = vmatpush1.bf16.msra.mxu0 %v2944
      %3010 = vmatprep.subr.bf16.mxu0 %v2947
      %3011 = vmatpush1.bf16.msra.mxu0 %v2946
      %3012 = vmatprep.subr.bf16.mxu0 %v2949
      %3013 = vmatpush1.bf16.msra.mxu0 %v2948
      %3014 = vmatprep.subr.bf16.mxu0 %v2951
      %3015 = vmatpush1.bf16.msra.mxu0 %v2950
      %3016 = vmatprep.subr.bf16.mxu0 %v2953
      %3017 = vmatpush1.bf16.msra.mxu0 %v2952
      %3018 = vmatprep.subr.bf16.mxu0 %v2955
      %3019 = vmatpush1.bf16.msra.mxu0 %v2954
      %3020 = vmatprep.subr.bf16.mxu0 %v2957
      %3021 = vmatpush1.bf16.msra.mxu0 %v2956
      %3022 = vmatprep.subr.bf16.mxu0 %v2959
      %3023 = vmatpush1.bf16.msra.mxu0 %v2958
      %3024 = vmatprep.subr.bf16.mxu0 %v2961
      %3025 = vmatpush1.bf16.msra.mxu0 %v2960
      %3026 = vmatprep.subr.bf16.mxu0 %v2963
      %3027 = vmatpush1.bf16.msra.mxu0 %v2962
      %3028 = vmatprep.subr.bf16.mxu0 %v2965
      %3029 = vmatpush1.bf16.msra.mxu0 %v2964
      %3030 = vmatprep.subr.bf16.mxu0 %v2967
      %3031 = vmatpush1.bf16.msra.mxu0 %v2966
      %3032 = vmatprep.subr.bf16.mxu0 %v2969
      %3033 = vmatpush1.bf16.msra.mxu0 %v2968
      %3034 = vmatprep.subr.bf16.mxu0 %v2971
      %3035 = vmatpush1.bf16.msra.mxu0 %v2970
      %3036 = vmatprep.mubr.bf16.mxu0 %v2813
      %3037 = vmatmul.mubr.bf16.gmra.mrb[0].mxu0 %v2812
      %v3038 = vpop.f32.mrb[0].mxu0
      %v3039 = vadd.f32 0.0, %v3038
      %v3040 = vpop.f32.mrb[0].mxu0
      %v3041 = vadd.f32 0.0, %v3040
      %v3042 = vpop.f32.mrb[0].mxu0
      %v3043 = vadd.f32 0.0, %v3042
      %v3044 = vpop.f32.mrb[0].mxu0
      %v3045 = vadd.f32 0.0, %v3044
      %3046 = vmatprep.mubr.bf16.mxu0 %v2815
      %3047 = vmatmul.mubr.bf16.gmra.mrb[0].mxu0 %v2814
      %v3048 = vpop.f32.mrb[0].mxu0
      %v3049 = vadd.f32 0.0, %v3048
      %v3050 = vpop.f32.mrb[0].mxu0
      %v3051 = vadd.f32 0.0, %v3050
      %v3052 = vpop.f32.mrb[0].mxu0
      %v3053 = vadd.f32 0.0, %v3052
      %v3054 = vpop.f32.mrb[0].mxu0
      %v3055 = vadd.f32 0.0, %v3054
      %3056 = vmatprep.mubr.bf16.mxu0 %v2817
      %3057 = vmatmul.mubr.bf16.gmra.mrb[0].mxu0 %v2816
      %v3058 = vpop.f32.mrb[0].mxu0
      %v3059 = vadd.f32 0.0, %v3058
      %v3060 = vpop.f32.mrb[0].mxu0
      %v3061 = vadd.f32 0.0, %v3060
      %v3062 = vpop.f32.mrb[0].mxu0
      %v3063 = vadd.f32 0.0, %v3062
      %v3064 = vpop.f32.mrb[0].mxu0
      %v3065 = vadd.f32 0.0, %v3064
      %3066 = vmatprep.mubr.bf16.mxu0 %v2819
      %3067 = vmatmul.mubr.bf16.gmra.mrb[0].mxu0 %v2818
      %v3068 = vpop.f32.mrb[0].mxu0
      %v3069 = vadd.f32 0.0, %v3068
      %v3070 = vpop.f32.mrb[0].mxu0
      %v3071 = vadd.f32 0.0, %v3070
      %v3072 = vpop.f32.mrb[0].mxu0
      %v3073 = vadd.f32 0.0, %v3072
      %v3074 = vpop.f32.mrb[0].mxu0
      %v3075 = vadd.f32 0.0, %v3074
      %3076 = vmatprep.mubr.bf16.mxu0 %v2821
      %3077 = vmatmul.mubr.bf16.gmra.mrb[0].mxu0 %v2820
      %v3078 = vpop.f32.mrb[0].mxu0
      %v3079 = vadd.f32 0.0, %v3078
      %v3080 = vpop.f32.mrb[0].mxu0
      %v3081 = vadd.f32 0.0, %v3080
      %v3082 = vpop.f32.mrb[0].mxu0
      %v3083 = vadd.f32 0.0, %v3082
      %v3084 = vpop.f32.mrb[0].mxu0
      %v3085 = vadd.f32 0.0, %v3084
      %3086 = vmatprep.mubr.bf16.mxu0 %v2823
      %3087 = vmatmul.mubr.bf16.gmra.mrb[0].mxu0 %v2822
      %v3088 = vpop.f32.mrb[0].mxu0
      %v3089 = vadd.f32 0.0, %v3088
      %v3090 = vpop.f32.mrb[0].mxu0
      %v3091 = vadd.f32 0.0, %v3090
      %v3092 = vpop.f32.mrb[0].mxu0
      %v3093 = vadd.f32 0.0, %v3092
      %v3094 = vpop.f32.mrb[0].mxu0
      %v3095 = vadd.f32 0.0, %v3094
      %3096 = vmatprep.mubr.bf16.mxu0 %v2825
      %3097 = vmatmul.mubr.bf16.gmra.mrb[0].mxu0 %v2824
      %v3098 = vpop.f32.mrb[0].mxu0
      %v3099 = vadd.f32 0.0, %v3098
      %v3100 = vpop.f32.mrb[0].mxu0
      %v3101 = vadd.f32 0.0, %v3100
      %v3102 = vpop.f32.mrb[0].mxu0
      %v3103 = vadd.f32 0.0, %v3102
      %v3104 = vpop.f32.mrb[0].mxu0
      %v3105 = vadd.f32 0.0, %v3104
      %3106 = vmatprep.mubr.bf16.mxu0 %v2827
      %3107 = vmatmul.mubr.bf16.gmra.mrb[0].mxu0 %v2826
      %v3108 = vpop.f32.mrb[0].mxu0
      %v3109 = vadd.f32 0.0, %v3108
      %v3110 = vpop.f32.mrb[0].mxu0
      %v3111 = vadd.f32 0.0, %v3110
      %v3112 = vpop.f32.mrb[0].mxu0
      %v3113 = vadd.f32 0.0, %v3112
      %v3114 = vpop.f32.mrb[0].mxu0
      %v3115 = vadd.f32 0.0, %v3114
      %3116 = vdwg.mxu0
      %v3117 = vadd.f32 %v2651, %v3039
      %v3118 = vadd.f32 %v2652, %v3041
      %v3119 = vadd.f32 %v2653, %v3043
      %v3120 = vadd.f32 %v2654, %v3045
      %v3121 = vadd.f32 %v2655, %v3049
      %v3122 = vadd.f32 %v2656, %v3051
      %v3123 = vadd.f32 %v2657, %v3053
      %v3124 = vadd.f32 %v2658, %v3055
      %v3125 = vadd.f32 %v2659, %v3059
      %v3126 = vadd.f32 %v2660, %v3061
      %v3127 = vadd.f32 %v2661, %v3063
      %v3128 = vadd.f32 %v2662, %v3065
      %v3129 = vadd.f32 %v2663, %v3069
      %v3130 = vadd.f32 %v2664, %v3071
      %v3131 = vadd.f32 %v2665, %v3073
      %v3132 = vadd.f32 %v2666, %v3075
      %v3133 = vadd.f32 %v2667, %v3079
      %v3134 = vadd.f32 %v2668, %v3081
      %v3135 = vadd.f32 %v2669, %v3083
      %v3136 = vadd.f32 %v2670, %v3085
      %v3137 = vadd.f32 %v2671, %v3089
      %v3138 = vadd.f32 %v2672, %v3091
      %v3139 = vadd.f32 %v2673, %v3093
      %v3140 = vadd.f32 %v2674, %v3095
      %v3141 = vadd.f32 %v2675, %v3099
      %v3142 = vadd.f32 %v2676, %v3101
      %v3143 = vadd.f32 %v2677, %v3103
      %v3144 = vadd.f32 %v2678, %v3105
      %v3145 = vadd.f32 %v2679, %v3109
      %v3146 = vadd.f32 %v2680, %v3111
      %v3147 = vadd.f32 %v2681, %v3113
      %v3148 = vadd.f32 %v2682, %v3115
      %s3149 = sadd.s32 %s196, 2
      %s3150 = smul.u32 %s3149, 6
      %s3151 = smul.addr %s3150, 4
      %s3152 = scalar_lea.vmem %s184, %s3151
      %v3153 = vld [vmem:[%s3152] sm:$0xff]
      %v3154 = vld [vmem:[%s3152 + $0x8] sm:$0xff]
      %v3155 = vld [vmem:[%s3152 + $0x10] sm:$0x11]
      %v3156 = vld [vmem:[%s3152 + $0x18] sm:$0xff]
      %v3157 = vld [vmem:[%s3152 + $0x20] sm:$0xff]
      %v3158 = vld [vmem:[%s3152 + $0x28] sm:$0x11]
      %v3159 = vld [vmem:[%s3152 + $0x30] sm:$0xff]
      %v3160 = vld [vmem:[%s3152 + $0x38] sm:$0xff]
      %v3161 = vld [vmem:[%s3152 + $0x40] sm:$0x11]
      %v3162 = vld [vmem:[%s3152 + $0x48] sm:$0xff]
      %v3163 = vld [vmem:[%s3152 + $0x50] sm:$0xff]
      %v3164 = vld [vmem:[%s3152 + $0x58] sm:$0x11]
      %v3165 = vld [vmem:[%s3152 + $0x60] sm:$0xff]
      %v3166 = vld [vmem:[%s3152 + $0x68] sm:$0xff]
      %v3167 = vld [vmem:[%s3152 + $0x70] sm:$0x11]
      %v3168 = vld [vmem:[%s3152 + $0x78] sm:$0xff]
      %v3169 = vld [vmem:[%s3152 + $0x80] sm:$0xff]
      %v3170 = vld [vmem:[%s3152 + $0x88] sm:$0x11]
      %v3171 = vld [vmem:[%s3152 + $0x90] sm:$0xff]
      %v3172 = vld [vmem:[%s3152 + $0x98] sm:$0xff]
      %v3173 = vld [vmem:[%s3152 + $0xa0] sm:$0x11]
      %v3174 = vld [vmem:[%s3152 + $0xa8] sm:$0xff]
      %v3175 = vld [vmem:[%s3152 + $0xb0] sm:$0xff]
      %v3176 = vld [vmem:[%s3152 + $0xb8] sm:$0x11]
      %s3177 = scalar_lea.vmem %s1, 1536
      %v3178 = vld [vmem:[%s3177] sm:$0xff]
      %v3179 = vld [vmem:[%s3177 + $0x8] sm:$0xff]
      %v3180 = vld [vmem:[%s3177 + $0x10] sm:$0xff]
      %v3181 = vld [vmem:[%s3177 + $0x18] sm:$0xff]
      %v3182 = vld [vmem:[%s3177 + $0x20] sm:$0xff]
      %v3183 = vld [vmem:[%s3177 + $0x28] sm:$0xff]
      %v3184 = vld [vmem:[%s3177 + $0x30] sm:$0xff]
      %v3185 = vld [vmem:[%s3177 + $0x38] sm:$0xff]
      %v3186 = vld [vmem:[%s3177 + $0x40] sm:$0xff]
      %v3187 = vld [vmem:[%s3177 + $0x48] sm:$0xff]
      %v3188 = vld [vmem:[%s3177 + $0x50] sm:$0xff]
      %v3189 = vld [vmem:[%s3177 + $0x58] sm:$0xff]
      %v3190 = vld [vmem:[%s3177 + $0x60] sm:$0xff]
      %v3191 = vld [vmem:[%s3177 + $0x68] sm:$0xff]
      %v3192 = vld [vmem:[%s3177 + $0x70] sm:$0xff]
      %v3193 = vld [vmem:[%s3177 + $0x78] sm:$0xff]
      %v3194 = vld [vmem:[%s3177 + $0x80] sm:$0xff]
      %v3195 = vld [vmem:[%s3177 + $0x88] sm:$0xff]
      %v3196 = vld [vmem:[%s3177 + $0x90] sm:$0xff]
      %v3197 = vld [vmem:[%s3177 + $0x98] sm:$0xff]
      %v3198 = vld [vmem:[%s3177 + $0xa0] sm:$0xff]
      %v3199 = vld [vmem:[%s3177 + $0xa8] sm:$0xff]
      %v3200 = vld [vmem:[%s3177 + $0xb0] sm:$0xff]
      %v3201 = vld [vmem:[%s3177 + $0xb8] sm:$0xff]
      %v3202 = vld [vmem:[%s3177 + $0xc0] sm:$0xff]
      %v3203 = vld [vmem:[%s3177 + $0xc8] sm:$0xff]
      %v3204 = vld [vmem:[%s3177 + $0xd0] sm:$0xff]
      %v3205 = vld [vmem:[%s3177 + $0xd8] sm:$0xff]
      %v3206 = vld [vmem:[%s3177 + $0xe0] sm:$0xff]
      %v3207 = vld [vmem:[%s3177 + $0xe8] sm:$0xff]
      %v3208 = vld [vmem:[%s3177 + $0xf0] sm:$0xff]
      %v3209 = vld [vmem:[%s3177 + $0xf8] sm:$0xff]
      %v3226 = vunpack.c.l.b16 %v3153
      %v3227 = vunpack.c.h.b16 %v3153
      %v3228 = vunpack.c.l.b16 %v3154
      %v3229 = vunpack.c.h.b16 %v3154
      %v3230 = vunpack.c.l.b16 %v3156
      %v3231 = vunpack.c.h.b16 %v3156
      %v3232 = vunpack.c.l.b16 %v3157
      %v3233 = vunpack.c.h.b16 %v3157
      %v3234 = vunpack.c.l.b16 %v3159
      %v3235 = vunpack.c.h.b16 %v3159
      %v3236 = vunpack.c.l.b16 %v3160
      %v3237 = vunpack.c.h.b16 %v3160
      %v3238 = vunpack.c.l.b16 %v3162
      %v3239 = vunpack.c.h.b16 %v3162
      %v3240 = vunpack.c.l.b16 %v3163
      %v3241 = vunpack.c.h.b16 %v3163
      %v3242 = vunpack.c.l.b16 %v3165
      %v3243 = vunpack.c.h.b16 %v3165
      %v3244 = vunpack.c.l.b16 %v3166
      %v3245 = vunpack.c.h.b16 %v3166
      %v3246 = vunpack.c.l.b16 %v3168
      %v3247 = vunpack.c.h.b16 %v3168
      %v3248 = vunpack.c.l.b16 %v3169
      %v3249 = vunpack.c.h.b16 %v3169
      %v3250 = vunpack.c.l.b16 %v3171
      %v3251 = vunpack.c.h.b16 %v3171
      %v3252 = vunpack.c.l.b16 %v3172
      %v3253 = vunpack.c.h.b16 %v3172
      %v3254 = vunpack.c.l.b16 %v3174
      %v3255 = vunpack.c.h.b16 %v3174
      %v3256 = vunpack.c.l.b16 %v3175
      %v3257 = vunpack.c.h.b16 %v3175
      %v3258 = vpack.c.b16 %v3228, %v3226
      %v3259 = vpack.c.b16 %v3229, %v3227
      %v3260 = vpack.c.b16 %v3232, %v3230
      %v3261 = vpack.c.b16 %v3233, %v3231
      %v3262 = vpack.c.b16 %v3236, %v3234
      %v3263 = vpack.c.b16 %v3237, %v3235
      %v3264 = vpack.c.b16 %v3240, %v3238
      %v3265 = vpack.c.b16 %v3241, %v3239
      %v3266 = vpack.c.b16 %v3244, %v3242
      %v3267 = vpack.c.b16 %v3245, %v3243
      %v3268 = vpack.c.b16 %v3248, %v3246
      %v3269 = vpack.c.b16 %v3249, %v3247
      %v3270 = vpack.c.b16 %v3252, %v3250
      %v3271 = vpack.c.b16 %v3253, %v3251
      %v3272 = vpack.c.b16 %v3256, %v3254
      %v3273 = vpack.c.b16 %v3257, %v3255
      %v3322 = vunpack.c.l.b16 %v3178
      %v3323 = vunpack.c.h.b16 %v3178
      %v3324 = vunpack.c.l.b16 %v3179
      %v3325 = vunpack.c.h.b16 %v3179
      %v3326 = vunpack.c.l.b16 %v3180
      %v3327 = vunpack.c.h.b16 %v3180
      %v3328 = vunpack.c.l.b16 %v3181
      %v3329 = vunpack.c.h.b16 %v3181
      %v3330 = vunpack.c.l.b16 %v3182
      %v3331 = vunpack.c.h.b16 %v3182
      %v3332 = vunpack.c.l.b16 %v3183
      %v3333 = vunpack.c.h.b16 %v3183
      %v3334 = vunpack.c.l.b16 %v3184
      %v3335 = vunpack.c.h.b16 %v3184
      %v3336 = vunpack.c.l.b16 %v3185
      %v3337 = vunpack.c.h.b16 %v3185
      %v3338 = vunpack.c.l.b16 %v3186
      %v3339 = vunpack.c.h.b16 %v3186
      %v3340 = vunpack.c.l.b16 %v3187
      %v3341 = vunpack.c.h.b16 %v3187
      %v3342 = vunpack.c.l.b16 %v3188
      %v3343 = vunpack.c.h.b16 %v3188
      %v3344 = vunpack.c.l.b16 %v3189
      %v3345 = vunpack.c.h.b16 %v3189
      %v3346 = vunpack.c.l.b16 %v3190
      %v3347 = vunpack.c.h.b16 %v3190
      %v3348 = vunpack.c.l.b16 %v3191
      %v3349 = vunpack.c.h.b16 %v3191
      %v3350 = vunpack.c.l.b16 %v3192
      %v3351 = vunpack.c.h.b16 %v3192
      %v3352 = vunpack.c.l.b16 %v3193
      %v3353 = vunpack.c.h.b16 %v3193
      %v3354 = vunpack.c.l.b16 %v3194
      %v3355 = vunpack.c.h.b16 %v3194
      %v3356 = vunpack.c.l.b16 %v3195
      %v3357 = vunpack.c.h.b16 %v3195
      %v3358 = vunpack.c.l.b16 %v3196
      %v3359 = vunpack.c.h.b16 %v3196
      %v3360 = vunpack.c.l.b16 %v3197
      %v3361 = vunpack.c.h.b16 %v3197
      %v3362 = vunpack.c.l.b16 %v3198
      %v3363 = vunpack.c.h.b16 %v3198
      %v3364 = vunpack.c.l.b16 %v3199
      %v3365 = vunpack.c.h.b16 %v3199
      %v3366 = vunpack.c.l.b16 %v3200
      %v3367 = vunpack.c.h.b16 %v3200
      %v3368 = vunpack.c.l.b16 %v3201
      %v3369 = vunpack.c.h.b16 %v3201
      %v3370 = vunpack.c.l.b16 %v3202
      %v3371 = vunpack.c.h.b16 %v3202
      %v3372 = vunpack.c.l.b16 %v3203
      %v3373 = vunpack.c.h.b16 %v3203
      %v3374 = vunpack.c.l.b16 %v3204
      %v3375 = vunpack.c.h.b16 %v3204
      %v3376 = vunpack.c.l.b16 %v3205
      %v3377 = vunpack.c.h.b16 %v3205
      %v3378 = vunpack.c.l.b16 %v3206
      %v3379 = vunpack.c.h.b16 %v3206
      %v3380 = vunpack.c.l.b16 %v3207
      %v3381 = vunpack.c.h.b16 %v3207
      %v3382 = vunpack.c.l.b16 %v3208
      %v3383 = vunpack.c.h.b16 %v3208
      %v3384 = vunpack.c.l.b16 %v3209
      %v3385 = vunpack.c.h.b16 %v3209
      %v3386 = vpack.c.b16 %v3324, %v3322
      %v3387 = vpack.c.b16 %v3325, %v3323
      %v3388 = vpack.c.b16 %v3328, %v3326
      %v3389 = vpack.c.b16 %v3329, %v3327
      %v3390 = vpack.c.b16 %v3332, %v3330
      %v3391 = vpack.c.b16 %v3333, %v3331
      %v3392 = vpack.c.b16 %v3336, %v3334
      %v3393 = vpack.c.b16 %v3337, %v3335
      %v3394 = vpack.c.b16 %v3340, %v3338
      %v3395 = vpack.c.b16 %v3341, %v3339
      %v3396 = vpack.c.b16 %v3344, %v3342
      %v3397 = vpack.c.b16 %v3345, %v3343
      %v3398 = vpack.c.b16 %v3348, %v3346
      %v3399 = vpack.c.b16 %v3349, %v3347
      %v3400 = vpack.c.b16 %v3352, %v3350
      %v3401 = vpack.c.b16 %v3353, %v3351
      %v3402 = vpack.c.b16 %v3356, %v3354
      %v3403 = vpack.c.b16 %v3357, %v3355
      %v3404 = vpack.c.b16 %v3360, %v3358
      %v3405 = vpack.c.b16 %v3361, %v3359
      %v3406 = vpack.c.b16 %v3364, %v3362
      %v3407 = vpack.c.b16 %v3365, %v3363
      %v3408 = vpack.c.b16 %v3368, %v3366
      %v3409 = vpack.c.b16 %v3369, %v3367
      %v3410 = vpack.c.b16 %v3372, %v3370
      %v3411 = vpack.c.b16 %v3373, %v3371
      %v3412 = vpack.c.b16 %v3376, %v3374
      %v3413 = vpack.c.b16 %v3377, %v3375
      %v3414 = vpack.c.b16 %v3380, %v3378
      %v3415 = vpack.c.b16 %v3381, %v3379
      %v3416 = vpack.c.b16 %v3384, %v3382
      %v3417 = vpack.c.b16 %v3385, %v3383
      %3450 = vmatprep.subr.bf16.mxu0 %v3387
      %3451 = vmatpush1.bf16.msra.mxu0 %v3386
      %3452 = vmatprep.subr.bf16.mxu0 %v3389
      %3453 = vmatpush1.bf16.msra.mxu0 %v3388
      %3454 = vmatprep.subr.bf16.mxu0 %v3391
      %3455 = vmatpush1.bf16.msra.mxu0 %v3390
      %3456 = vmatprep.subr.bf16.mxu0 %v3393
      %3457 = vmatpush1.bf16.msra.mxu0 %v3392
      %3458 = vmatprep.subr.bf16.mxu0 %v3395
      %3459 = vmatpush1.bf16.msra.mxu0 %v3394
      %3460 = vmatprep.subr.bf16.mxu0 %v3397
      %3461 = vmatpush1.bf16.msra.mxu0 %v3396
      %3462 = vmatprep.subr.bf16.mxu0 %v3399
      %3463 = vmatpush1.bf16.msra.mxu0 %v3398
      %3464 = vmatprep.subr.bf16.mxu0 %v3401
      %3465 = vmatpush1.bf16.msra.mxu0 %v3400
      %3466 = vmatprep.subr.bf16.mxu0 %v3403
      %3467 = vmatpush1.bf16.msra.mxu0 %v3402
      %3468 = vmatprep.subr.bf16.mxu0 %v3405
      %3469 = vmatpush1.bf16.msra.mxu0 %v3404
      %3470 = vmatprep.subr.bf16.mxu0 %v3407
      %3471 = vmatpush1.bf16.msra.mxu0 %v3406
      %3472 = vmatprep.subr.bf16.mxu0 %v3409
      %3473 = vmatpush1.bf16.msra.mxu0 %v3408
      %3474 = vmatprep.subr.bf16.mxu0 %v3411
      %3475 = vmatpush1.bf16.msra.mxu0 %v3410
      %3476 = vmatprep.subr.bf16.mxu0 %v3413
      %3477 = vmatpush1.bf16.msra.mxu0 %v3412
      %3478 = vmatprep.subr.bf16.mxu0 %v3415
      %3479 = vmatpush1.bf16.msra.mxu0 %v3414
      %3480 = vmatprep.subr.bf16.mxu0 %v3417
      %3481 = vmatpush1.bf16.msra.mxu0 %v3416
      %3482 = vmatprep.mubr.bf16.mxu0 %v3259
      %3483 = vmatmul.mubr.bf16.gmra.mrb[0].mxu0 %v3258
      %v3484 = vpop.f32.mrb[0].mxu0
      %v3485 = vadd.f32 0.0, %v3484
      %v3486 = vpop.f32.mrb[0].mxu0
      %v3487 = vadd.f32 0.0, %v3486
      %v3488 = vpop.f32.mrb[0].mxu0
      %v3489 = vadd.f32 0.0, %v3488
      %v3490 = vpop.f32.mrb[0].mxu0
      %v3491 = vadd.f32 0.0, %v3490
      %3492 = vmatprep.mubr.bf16.mxu0 %v3261
      %3493 = vmatmul.mubr.bf16.gmra.mrb[0].mxu0 %v3260
      %v3494 = vpop.f32.mrb[0].mxu0
      %v3495 = vadd.f32 0.0, %v3494
      %v3496 = vpop.f32.mrb[0].mxu0
      %v3497 = vadd.f32 0.0, %v3496
      %v3498 = vpop.f32.mrb[0].mxu0
      %v3499 = vadd.f32 0.0, %v3498
      %v3500 = vpop.f32.mrb[0].mxu0
      %v3501 = vadd.f32 0.0, %v3500
      %3502 = vmatprep.mubr.bf16.mxu0 %v3263
      %3503 = vmatmul.mubr.bf16.gmra.mrb[0].mxu0 %v3262
      %v3504 = vpop.f32.mrb[0].mxu0
      %v3505 = vadd.f32 0.0, %v3504
      %v3506 = vpop.f32.mrb[0].mxu0
      %v3507 = vadd.f32 0.0, %v3506
      %v3508 = vpop.f32.mrb[0].mxu0
      %v3509 = vadd.f32 0.0, %v3508
      %v3510 = vpop.f32.mrb[0].mxu0
      %v3511 = vadd.f32 0.0, %v3510
      %3512 = vmatprep.mubr.bf16.mxu0 %v3265
      %3513 = vmatmul.mubr.bf16.gmra.mrb[0].mxu0 %v3264
      %v3514 = vpop.f32.mrb[0].mxu0
      %v3515 = vadd.f32 0.0, %v3514
      %v3516 = vpop.f32.mrb[0].mxu0
      %v3517 = vadd.f32 0.0, %v3516
      %v3518 = vpop.f32.mrb[0].mxu0
      %v3519 = vadd.f32 0.0, %v3518
      %v3520 = vpop.f32.mrb[0].mxu0
      %v3521 = vadd.f32 0.0, %v3520
      %3522 = vmatprep.mubr.bf16.mxu0 %v3267
      %3523 = vmatmul.mubr.bf16.gmra.mrb[0].mxu0 %v3266
      %v3524 = vpop.f32.mrb[0].mxu0
      %v3525 = vadd.f32 0.0, %v3524
      %v3526 = vpop.f32.mrb[0].mxu0
      %v3527 = vadd.f32 0.0, %v3526
      %v3528 = vpop.f32.mrb[0].mxu0
      %v3529 = vadd.f32 0.0, %v3528
      %v3530 = vpop.f32.mrb[0].mxu0
      %v3531 = vadd.f32 0.0, %v3530
      %3532 = vmatprep.mubr.bf16.mxu0 %v3269
      %3533 = vmatmul.mubr.bf16.gmra.mrb[0].mxu0 %v3268
      %v3534 = vpop.f32.mrb[0].mxu0
      %v3535 = vadd.f32 0.0, %v3534
      %v3536 = vpop.f32.mrb[0].mxu0
      %v3537 = vadd.f32 0.0, %v3536
      %v3538 = vpop.f32.mrb[0].mxu0
      %v3539 = vadd.f32 0.0, %v3538
      %v3540 = vpop.f32.mrb[0].mxu0
      %v3541 = vadd.f32 0.0, %v3540
      %3542 = vmatprep.mubr.bf16.mxu0 %v3271
      %3543 = vmatmul.mubr.bf16.gmra.mrb[0].mxu0 %v3270
      %v3544 = vpop.f32.mrb[0].mxu0
      %v3545 = vadd.f32 0.0, %v3544
      %v3546 = vpop.f32.mrb[0].mxu0
      %v3547 = vadd.f32 0.0, %v3546
      %v3548 = vpop.f32.mrb[0].mxu0
      %v3549 = vadd.f32 0.0, %v3548
      %v3550 = vpop.f32.mrb[0].mxu0
      %v3551 = vadd.f32 0.0, %v3550
      %3552 = vmatprep.mubr.bf16.mxu0 %v3273
      %3553 = vmatmul.mubr.bf16.gmra.mrb[0].mxu0 %v3272
      %v3554 = vpop.f32.mrb[0].mxu0
      %v3555 = vadd.f32 0.0, %v3554
      %v3556 = vpop.f32.mrb[0].mxu0
      %v3557 = vadd.f32 0.0, %v3556
      %v3558 = vpop.f32.mrb[0].mxu0
      %v3559 = vadd.f32 0.0, %v3558
      %v3560 = vpop.f32.mrb[0].mxu0
      %v3561 = vadd.f32 0.0, %v3560
      %3562 = vdwg.mxu0
      %v3563 = vadd.f32 %v3117, %v3485
      %v3564 = vadd.f32 %v3118, %v3487
      %v3565 = vadd.f32 %v3119, %v3489
      %v3566 = vadd.f32 %v3120, %v3491
      %v3567 = vadd.f32 %v3121, %v3495
      %v3568 = vadd.f32 %v3122, %v3497
      %v3569 = vadd.f32 %v3123, %v3499
      %v3570 = vadd.f32 %v3124, %v3501
      %v3571 = vadd.f32 %v3125, %v3505
      %v3572 = vadd.f32 %v3126, %v3507
      %v3573 = vadd.f32 %v3127, %v3509
      %v3574 = vadd.f32 %v3128, %v3511
      %v3575 = vadd.f32 %v3129, %v3515
      %v3576 = vadd.f32 %v3130, %v3517
      %v3577 = vadd.f32 %v3131, %v3519
      %v3578 = vadd.f32 %v3132, %v3521
      %v3579 = vadd.f32 %v3133, %v3525
      %v3580 = vadd.f32 %v3134, %v3527
      %v3581 = vadd.f32 %v3135, %v3529
      %v3582 = vadd.f32 %v3136, %v3531
      %v3583 = vadd.f32 %v3137, %v3535
      %v3584 = vadd.f32 %v3138, %v3537
      %v3585 = vadd.f32 %v3139, %v3539
      %v3586 = vadd.f32 %v3140, %v3541
      %v3587 = vadd.f32 %v3141, %v3545
      %v3588 = vadd.f32 %v3142, %v3547
      %v3589 = vadd.f32 %v3143, %v3549
      %v3590 = vadd.f32 %v3144, %v3551
      %v3591 = vadd.f32 %v3145, %v3555
      %v3592 = vadd.f32 %v3146, %v3557
      %v3593 = vadd.f32 %v3147, %v3559
      %v3594 = vadd.f32 %v3148, %v3561
      %v3596 = vshrl.u32 %v3153, 16
      %v3598 = vrot.slane %v3596, 4
      %v3599 = vshll.u32 %v3153, 16
      %v3601 = vrot.slane %v3599, 5
      %v3602 = vor.u32 %v3598, %v3601
      %v3603 = vrot.slane %v3602, 4
      %v3605 = vshll.u32 %v3154, 16
      %v3607 = vrot.slane %v3605, 5
      %v3608 = vsel %vm258, %v3603, %v3607
      %v3609 = vshrl.u32 %v3154, 16
      %v3611 = vrot.slane %v3609, 4
      %v3612 = vor.u32 %v3611, %v3607
      %v3613 = vrot.slane %v3612, 4
      %v3615 = vshll.u32 %v3155, 16
      %v3617 = vrot.slane %v3615, 5
      %v3618 = vsel %vm258, %v3613, %v3617
      %v3620 = vshrl.u32 %v3156, 16
      %v3622 = vrot.slane %v3620, 4
      %v3623 = vshll.u32 %v3156, 16
      %v3625 = vrot.slane %v3623, 5
      %v3626 = vor.u32 %v3622, %v3625
      %v3627 = vrot.slane %v3626, 4
      %v3629 = vshll.u32 %v3157, 16
      %v3631 = vrot.slane %v3629, 5
      %v3632 = vsel %vm258, %v3627, %v3631
      %v3633 = vshrl.u32 %v3157, 16
      %v3635 = vrot.slane %v3633, 4
      %v3636 = vor.u32 %v3635, %v3631
      %v3637 = vrot.slane %v3636, 4
      %v3639 = vshll.u32 %v3158, 16
      %v3641 = vrot.slane %v3639, 5
      %v3642 = vsel %vm258, %v3637, %v3641
      %v3644 = vshrl.u32 %v3159, 16
      %v3646 = vrot.slane %v3644, 4
      %v3647 = vshll.u32 %v3159, 16
      %v3649 = vrot.slane %v3647, 5
      %v3650 = vor.u32 %v3646, %v3649
      %v3651 = vrot.slane %v3650, 4
      %v3653 = vshll.u32 %v3160, 16
      %v3655 = vrot.slane %v3653, 5
      %v3656 = vsel %vm258, %v3651, %v3655
      %v3657 = vshrl.u32 %v3160, 16
      %v3659 = vrot.slane %v3657, 4
      %v3660 = vor.u32 %v3659, %v3655
      %v3661 = vrot.slane %v3660, 4
      %v3663 = vshll.u32 %v3161, 16
      %v3665 = vrot.slane %v3663, 5
      %v3666 = vsel %vm258, %v3661, %v3665
      %v3668 = vshrl.u32 %v3162, 16
      %v3670 = vrot.slane %v3668, 4
      %v3671 = vshll.u32 %v3162, 16
      %v3673 = vrot.slane %v3671, 5
      %v3674 = vor.u32 %v3670, %v3673
      %v3675 = vrot.slane %v3674, 4
      %v3677 = vshll.u32 %v3163, 16
      %v3679 = vrot.slane %v3677, 5
      %v3680 = vsel %vm258, %v3675, %v3679
      %v3681 = vshrl.u32 %v3163, 16
      %v3683 = vrot.slane %v3681, 4
      %v3684 = vor.u32 %v3683, %v3679
      %v3685 = vrot.slane %v3684, 4
      %v3687 = vshll.u32 %v3164, 16
      %v3689 = vrot.slane %v3687, 5
      %v3690 = vsel %vm258, %v3685, %v3689
      %v3692 = vshrl.u32 %v3165, 16
      %v3694 = vrot.slane %v3692, 4
      %v3695 = vshll.u32 %v3165, 16
      %v3697 = vrot.slane %v3695, 5
      %v3698 = vor.u32 %v3694, %v3697
      %v3699 = vrot.slane %v3698, 4
      %v3701 = vshll.u32 %v3166, 16
      %v3703 = vrot.slane %v3701, 5
      %v3704 = vsel %vm258, %v3699, %v3703
      %v3705 = vshrl.u32 %v3166, 16
      %v3707 = vrot.slane %v3705, 4
      %v3708 = vor.u32 %v3707, %v3703
      %v3709 = vrot.slane %v3708, 4
      %v3711 = vshll.u32 %v3167, 16
      %v3713 = vrot.slane %v3711, 5
      %v3714 = vsel %vm258, %v3709, %v3713
      %v3716 = vshrl.u32 %v3168, 16
      %v3718 = vrot.slane %v3716, 4
      %v3719 = vshll.u32 %v3168, 16
      %v3721 = vrot.slane %v3719, 5
      %v3722 = vor.u32 %v3718, %v3721
      %v3723 = vrot.slane %v3722, 4
      %v3725 = vshll.u32 %v3169, 16
      %v3727 = vrot.slane %v3725, 5
      %v3728 = vsel %vm258, %v3723, %v3727
      %v3729 = vshrl.u32 %v3169, 16
      %v3731 = vrot.slane %v3729, 4
      %v3732 = vor.u32 %v3731, %v3727
      %v3733 = vrot.slane %v3732, 4
      %v3735 = vshll.u32 %v3170, 16
      %v3737 = vrot.slane %v3735, 5
      %v3738 = vsel %vm258, %v3733, %v3737
      %v3740 = vshrl.u32 %v3171, 16
      %v3742 = vrot.slane %v3740, 4
      %v3743 = vshll.u32 %v3171, 16
      %v3745 = vrot.slane %v3743, 5
      %v3746 = vor.u32 %v3742, %v3745
      %v3747 = vrot.slane %v3746, 4
      %v3749 = vshll.u32 %v3172, 16
      %v3751 = vrot.slane %v3749, 5
      %v3752 = vsel %vm258, %v3747, %v3751
      %v3753 = vshrl.u32 %v3172, 16
      %v3755 = vrot.slane %v3753, 4
      %v3756 = vor.u32 %v3755, %v3751
      %v3757 = vrot.slane %v3756, 4
      %v3759 = vshll.u32 %v3173, 16
      %v3761 = vrot.slane %v3759, 5
      %v3762 = vsel %vm258, %v3757, %v3761
      %v3764 = vshrl.u32 %v3174, 16
      %v3766 = vrot.slane %v3764, 4
      %v3767 = vshll.u32 %v3174, 16
      %v3769 = vrot.slane %v3767, 5
      %v3770 = vor.u32 %v3766, %v3769
      %v3771 = vrot.slane %v3770, 4
      %v3773 = vshll.u32 %v3175, 16
      %v3775 = vrot.slane %v3773, 5
      %v3776 = vsel %vm258, %v3771, %v3775
      %v3777 = vshrl.u32 %v3175, 16
      %v3779 = vrot.slane %v3777, 4
      %v3780 = vor.u32 %v3779, %v3775
      %v3781 = vrot.slane %v3780, 4
      %v3783 = vshll.u32 %v3176, 16
      %v3785 = vrot.slane %v3783, 5
      %v3786 = vsel %vm258, %v3781, %v3785
      %s3787 = scalar_lea.vmem %s1, 1792
      %v3788 = vld [vmem:[%s3787] sm:$0xff]
      %v3789 = vld [vmem:[%s3787 + $0x8] sm:$0xff]
      %v3790 = vld [vmem:[%s3787 + $0x10] sm:$0xff]
      %v3791 = vld [vmem:[%s3787 + $0x18] sm:$0xff]
      %v3792 = vld [vmem:[%s3787 + $0x20] sm:$0xff]
      %v3793 = vld [vmem:[%s3787 + $0x28] sm:$0xff]
      %v3794 = vld [vmem:[%s3787 + $0x30] sm:$0xff]
      %v3795 = vld [vmem:[%s3787 + $0x38] sm:$0xff]
      %v3796 = vld [vmem:[%s3787 + $0x40] sm:$0xff]
      %v3797 = vld [vmem:[%s3787 + $0x48] sm:$0xff]
      %v3798 = vld [vmem:[%s3787 + $0x50] sm:$0xff]
      %v3799 = vld [vmem:[%s3787 + $0x58] sm:$0xff]
      %v3800 = vld [vmem:[%s3787 + $0x60] sm:$0xff]
      %v3801 = vld [vmem:[%s3787 + $0x68] sm:$0xff]
      %v3802 = vld [vmem:[%s3787 + $0x70] sm:$0xff]
      %v3803 = vld [vmem:[%s3787 + $0x78] sm:$0xff]
      %v3804 = vld [vmem:[%s3787 + $0x80] sm:$0xff]
      %v3805 = vld [vmem:[%s3787 + $0x88] sm:$0xff]
      %v3806 = vld [vmem:[%s3787 + $0x90] sm:$0xff]
      %v3807 = vld [vmem:[%s3787 + $0x98] sm:$0xff]
      %v3808 = vld [vmem:[%s3787 + $0xa0] sm:$0xff]
      %v3809 = vld [vmem:[%s3787 + $0xa8] sm:$0xff]
      %v3810 = vld [vmem:[%s3787 + $0xb0] sm:$0xff]
      %v3811 = vld [vmem:[%s3787 + $0xb8] sm:$0xff]
      %v3812 = vld [vmem:[%s3787 + $0xc0] sm:$0xff]
      %v3813 = vld [vmem:[%s3787 + $0xc8] sm:$0xff]
      %v3814 = vld [vmem:[%s3787 + $0xd0] sm:$0xff]
      %v3815 = vld [vmem:[%s3787 + $0xd8] sm:$0xff]
      %v3816 = vld [vmem:[%s3787 + $0xe0] sm:$0xff]
      %v3817 = vld [vmem:[%s3787 + $0xe8] sm:$0xff]
      %v3818 = vld [vmem:[%s3787 + $0xf0] sm:$0xff]
      %v3819 = vld [vmem:[%s3787 + $0xf8] sm:$0xff]
      %v3820 = vunpack.c.l.b16 %v3608
      %v3821 = vunpack.c.h.b16 %v3608
      %v3822 = vunpack.c.l.b16 %v3618
      %v3823 = vunpack.c.h.b16 %v3618
      %v3824 = vunpack.c.l.b16 %v3632
      %v3825 = vunpack.c.h.b16 %v3632
      %v3826 = vunpack.c.l.b16 %v3642
      %v3827 = vunpack.c.h.b16 %v3642
      %v3828 = vunpack.c.l.b16 %v3656
      %v3829 = vunpack.c.h.b16 %v3656
      %v3830 = vunpack.c.l.b16 %v3666
      %v3831 = vunpack.c.h.b16 %v3666
      %v3832 = vunpack.c.l.b16 %v3680
      %v3833 = vunpack.c.h.b16 %v3680
      %v3834 = vunpack.c.l.b16 %v3690
      %v3835 = vunpack.c.h.b16 %v3690
      %v3836 = vunpack.c.l.b16 %v3704
      %v3837 = vunpack.c.h.b16 %v3704
      %v3838 = vunpack.c.l.b16 %v3714
      %v3839 = vunpack.c.h.b16 %v3714
      %v3840 = vunpack.c.l.b16 %v3728
      %v3841 = vunpack.c.h.b16 %v3728
      %v3842 = vunpack.c.l.b16 %v3738
      %v3843 = vunpack.c.h.b16 %v3738
      %v3844 = vunpack.c.l.b16 %v3752
      %v3845 = vunpack.c.h.b16 %v3752
      %v3846 = vunpack.c.l.b16 %v3762
      %v3847 = vunpack.c.h.b16 %v3762
      %v3848 = vunpack.c.l.b16 %v3776
      %v3849 = vunpack.c.h.b16 %v3776
      %v3850 = vunpack.c.l.b16 %v3786
      %v3851 = vunpack.c.h.b16 %v3786
      %v3852 = vpack.c.b16 %v3822, %v3820
      %v3853 = vpack.c.b16 %v3823, %v3821
      %v3854 = vpack.c.b16 %v3826, %v3824
      %v3855 = vpack.c.b16 %v3827, %v3825
      %v3856 = vpack.c.b16 %v3830, %v3828
      %v3857 = vpack.c.b16 %v3831, %v3829
      %v3858 = vpack.c.b16 %v3834, %v3832
      %v3859 = vpack.c.b16 %v3835, %v3833
      %v3860 = vpack.c.b16 %v3838, %v3836
      %v3861 = vpack.c.b16 %v3839, %v3837
      %v3862 = vpack.c.b16 %v3842, %v3840
      %v3863 = vpack.c.b16 %v3843, %v3841
      %v3864 = vpack.c.b16 %v3846, %v3844
      %v3865 = vpack.c.b16 %v3847, %v3845
      %v3866 = vpack.c.b16 %v3850, %v3848
      %v3867 = vpack.c.b16 %v3851, %v3849
      %v3916 = vunpack.c.l.b16 %v3788
      %v3917 = vunpack.c.h.b16 %v3788
      %v3918 = vunpack.c.l.b16 %v3789
      %v3919 = vunpack.c.h.b16 %v3789
      %v3920 = vunpack.c.l.b16 %v3790
      %v3921 = vunpack.c.h.b16 %v3790
      %v3922 = vunpack.c.l.b16 %v3791
      %v3923 = vunpack.c.h.b16 %v3791
      %v3924 = vunpack.c.l.b16 %v3792
      %v3925 = vunpack.c.h.b16 %v3792
      %v3926 = vunpack.c.l.b16 %v3793
      %v3927 = vunpack.c.h.b16 %v3793
      %v3928 = vunpack.c.l.b16 %v3794
      %v3929 = vunpack.c.h.b16 %v3794
      %v3930 = vunpack.c.l.b16 %v3795
      %v3931 = vunpack.c.h.b16 %v3795
      %v3932 = vunpack.c.l.b16 %v3796
      %v3933 = vunpack.c.h.b16 %v3796
      %v3934 = vunpack.c.l.b16 %v3797
      %v3935 = vunpack.c.h.b16 %v3797
      %v3936 = vunpack.c.l.b16 %v3798
      %v3937 = vunpack.c.h.b16 %v3798
      %v3938 = vunpack.c.l.b16 %v3799
      %v3939 = vunpack.c.h.b16 %v3799
      %v3940 = vunpack.c.l.b16 %v3800
      %v3941 = vunpack.c.h.b16 %v3800
      %v3942 = vunpack.c.l.b16 %v3801
      %v3943 = vunpack.c.h.b16 %v3801
      %v3944 = vunpack.c.l.b16 %v3802
      %v3945 = vunpack.c.h.b16 %v3802
      %v3946 = vunpack.c.l.b16 %v3803
      %v3947 = vunpack.c.h.b16 %v3803
      %v3948 = vunpack.c.l.b16 %v3804
      %v3949 = vunpack.c.h.b16 %v3804
      %v3950 = vunpack.c.l.b16 %v3805
      %v3951 = vunpack.c.h.b16 %v3805
      %v3952 = vunpack.c.l.b16 %v3806
      %v3953 = vunpack.c.h.b16 %v3806
      %v3954 = vunpack.c.l.b16 %v3807
      %v3955 = vunpack.c.h.b16 %v3807
      %v3956 = vunpack.c.l.b16 %v3808
      %v3957 = vunpack.c.h.b16 %v3808
      %v3958 = vunpack.c.l.b16 %v3809
      %v3959 = vunpack.c.h.b16 %v3809
      %v3960 = vunpack.c.l.b16 %v3810
      %v3961 = vunpack.c.h.b16 %v3810
      %v3962 = vunpack.c.l.b16 %v3811
      %v3963 = vunpack.c.h.b16 %v3811
      %v3964 = vunpack.c.l.b16 %v3812
      %v3965 = vunpack.c.h.b16 %v3812
      %v3966 = vunpack.c.l.b16 %v3813
      %v3967 = vunpack.c.h.b16 %v3813
      %v3968 = vunpack.c.l.b16 %v3814
      %v3969 = vunpack.c.h.b16 %v3814
      %v3970 = vunpack.c.l.b16 %v3815
      %v3971 = vunpack.c.h.b16 %v3815
      %v3972 = vunpack.c.l.b16 %v3816
      %v3973 = vunpack.c.h.b16 %v3816
      %v3974 = vunpack.c.l.b16 %v3817
      %v3975 = vunpack.c.h.b16 %v3817
      %v3976 = vunpack.c.l.b16 %v3818
      %v3977 = vunpack.c.h.b16 %v3818
      %v3978 = vunpack.c.l.b16 %v3819
      %v3979 = vunpack.c.h.b16 %v3819
      %v3980 = vpack.c.b16 %v3918, %v3916
      %v3981 = vpack.c.b16 %v3919, %v3917
      %v3982 = vpack.c.b16 %v3922, %v3920
      %v3983 = vpack.c.b16 %v3923, %v3921
      %v3984 = vpack.c.b16 %v3926, %v3924
      %v3985 = vpack.c.b16 %v3927, %v3925
      %v3986 = vpack.c.b16 %v3930, %v3928
      %v3987 = vpack.c.b16 %v3931, %v3929
      %v3988 = vpack.c.b16 %v3934, %v3932
      %v3989 = vpack.c.b16 %v3935, %v3933
      %v3990 = vpack.c.b16 %v3938, %v3936
      %v3991 = vpack.c.b16 %v3939, %v3937
      %v3992 = vpack.c.b16 %v3942, %v3940
      %v3993 = vpack.c.b16 %v3943, %v3941
      %v3994 = vpack.c.b16 %v3946, %v3944
      %v3995 = vpack.c.b16 %v3947, %v3945
      %v3996 = vpack.c.b16 %v3950, %v3948
      %v3997 = vpack.c.b16 %v3951, %v3949
      %v3998 = vpack.c.b16 %v3954, %v3952
      %v3999 = vpack.c.b16 %v3955, %v3953
      %v4000 = vpack.c.b16 %v3958, %v3956
      %v4001 = vpack.c.b16 %v3959, %v3957
      %v4002 = vpack.c.b16 %v3962, %v3960
      %v4003 = vpack.c.b16 %v3963, %v3961
      %v4004 = vpack.c.b16 %v3966, %v3964
      %v4005 = vpack.c.b16 %v3967, %v3965
      %v4006 = vpack.c.b16 %v3970, %v3968
      %v4007 = vpack.c.b16 %v3971, %v3969
      %v4008 = vpack.c.b16 %v3974, %v3972
      %v4009 = vpack.c.b16 %v3975, %v3973
      %v4010 = vpack.c.b16 %v3978, %v3976
      %v4011 = vpack.c.b16 %v3979, %v3977
      %4044 = vmatprep.subr.bf16.mxu0 %v3981
      %4045 = vmatpush1.bf16.msra.mxu0 %v3980
      %4046 = vmatprep.subr.bf16.mxu0 %v3983
      %4047 = vmatpush1.bf16.msra.mxu0 %v3982
      %4048 = vmatprep.subr.bf16.mxu0 %v3985
      %4049 = vmatpush1.bf16.msra.mxu0 %v3984
      %4050 = vmatprep.subr.bf16.mxu0 %v3987
      %4051 = vmatpush1.bf16.msra.mxu0 %v3986
      %4052 = vmatprep.subr.bf16.mxu0 %v3989
      %4053 = vmatpush1.bf16.msra.mxu0 %v3988
      %4054 = vmatprep.subr.bf16.mxu0 %v3991
      %4055 = vmatpush1.bf16.msra.mxu0 %v3990
      %4056 = vmatprep.subr.bf16.mxu0 %v3993
      %4057 = vmatpush1.bf16.msra.mxu0 %v3992
      %4058 = vmatprep.subr.bf16.mxu0 %v3995
      %4059 = vmatpush1.bf16.msra.mxu0 %v3994
      %4060 = vmatprep.subr.bf16.mxu0 %v3997
      %4061 = vmatpush1.bf16.msra.mxu0 %v3996
      %4062 = vmatprep.subr.bf16.mxu0 %v3999
      %4063 = vmatpush1.bf16.msra.mxu0 %v3998
      %4064 = vmatprep.subr.bf16.mxu0 %v4001
      %4065 = vmatpush1.bf16.msra.mxu0 %v4000
      %4066 = vmatprep.subr.bf16.mxu0 %v4003
      %4067 = vmatpush1.bf16.msra.mxu0 %v4002
      %4068 = vmatprep.subr.bf16.mxu0 %v4005
      %4069 = vmatpush1.bf16.msra.mxu0 %v4004
      %4070 = vmatprep.subr.bf16.mxu0 %v4007
      %4071 = vmatpush1.bf16.msra.mxu0 %v4006
      %4072 = vmatprep.subr.bf16.mxu0 %v4009
      %4073 = vmatpush1.bf16.msra.mxu0 %v4008
      %4074 = vmatprep.subr.bf16.mxu0 %v4011
      %4075 = vmatpush1.bf16.msra.mxu0 %v4010
      %4076 = vmatprep.mubr.bf16.mxu0 %v3853
      %4077 = vmatmul.mubr.bf16.gmra.mrb[0].mxu0 %v3852
      %v4078 = vpop.f32.mrb[0].mxu0
      %v4079 = vadd.f32 0.0, %v4078
      %v4080 = vpop.f32.mrb[0].mxu0
      %v4081 = vadd.f32 0.0, %v4080
      %v4082 = vpop.f32.mrb[0].mxu0
      %v4083 = vadd.f32 0.0, %v4082
      %v4084 = vpop.f32.mrb[0].mxu0
      %v4085 = vadd.f32 0.0, %v4084
      %4086 = vmatprep.mubr.bf16.mxu0 %v3855
      %4087 = vmatmul.mubr.bf16.gmra.mrb[0].mxu0 %v3854
      %v4088 = vpop.f32.mrb[0].mxu0
      %v4089 = vadd.f32 0.0, %v4088
      %v4090 = vpop.f32.mrb[0].mxu0
      %v4091 = vadd.f32 0.0, %v4090
      %v4092 = vpop.f32.mrb[0].mxu0
      %v4093 = vadd.f32 0.0, %v4092
      %v4094 = vpop.f32.mrb[0].mxu0
      %v4095 = vadd.f32 0.0, %v4094
      %4096 = vmatprep.mubr.bf16.mxu0 %v3857
      %4097 = vmatmul.mubr.bf16.gmra.mrb[0].mxu0 %v3856
      %v4098 = vpop.f32.mrb[0].mxu0
      %v4099 = vadd.f32 0.0, %v4098
      %v4100 = vpop.f32.mrb[0].mxu0
      %v4101 = vadd.f32 0.0, %v4100
      %v4102 = vpop.f32.mrb[0].mxu0
      %v4103 = vadd.f32 0.0, %v4102
      %v4104 = vpop.f32.mrb[0].mxu0
      %v4105 = vadd.f32 0.0, %v4104
      %4106 = vmatprep.mubr.bf16.mxu0 %v3859
      %4107 = vmatmul.mubr.bf16.gmra.mrb[0].mxu0 %v3858
      %v4108 = vpop.f32.mrb[0].mxu0
      %v4109 = vadd.f32 0.0, %v4108
      %v4110 = vpop.f32.mrb[0].mxu0
      %v4111 = vadd.f32 0.0, %v4110
      %v4112 = vpop.f32.mrb[0].mxu0
      %v4113 = vadd.f32 0.0, %v4112
      %v4114 = vpop.f32.mrb[0].mxu0
      %v4115 = vadd.f32 0.0, %v4114
      %4116 = vmatprep.mubr.bf16.mxu0 %v3861
      %4117 = vmatmul.mubr.bf16.gmra.mrb[0].mxu0 %v3860
      %v4118 = vpop.f32.mrb[0].mxu0
      %v4119 = vadd.f32 0.0, %v4118
      %v4120 = vpop.f32.mrb[0].mxu0
      %v4121 = vadd.f32 0.0, %v4120
      %v4122 = vpop.f32.mrb[0].mxu0
      %v4123 = vadd.f32 0.0, %v4122
      %v4124 = vpop.f32.mrb[0].mxu0
      %v4125 = vadd.f32 0.0, %v4124
      %4126 = vmatprep.mubr.bf16.mxu0 %v3863
      %4127 = vmatmul.mubr.bf16.gmra.mrb[0].mxu0 %v3862
      %v4128 = vpop.f32.mrb[0].mxu0
      %v4129 = vadd.f32 0.0, %v4128
      %v4130 = vpop.f32.mrb[0].mxu0
      %v4131 = vadd.f32 0.0, %v4130
      %v4132 = vpop.f32.mrb[0].mxu0
      %v4133 = vadd.f32 0.0, %v4132
      %v4134 = vpop.f32.mrb[0].mxu0
      %v4135 = vadd.f32 0.0, %v4134
      %4136 = vmatprep.mubr.bf16.mxu0 %v3865
      %4137 = vmatmul.mubr.bf16.gmra.mrb[0].mxu0 %v3864
      %v4138 = vpop.f32.mrb[0].mxu0
      %v4139 = vadd.f32 0.0, %v4138
      %v4140 = vpop.f32.mrb[0].mxu0
      %v4141 = vadd.f32 0.0, %v4140
      %v4142 = vpop.f32.mrb[0].mxu0
      %v4143 = vadd.f32 0.0, %v4142
      %v4144 = vpop.f32.mrb[0].mxu0
      %v4145 = vadd.f32 0.0, %v4144
      %4146 = vmatprep.mubr.bf16.mxu0 %v3867
      %4147 = vmatmul.mubr.bf16.gmra.mrb[0].mxu0 %v3866
      %v4148 = vpop.f32.mrb[0].mxu0
      %v4149 = vadd.f32 0.0, %v4148
      %v4150 = vpop.f32.mrb[0].mxu0
      %v4151 = vadd.f32 0.0, %v4150
      %v4152 = vpop.f32.mrb[0].mxu0
      %v4153 = vadd.f32 0.0, %v4152
      %v4154 = vpop.f32.mrb[0].mxu0
      %v4155 = vadd.f32 0.0, %v4154
      %4156 = vdwg.mxu0
      %v4157 = vadd.f32 %v3563, %v4079
      %v4158 = vadd.f32 %v3564, %v4081
      %v4159 = vadd.f32 %v3565, %v4083
      %v4160 = vadd.f32 %v3566, %v4085
      %v4161 = vadd.f32 %v3567, %v4089
      %v4162 = vadd.f32 %v3568, %v4091
      %v4163 = vadd.f32 %v3569, %v4093
      %v4164 = vadd.f32 %v3570, %v4095
      %v4165 = vadd.f32 %v3571, %v4099
      %v4166 = vadd.f32 %v3572, %v4101
      %v4167 = vadd.f32 %v3573, %v4103
      %v4168 = vadd.f32 %v3574, %v4105
      %v4169 = vadd.f32 %v3575, %v4109
      %v4170 = vadd.f32 %v3576, %v4111
      %v4171 = vadd.f32 %v3577, %v4113
      %v4172 = vadd.f32 %v3578, %v4115
      %v4173 = vadd.f32 %v3579, %v4119
      %v4174 = vadd.f32 %v3580, %v4121
      %v4175 = vadd.f32 %v3581, %v4123
      %v4176 = vadd.f32 %v3582, %v4125
      %v4177 = vadd.f32 %v3583, %v4129
      %v4178 = vadd.f32 %v3584, %v4131
      %v4179 = vadd.f32 %v3585, %v4133
      %v4180 = vadd.f32 %v3586, %v4135
      %v4181 = vadd.f32 %v3587, %v4139
      %v4182 = vadd.f32 %v3588, %v4141
      %v4183 = vadd.f32 %v3589, %v4143
      %v4184 = vadd.f32 %v3590, %v4145
      %v4185 = vadd.f32 %v3591, %v4149
      %v4186 = vadd.f32 %v3592, %v4151
      %v4187 = vadd.f32 %v3593, %v4153
      %v4188 = vadd.f32 %v3594, %v4155
      %v4197 = vrot.slane %v3153, 5
      %v4198 = vrot.slane %v4197, 4
      %v4199 = vrot.slane %v3154, 5
      %v4200 = vsel %vm1184, %v4198, %v4199
      %v4201 = vrot.slane %v4199, 4
      %v4202 = vrot.slane %v3155, 5
      %v4203 = vsel %vm1184, %v4201, %v4202
      %v4204 = vrot.slane %v3156, 5
      %v4205 = vrot.slane %v4204, 4
      %v4206 = vrot.slane %v3157, 5
      %v4207 = vsel %vm1184, %v4205, %v4206
      %v4208 = vrot.slane %v4206, 4
      %v4209 = vrot.slane %v3158, 5
      %v4210 = vsel %vm1184, %v4208, %v4209
      %v4211 = vrot.slane %v3159, 5
      %v4212 = vrot.slane %v4211, 4
      %v4213 = vrot.slane %v3160, 5
      %v4214 = vsel %vm1184, %v4212, %v4213
      %v4215 = vrot.slane %v4213, 4
      %v4216 = vrot.slane %v3161, 5
      %v4217 = vsel %vm1184, %v4215, %v4216
      %v4218 = vrot.slane %v3162, 5
      %v4219 = vrot.slane %v4218, 4
      %v4220 = vrot.slane %v3163, 5
      %v4221 = vsel %vm1184, %v4219, %v4220
      %v4222 = vrot.slane %v4220, 4
      %v4223 = vrot.slane %v3164, 5
      %v4224 = vsel %vm1184, %v4222, %v4223
      %v4225 = vrot.slane %v3165, 5
      %v4226 = vrot.slane %v4225, 4
      %v4227 = vrot.slane %v3166, 5
      %v4228 = vsel %vm1184, %v4226, %v4227
      %v4229 = vrot.slane %v4227, 4
      %v4230 = vrot.slane %v3167, 5
      %v4231 = vsel %vm1184, %v4229, %v4230
      %v4232 = vrot.slane %v3168, 5
      %v4233 = vrot.slane %v4232, 4
      %v4234 = vrot.slane %v3169, 5
      %v4235 = vsel %vm1184, %v4233, %v4234
      %v4236 = vrot.slane %v4234, 4
      %v4237 = vrot.slane %v3170, 5
      %v4238 = vsel %vm1184, %v4236, %v4237
      %v4239 = vrot.slane %v3171, 5
      %v4240 = vrot.slane %v4239, 4
      %v4241 = vrot.slane %v3172, 5
      %v4242 = vsel %vm1184, %v4240, %v4241
      %v4243 = vrot.slane %v4241, 4
      %v4244 = vrot.slane %v3173, 5
      %v4245 = vsel %vm1184, %v4243, %v4244
      %v4246 = vrot.slane %v3174, 5
      %v4247 = vrot.slane %v4246, 4
      %v4248 = vrot.slane %v3175, 5
      %v4249 = vsel %vm1184, %v4247, %v4248
      %v4250 = vrot.slane %v4248, 4
      %v4251 = vrot.slane %v3176, 5
      %v4252 = vsel %vm1184, %v4250, %v4251
      %s4253 = scalar_lea.vmem %s1, 2048
      %v4254 = vld [vmem:[%s4253] sm:$0xff]
      %v4255 = vld [vmem:[%s4253 + $0x8] sm:$0xff]
      %v4256 = vld [vmem:[%s4253 + $0x10] sm:$0xff]
      %v4257 = vld [vmem:[%s4253 + $0x18] sm:$0xff]
      %v4258 = vld [vmem:[%s4253 + $0x20] sm:$0xff]
      %v4259 = vld [vmem:[%s4253 + $0x28] sm:$0xff]
      %v4260 = vld [vmem:[%s4253 + $0x30] sm:$0xff]
      %v4261 = vld [vmem:[%s4253 + $0x38] sm:$0xff]
      %v4262 = vld [vmem:[%s4253 + $0x40] sm:$0xff]
      %v4263 = vld [vmem:[%s4253 + $0x48] sm:$0xff]
      %v4264 = vld [vmem:[%s4253 + $0x50] sm:$0xff]
      %v4265 = vld [vmem:[%s4253 + $0x58] sm:$0xff]
      %v4266 = vld [vmem:[%s4253 + $0x60] sm:$0xff]
      %v4267 = vld [vmem:[%s4253 + $0x68] sm:$0xff]
      %v4268 = vld [vmem:[%s4253 + $0x70] sm:$0xff]
      %v4269 = vld [vmem:[%s4253 + $0x78] sm:$0xff]
      %v4270 = vld [vmem:[%s4253 + $0x80] sm:$0xff]
      %v4271 = vld [vmem:[%s4253 + $0x88] sm:$0xff]
      %v4272 = vld [vmem:[%s4253 + $0x90] sm:$0xff]
      %v4273 = vld [vmem:[%s4253 + $0x98] sm:$0xff]
      %v4274 = vld [vmem:[%s4253 + $0xa0] sm:$0xff]
      %v4275 = vld [vmem:[%s4253 + $0xa8] sm:$0xff]
      %v4276 = vld [vmem:[%s4253 + $0xb0] sm:$0xff]
      %v4277 = vld [vmem:[%s4253 + $0xb8] sm:$0xff]
      %v4278 = vld [vmem:[%s4253 + $0xc0] sm:$0xff]
      %v4279 = vld [vmem:[%s4253 + $0xc8] sm:$0xff]
      %v4280 = vld [vmem:[%s4253 + $0xd0] sm:$0xff]
      %v4281 = vld [vmem:[%s4253 + $0xd8] sm:$0xff]
      %v4282 = vld [vmem:[%s4253 + $0xe0] sm:$0xff]
      %v4283 = vld [vmem:[%s4253 + $0xe8] sm:$0xff]
      %v4284 = vld [vmem:[%s4253 + $0xf0] sm:$0xff]
      %v4285 = vld [vmem:[%s4253 + $0xf8] sm:$0xff]
      %v4286 = vunpack.c.l.b16 %v4200
      %v4287 = vunpack.c.h.b16 %v4200
      %v4288 = vunpack.c.l.b16 %v4203
      %v4289 = vunpack.c.h.b16 %v4203
      %v4290 = vunpack.c.l.b16 %v4207
      %v4291 = vunpack.c.h.b16 %v4207
      %v4292 = vunpack.c.l.b16 %v4210
      %v4293 = vunpack.c.h.b16 %v4210
      %v4294 = vunpack.c.l.b16 %v4214
      %v4295 = vunpack.c.h.b16 %v4214
      %v4296 = vunpack.c.l.b16 %v4217
      %v4297 = vunpack.c.h.b16 %v4217
      %v4298 = vunpack.c.l.b16 %v4221
      %v4299 = vunpack.c.h.b16 %v4221
      %v4300 = vunpack.c.l.b16 %v4224
      %v4301 = vunpack.c.h.b16 %v4224
      %v4302 = vunpack.c.l.b16 %v4228
      %v4303 = vunpack.c.h.b16 %v4228
      %v4304 = vunpack.c.l.b16 %v4231
      %v4305 = vunpack.c.h.b16 %v4231
      %v4306 = vunpack.c.l.b16 %v4235
      %v4307 = vunpack.c.h.b16 %v4235
      %v4308 = vunpack.c.l.b16 %v4238
      %v4309 = vunpack.c.h.b16 %v4238
      %v4310 = vunpack.c.l.b16 %v4242
      %v4311 = vunpack.c.h.b16 %v4242
      %v4312 = vunpack.c.l.b16 %v4245
      %v4313 = vunpack.c.h.b16 %v4245
      %v4314 = vunpack.c.l.b16 %v4249
      %v4315 = vunpack.c.h.b16 %v4249
      %v4316 = vunpack.c.l.b16 %v4252
      %v4317 = vunpack.c.h.b16 %v4252
      %v4318 = vpack.c.b16 %v4288, %v4286
      %v4319 = vpack.c.b16 %v4289, %v4287
      %v4320 = vpack.c.b16 %v4292, %v4290
      %v4321 = vpack.c.b16 %v4293, %v4291
      %v4322 = vpack.c.b16 %v4296, %v4294
      %v4323 = vpack.c.b16 %v4297, %v4295
      %v4324 = vpack.c.b16 %v4300, %v4298
      %v4325 = vpack.c.b16 %v4301, %v4299
      %v4326 = vpack.c.b16 %v4304, %v4302
      %v4327 = vpack.c.b16 %v4305, %v4303
      %v4328 = vpack.c.b16 %v4308, %v4306
      %v4329 = vpack.c.b16 %v4309, %v4307
      %v4330 = vpack.c.b16 %v4312, %v4310
      %v4331 = vpack.c.b16 %v4313, %v4311
      %v4332 = vpack.c.b16 %v4316, %v4314
      %v4333 = vpack.c.b16 %v4317, %v4315
      %v4382 = vunpack.c.l.b16 %v4254
      %v4383 = vunpack.c.h.b16 %v4254
      %v4384 = vunpack.c.l.b16 %v4255
      %v4385 = vunpack.c.h.b16 %v4255
      %v4386 = vunpack.c.l.b16 %v4256
      %v4387 = vunpack.c.h.b16 %v4256
      %v4388 = vunpack.c.l.b16 %v4257
      %v4389 = vunpack.c.h.b16 %v4257
      %v4390 = vunpack.c.l.b16 %v4258
      %v4391 = vunpack.c.h.b16 %v4258
      %v4392 = vunpack.c.l.b16 %v4259
      %v4393 = vunpack.c.h.b16 %v4259
      %v4394 = vunpack.c.l.b16 %v4260
      %v4395 = vunpack.c.h.b16 %v4260
      %v4396 = vunpack.c.l.b16 %v4261
      %v4397 = vunpack.c.h.b16 %v4261
      %v4398 = vunpack.c.l.b16 %v4262
      %v4399 = vunpack.c.h.b16 %v4262
      %v4400 = vunpack.c.l.b16 %v4263
      %v4401 = vunpack.c.h.b16 %v4263
      %v4402 = vunpack.c.l.b16 %v4264
      %v4403 = vunpack.c.h.b16 %v4264
      %v4404 = vunpack.c.l.b16 %v4265
      %v4405 = vunpack.c.h.b16 %v4265
      %v4406 = vunpack.c.l.b16 %v4266
      %v4407 = vunpack.c.h.b16 %v4266
      %v4408 = vunpack.c.l.b16 %v4267
      %v4409 = vunpack.c.h.b16 %v4267
      %v4410 = vunpack.c.l.b16 %v4268
      %v4411 = vunpack.c.h.b16 %v4268
      %v4412 = vunpack.c.l.b16 %v4269
      %v4413 = vunpack.c.h.b16 %v4269
      %v4414 = vunpack.c.l.b16 %v4270
      %v4415 = vunpack.c.h.b16 %v4270
      %v4416 = vunpack.c.l.b16 %v4271
      %v4417 = vunpack.c.h.b16 %v4271
      %v4418 = vunpack.c.l.b16 %v4272
      %v4419 = vunpack.c.h.b16 %v4272
      %v4420 = vunpack.c.l.b16 %v4273
      %v4421 = vunpack.c.h.b16 %v4273
      %v4422 = vunpack.c.l.b16 %v4274
      %v4423 = vunpack.c.h.b16 %v4274
      %v4424 = vunpack.c.l.b16 %v4275
      %v4425 = vunpack.c.h.b16 %v4275
      %v4426 = vunpack.c.l.b16 %v4276
      %v4427 = vunpack.c.h.b16 %v4276
      %v4428 = vunpack.c.l.b16 %v4277
      %v4429 = vunpack.c.h.b16 %v4277
      %v4430 = vunpack.c.l.b16 %v4278
      %v4431 = vunpack.c.h.b16 %v4278
      %v4432 = vunpack.c.l.b16 %v4279
      %v4433 = vunpack.c.h.b16 %v4279
      %v4434 = vunpack.c.l.b16 %v4280
      %v4435 = vunpack.c.h.b16 %v4280
      %v4436 = vunpack.c.l.b16 %v4281
      %v4437 = vunpack.c.h.b16 %v4281
      %v4438 = vunpack.c.l.b16 %v4282
      %v4439 = vunpack.c.h.b16 %v4282
      %v4440 = vunpack.c.l.b16 %v4283
      %v4441 = vunpack.c.h.b16 %v4283
      %v4442 = vunpack.c.l.b16 %v4284
      %v4443 = vunpack.c.h.b16 %v4284
      %v4444 = vunpack.c.l.b16 %v4285
      %v4445 = vunpack.c.h.b16 %v4285
      %v4446 = vpack.c.b16 %v4384, %v4382
      %v4447 = vpack.c.b16 %v4385, %v4383
      %v4448 = vpack.c.b16 %v4388, %v4386
      %v4449 = vpack.c.b16 %v4389, %v4387
      %v4450 = vpack.c.b16 %v4392, %v4390
      %v4451 = vpack.c.b16 %v4393, %v4391
      %v4452 = vpack.c.b16 %v4396, %v4394
      %v4453 = vpack.c.b16 %v4397, %v4395
      %v4454 = vpack.c.b16 %v4400, %v4398
      %v4455 = vpack.c.b16 %v4401, %v4399
      %v4456 = vpack.c.b16 %v4404, %v4402
      %v4457 = vpack.c.b16 %v4405, %v4403
      %v4458 = vpack.c.b16 %v4408, %v4406
      %v4459 = vpack.c.b16 %v4409, %v4407
      %v4460 = vpack.c.b16 %v4412, %v4410
      %v4461 = vpack.c.b16 %v4413, %v4411
      %v4462 = vpack.c.b16 %v4416, %v4414
      %v4463 = vpack.c.b16 %v4417, %v4415
      %v4464 = vpack.c.b16 %v4420, %v4418
      %v4465 = vpack.c.b16 %v4421, %v4419
      %v4466 = vpack.c.b16 %v4424, %v4422
      %v4467 = vpack.c.b16 %v4425, %v4423
      %v4468 = vpack.c.b16 %v4428, %v4426
      %v4469 = vpack.c.b16 %v4429, %v4427
      %v4470 = vpack.c.b16 %v4432, %v4430
      %v4471 = vpack.c.b16 %v4433, %v4431
      %v4472 = vpack.c.b16 %v4436, %v4434
      %v4473 = vpack.c.b16 %v4437, %v4435
      %v4474 = vpack.c.b16 %v4440, %v4438
      %v4475 = vpack.c.b16 %v4441, %v4439
      %v4476 = vpack.c.b16 %v4444, %v4442
      %v4477 = vpack.c.b16 %v4445, %v4443
      %4510 = vmatprep.subr.bf16.mxu0 %v4447
      %4511 = vmatpush1.bf16.msra.mxu0 %v4446
      %4512 = vmatprep.subr.bf16.mxu0 %v4449
      %4513 = vmatpush1.bf16.msra.mxu0 %v4448
      %4514 = vmatprep.subr.bf16.mxu0 %v4451
      %4515 = vmatpush1.bf16.msra.mxu0 %v4450
      %4516 = vmatprep.subr.bf16.mxu0 %v4453
      %4517 = vmatpush1.bf16.msra.mxu0 %v4452
      %4518 = vmatprep.subr.bf16.mxu0 %v4455
      %4519 = vmatpush1.bf16.msra.mxu0 %v4454
      %4520 = vmatprep.subr.bf16.mxu0 %v4457
      %4521 = vmatpush1.bf16.msra.mxu0 %v4456
      %4522 = vmatprep.subr.bf16.mxu0 %v4459
      %4523 = vmatpush1.bf16.msra.mxu0 %v4458
      %4524 = vmatprep.subr.bf16.mxu0 %v4461
      %4525 = vmatpush1.bf16.msra.mxu0 %v4460
      %4526 = vmatprep.subr.bf16.mxu0 %v4463
      %4527 = vmatpush1.bf16.msra.mxu0 %v4462
      %4528 = vmatprep.subr.bf16.mxu0 %v4465
      %4529 = vmatpush1.bf16.msra.mxu0 %v4464
      %4530 = vmatprep.subr.bf16.mxu0 %v4467
      %4531 = vmatpush1.bf16.msra.mxu0 %v4466
      %4532 = vmatprep.subr.bf16.mxu0 %v4469
      %4533 = vmatpush1.bf16.msra.mxu0 %v4468
      %4534 = vmatprep.subr.bf16.mxu0 %v4471
      %4535 = vmatpush1.bf16.msra.mxu0 %v4470
      %4536 = vmatprep.subr.bf16.mxu0 %v4473
      %4537 = vmatpush1.bf16.msra.mxu0 %v4472
      %4538 = vmatprep.subr.bf16.mxu0 %v4475
      %4539 = vmatpush1.bf16.msra.mxu0 %v4474
      %4540 = vmatprep.subr.bf16.mxu0 %v4477
      %4541 = vmatpush1.bf16.msra.mxu0 %v4476
      %4542 = vmatprep.mubr.bf16.mxu0 %v4319
      %4543 = vmatmul.mubr.bf16.gmra.mrb[0].mxu0 %v4318
      %v4544 = vpop.f32.mrb[0].mxu0
      %v4545 = vadd.f32 0.0, %v4544
      %v4546 = vpop.f32.mrb[0].mxu0
      %v4547 = vadd.f32 0.0, %v4546
      %v4548 = vpop.f32.mrb[0].mxu0
      %v4549 = vadd.f32 0.0, %v4548
      %v4550 = vpop.f32.mrb[0].mxu0
      %v4551 = vadd.f32 0.0, %v4550
      %4552 = vmatprep.mubr.bf16.mxu0 %v4321
      %4553 = vmatmul.mubr.bf16.gmra.mrb[0].mxu0 %v4320
      %v4554 = vpop.f32.mrb[0].mxu0
      %v4555 = vadd.f32 0.0, %v4554
      %v4556 = vpop.f32.mrb[0].mxu0
      %v4557 = vadd.f32 0.0, %v4556
      %v4558 = vpop.f32.mrb[0].mxu0
      %v4559 = vadd.f32 0.0, %v4558
      %v4560 = vpop.f32.mrb[0].mxu0
      %v4561 = vadd.f32 0.0, %v4560
      %4562 = vmatprep.mubr.bf16.mxu0 %v4323
      %4563 = vmatmul.mubr.bf16.gmra.mrb[0].mxu0 %v4322
      %v4564 = vpop.f32.mrb[0].mxu0
      %v4565 = vadd.f32 0.0, %v4564
      %v4566 = vpop.f32.mrb[0].mxu0
      %v4567 = vadd.f32 0.0, %v4566
      %v4568 = vpop.f32.mrb[0].mxu0
      %v4569 = vadd.f32 0.0, %v4568
      %v4570 = vpop.f32.mrb[0].mxu0
      %v4571 = vadd.f32 0.0, %v4570
      %4572 = vmatprep.mubr.bf16.mxu0 %v4325
      %4573 = vmatmul.mubr.bf16.gmra.mrb[0].mxu0 %v4324
      %v4574 = vpop.f32.mrb[0].mxu0
      %v4575 = vadd.f32 0.0, %v4574
      %v4576 = vpop.f32.mrb[0].mxu0
      %v4577 = vadd.f32 0.0, %v4576
      %v4578 = vpop.f32.mrb[0].mxu0
      %v4579 = vadd.f32 0.0, %v4578
      %v4580 = vpop.f32.mrb[0].mxu0
      %v4581 = vadd.f32 0.0, %v4580
      %4582 = vmatprep.mubr.bf16.mxu0 %v4327
      %4583 = vmatmul.mubr.bf16.gmra.mrb[0].mxu0 %v4326
      %v4584 = vpop.f32.mrb[0].mxu0
      %v4585 = vadd.f32 0.0, %v4584
      %v4586 = vpop.f32.mrb[0].mxu0
      %v4587 = vadd.f32 0.0, %v4586
      %v4588 = vpop.f32.mrb[0].mxu0
      %v4589 = vadd.f32 0.0, %v4588
      %v4590 = vpop.f32.mrb[0].mxu0
      %v4591 = vadd.f32 0.0, %v4590
      %4592 = vmatprep.mubr.bf16.mxu0 %v4329
      %4593 = vmatmul.mubr.bf16.gmra.mrb[0].mxu0 %v4328
      %v4594 = vpop.f32.mrb[0].mxu0
      %v4595 = vadd.f32 0.0, %v4594
      %v4596 = vpop.f32.mrb[0].mxu0
      %v4597 = vadd.f32 0.0, %v4596
      %v4598 = vpop.f32.mrb[0].mxu0
      %v4599 = vadd.f32 0.0, %v4598
      %v4600 = vpop.f32.mrb[0].mxu0
      %v4601 = vadd.f32 0.0, %v4600
      %4602 = vmatprep.mubr.bf16.mxu0 %v4331
      %4603 = vmatmul.mubr.bf16.gmra.mrb[0].mxu0 %v4330
      %v4604 = vpop.f32.mrb[0].mxu0
      %v4605 = vadd.f32 0.0, %v4604
      %v4606 = vpop.f32.mrb[0].mxu0
      %v4607 = vadd.f32 0.0, %v4606
      %v4608 = vpop.f32.mrb[0].mxu0
      %v4609 = vadd.f32 0.0, %v4608
      %v4610 = vpop.f32.mrb[0].mxu0
      %v4611 = vadd.f32 0.0, %v4610
      %4612 = vmatprep.mubr.bf16.mxu0 %v4333
      %4613 = vmatmul.mubr.bf16.gmra.mrb[0].mxu0 %v4332
      %v4614 = vpop.f32.mrb[0].mxu0
      %v4615 = vadd.f32 0.0, %v4614
      %v4616 = vpop.f32.mrb[0].mxu0
      %v4617 = vadd.f32 0.0, %v4616
      %v4618 = vpop.f32.mrb[0].mxu0
      %v4619 = vadd.f32 0.0, %v4618
      %v4620 = vpop.f32.mrb[0].mxu0
      %v4621 = vadd.f32 0.0, %v4620
      %4622 = vdwg.mxu0
      %v4623 = vadd.f32 %v4157, %v4545
      %v4624 = vadd.f32 %v4158, %v4547
      %v4625 = vadd.f32 %v4159, %v4549
      %v4626 = vadd.f32 %v4160, %v4551
      %v4627 = vadd.f32 %v4161, %v4555
      %v4628 = vadd.f32 %v4162, %v4557
      %v4629 = vadd.f32 %v4163, %v4559
      %v4630 = vadd.f32 %v4164, %v4561
      %v4631 = vadd.f32 %v4165, %v4565
      %v4632 = vadd.f32 %v4166, %v4567
      %v4633 = vadd.f32 %v4167, %v4569
      %v4634 = vadd.f32 %v4168, %v4571
      %v4635 = vadd.f32 %v4169, %v4575
      %v4636 = vadd.f32 %v4170, %v4577
      %v4637 = vadd.f32 %v4171, %v4579
      %v4638 = vadd.f32 %v4172, %v4581
      %v4639 = vadd.f32 %v4173, %v4585
      %v4640 = vadd.f32 %v4174, %v4587
      %v4641 = vadd.f32 %v4175, %v4589
      %v4642 = vadd.f32 %v4176, %v4591
      %v4643 = vadd.f32 %v4177, %v4595
      %v4644 = vadd.f32 %v4178, %v4597
      %v4645 = vadd.f32 %v4179, %v4599
      %v4646 = vadd.f32 %v4180, %v4601
      %v4647 = vadd.f32 %v4181, %v4605
      %v4648 = vadd.f32 %v4182, %v4607
      %v4649 = vadd.f32 %v4183, %v4609
      %v4650 = vadd.f32 %v4184, %v4611
      %v4651 = vadd.f32 %v4185, %v4615
      %v4652 = vadd.f32 %v4186, %v4617
      %v4653 = vadd.f32 %v4187, %v4619
      %v4654 = vadd.f32 %v4188, %v4621
      %v4655 = vld [vmem:[%s2] sm:$0x3]
      %v4657 = vlaneseq
      %v4658 = vshrl.u32 %v4657, 7
      %v4659 = vsub.s32 0, %v4658
      %v4660 = vrot.slane %v4655, %v4659
      %v4661 = vlaneseq
      %v4662 = vshrl.u32 %v4661, 7
      %v4663 = vsub.s32 1, %v4662
      %v4664 = vrot.slane %v4655, %v4663
      %v4667 = vadd.f32 %v4623, %v4660
      %v4668 = vadd.f32 %v4624, %v4664
      %v4669 = vadd.f32 %v4625, %v4660
      %v4670 = vadd.f32 %v4626, %v4664
      %v4671 = vadd.f32 %v4627, %v4660
      %v4672 = vadd.f32 %v4628, %v4664
      %v4673 = vadd.f32 %v4629, %v4660
      %v4674 = vadd.f32 %v4630, %v4664
      %v4675 = vadd.f32 %v4631, %v4660
      %v4676 = vadd.f32 %v4632, %v4664
      %v4677 = vadd.f32 %v4633, %v4660
      %v4678 = vadd.f32 %v4634, %v4664
      %v4679 = vadd.f32 %v4635, %v4660
      %v4680 = vadd.f32 %v4636, %v4664
      %v4681 = vadd.f32 %v4637, %v4660
      %v4682 = vadd.f32 %v4638, %v4664
      %v4683 = vadd.f32 %v4639, %v4660
      %v4684 = vadd.f32 %v4640, %v4664
      %v4685 = vadd.f32 %v4641, %v4660
      %v4686 = vadd.f32 %v4642, %v4664
      %v4687 = vadd.f32 %v4643, %v4660
      %v4688 = vadd.f32 %v4644, %v4664
      %v4689 = vadd.f32 %v4645, %v4660
      %v4690 = vadd.f32 %v4646, %v4664
      %v4691 = vadd.f32 %v4647, %v4660
      %v4692 = vadd.f32 %v4648, %v4664
      %v4693 = vadd.f32 %v4649, %v4660
      %v4694 = vadd.f32 %v4650, %v4664
      %v4695 = vadd.f32 %v4651, %v4660
      %v4696 = vadd.f32 %v4652, %v4664
      %v4697 = vadd.f32 %v4653, %v4660
      %v4698 = vadd.f32 %v4654, %v4664
      %v4699 = vmax.f32 %v4667, 0.0
      %v4700 = vmax.f32 %v4668, 0.0
      %v4701 = vmax.f32 %v4669, 0.0
      %v4702 = vmax.f32 %v4670, 0.0
      %v4703 = vmax.f32 %v4671, 0.0
      %v4704 = vmax.f32 %v4672, 0.0
      %v4705 = vmax.f32 %v4673, 0.0
      %v4706 = vmax.f32 %v4674, 0.0
      %v4707 = vmax.f32 %v4675, 0.0
      %v4708 = vmax.f32 %v4676, 0.0
      %v4709 = vmax.f32 %v4677, 0.0
      %v4710 = vmax.f32 %v4678, 0.0
      %v4711 = vmax.f32 %v4679, 0.0
      %v4712 = vmax.f32 %v4680, 0.0
      %v4713 = vmax.f32 %v4681, 0.0
      %v4714 = vmax.f32 %v4682, 0.0
      %v4715 = vmax.f32 %v4683, 0.0
      %v4716 = vmax.f32 %v4684, 0.0
      %v4717 = vmax.f32 %v4685, 0.0
      %v4718 = vmax.f32 %v4686, 0.0
      %v4719 = vmax.f32 %v4687, 0.0
      %v4720 = vmax.f32 %v4688, 0.0
      %v4721 = vmax.f32 %v4689, 0.0
      %v4722 = vmax.f32 %v4690, 0.0
      %v4723 = vmax.f32 %v4691, 0.0
      %v4724 = vmax.f32 %v4692, 0.0
      %v4725 = vmax.f32 %v4693, 0.0
      %v4726 = vmax.f32 %v4694, 0.0
      %v4727 = vmax.f32 %v4695, 0.0
      %v4728 = vmax.f32 %v4696, 0.0
      %v4729 = vmax.f32 %v4697, 0.0
      %v4730 = vmax.f32 %v4698, 0.0
      %v4731 = vpack.c.bf16 %v4701, %v4699
      %v4732 = vpack.c.bf16 %v4702, %v4700
      %v4733 = vpack.c.bf16 %v4705, %v4703
      %v4734 = vpack.c.bf16 %v4706, %v4704
      %v4735 = vpack.c.bf16 %v4709, %v4707
      %v4736 = vpack.c.bf16 %v4710, %v4708
      %v4737 = vpack.c.bf16 %v4713, %v4711
      %v4738 = vpack.c.bf16 %v4714, %v4712
      %v4739 = vpack.c.bf16 %v4717, %v4715
      %v4740 = vpack.c.bf16 %v4718, %v4716
      %v4741 = vpack.c.bf16 %v4721, %v4719
      %v4742 = vpack.c.bf16 %v4722, %v4720
      %v4743 = vpack.c.bf16 %v4725, %v4723
      %v4744 = vpack.c.bf16 %v4726, %v4724
      %v4745 = vpack.c.bf16 %v4729, %v4727
      %v4746 = vpack.c.bf16 %v4730, %v4728
      %v4763 = vunpack.c.l.b16 %v4731
      %v4764 = vunpack.c.l.b16 %v4732
      %v4765 = vunpack.c.h.b16 %v4731
      %v4766 = vunpack.c.h.b16 %v4732
      %v4767 = vunpack.c.l.b16 %v4733
      %v4768 = vunpack.c.l.b16 %v4734
      %v4769 = vunpack.c.h.b16 %v4733
      %v4770 = vunpack.c.h.b16 %v4734
      %v4771 = vunpack.c.l.b16 %v4735
      %v4772 = vunpack.c.l.b16 %v4736
      %v4773 = vunpack.c.h.b16 %v4735
      %v4774 = vunpack.c.h.b16 %v4736
      %v4775 = vunpack.c.l.b16 %v4737
      %v4776 = vunpack.c.l.b16 %v4738
      %v4777 = vunpack.c.h.b16 %v4737
      %v4778 = vunpack.c.h.b16 %v4738
      %v4779 = vunpack.c.l.b16 %v4739
      %v4780 = vunpack.c.l.b16 %v4740
      %v4781 = vunpack.c.h.b16 %v4739
      %v4782 = vunpack.c.h.b16 %v4740
      %v4783 = vunpack.c.l.b16 %v4741
      %v4784 = vunpack.c.l.b16 %v4742
      %v4785 = vunpack.c.h.b16 %v4741
      %v4786 = vunpack.c.h.b16 %v4742
      %v4787 = vunpack.c.l.b16 %v4743
      %v4788 = vunpack.c.l.b16 %v4744
      %v4789 = vunpack.c.h.b16 %v4743
      %v4790 = vunpack.c.h.b16 %v4744
      %v4791 = vunpack.c.l.b16 %v4745
      %v4792 = vunpack.c.l.b16 %v4746
      %v4793 = vunpack.c.h.b16 %v4745
      %v4794 = vunpack.c.h.b16 %v4746
      %v4795 = vpack.c.b16 %v4764, %v4763
      %v4796 = vpack.c.b16 %v4766, %v4765
      %v4797 = vpack.c.b16 %v4768, %v4767
      %v4798 = vpack.c.b16 %v4770, %v4769
      %v4799 = vpack.c.b16 %v4772, %v4771
      %v4800 = vpack.c.b16 %v4774, %v4773
      %v4801 = vpack.c.b16 %v4776, %v4775
      %v4802 = vpack.c.b16 %v4778, %v4777
      %v4803 = vpack.c.b16 %v4780, %v4779
      %v4804 = vpack.c.b16 %v4782, %v4781
      %v4805 = vpack.c.b16 %v4784, %v4783
      %v4806 = vpack.c.b16 %v4786, %v4785
      %v4807 = vpack.c.b16 %v4788, %v4787
      %v4808 = vpack.c.b16 %v4790, %v4789
      %v4809 = vpack.c.b16 %v4792, %v4791
      %v4810 = vpack.c.b16 %v4794, %v4793
      %4827 = vst [vmem:[%s194] sm:$0xff] %v4795
      %4828 = vst [vmem:[%s194 + $0x8] sm:$0xff] %v4796
      %4829 = vst [vmem:[%s194 + $0x10] sm:$0xff] %v4797
      %4830 = vst [vmem:[%s194 + $0x18] sm:$0xff] %v4798
      %4831 = vst [vmem:[%s194 + $0x20] sm:$0xff] %v4799
      %4832 = vst [vmem:[%s194 + $0x28] sm:$0xff] %v4800
      %4833 = vst [vmem:[%s194 + $0x30] sm:$0xff] %v4801
      %4834 = vst [vmem:[%s194 + $0x38] sm:$0xff] %v4802
      %4835 = vst [vmem:[%s194 + $0x40] sm:$0xff] %v4803
      %4836 = vst [vmem:[%s194 + $0x48] sm:$0xff] %v4804
      %4837 = vst [vmem:[%s194 + $0x50] sm:$0xff] %v4805
      %4838 = vst [vmem:[%s194 + $0x58] sm:$0xff] %v4806
      %4839 = vst [vmem:[%s194 + $0x60] sm:$0xff] %v4807
      %4840 = vst [vmem:[%s194 + $0x68] sm:$0xff] %v4808
      %4841 = vst [vmem:[%s194 + $0x70] sm:$0xff] %v4809
      %4842 = vst [vmem:[%s194 + $0x78] sm:$0xff] %v4810
      %s4843 = smul.u32 8, %s19
      %p4844 = scmp.lt.s32.totalorder %s18, 1
      %s4845 = scalar_select %p4844, %s18, 1
      %p4846 = scmp.lt.s32.totalorder %s4843, 15
      %s4847 = scalar_select %p4846, %s4843, 15
      %s4848 = smul.addr %s4847, 4
      %s4849 = smul.addr %s4845, 64
      %s4850 = sadd.s32 %s4848, %s4849
      %s4851 = smul.addr %s4850, 4
      %s4852 = scalar_lea.vmem %s3, %s4851
      // Predicated region
      $region33: #{density_regressor_forward.4} parent=31 // pred_check
        %p4853 = pneg %p114
      $region34: #{density_regressor_forward.4} parent=31 // pred_check_branch
        %4855 = sbr.rel (%p4853) target = $region36
      $region35: #{density_regressor_forward.4} parent=31 // pred_region
        %s4856 = smul.u32 8, %s19
      $region36: #{density_regressor_forward.4} parent=31 // pred_fallthru
        _
    $region32: #{density_regressor_forward.4} parent=5 // pred_fallthru
      _
    %p4857 = scmp.le.s32.totalorder 2, %s9
    // Predicated region
    $region37: #{density_regressor_forward.4} parent=5 // pred_check
      %p4858 = pneg %p4857
    $region38: #{density_regressor_forward.4} parent=5 // pred_check_branch
      %4860 = sbr.rel (%p4858) target = $region40
    $region39: #{density_regressor_forward.4} parent=5 // pred_region
      %s4861 = ssub.s32 %s9, 2
      // Predicated region
      $region41: #{density_regressor_forward.4} parent=39 // pred_check
        %p4862 = pneg %p120
      $region42: #{density_regressor_forward.4} parent=39 // pred_check_branch
        %4864 = sbr.rel (%p4862) target = $region44
      $region43: #{density_regressor_forward.4} parent=39 // pred_region
        %s4865 = smul.u32 8, %s21
        %p4866 = scmp.lt.s32.totalorder %s20, 1
        %s4867 = scalar_select %p4866, %s20, 1
        %p4868 = scmp.lt.s32.totalorder %s4865, 15
        %s4869 = scalar_select %p4868, %s4865, 15
        %s4870 = smul.addr %s4869, 4
        %s4871 = smul.addr %s4867, 64
        %s4872 = sadd.s32 %s4870, %s4871
        %s4873 = smul.addr %s4872, 4
        %s4874 = scalar_lea.vmem %s3, %s4873
      $region44: #{density_regressor_forward.4} parent=39 // pred_fallthru
        _
    $region40: #{density_regressor_forward.4} parent=5 // pred_fallthru
      _
  $region6: #{density_regressor_forward.4} parent=0 // loop_footer
    %s13 = sadd.s32 1, %s9
  $region7: #{density_regressor_forward.4} parent=0 // loop_footer_branch
    %8 = sbr.rel target = $region3
  $region8: #{density_regressor_forward.4} parent=0 // loop_exit
    _

// kernel: density_regressor_forward.5
$region0: #{density_regressor_forward.5}
  #allocation0 [shape = 'u32[]', space=smem, size = 0x4, offset = 0x4, fixed_abs, tag = 'smem constant byte address 0x4 - core index']
  #allocation1 [shape = 'u32[144,128]{1,0:T(1,128)}', space=vmem, size = 0x12000, scoped, tag = 'internal scratch']
  %s0 = inlined_call_operand.vmem [shape: bf16[2,18,18,256], index: 0, kind: input, shape index: {}]
  %s1 = inlined_call_operand.vmem [shape: bf16[9,256,128], index: 1, kind: input, shape index: {}]
  %s2 = inlined_call_operand.vmem [shape: f32[1,128], index: 2, kind: input, shape index: {}]
  %s3 = inlined_call_operand.vmem [shape: f32[2,16,16,128], index: 3, kind: output, shape index: {}]
  %s4 = sld [smem:[#allocation0]]
  $region45: #{density_regressor_forward.5} parent=0
    _
  %s6 = ssub.s32 1, %s4
  %s7 = scalar_select 0, %s6, %s4
  loop: start=0, step=1, limit=6
  $region2: #{density_regressor_forward.5} parent=0 // loop_pre_header
    _
  $region3: #{density_regressor_forward.5} parent=0 // loop_header
    %s9 = sphi 0, %s13
    %p10 = scmp.ge.s32.totalorder %s9, 6
    %s16 = sphi 0, %s28
    %s17 = sphi 0, %s24
    %s18 = sphi 0, %s16
    %s19 = sphi 0, %s17
    %s20 = sphi 0, %s18
    %s21 = sphi 0, %s19
    %s31 = sphi 0, %s33
    %s34 = sphi 0, %s31
    %s35 = sphi 0, %s34
    %s51 = sphi 0, %s35
    %s55 = sphi 0, %s55
    %s57 = sphi 0, %s55
    %s58 = sphi 0, %s57
    %s72 = sphi 0, %s58
    %s76 = sphi 0, %s76
    %s78 = sphi 0, %s76
    %s79 = sphi 0, %s78
    %s93 = sphi 0, %s79
    %s101 = sphi 0, %s103
    %s104 = sphi 0, %s101
    %s105 = sphi 0, %s104
    %s121 = sphi 0, %s105
  $region4: #{density_regressor_forward.5} parent=0 // loop_header_branch
    %12 = sbr.rel (%p10) target = $region8
  $region5: #{density_regressor_forward.5} parent=0 // loop_body
    %s14 = ssub.s32 %s9, 1
    %s15 = ssub.s32 %s9, 2
    %s22 = sadd.s32 1, %s17
    %p23 = scmp.ge.s32.totalorder %s22, 2
    %s24 = scalar_select %p23, 0, %s22
    %s25 = sadd.s32 1, %s16
    %s26 = scalar_select %p23, %s25, %s16
    %p27 = scmp.ge.s32.totalorder %s26, 2
    %s28 = scalar_select %p27, 0, %s26
    %s29 = ssub.s32 %s16, %s28
    %p30 = scmp.eq.s32.totalorder %s29, 0
    %s32 = sadd.s32 %s31, 1
    %s33 = scalar_select %p30, %s31, %s32
    %p36 = pneg %p30
    %p37 = scmp.eq.s32.totalorder %s9, 3
    %p38 = por %p36, %p37
    %p39 = scmp.ne.s32.totalorder %s31, %s34
    %p40 = scmp.eq.s32.totalorder %s9, 0
    %p41 = por %p39, %p40
    %p42 = scmp.ne.s32.totalorder %s31, %s34
    %p43 = scmp.eq.s32.totalorder %s14, 3
    %p44 = por %p42, %p43
    %p45 = scmp.ne.s32.totalorder %s34, %s35
    %p46 = scmp.eq.s32.totalorder %s14, 0
    %p47 = por %p45, %p46
    %p48 = scmp.ne.s32.totalorder %s34, %s35
    %p49 = scmp.eq.s32.totalorder %s15, 3
    %p50 = por %p48, %p49
    %p52 = scmp.ne.s32.totalorder %s35, %s51
    %p53 = scmp.eq.s32.totalorder %s15, 0
    %p54 = por %p52, %p53
    %s56 = sadd.s32 %s55, 1
    %p59 = scmp.eq.s32.totalorder %s9, 3
    %p60 = scmp.ne.s32.totalorder %s55, %s57
    %p61 = scmp.eq.s32.totalorder %s9, 0
    %p62 = por %p60, %p61
    %p63 = scmp.ne.s32.totalorder %s55, %s57
    %p64 = scmp.eq.s32.totalorder %s14, 3
    %p65 = por %p63, %p64
    %p66 = scmp.ne.s32.totalorder %s57, %s58
    %p67 = scmp.eq.s32.totalorder %s14, 0
    %p68 = por %p66, %p67
    %p69 = scmp.ne.s32.totalorder %s57, %s58
    %p70 = scmp.eq.s32.totalorder %s15, 3
    %p71 = por %p69, %p70
    %p73 = scmp.ne.s32.totalorder %s58, %s72
    %p74 = scmp.eq.s32.totalorder %s15, 0
    %p75 = por %p73, %p74
    %s77 = sadd.s32 %s76, 1
    %p80 = scmp.eq.s32.totalorder %s9, 3
    %p81 = scmp.ne.s32.totalorder %s76, %s78
    %p82 = scmp.eq.s32.totalorder %s9, 0
    %p83 = por %p81, %p82
    %p84 = scmp.ne.s32.totalorder %s76, %s78
    %p85 = scmp.eq.s32.totalorder %s14, 3
    %p86 = por %p84, %p85
    %p87 = scmp.ne.s32.totalorder %s78, %s79
    %p88 = scmp.eq.s32.totalorder %s14, 0
    %p89 = por %p87, %p88
    %p90 = scmp.ne.s32.totalorder %s78, %s79
    %p91 = scmp.eq.s32.totalorder %s15, 3
    %p92 = por %p90, %p91
    %p94 = scmp.ne.s32.totalorder %s79, %s93
    %p95 = scmp.eq.s32.totalorder %s15, 0
    %p96 = por %p94, %p95
    %s97 = ssub.s32 %s16, %s28
    %s98 = ssub.s32 %s17, %s24
    %s99 = sor.u32 %s97, %s98
    %p100 = scmp.eq.s32.totalorder %s99, 0
    %s102 = sadd.s32 %s101, 1
    %s103 = scalar_select %p100, %s101, %s102
    %p106 = pneg %p100
    %p107 = scmp.eq.s32.totalorder %s9, 3
    %p108 = por %p106, %p107
    %p109 = scmp.ne.s32.totalorder %s101, %s104
    %p110 = scmp.eq.s32.totalorder %s9, 0
    %p111 = por %p109, %p110
    %p112 = scmp.ne.s32.totalorder %s101, %s104
    %p113 = scmp.eq.s32.totalorder %s14, 3
    %p114 = por %p112, %p113
    %p115 = scmp.ne.s32.totalorder %s104, %s105
    %p116 = scmp.eq.s32.totalorder %s14, 0
    %p117 = por %p115, %p116
    %p118 = scmp.ne.s32.totalorder %s104, %s105
    %p119 = scmp.eq.s32.totalorder %s15, 3
    %p120 = por %p118, %p119
    %p122 = scmp.ne.s32.totalorder %s105, %s121
    %p123 = scmp.eq.s32.totalorder %s15, 0
    %p124 = por %p122, %p123
    %p125 = scmp.le.s32.totalorder 1, %s9
    %p126 = scmp.lt.s32.totalorder %s9, 5
    %p127 = pnand %p125, %p126
    %p128 = pneg %p127
    // Predicated region
    $region9: #{density_regressor_forward.5} parent=5 // pred_check
      _
    $region10: #{density_regressor_forward.5} parent=5 // pred_check_branch
      %130 = sbr.rel (%p127) target = $region12
    $region11: #{density_regressor_forward.5} parent=5 // pred_region
      %s131 = ssub.s32 %s9, 1
      // Predicated region
      $region13: #{density_regressor_forward.5} parent=11 // pred_check
        %p132 = pneg %p68
      $region14: #{density_regressor_forward.5} parent=11 // pred_check_branch
        %134 = sbr.rel (%p132) target = $region16
      $region15: #{density_regressor_forward.5} parent=11 // pred_region
        _
      $region16: #{density_regressor_forward.5} parent=11 // pred_fallthru
        _
      // Predicated region
      $region17: #{density_regressor_forward.5} parent=11 // pred_check
        %p135 = pneg %p89
      $region18: #{density_regressor_forward.5} parent=11 // pred_check_branch
        %137 = sbr.rel (%p135) target = $region20
      $region19: #{density_regressor_forward.5} parent=11 // pred_region
        _
      $region20: #{density_regressor_forward.5} parent=11 // pred_fallthru
        _
    $region12: #{density_regressor_forward.5} parent=5 // pred_fallthru
      _
    %p138 = scmp.lt.s32.totalorder %s9, 4
    // Predicated region
    $region21: #{density_regressor_forward.5} parent=5 // pred_check
      %p139 = pneg %p138
    $region22: #{density_regressor_forward.5} parent=5 // pred_check_branch
      %141 = sbr.rel (%p139) target = $region24
    $region23: #{density_regressor_forward.5} parent=5 // pred_region
      // Predicated region
      $region25: #{density_regressor_forward.5} parent=23 // pred_check
        %p142 = pneg %p41
      $region26: #{density_regressor_forward.5} parent=23 // pred_check_branch
        %144 = sbr.rel (%p142) target = $region28
      $region27: #{density_regressor_forward.5} parent=23 // pred_region
        %p145 = scmp.lt.s32.totalorder %s16, 1
        %s146 = scalar_select %p145, %s16, 1
        %s147 = smul.addr %s146, 108
        %s148 = smul.addr %s147, 4
        %s149 = scalar_lea.vmem %s0, %s148
      $region28: #{density_regressor_forward.5} parent=23 // pred_fallthru
        _
    $region24: #{density_regressor_forward.5} parent=5 // pred_fallthru
      _
    %p150 = scmp.le.s32.totalorder 1, %s9
    %p151 = scmp.lt.s32.totalorder %s9, 5
    %p152 = pnand %p150, %p151
    %p153 = pneg %p152
    // Predicated region
    $region29: #{density_regressor_forward.5} parent=5 // pred_check
      _
    $region30: #{density_regressor_forward.5} parent=5 // pred_check_branch
      %155 = sbr.rel (%p152) target = $region32
    $region31: #{density_regressor_forward.5} parent=5 // pred_region
      %s156 = ssub.s32 %s9, 1
      %p157 = scmp.lt.s32.totalorder %s18, 1
      %s158 = scalar_select %p157, %s18, 1
      %s159 = smul.addr %s158, 108
      %s160 = smul.addr %s159, 4
      %s161 = scalar_lea.vmem %s0, %s160
      %p162 = pneg %p47
      %p163 = pneg %p44
      %p164 = pneg %p68
      %p165 = pneg %p65
      %p166 = pneg %p89
      %p167 = pneg %p86
      %p168 = pneg %p117
      %p169 = pneg %p114
      %s170 = smul.u32 8, %s19
      %p171 = scmp.lt.s32.totalorder %s18, 1
      %s172 = scalar_select %p171, %s18, 1
      %p173 = scmp.lt.s32.totalorder %s170, 15
      %s174 = scalar_select %p173, %s170, 15
      %s175 = smul.addr %s174, 2
      %s176 = smul.addr %s172, 32
      %s177 = sadd.s32 %s175, %s176
      %s178 = smul.addr %s177, 8
      %s179 = scalar_lea.vmem %s3, %s178
      %p180 = scmp.lt.s32.totalorder %s18, 1
      %s181 = scalar_select %p180, %s18, 1
      %s182 = smul.addr %s181, 108
      %s183 = smul.addr %s182, 4
      %s184 = scalar_lea.vmem %s0, %s183
      %s185 = smul.u32 8, %s19
      %p186 = scmp.lt.s32.totalorder %s18, 1
      %s187 = scalar_select %p186, %s18, 1
      %p188 = scmp.lt.s32.totalorder %s185, 15
      %s189 = scalar_select %p188, %s185, 15
      %s190 = smul.addr %s189, 2
      %s191 = smul.addr %s187, 32
      %s192 = sadd.s32 %s190, %s191
      %s193 = smul.addr %s192, 8
      %s194 = scalar_lea.vmem %s3, %s193
      %s195 = smul.u32 8, %s19
      %s197 = smul.u32 %s19, 8
      %s198 = smul.u32 %s197, 6
      %s199 = smul.addr %s198, 4
      %s200 = scalar_lea.vmem %s184, %s199
      %v201 = vld [vmem:[%s200] sm:$0xff]
      %v202 = vld [vmem:[%s200 + $0x8] sm:$0xff]
      %v203 = vld [vmem:[%s200 + $0x10] sm:$0x11]
      %v204 = vld [vmem:[%s200 + $0x18] sm:$0xff]
      %v205 = vld [vmem:[%s200 + $0x20] sm:$0xff]
      %v206 = vld [vmem:[%s200 + $0x28] sm:$0x11]
      %v207 = vld [vmem:[%s200 + $0x30] sm:$0xff]
      %v208 = vld [vmem:[%s200 + $0x38] sm:$0xff]
      %v209 = vld [vmem:[%s200 + $0x40] sm:$0x11]
      %v210 = vld [vmem:[%s200 + $0x48] sm:$0xff]
      %v211 = vld [vmem:[%s200 + $0x50] sm:$0xff]
      %v212 = vld [vmem:[%s200 + $0x58] sm:$0x11]
      %v213 = vld [vmem:[%s200 + $0x60] sm:$0xff]
      %v214 = vld [vmem:[%s200 + $0x68] sm:$0xff]
      %v215 = vld [vmem:[%s200 + $0x70] sm:$0x11]
      %v216 = vld [vmem:[%s200 + $0x78] sm:$0xff]
      %v217 = vld [vmem:[%s200 + $0x80] sm:$0xff]
      %v218 = vld [vmem:[%s200 + $0x88] sm:$0x11]
      %v219 = vld [vmem:[%s200 + $0x90] sm:$0xff]
      %v220 = vld [vmem:[%s200 + $0x98] sm:$0xff]
      %v221 = vld [vmem:[%s200 + $0xa0] sm:$0x11]
      %v222 = vld [vmem:[%s200 + $0xa8] sm:$0xff]
      %v223 = vld [vmem:[%s200 + $0xb0] sm:$0xff]
      %v224 = vld [vmem:[%s200 + $0xb8] sm:$0x11]
      %v225 = vld [vmem:[%s1] sm:$0xf]
      %v226 = vld [vmem:[%s1 + $0x4] sm:$0xf]
      %v227 = vld [vmem:[%s1 + $0x8] sm:$0xf]
      %v228 = vld [vmem:[%s1 + $0xc] sm:$0xf]
      %v229 = vld [vmem:[%s1 + $0x10] sm:$0xf]
      %v230 = vld [vmem:[%s1 + $0x14] sm:$0xf]
      %v231 = vld [vmem:[%s1 + $0x18] sm:$0xf]
      %v232 = vld [vmem:[%s1 + $0x1c] sm:$0xf]
      %v233 = vld [vmem:[%s1 + $0x20] sm:$0xf]
      %v234 = vld [vmem:[%s1 + $0x24] sm:$0xf]
      %v235 = vld [vmem:[%s1 + $0x28] sm:$0xf]
      %v236 = vld [vmem:[%s1 + $0x2c] sm:$0xf]
      %v237 = vld [vmem:[%s1 + $0x30] sm:$0xf]
      %v238 = vld [vmem:[%s1 + $0x34] sm:$0xf]
      %v239 = vld [vmem:[%s1 + $0x38] sm:$0xf]
      %v240 = vld [vmem:[%s1 + $0x3c] sm:$0xf]
      %v241 = vld [vmem:[%s1 + $0x40] sm:$0xf]
      %v242 = vld [vmem:[%s1 + $0x44] sm:$0xf]
      %v243 = vld [vmem:[%s1 + $0x48] sm:$0xf]
      %v244 = vld [vmem:[%s1 + $0x4c] sm:$0xf]
      %v245 = vld [vmem:[%s1 + $0x50] sm:$0xf]
      %v246 = vld [vmem:[%s1 + $0x54] sm:$0xf]
      %v247 = vld [vmem:[%s1 + $0x58] sm:$0xf]
      %v248 = vld [vmem:[%s1 + $0x5c] sm:$0xf]
      %v249 = vld [vmem:[%s1 + $0x60] sm:$0xf]
      %v250 = vld [vmem:[%s1 + $0x64] sm:$0xf]
      %v251 = vld [vmem:[%s1 + $0x68] sm:$0xf]
      %v252 = vld [vmem:[%s1 + $0x6c] sm:$0xf]
      %v253 = vld [vmem:[%s1 + $0x70] sm:$0xf]
      %v254 = vld [vmem:[%s1 + $0x74] sm:$0xf]
      %v255 = vld [vmem:[%s1 + $0x78] sm:$0xf]
      %v256 = vld [vmem:[%s1 + $0x7c] sm:$0xf]
      %vm257 = vsmask.f32 3328
      %vm258 = vsmask.f32 7440
      %vm259 = vmor %vm257, %vm258
      %v261 = vshrl.u32 %v201, 16
      %v263 = vrot.slane %v261, 4
      %v264 = vshll.u32 %v201, 16
      %v266 = vrot.slane %v264, 5
      %v267 = vor.u32 %v263, %v266
      %v268 = vrot.slane %v267, 4
      %v270 = vshll.u32 %v202, 16
      %v272 = vrot.slane %v270, 5
      %v273 = vsel %vm259, %v268, %v272
      %v274 = vshrl.u32 %v202, 16
      %v276 = vrot.slane %v274, 4
      %v277 = vor.u32 %v276, %v272
      %v278 = vrot.slane %v277, 4
      %v280 = vshll.u32 %v203, 16
      %v282 = vrot.slane %v280, 5
      %v283 = vsel %vm259, %v278, %v282
      %v285 = vshrl.u32 %v204, 16
      %v287 = vrot.slane %v285, 4
      %v288 = vshll.u32 %v204, 16
      %v290 = vrot.slane %v288, 5
      %v291 = vor.u32 %v287, %v290
      %v292 = vrot.slane %v291, 4
      %v294 = vshll.u32 %v205, 16
      %v296 = vrot.slane %v294, 5
      %v297 = vsel %vm259, %v292, %v296
      %v298 = vshrl.u32 %v205, 16
      %v300 = vrot.slane %v298, 4
      %v301 = vor.u32 %v300, %v296
      %v302 = vrot.slane %v301, 4
      %v304 = vshll.u32 %v206, 16
      %v306 = vrot.slane %v304, 5
      %v307 = vsel %vm259, %v302, %v306
      %v309 = vshrl.u32 %v207, 16
      %v311 = vrot.slane %v309, 4
      %v312 = vshll.u32 %v207, 16
      %v314 = vrot.slane %v312, 5
      %v315 = vor.u32 %v311, %v314
      %v316 = vrot.slane %v315, 4
      %v318 = vshll.u32 %v208, 16
      %v320 = vrot.slane %v318, 5
      %v321 = vsel %vm259, %v316, %v320
      %v322 = vshrl.u32 %v208, 16
      %v324 = vrot.slane %v322, 4
      %v325 = vor.u32 %v324, %v320
      %v326 = vrot.slane %v325, 4
      %v328 = vshll.u32 %v209, 16
      %v330 = vrot.slane %v328, 5
      %v331 = vsel %vm259, %v326, %v330
      %v333 = vshrl.u32 %v210, 16
      %v335 = vrot.slane %v333, 4
      %v336 = vshll.u32 %v210, 16
      %v338 = vrot.slane %v336, 5
      %v339 = vor.u32 %v335, %v338
      %v340 = vrot.slane %v339, 4
      %v342 = vshll.u32 %v211, 16
      %v344 = vrot.slane %v342, 5
      %v345 = vsel %vm259, %v340, %v344
      %v346 = vshrl.u32 %v211, 16
      %v348 = vrot.slane %v346, 4
      %v349 = vor.u32 %v348, %v344
      %v350 = vrot.slane %v349, 4
      %v352 = vshll.u32 %v212, 16
      %v354 = vrot.slane %v352, 5
      %v355 = vsel %vm259, %v350, %v354
      %v357 = vshrl.u32 %v213, 16
      %v359 = vrot.slane %v357, 4
      %v360 = vshll.u32 %v213, 16
      %v362 = vrot.slane %v360, 5
      %v363 = vor.u32 %v359, %v362
      %v364 = vrot.slane %v363, 4
      %v366 = vshll.u32 %v214, 16
      %v368 = vrot.slane %v366, 5
      %v369 = vsel %vm259, %v364, %v368
      %v370 = vshrl.u32 %v214, 16
      %v372 = vrot.slane %v370, 4
      %v373 = vor.u32 %v372, %v368
      %v374 = vrot.slane %v373, 4
      %v376 = vshll.u32 %v215, 16
      %v378 = vrot.slane %v376, 5
      %v379 = vsel %vm259, %v374, %v378
      %v381 = vshrl.u32 %v216, 16
      %v383 = vrot.slane %v381, 4
      %v384 = vshll.u32 %v216, 16
      %v386 = vrot.slane %v384, 5
      %v387 = vor.u32 %v383, %v386
      %v388 = vrot.slane %v387, 4
      %v390 = vshll.u32 %v217, 16
      %v392 = vrot.slane %v390, 5
      %v393 = vsel %vm259, %v388, %v392
      %v394 = vshrl.u32 %v217, 16
      %v396 = vrot.slane %v394, 4
      %v397 = vor.u32 %v396, %v392
      %v398 = vrot.slane %v397, 4
      %v400 = vshll.u32 %v218, 16
      %v402 = vrot.slane %v400, 5
      %v403 = vsel %vm259, %v398, %v402
      %v405 = vshrl.u32 %v219, 16
      %v407 = vrot.slane %v405, 4
      %v408 = vshll.u32 %v219, 16
      %v410 = vrot.slane %v408, 5
      %v411 = vor.u32 %v407, %v410
      %v412 = vrot.slane %v411, 4
      %v414 = vshll.u32 %v220, 16
      %v416 = vrot.slane %v414, 5
      %v417 = vsel %vm259, %v412, %v416
      %v418 = vshrl.u32 %v220, 16
      %v420 = vrot.slane %v418, 4
      %v421 = vor.u32 %v420, %v416
      %v422 = vrot.slane %v421, 4
      %v424 = vshll.u32 %v221, 16
      %v426 = vrot.slane %v424, 5
      %v427 = vsel %vm259, %v422, %v426
      %v429 = vshrl.u32 %v222, 16
      %v431 = vrot.slane %v429, 4
      %v432 = vshll.u32 %v222, 16
      %v434 = vrot.slane %v432, 5
      %v435 = vor.u32 %v431, %v434
      %v436 = vrot.slane %v435, 4
      %v438 = vshll.u32 %v223, 16
      %v440 = vrot.slane %v438, 5
      %v441 = vsel %vm259, %v436, %v440
      %v442 = vshrl.u32 %v223, 16
      %v444 = vrot.slane %v442, 4
      %v445 = vor.u32 %v444, %v440
      %v446 = vrot.slane %v445, 4
      %v448 = vshll.u32 %v224, 16
      %v450 = vrot.slane %v448, 5
      %v451 = vsel %vm259, %v446, %v450
      %s452 = scalar_lea.vmem %s1, 128
      %v453 = vld [vmem:[%s452] sm:$0xf]
      %v454 = vld [vmem:[%s452 + $0x4] sm:$0xf]
      %v455 = vld [vmem:[%s452 + $0x8] sm:$0xf]
      %v456 = vld [vmem:[%s452 + $0xc] sm:$0xf]
      %v457 = vld [vmem:[%s452 + $0x10] sm:$0xf]
      %v458 = vld [vmem:[%s452 + $0x14] sm:$0xf]
      %v459 = vld [vmem:[%s452 + $0x18] sm:$0xf]
      %v460 = vld [vmem:[%s452 + $0x1c] sm:$0xf]
      %v461 = vld [vmem:[%s452 + $0x20] sm:$0xf]
      %v462 = vld [vmem:[%s452 + $0x24] sm:$0xf]
      %v463 = vld [vmem:[%s452 + $0x28] sm:$0xf]
      %v464 = vld [vmem:[%s452 + $0x2c] sm:$0xf]
      %v465 = vld [vmem:[%s452 + $0x30] sm:$0xf]
      %v466 = vld [vmem:[%s452 + $0x34] sm:$0xf]
      %v467 = vld [vmem:[%s452 + $0x38] sm:$0xf]
      %v468 = vld [vmem:[%s452 + $0x3c] sm:$0xf]
      %v469 = vld [vmem:[%s452 + $0x40] sm:$0xf]
      %v470 = vld [vmem:[%s452 + $0x44] sm:$0xf]
      %v471 = vld [vmem:[%s452 + $0x48] sm:$0xf]
      %v472 = vld [vmem:[%s452 + $0x4c] sm:$0xf]
      %v473 = vld [vmem:[%s452 + $0x50] sm:$0xf]
      %v474 = vld [vmem:[%s452 + $0x54] sm:$0xf]
      %v475 = vld [vmem:[%s452 + $0x58] sm:$0xf]
      %v476 = vld [vmem:[%s452 + $0x5c] sm:$0xf]
      %v477 = vld [vmem:[%s452 + $0x60] sm:$0xf]
      %v478 = vld [vmem:[%s452 + $0x64] sm:$0xf]
      %v479 = vld [vmem:[%s452 + $0x68] sm:$0xf]
      %v480 = vld [vmem:[%s452 + $0x6c] sm:$0xf]
      %v481 = vld [vmem:[%s452 + $0x70] sm:$0xf]
      %v482 = vld [vmem:[%s452 + $0x74] sm:$0xf]
      %v483 = vld [vmem:[%s452 + $0x78] sm:$0xf]
      %v484 = vld [vmem:[%s452 + $0x7c] sm:$0xf]
      %v485 = vunpack.c.l.b16 %v273
      %v486 = vunpack.c.h.b16 %v273
      %v487 = vunpack.c.l.b16 %v283
      %v488 = vunpack.c.h.b16 %v283
      %v489 = vunpack.c.l.b16 %v297
      %v490 = vunpack.c.h.b16 %v297
      %v491 = vunpack.c.l.b16 %v307
      %v492 = vunpack.c.h.b16 %v307
      %v493 = vunpack.c.l.b16 %v321
      %v494 = vunpack.c.h.b16 %v321
      %v495 = vunpack.c.l.b16 %v331
      %v496 = vunpack.c.h.b16 %v331
      %v497 = vunpack.c.l.b16 %v345
      %v498 = vunpack.c.h.b16 %v345
      %v499 = vunpack.c.l.b16 %v355
      %v500 = vunpack.c.h.b16 %v355
      %v501 = vunpack.c.l.b16 %v369
      %v502 = vunpack.c.h.b16 %v369
      %v503 = vunpack.c.l.b16 %v379
      %v504 = vunpack.c.h.b16 %v379
      %v505 = vunpack.c.l.b16 %v393
      %v506 = vunpack.c.h.b16 %v393
      %v507 = vunpack.c.l.b16 %v403
      %v508 = vunpack.c.h.b16 %v403
      %v509 = vunpack.c.l.b16 %v417
      %v510 = vunpack.c.h.b16 %v417
      %v511 = vunpack.c.l.b16 %v427
      %v512 = vunpack.c.h.b16 %v427
      %v513 = vunpack.c.l.b16 %v441
      %v514 = vunpack.c.h.b16 %v441
      %v515 = vunpack.c.l.b16 %v451
      %v516 = vunpack.c.h.b16 %v451
      %v517 = vpack.c.b16 %v487, %v485
      %v518 = vpack.c.b16 %v488, %v486
      %v519 = vpack.c.b16 %v491, %v489
      %v520 = vpack.c.b16 %v492, %v490
      %v521 = vpack.c.b16 %v495, %v493
      %v522 = vpack.c.b16 %v496, %v494
      %v523 = vpack.c.b16 %v499, %v497
      %v524 = vpack.c.b16 %v500, %v498
      %v525 = vpack.c.b16 %v503, %v501
      %v526 = vpack.c.b16 %v504, %v502
      %v527 = vpack.c.b16 %v507, %v505
      %v528 = vpack.c.b16 %v508, %v506
      %v529 = vpack.c.b16 %v511, %v509
      %v530 = vpack.c.b16 %v512, %v510
      %v531 = vpack.c.b16 %v515, %v513
      %v532 = vpack.c.b16 %v516, %v514
      %v581 = vunpack.c.l.b16 %v453
      %v582 = vunpack.c.l.b16 %v454
      %v583 = vunpack.c.l.b16 %v455
      %v584 = vunpack.c.l.b16 %v456
      %v585 = vunpack.c.l.b16 %v457
      %v586 = vunpack.c.l.b16 %v458
      %v587 = vunpack.c.l.b16 %v459
      %v588 = vunpack.c.l.b16 %v460
      %v589 = vunpack.c.l.b16 %v461
      %v590 = vunpack.c.l.b16 %v462
      %v591 = vunpack.c.l.b16 %v463
      %v592 = vunpack.c.l.b16 %v464
      %v593 = vunpack.c.l.b16 %v465
      %v594 = vunpack.c.l.b16 %v466
      %v595 = vunpack.c.l.b16 %v467
      %v596 = vunpack.c.l.b16 %v468
      %v597 = vunpack.c.l.b16 %v469
      %v598 = vunpack.c.l.b16 %v470
      %v599 = vunpack.c.l.b16 %v471
      %v600 = vunpack.c.l.b16 %v472
      %v601 = vunpack.c.l.b16 %v473
      %v602 = vunpack.c.l.b16 %v474
      %v603 = vunpack.c.l.b16 %v475
      %v604 = vunpack.c.l.b16 %v476
      %v605 = vunpack.c.l.b16 %v477
      %v606 = vunpack.c.l.b16 %v478
      %v607 = vunpack.c.l.b16 %v479
      %v608 = vunpack.c.l.b16 %v480
      %v609 = vunpack.c.l.b16 %v481
      %v610 = vunpack.c.l.b16 %v482
      %v611 = vunpack.c.l.b16 %v483
      %v612 = vunpack.c.l.b16 %v484
      %v613 = vpack.c.b16 %v582, %v581
      %v614 = vpack.c.b16 %v584, %v583
      %v615 = vpack.c.b16 %v586, %v585
      %v616 = vpack.c.b16 %v588, %v587
      %v617 = vpack.c.b16 %v590, %v589
      %v618 = vpack.c.b16 %v592, %v591
      %v619 = vpack.c.b16 %v594, %v593
      %v620 = vpack.c.b16 %v596, %v595
      %v621 = vpack.c.b16 %v598, %v597
      %v622 = vpack.c.b16 %v600, %v599
      %v623 = vpack.c.b16 %v602, %v601
      %v624 = vpack.c.b16 %v604, %v603
      %v625 = vpack.c.b16 %v606, %v605
      %v626 = vpack.c.b16 %v608, %v607
      %v627 = vpack.c.b16 %v610, %v609
      %v628 = vpack.c.b16 %v612, %v611
      %645 = vmatprep.subr.bf16.mxu0 0
      %646 = vmatpush1.bf16.msra.mxu0 %v613
      %647 = vmatprep.subr.bf16.mxu0 0
      %648 = vmatpush1.bf16.msra.mxu0 %v614
      %649 = vmatprep.subr.bf16.mxu0 0
      %650 = vmatpush1.bf16.msra.mxu0 %v615
      %651 = vmatprep.subr.bf16.mxu0 0
      %652 = vmatpush1.bf16.msra.mxu0 %v616
      %653 = vmatprep.subr.bf16.mxu0 0
      %654 = vmatpush1.bf16.msra.mxu0 %v617
      %655 = vmatprep.subr.bf16.mxu0 0
      %656 = vmatpush1.bf16.msra.mxu0 %v618
      %657 = vmatprep.subr.bf16.mxu0 0
      %658 = vmatpush1.bf16.msra.mxu0 %v619
      %659 = vmatprep.subr.bf16.mxu0 0
      %660 = vmatpush1.bf16.msra.mxu0 %v620
      %661 = vmatprep.subr.bf16.mxu0 0
      %662 = vmatpush1.bf16.msra.mxu0 %v621
      %663 = vmatprep.subr.bf16.mxu0 0
      %664 = vmatpush1.bf16.msra.mxu0 %v622
      %665 = vmatprep.subr.bf16.mxu0 0
      %666 = vmatpush1.bf16.msra.mxu0 %v623
      %667 = vmatprep.subr.bf16.mxu0 0
      %668 = vmatpush1.bf16.msra.mxu0 %v624
      %669 = vmatprep.subr.bf16.mxu0 0
      %670 = vmatpush1.bf16.msra.mxu0 %v625
      %671 = vmatprep.subr.bf16.mxu0 0
      %672 = vmatpush1.bf16.msra.mxu0 %v626
      %673 = vmatprep.subr.bf16.mxu0 0
      %674 = vmatpush1.bf16.msra.mxu0 %v627
      %675 = vmatprep.subr.bf16.mxu0 0
      %676 = vmatpush1.bf16.msra.mxu0 %v628
      %677 = vmatprep.mubr.bf16.mxu0 %v518
      %678 = vmatmul.mubr.bf16.gmra.mrb[0].mxu0 %v517
      %v679 = vpop.f32.mrb[0].mxu0
      %v680 = vadd.f32 0.0, %v679
      %v681 = vpop.f32.mrb[0].mxu0
      %v682 = vpop.f32.mrb[0].mxu0
      %v683 = vadd.f32 0.0, %v682
      %v684 = vpop.f32.mrb[0].mxu0
      %685 = vmatprep.mubr.bf16.mxu0 %v520
      %686 = vmatmul.mubr.bf16.gmra.mrb[0].mxu0 %v519
      %v687 = vpop.f32.mrb[0].mxu0
      %v688 = vadd.f32 0.0, %v687
      %v689 = vpop.f32.mrb[0].mxu0
      %v690 = vpop.f32.mrb[0].mxu0
      %v691 = vadd.f32 0.0, %v690
      %v692 = vpop.f32.mrb[0].mxu0
      %693 = vmatprep.mubr.bf16.mxu0 %v522
      %694 = vmatmul.mubr.bf16.gmra.mrb[0].mxu0 %v521
      %v695 = vpop.f32.mrb[0].mxu0
      %v696 = vadd.f32 0.0, %v695
      %v697 = vpop.f32.mrb[0].mxu0
      %v698 = vpop.f32.mrb[0].mxu0
      %v699 = vadd.f32 0.0, %v698
      %v700 = vpop.f32.mrb[0].mxu0
      %701 = vmatprep.mubr.bf16.mxu0 %v524
      %702 = vmatmul.mubr.bf16.gmra.mrb[0].mxu0 %v523
      %v703 = vpop.f32.mrb[0].mxu0
      %v704 = vadd.f32 0.0, %v703
      %v705 = vpop.f32.mrb[0].mxu0
      %v706 = vpop.f32.mrb[0].mxu0
      %v707 = vadd.f32 0.0, %v706
      %v708 = vpop.f32.mrb[0].mxu0
      %709 = vmatprep.mubr.bf16.mxu0 %v526
      %710 = vmatmul.mubr.bf16.gmra.mrb[0].mxu0 %v525
      %v711 = vpop.f32.mrb[0].mxu0
      %v712 = vadd.f32 0.0, %v711
      %v713 = vpop.f32.mrb[0].mxu0
      %v714 = vpop.f32.mrb[0].mxu0
      %v715 = vadd.f32 0.0, %v714
      %v716 = vpop.f32.mrb[0].mxu0
      %717 = vmatprep.mubr.bf16.mxu0 %v528
      %718 = vmatmul.mubr.bf16.gmra.mrb[0].mxu0 %v527
      %v719 = vpop.f32.mrb[0].mxu0
      %v720 = vadd.f32 0.0, %v719
      %v721 = vpop.f32.mrb[0].mxu0
      %v722 = vpop.f32.mrb[0].mxu0
      %v723 = vadd.f32 0.0, %v722
      %v724 = vpop.f32.mrb[0].mxu0
      %725 = vmatprep.mubr.bf16.mxu0 %v530
      %726 = vmatmul.mubr.bf16.gmra.mrb[0].mxu0 %v529
      %v727 = vpop.f32.mrb[0].mxu0
      %v728 = vadd.f32 0.0, %v727
      %v729 = vpop.f32.mrb[0].mxu0
      %v730 = vpop.f32.mrb[0].mxu0
      %v731 = vadd.f32 0.0, %v730
      %v732 = vpop.f32.mrb[0].mxu0
      %733 = vmatprep.mubr.bf16.mxu0 %v532
      %734 = vmatmul.mubr.bf16.gmra.mrb[0].mxu0 %v531
      %v735 = vpop.f32.mrb[0].mxu0
      %v736 = vadd.f32 0.0, %v735
      %v737 = vpop.f32.mrb[0].mxu0
      %v738 = vpop.f32.mrb[0].mxu0
      %v739 = vadd.f32 0.0, %v738
      %v740 = vpop.f32.mrb[0].mxu0
      %741 = vdwg.mxu0
      %v758 = vunpack.c.l.b16 %v201
      %v759 = vunpack.c.h.b16 %v201
      %v760 = vunpack.c.l.b16 %v202
      %v761 = vunpack.c.h.b16 %v202
      %v762 = vunpack.c.l.b16 %v204
      %v763 = vunpack.c.h.b16 %v204
      %v764 = vunpack.c.l.b16 %v205
      %v765 = vunpack.c.h.b16 %v205
      %v766 = vunpack.c.l.b16 %v207
      %v767 = vunpack.c.h.b16 %v207
      %v768 = vunpack.c.l.b16 %v208
      %v769 = vunpack.c.h.b16 %v208
      %v770 = vunpack.c.l.b16 %v210
      %v771 = vunpack.c.h.b16 %v210
      %v772 = vunpack.c.l.b16 %v211
      %v773 = vunpack.c.h.b16 %v211
      %v774 = vunpack.c.l.b16 %v213
      %v775 = vunpack.c.h.b16 %v213
      %v776 = vunpack.c.l.b16 %v214
      %v777 = vunpack.c.h.b16 %v214
      %v778 = vunpack.c.l.b16 %v216
      %v779 = vunpack.c.h.b16 %v216
      %v780 = vunpack.c.l.b16 %v217
      %v781 = vunpack.c.h.b16 %v217
      %v782 = vunpack.c.l.b16 %v219
      %v783 = vunpack.c.h.b16 %v219
      %v784 = vunpack.c.l.b16 %v220
      %v785 = vunpack.c.h.b16 %v220
      %v786 = vunpack.c.l.b16 %v222
      %v787 = vunpack.c.h.b16 %v222
      %v788 = vunpack.c.l.b16 %v223
      %v789 = vunpack.c.h.b16 %v223
      %v790 = vpack.c.b16 %v760, %v758
      %v791 = vpack.c.b16 %v761, %v759
      %v792 = vpack.c.b16 %v764, %v762
      %v793 = vpack.c.b16 %v765, %v763
      %v794 = vpack.c.b16 %v768, %v766
      %v795 = vpack.c.b16 %v769, %v767
      %v796 = vpack.c.b16 %v772, %v770
      %v797 = vpack.c.b16 %v773, %v771
      %v798 = vpack.c.b16 %v776, %v774
      %v799 = vpack.c.b16 %v777, %v775
      %v800 = vpack.c.b16 %v780, %v778
      %v801 = vpack.c.b16 %v781, %v779
      %v802 = vpack.c.b16 %v784, %v782
      %v803 = vpack.c.b16 %v785, %v783
      %v804 = vpack.c.b16 %v788, %v786
      %v805 = vpack.c.b16 %v789, %v787
      %v854 = vunpack.c.l.b16 %v225
      %v855 = vunpack.c.l.b16 %v226
      %v856 = vunpack.c.l.b16 %v227
      %v857 = vunpack.c.l.b16 %v228
      %v858 = vunpack.c.l.b16 %v229
      %v859 = vunpack.c.l.b16 %v230
      %v860 = vunpack.c.l.b16 %v231
      %v861 = vunpack.c.l.b16 %v232
      %v862 = vunpack.c.l.b16 %v233
      %v863 = vunpack.c.l.b16 %v234
      %v864 = vunpack.c.l.b16 %v235
      %v865 = vunpack.c.l.b16 %v236
      %v866 = vunpack.c.l.b16 %v237
      %v867 = vunpack.c.l.b16 %v238
      %v868 = vunpack.c.l.b16 %v239
      %v869 = vunpack.c.l.b16 %v240
      %v870 = vunpack.c.l.b16 %v241
      %v871 = vunpack.c.l.b16 %v242
      %v872 = vunpack.c.l.b16 %v243
      %v873 = vunpack.c.l.b16 %v244
      %v874 = vunpack.c.l.b16 %v245
      %v875 = vunpack.c.l.b16 %v246
      %v876 = vunpack.c.l.b16 %v247
      %v877 = vunpack.c.l.b16 %v248
      %v878 = vunpack.c.l.b16 %v249
      %v879 = vunpack.c.l.b16 %v250
      %v880 = vunpack.c.l.b16 %v251
      %v881 = vunpack.c.l.b16 %v252
      %v882 = vunpack.c.l.b16 %v253
      %v883 = vunpack.c.l.b16 %v254
      %v884 = vunpack.c.l.b16 %v255
      %v885 = vunpack.c.l.b16 %v256
      %v886 = vpack.c.b16 %v855, %v854
      %v887 = vpack.c.b16 %v857, %v856
      %v888 = vpack.c.b16 %v859, %v858
      %v889 = vpack.c.b16 %v861, %v860
      %v890 = vpack.c.b16 %v863, %v862
      %v891 = vpack.c.b16 %v865, %v864
      %v892 = vpack.c.b16 %v867, %v866
      %v893 = vpack.c.b16 %v869, %v868
      %v894 = vpack.c.b16 %v871, %v870
      %v895 = vpack.c.b16 %v873, %v872
      %v896 = vpack.c.b16 %v875, %v874
      %v897 = vpack.c.b16 %v877, %v876
      %v898 = vpack.c.b16 %v879, %v878
      %v899 = vpack.c.b16 %v881, %v880
      %v900 = vpack.c.b16 %v883, %v882
      %v901 = vpack.c.b16 %v885, %v884
      %918 = vmatprep.subr.bf16.mxu0 0
      %919 = vmatpush1.bf16.msra.mxu0 %v886
      %920 = vmatprep.subr.bf16.mxu0 0
      %921 = vmatpush1.bf16.msra.mxu0 %v887
      %922 = vmatprep.subr.bf16.mxu0 0
      %923 = vmatpush1.bf16.msra.mxu0 %v888
      %924 = vmatprep.subr.bf16.mxu0 0
      %925 = vmatpush1.bf16.msra.mxu0 %v889
      %926 = vmatprep.subr.bf16.mxu0 0
      %927 = vmatpush1.bf16.msra.mxu0 %v890
      %928 = vmatprep.subr.bf16.mxu0 0
      %929 = vmatpush1.bf16.msra.mxu0 %v891
      %930 = vmatprep.subr.bf16.mxu0 0
      %931 = vmatpush1.bf16.msra.mxu0 %v892
      %932 = vmatprep.subr.bf16.mxu0 0
      %933 = vmatpush1.bf16.msra.mxu0 %v893
      %934 = vmatprep.subr.bf16.mxu0 0
      %935 = vmatpush1.bf16.msra.mxu0 %v894
      %936 = vmatprep.subr.bf16.mxu0 0
      %937 = vmatpush1.bf16.msra.mxu0 %v895
      %938 = vmatprep.subr.bf16.mxu0 0
      %939 = vmatpush1.bf16.msra.mxu0 %v896
      %940 = vmatprep.subr.bf16.mxu0 0
      %941 = vmatpush1.bf16.msra.mxu0 %v897
      %942 = vmatprep.subr.bf16.mxu0 0
      %943 = vmatpush1.bf16.msra.mxu0 %v898
      %944 = vmatprep.subr.bf16.mxu0 0
      %945 = vmatpush1.bf16.msra.mxu0 %v899
      %946 = vmatprep.subr.bf16.mxu0 0
      %947 = vmatpush1.bf16.msra.mxu0 %v900
      %948 = vmatprep.subr.bf16.mxu0 0
      %949 = vmatpush1.bf16.msra.mxu0 %v901
      %950 = vmatprep.mubr.bf16.mxu0 %v791
      %951 = vmatmul.mubr.bf16.gmra.mrb[0].mxu0 %v790
      %v952 = vpop.f32.mrb[0].mxu0
      %v953 = vadd.f32 %v680, %v952
      %v954 = vpop.f32.mrb[0].mxu0
      %v955 = vpop.f32.mrb[0].mxu0
      %v956 = vadd.f32 %v683, %v955
      %v957 = vpop.f32.mrb[0].mxu0
      %958 = vmatprep.mubr.bf16.mxu0 %v793
      %959 = vmatmul.mubr.bf16.gmra.mrb[0].mxu0 %v792
      %v960 = vpop.f32.mrb[0].mxu0
      %v961 = vadd.f32 %v688, %v960
      %v962 = vpop.f32.mrb[0].mxu0
      %v963 = vpop.f32.mrb[0].mxu0
      %v964 = vadd.f32 %v691, %v963
      %v965 = vpop.f32.mrb[0].mxu0
      %966 = vmatprep.mubr.bf16.mxu0 %v795
      %967 = vmatmul.mubr.bf16.gmra.mrb[0].mxu0 %v794
      %v968 = vpop.f32.mrb[0].mxu0
      %v969 = vadd.f32 %v696, %v968
      %v970 = vpop.f32.mrb[0].mxu0
      %v971 = vpop.f32.mrb[0].mxu0
      %v972 = vadd.f32 %v699, %v971
      %v973 = vpop.f32.mrb[0].mxu0
      %974 = vmatprep.mubr.bf16.mxu0 %v797
      %975 = vmatmul.mubr.bf16.gmra.mrb[0].mxu0 %v796
      %v976 = vpop.f32.mrb[0].mxu0
      %v977 = vadd.f32 %v704, %v976
      %v978 = vpop.f32.mrb[0].mxu0
      %v979 = vpop.f32.mrb[0].mxu0
      %v980 = vadd.f32 %v707, %v979
      %v981 = vpop.f32.mrb[0].mxu0
      %982 = vmatprep.mubr.bf16.mxu0 %v799
      %983 = vmatmul.mubr.bf16.gmra.mrb[0].mxu0 %v798
      %v984 = vpop.f32.mrb[0].mxu0
      %v985 = vadd.f32 %v712, %v984
      %v986 = vpop.f32.mrb[0].mxu0
      %v987 = vpop.f32.mrb[0].mxu0
      %v988 = vadd.f32 %v715, %v987
      %v989 = vpop.f32.mrb[0].mxu0
      %990 = vmatprep.mubr.bf16.mxu0 %v801
      %991 = vmatmul.mubr.bf16.gmra.mrb[0].mxu0 %v800
      %v992 = vpop.f32.mrb[0].mxu0
      %v993 = vadd.f32 %v720, %v992
      %v994 = vpop.f32.mrb[0].mxu0
      %v995 = vpop.f32.mrb[0].mxu0
      %v996 = vadd.f32 %v723, %v995
      %v997 = vpop.f32.mrb[0].mxu0
      %998 = vmatprep.mubr.bf16.mxu0 %v803
      %999 = vmatmul.mubr.bf16.gmra.mrb[0].mxu0 %v802
      %v1000 = vpop.f32.mrb[0].mxu0
      %v1001 = vadd.f32 %v728, %v1000
      %v1002 = vpop.f32.mrb[0].mxu0
      %v1003 = vpop.f32.mrb[0].mxu0
      %v1004 = vadd.f32 %v731, %v1003
      %v1005 = vpop.f32.mrb[0].mxu0
      %1006 = vmatprep.mubr.bf16.mxu0 %v805
      %1007 = vmatmul.mubr.bf16.gmra.mrb[0].mxu0 %v804
      %v1008 = vpop.f32.mrb[0].mxu0
      %v1009 = vadd.f32 %v736, %v1008
      %v1010 = vpop.f32.mrb[0].mxu0
      %v1011 = vpop.f32.mrb[0].mxu0
      %v1012 = vadd.f32 %v739, %v1011
      %v1013 = vpop.f32.mrb[0].mxu0
      %1014 = vdwg.mxu0
      %vm1023 = vcmask 1042432
      %vm1024 = vcmask 1046532
      %vm1025 = vmor %vm1023, %vm1024
      %v1026 = vrot.slane %v201, 5
      %v1027 = vrot.slane %v1026, 4
      %v1028 = vrot.slane %v202, 5
      %v1029 = vsel %vm1025, %v1027, %v1028
      %v1030 = vrot.slane %v1028, 4
      %v1031 = vrot.slane %v203, 5
      %v1032 = vsel %vm1025, %v1030, %v1031
      %v1033 = vrot.slane %v204, 5
      %v1034 = vrot.slane %v1033, 4
      %v1035 = vrot.slane %v205, 5
      %v1036 = vsel %vm1025, %v1034, %v1035
      %v1037 = vrot.slane %v1035, 4
      %v1038 = vrot.slane %v206, 5
      %v1039 = vsel %vm1025, %v1037, %v1038
      %v1040 = vrot.slane %v207, 5
      %v1041 = vrot.slane %v1040, 4
      %v1042 = vrot.slane %v208, 5
      %v1043 = vsel %vm1025, %v1041, %v1042
      %v1044 = vrot.slane %v1042, 4
      %v1045 = vrot.slane %v209, 5
      %v1046 = vsel %vm1025, %v1044, %v1045
      %v1047 = vrot.slane %v210, 5
      %v1048 = vrot.slane %v1047, 4
      %v1049 = vrot.slane %v211, 5
      %v1050 = vsel %vm1025, %v1048, %v1049
      %v1051 = vrot.slane %v1049, 4
      %v1052 = vrot.slane %v212, 5
      %v1053 = vsel %vm1025, %v1051, %v1052
      %v1054 = vrot.slane %v213, 5
      %v1055 = vrot.slane %v1054, 4
      %v1056 = vrot.slane %v214, 5
      %v1057 = vsel %vm1025, %v1055, %v1056
      %v1058 = vrot.slane %v1056, 4
      %v1059 = vrot.slane %v215, 5
      %v1060 = vsel %vm1025, %v1058, %v1059
      %v1061 = vrot.slane %v216, 5
      %v1062 = vrot.slane %v1061, 4
      %v1063 = vrot.slane %v217, 5
      %v1064 = vsel %vm1025, %v1062, %v1063
      %v1065 = vrot.slane %v1063, 4
      %v1066 = vrot.slane %v218, 5
      %v1067 = vsel %vm1025, %v1065, %v1066
      %v1068 = vrot.slane %v219, 5
      %v1069 = vrot.slane %v1068, 4
      %v1070 = vrot.slane %v220, 5
      %v1071 = vsel %vm1025, %v1069, %v1070
      %v1072 = vrot.slane %v1070, 4
      %v1073 = vrot.slane %v221, 5
      %v1074 = vsel %vm1025, %v1072, %v1073
      %v1075 = vrot.slane %v222, 5
      %v1076 = vrot.slane %v1075, 4
      %v1077 = vrot.slane %v223, 5
      %v1078 = vsel %vm1025, %v1076, %v1077
      %v1079 = vrot.slane %v1077, 4
      %v1080 = vrot.slane %v224, 5
      %v1081 = vsel %vm1025, %v1079, %v1080
      %s1082 = scalar_lea.vmem %s1, 256
      %v1083 = vld [vmem:[%s1082] sm:$0xf]
      %v1084 = vld [vmem:[%s1082 + $0x4] sm:$0xf]
      %v1085 = vld [vmem:[%s1082 + $0x8] sm:$0xf]
      %v1086 = vld [vmem:[%s1082 + $0xc] sm:$0xf]
      %v1087 = vld [vmem:[%s1082 + $0x10] sm:$0xf]
      %v1088 = vld [vmem:[%s1082 + $0x14] sm:$0xf]
      %v1089 = vld [vmem:[%s1082 + $0x18] sm:$0xf]
      %v1090 = vld [vmem:[%s1082 + $0x1c] sm:$0xf]
      %v1091 = vld [vmem:[%s1082 + $0x20] sm:$0xf]
      %v1092 = vld [vmem:[%s1082 + $0x24] sm:$0xf]
      %v1093 = vld [vmem:[%s1082 + $0x28] sm:$0xf]
      %v1094 = vld [vmem:[%s1082 + $0x2c] sm:$0xf]
      %v1095 = vld [vmem:[%s1082 + $0x30] sm:$0xf]
      %v1096 = vld [vmem:[%s1082 + $0x34] sm:$0xf]
      %v1097 = vld [vmem:[%s1082 + $0x38] sm:$0xf]
      %v1098 = vld [vmem:[%s1082 + $0x3c] sm:$0xf]
      %v1099 = vld [vmem:[%s1082 + $0x40] sm:$0xf]
      %v1100 = vld [vmem:[%s1082 + $0x44] sm:$0xf]
      %v1101 = vld [vmem:[%s1082 + $0x48] sm:$0xf]
      %v1102 = vld [vmem:[%s1082 + $0x4c] sm:$0xf]
      %v1103 = vld [vmem:[%s1082 + $0x50] sm:$0xf]
      %v1104 = vld [vmem:[%s1082 + $0x54] sm:$0xf]
      %v1105 = vld [vmem:[%s1082 + $0x58] sm:$0xf]
      %v1106 = vld [vmem:[%s1082 + $0x5c] sm:$0xf]
      %v1107 = vld [vmem:[%s1082 + $0x60] sm:$0xf]
      %v1108 = vld [vmem:[%s1082 + $0x64] sm:$0xf]
      %v1109 = vld [vmem:[%s1082 + $0x68] sm:$0xf]
      %v1110 = vld [vmem:[%s1082 + $0x6c] sm:$0xf]
      %v1111 = vld [vmem:[%s1082 + $0x70] sm:$0xf]
      %v1112 = vld [vmem:[%s1082 + $0x74] sm:$0xf]
      %v1113 = vld [vmem:[%s1082 + $0x78] sm:$0xf]
      %v1114 = vld [vmem:[%s1082 + $0x7c] sm:$0xf]
      %v1115 = vunpack.c.l.b16 %v1029
      %v1116 = vunpack.c.h.b16 %v1029
      %v1117 = vunpack.c.l.b16 %v1032
      %v1118 = vunpack.c.h.b16 %v1032
      %v1119 = vunpack.c.l.b16 %v1036
      %v1120 = vunpack.c.h.b16 %v1036
      %v1121 = vunpack.c.l.b16 %v1039
      %v1122 = vunpack.c.h.b16 %v1039
      %v1123 = vunpack.c.l.b16 %v1043
      %v1124 = vunpack.c.h.b16 %v1043
      %v1125 = vunpack.c.l.b16 %v1046
      %v1126 = vunpack.c.h.b16 %v1046
      %v1127 = vunpack.c.l.b16 %v1050
      %v1128 = vunpack.c.h.b16 %v1050
      %v1129 = vunpack.c.l.b16 %v1053
      %v1130 = vunpack.c.h.b16 %v1053
      %v1131 = vunpack.c.l.b16 %v1057
      %v1132 = vunpack.c.h.b16 %v1057
      %v1133 = vunpack.c.l.b16 %v1060
      %v1134 = vunpack.c.h.b16 %v1060
      %v1135 = vunpack.c.l.b16 %v1064
      %v1136 = vunpack.c.h.b16 %v1064
      %v1137 = vunpack.c.l.b16 %v1067
      %v1138 = vunpack.c.h.b16 %v1067
      %v1139 = vunpack.c.l.b16 %v1071
      %v1140 = vunpack.c.h.b16 %v1071
      %v1141 = vunpack.c.l.b16 %v1074
      %v1142 = vunpack.c.h.b16 %v1074
      %v1143 = vunpack.c.l.b16 %v1078
      %v1144 = vunpack.c.h.b16 %v1078
      %v1145 = vunpack.c.l.b16 %v1081
      %v1146 = vunpack.c.h.b16 %v1081
      %v1147 = vpack.c.b16 %v1117, %v1115
      %v1148 = vpack.c.b16 %v1118, %v1116
      %v1149 = vpack.c.b16 %v1121, %v1119
      %v1150 = vpack.c.b16 %v1122, %v1120
      %v1151 = vpack.c.b16 %v1125, %v1123
      %v1152 = vpack.c.b16 %v1126, %v1124
      %v1153 = vpack.c.b16 %v1129, %v1127
      %v1154 = vpack.c.b16 %v1130, %v1128
      %v1155 = vpack.c.b16 %v1133, %v1131
      %v1156 = vpack.c.b16 %v1134, %v1132
      %v1157 = vpack.c.b16 %v1137, %v1135
      %v1158 = vpack.c.b16 %v1138, %v1136
      %v1159 = vpack.c.b16 %v1141, %v1139
      %v1160 = vpack.c.b16 %v1142, %v1140
      %v1161 = vpack.c.b16 %v1145, %v1143
      %v1162 = vpack.c.b16 %v1146, %v1144
      %v1211 = vunpack.c.l.b16 %v1083
      %v1212 = vunpack.c.l.b16 %v1084
      %v1213 = vunpack.c.l.b16 %v1085
      %v1214 = vunpack.c.l.b16 %v1086
      %v1215 = vunpack.c.l.b16 %v1087
      %v1216 = vunpack.c.l.b16 %v1088
      %v1217 = vunpack.c.l.b16 %v1089
      %v1218 = vunpack.c.l.b16 %v1090
      %v1219 = vunpack.c.l.b16 %v1091
      %v1220 = vunpack.c.l.b16 %v1092
      %v1221 = vunpack.c.l.b16 %v1093
      %v1222 = vunpack.c.l.b16 %v1094
      %v1223 = vunpack.c.l.b16 %v1095
      %v1224 = vunpack.c.l.b16 %v1096
      %v1225 = vunpack.c.l.b16 %v1097
      %v1226 = vunpack.c.l.b16 %v1098
      %v1227 = vunpack.c.l.b16 %v1099
      %v1228 = vunpack.c.l.b16 %v1100
      %v1229 = vunpack.c.l.b16 %v1101
      %v1230 = vunpack.c.l.b16 %v1102
      %v1231 = vunpack.c.l.b16 %v1103
      %v1232 = vunpack.c.l.b16 %v1104
      %v1233 = vunpack.c.l.b16 %v1105
      %v1234 = vunpack.c.l.b16 %v1106
      %v1235 = vunpack.c.l.b16 %v1107
      %v1236 = vunpack.c.l.b16 %v1108
      %v1237 = vunpack.c.l.b16 %v1109
      %v1238 = vunpack.c.l.b16 %v1110
      %v1239 = vunpack.c.l.b16 %v1111
      %v1240 = vunpack.c.l.b16 %v1112
      %v1241 = vunpack.c.l.b16 %v1113
      %v1242 = vunpack.c.l.b16 %v1114
      %v1243 = vpack.c.b16 %v1212, %v1211
      %v1244 = vpack.c.b16 %v1214, %v1213
      %v1245 = vpack.c.b16 %v1216, %v1215
      %v1246 = vpack.c.b16 %v1218, %v1217
      %v1247 = vpack.c.b16 %v1220, %v1219
      %v1248 = vpack.c.b16 %v1222, %v1221
      %v1249 = vpack.c.b16 %v1224, %v1223
      %v1250 = vpack.c.b16 %v1226, %v1225
      %v1251 = vpack.c.b16 %v1228, %v1227
      %v1252 = vpack.c.b16 %v1230, %v1229
      %v1253 = vpack.c.b16 %v1232, %v1231
      %v1254 = vpack.c.b16 %v1234, %v1233
      %v1255 = vpack.c.b16 %v1236, %v1235
      %v1256 = vpack.c.b16 %v1238, %v1237
      %v1257 = vpack.c.b16 %v1240, %v1239
      %v1258 = vpack.c.b16 %v1242, %v1241
      %1275 = vmatprep.subr.bf16.mxu0 0
      %1276 = vmatpush1.bf16.msra.mxu0 %v1243
      %1277 = vmatprep.subr.bf16.mxu0 0
      %1278 = vmatpush1.bf16.msra.mxu0 %v1244
      %1279 = vmatprep.subr.bf16.mxu0 0
      %1280 = vmatpush1.bf16.msra.mxu0 %v1245
      %1281 = vmatprep.subr.bf16.mxu0 0
      %1282 = vmatpush1.bf16.msra.mxu0 %v1246
      %1283 = vmatprep.subr.bf16.mxu0 0
      %1284 = vmatpush1.bf16.msra.mxu0 %v1247
      %1285 = vmatprep.subr.bf16.mxu0 0
      %1286 = vmatpush1.bf16.msra.mxu0 %v1248
      %1287 = vmatprep.subr.bf16.mxu0 0
      %1288 = vmatpush1.bf16.msra.mxu0 %v1249
      %1289 = vmatprep.subr.bf16.mxu0 0
      %1290 = vmatpush1.bf16.msra.mxu0 %v1250
      %1291 = vmatprep.subr.bf16.mxu0 0
      %1292 = vmatpush1.bf16.msra.mxu0 %v1251
      %1293 = vmatprep.subr.bf16.mxu0 0
      %1294 = vmatpush1.bf16.msra.mxu0 %v1252
      %1295 = vmatprep.subr.bf16.mxu0 0
      %1296 = vmatpush1.bf16.msra.mxu0 %v1253
      %1297 = vmatprep.subr.bf16.mxu0 0
      %1298 = vmatpush1.bf16.msra.mxu0 %v1254
      %1299 = vmatprep.subr.bf16.mxu0 0
      %1300 = vmatpush1.bf16.msra.mxu0 %v1255
      %1301 = vmatprep.subr.bf16.mxu0 0
      %1302 = vmatpush1.bf16.msra.mxu0 %v1256
      %1303 = vmatprep.subr.bf16.mxu0 0
      %1304 = vmatpush1.bf16.msra.mxu0 %v1257
      %1305 = vmatprep.subr.bf16.mxu0 0
      %1306 = vmatpush1.bf16.msra.mxu0 %v1258
      %1307 = vmatprep.mubr.bf16.mxu0 %v1148
      %1308 = vmatmul.mubr.bf16.gmra.mrb[0].mxu0 %v1147
      %v1309 = vpop.f32.mrb[0].mxu0
      %v1310 = vadd.f32 0.0, %v1309
      %v1311 = vpop.f32.mrb[0].mxu0
      %v1312 = vpop.f32.mrb[0].mxu0
      %v1313 = vadd.f32 0.0, %v1312
      %v1314 = vpop.f32.mrb[0].mxu0
      %1315 = vmatprep.mubr.bf16.mxu0 %v1150
      %1316 = vmatmul.mubr.bf16.gmra.mrb[0].mxu0 %v1149
      %v1317 = vpop.f32.mrb[0].mxu0
      %v1318 = vadd.f32 0.0, %v1317
      %v1319 = vpop.f32.mrb[0].mxu0
      %v1320 = vpop.f32.mrb[0].mxu0
      %v1321 = vadd.f32 0.0, %v1320
      %v1322 = vpop.f32.mrb[0].mxu0
      %1323 = vmatprep.mubr.bf16.mxu0 %v1152
      %1324 = vmatmul.mubr.bf16.gmra.mrb[0].mxu0 %v1151
      %v1325 = vpop.f32.mrb[0].mxu0
      %v1326 = vadd.f32 0.0, %v1325
      %v1327 = vpop.f32.mrb[0].mxu0
      %v1328 = vpop.f32.mrb[0].mxu0
      %v1329 = vadd.f32 0.0, %v1328
      %v1330 = vpop.f32.mrb[0].mxu0
      %1331 = vmatprep.mubr.bf16.mxu0 %v1154
      %1332 = vmatmul.mubr.bf16.gmra.mrb[0].mxu0 %v1153
      %v1333 = vpop.f32.mrb[0].mxu0
      %v1334 = vadd.f32 0.0, %v1333
      %v1335 = vpop.f32.mrb[0].mxu0
      %v1336 = vpop.f32.mrb[0].mxu0
      %v1337 = vadd.f32 0.0, %v1336
      %v1338 = vpop.f32.mrb[0].mxu0
      %1339 = vmatprep.mubr.bf16.mxu0 %v1156
      %1340 = vmatmul.mubr.bf16.gmra.mrb[0].mxu0 %v1155
      %v1341 = vpop.f32.mrb[0].mxu0
      %v1342 = vadd.f32 0.0, %v1341
      %v1343 = vpop.f32.mrb[0].mxu0
      %v1344 = vpop.f32.mrb[0].mxu0
      %v1345 = vadd.f32 0.0, %v1344
      %v1346 = vpop.f32.mrb[0].mxu0
      %1347 = vmatprep.mubr.bf16.mxu0 %v1158
      %1348 = vmatmul.mubr.bf16.gmra.mrb[0].mxu0 %v1157
      %v1349 = vpop.f32.mrb[0].mxu0
      %v1350 = vadd.f32 0.0, %v1349
      %v1351 = vpop.f32.mrb[0].mxu0
      %v1352 = vpop.f32.mrb[0].mxu0
      %v1353 = vadd.f32 0.0, %v1352
      %v1354 = vpop.f32.mrb[0].mxu0
      %1355 = vmatprep.mubr.bf16.mxu0 %v1160
      %1356 = vmatmul.mubr.bf16.gmra.mrb[0].mxu0 %v1159
      %v1357 = vpop.f32.mrb[0].mxu0
      %v1358 = vadd.f32 0.0, %v1357
      %v1359 = vpop.f32.mrb[0].mxu0
      %v1360 = vpop.f32.mrb[0].mxu0
      %v1361 = vadd.f32 0.0, %v1360
      %v1362 = vpop.f32.mrb[0].mxu0
      %1363 = vmatprep.mubr.bf16.mxu0 %v1162
      %1364 = vmatmul.mubr.bf16.gmra.mrb[0].mxu0 %v1161
      %v1365 = vpop.f32.mrb[0].mxu0
      %v1366 = vadd.f32 0.0, %v1365
      %v1367 = vpop.f32.mrb[0].mxu0
      %v1368 = vpop.f32.mrb[0].mxu0
      %v1369 = vadd.f32 0.0, %v1368
      %v1370 = vpop.f32.mrb[0].mxu0
      %1371 = vdwg.mxu0
      %v1372 = vadd.f32 %v953, %v1310
      %v1373 = vadd.f32 %v956, %v1313
      %v1374 = vadd.f32 %v961, %v1318
      %v1375 = vadd.f32 %v964, %v1321
      %v1376 = vadd.f32 %v969, %v1326
      %v1377 = vadd.f32 %v972, %v1329
      %v1378 = vadd.f32 %v977, %v1334
      %v1379 = vadd.f32 %v980, %v1337
      %v1380 = vadd.f32 %v985, %v1342
      %v1381 = vadd.f32 %v988, %v1345
      %v1382 = vadd.f32 %v993, %v1350
      %v1383 = vadd.f32 %v996, %v1353
      %v1384 = vadd.f32 %v1001, %v1358
      %v1385 = vadd.f32 %v1004, %v1361
      %v1386 = vadd.f32 %v1009, %v1366
      %v1387 = vadd.f32 %v1012, %v1369
      %s1388 = sadd.s32 %s197, 1
      %s1389 = smul.u32 %s1388, 6
      %s1390 = smul.addr %s1389, 4
      %s1391 = scalar_lea.vmem %s184, %s1390
      %v1392 = vld [vmem:[%s1391] sm:$0xff]
      %v1393 = vld [vmem:[%s1391 + $0x8] sm:$0xff]
      %v1394 = vld [vmem:[%s1391 + $0x10] sm:$0x11]
      %v1395 = vld [vmem:[%s1391 + $0x18] sm:$0xff]
      %v1396 = vld [vmem:[%s1391 + $0x20] sm:$0xff]
      %v1397 = vld [vmem:[%s1391 + $0x28] sm:$0x11]
      %v1398 = vld [vmem:[%s1391 + $0x30] sm:$0xff]
      %v1399 = vld [vmem:[%s1391 + $0x38] sm:$0xff]
      %v1400 = vld [vmem:[%s1391 + $0x40] sm:$0x11]
      %v1401 = vld [vmem:[%s1391 + $0x48] sm:$0xff]
      %v1402 = vld [vmem:[%s1391 + $0x50] sm:$0xff]
      %v1403 = vld [vmem:[%s1391 + $0x58] sm:$0x11]
      %v1404 = vld [vmem:[%s1391 + $0x60] sm:$0xff]
      %v1405 = vld [vmem:[%s1391 + $0x68] sm:$0xff]
      %v1406 = vld [vmem:[%s1391 + $0x70] sm:$0x11]
      %v1407 = vld [vmem:[%s1391 + $0x78] sm:$0xff]
      %v1408 = vld [vmem:[%s1391 + $0x80] sm:$0xff]
      %v1409 = vld [vmem:[%s1391 + $0x88] sm:$0x11]
      %v1410 = vld [vmem:[%s1391 + $0x90] sm:$0xff]
      %v1411 = vld [vmem:[%s1391 + $0x98] sm:$0xff]
      %v1412 = vld [vmem:[%s1391 + $0xa0] sm:$0x11]
      %v1413 = vld [vmem:[%s1391 + $0xa8] sm:$0xff]
      %v1414 = vld [vmem:[%s1391 + $0xb0] sm:$0xff]
      %v1415 = vld [vmem:[%s1391 + $0xb8] sm:$0x11]
      %s1416 = scalar_lea.vmem %s1, 384
      %v1417 = vld [vmem:[%s1416] sm:$0xf]
      %v1418 = vld [vmem:[%s1416 + $0x4] sm:$0xf]
      %v1419 = vld [vmem:[%s1416 + $0x8] sm:$0xf]
      %v1420 = vld [vmem:[%s1416 + $0xc] sm:$0xf]
      %v1421 = vld [vmem:[%s1416 + $0x10] sm:$0xf]
      %v1422 = vld [vmem:[%s1416 + $0x14] sm:$0xf]
      %v1423 = vld [vmem:[%s1416 + $0x18] sm:$0xf]
      %v1424 = vld [vmem:[%s1416 + $0x1c] sm:$0xf]
      %v1425 = vld [vmem:[%s1416 + $0x20] sm:$0xf]
      %v1426 = vld [vmem:[%s1416 + $0x24] sm:$0xf]
      %v1427 = vld [vmem:[%s1416 + $0x28] sm:$0xf]
      %v1428 = vld [vmem:[%s1416 + $0x2c] sm:$0xf]
      %v1429 = vld [vmem:[%s1416 + $0x30] sm:$0xf]
      %v1430 = vld [vmem:[%s1416 + $0x34] sm:$0xf]
      %v1431 = vld [vmem:[%s1416 + $0x38] sm:$0xf]
      %v1432 = vld [vmem:[%s1416 + $0x3c] sm:$0xf]
      %v1433 = vld [vmem:[%s1416 + $0x40] sm:$0xf]
      %v1434 = vld [vmem:[%s1416 + $0x44] sm:$0xf]
      %v1435 = vld [vmem:[%s1416 + $0x48] sm:$0xf]
      %v1436 = vld [vmem:[%s1416 + $0x4c] sm:$0xf]
      %v1437 = vld [vmem:[%s1416 + $0x50] sm:$0xf]
      %v1438 = vld [vmem:[%s1416 + $0x54] sm:$0xf]
      %v1439 = vld [vmem:[%s1416 + $0x58] sm:$0xf]
      %v1440 = vld [vmem:[%s1416 + $0x5c] sm:$0xf]
      %v1441 = vld [vmem:[%s1416 + $0x60] sm:$0xf]
      %v1442 = vld [vmem:[%s1416 + $0x64] sm:$0xf]
      %v1443 = vld [vmem:[%s1416 + $0x68] sm:$0xf]
      %v1444 = vld [vmem:[%s1416 + $0x6c] sm:$0xf]
      %v1445 = vld [vmem:[%s1416 + $0x70] sm:$0xf]
      %v1446 = vld [vmem:[%s1416 + $0x74] sm:$0xf]
      %v1447 = vld [vmem:[%s1416 + $0x78] sm:$0xf]
      %v1448 = vld [vmem:[%s1416 + $0x7c] sm:$0xf]
      %v1465 = vunpack.c.l.b16 %v1392
      %v1466 = vunpack.c.h.b16 %v1392
      %v1467 = vunpack.c.l.b16 %v1393
      %v1468 = vunpack.c.h.b16 %v1393
      %v1469 = vunpack.c.l.b16 %v1395
      %v1470 = vunpack.c.h.b16 %v1395
      %v1471 = vunpack.c.l.b16 %v1396
      %v1472 = vunpack.c.h.b16 %v1396
      %v1473 = vunpack.c.l.b16 %v1398
      %v1474 = vunpack.c.h.b16 %v1398
      %v1475 = vunpack.c.l.b16 %v1399
      %v1476 = vunpack.c.h.b16 %v1399
      %v1477 = vunpack.c.l.b16 %v1401
      %v1478 = vunpack.c.h.b16 %v1401
      %v1479 = vunpack.c.l.b16 %v1402
      %v1480 = vunpack.c.h.b16 %v1402
      %v1481 = vunpack.c.l.b16 %v1404
      %v1482 = vunpack.c.h.b16 %v1404
      %v1483 = vunpack.c.l.b16 %v1405
      %v1484 = vunpack.c.h.b16 %v1405
      %v1485 = vunpack.c.l.b16 %v1407
      %v1486 = vunpack.c.h.b16 %v1407
      %v1487 = vunpack.c.l.b16 %v1408
      %v1488 = vunpack.c.h.b16 %v1408
      %v1489 = vunpack.c.l.b16 %v1410
      %v1490 = vunpack.c.h.b16 %v1410
      %v1491 = vunpack.c.l.b16 %v1411
      %v1492 = vunpack.c.h.b16 %v1411
      %v1493 = vunpack.c.l.b16 %v1413
      %v1494 = vunpack.c.h.b16 %v1413
      %v1495 = vunpack.c.l.b16 %v1414
      %v1496 = vunpack.c.h.b16 %v1414
      %v1497 = vpack.c.b16 %v1467, %v1465
      %v1498 = vpack.c.b16 %v1468, %v1466
      %v1499 = vpack.c.b16 %v1471, %v1469
      %v1500 = vpack.c.b16 %v1472, %v1470
      %v1501 = vpack.c.b16 %v1475, %v1473
      %v1502 = vpack.c.b16 %v1476, %v1474
      %v1503 = vpack.c.b16 %v1479, %v1477
      %v1504 = vpack.c.b16 %v1480, %v1478
      %v1505 = vpack.c.b16 %v1483, %v1481
      %v1506 = vpack.c.b16 %v1484, %v1482
      %v1507 = vpack.c.b16 %v1487, %v1485
      %v1508 = vpack.c.b16 %v1488, %v1486
      %v1509 = vpack.c.b16 %v1491, %v1489
      %v1510 = vpack.c.b16 %v1492, %v1490
      %v1511 = vpack.c.b16 %v1495, %v1493
      %v1512 = vpack.c.b16 %v1496, %v1494
      %v1561 = vunpack.c.l.b16 %v1417
      %v1562 = vunpack.c.l.b16 %v1418
      %v1563 = vunpack.c.l.b16 %v1419
      %v1564 = vunpack.c.l.b16 %v1420
      %v1565 = vunpack.c.l.b16 %v1421
      %v1566 = vunpack.c.l.b16 %v1422
      %v1567 = vunpack.c.l.b16 %v1423
      %v1568 = vunpack.c.l.b16 %v1424
      %v1569 = vunpack.c.l.b16 %v1425
      %v1570 = vunpack.c.l.b16 %v1426
      %v1571 = vunpack.c.l.b16 %v1427
      %v1572 = vunpack.c.l.b16 %v1428
      %v1573 = vunpack.c.l.b16 %v1429
      %v1574 = vunpack.c.l.b16 %v1430
      %v1575 = vunpack.c.l.b16 %v1431
      %v1576 = vunpack.c.l.b16 %v1432
      %v1577 = vunpack.c.l.b16 %v1433
      %v1578 = vunpack.c.l.b16 %v1434
      %v1579 = vunpack.c.l.b16 %v1435
      %v1580 = vunpack.c.l.b16 %v1436
      %v1581 = vunpack.c.l.b16 %v1437
      %v1582 = vunpack.c.l.b16 %v1438
      %v1583 = vunpack.c.l.b16 %v1439
      %v1584 = vunpack.c.l.b16 %v1440
      %v1585 = vunpack.c.l.b16 %v1441
      %v1586 = vunpack.c.l.b16 %v1442
      %v1587 = vunpack.c.l.b16 %v1443
      %v1588 = vunpack.c.l.b16 %v1444
      %v1589 = vunpack.c.l.b16 %v1445
      %v1590 = vunpack.c.l.b16 %v1446
      %v1591 = vunpack.c.l.b16 %v1447
      %v1592 = vunpack.c.l.b16 %v1448
      %v1593 = vpack.c.b16 %v1562, %v1561
      %v1594 = vpack.c.b16 %v1564, %v1563
      %v1595 = vpack.c.b16 %v1566, %v1565
      %v1596 = vpack.c.b16 %v1568, %v1567
      %v1597 = vpack.c.b16 %v1570, %v1569
      %v1598 = vpack.c.b16 %v1572, %v1571
      %v1599 = vpack.c.b16 %v1574, %v1573
      %v1600 = vpack.c.b16 %v1576, %v1575
      %v1601 = vpack.c.b16 %v1578, %v1577
      %v1602 = vpack.c.b16 %v1580, %v1579
      %v1603 = vpack.c.b16 %v1582, %v1581
      %v1604 = vpack.c.b16 %v1584, %v1583
      %v1605 = vpack.c.b16 %v1586, %v1585
      %v1606 = vpack.c.b16 %v1588, %v1587
      %v1607 = vpack.c.b16 %v1590, %v1589
      %v1608 = vpack.c.b16 %v1592, %v1591
      %1625 = vmatprep.subr.bf16.mxu0 0
      %1626 = vmatpush1.bf16.msra.mxu0 %v1593
      %1627 = vmatprep.subr.bf16.mxu0 0
      %1628 = vmatpush1.bf16.msra.mxu0 %v1594
      %1629 = vmatprep.subr.bf16.mxu0 0
      %1630 = vmatpush1.bf16.msra.mxu0 %v1595
      %1631 = vmatprep.subr.bf16.mxu0 0
      %1632 = vmatpush1.bf16.msra.mxu0 %v1596
      %1633 = vmatprep.subr.bf16.mxu0 0
      %1634 = vmatpush1.bf16.msra.mxu0 %v1597
      %1635 = vmatprep.subr.bf16.mxu0 0
      %1636 = vmatpush1.bf16.msra.mxu0 %v1598
      %1637 = vmatprep.subr.bf16.mxu0 0
      %1638 = vmatpush1.bf16.msra.mxu0 %v1599
      %1639 = vmatprep.subr.bf16.mxu0 0
      %1640 = vmatpush1.bf16.msra.mxu0 %v1600
      %1641 = vmatprep.subr.bf16.mxu0 0
      %1642 = vmatpush1.bf16.msra.mxu0 %v1601
      %1643 = vmatprep.subr.bf16.mxu0 0
      %1644 = vmatpush1.bf16.msra.mxu0 %v1602
      %1645 = vmatprep.subr.bf16.mxu0 0
      %1646 = vmatpush1.bf16.msra.mxu0 %v1603
      %1647 = vmatprep.subr.bf16.mxu0 0
      %1648 = vmatpush1.bf16.msra.mxu0 %v1604
      %1649 = vmatprep.subr.bf16.mxu0 0
      %1650 = vmatpush1.bf16.msra.mxu0 %v1605
      %1651 = vmatprep.subr.bf16.mxu0 0
      %1652 = vmatpush1.bf16.msra.mxu0 %v1606
      %1653 = vmatprep.subr.bf16.mxu0 0
      %1654 = vmatpush1.bf16.msra.mxu0 %v1607
      %1655 = vmatprep.subr.bf16.mxu0 0
      %1656 = vmatpush1.bf16.msra.mxu0 %v1608
      %1657 = vmatprep.mubr.bf16.mxu0 %v1498
      %1658 = vmatmul.mubr.bf16.gmra.mrb[0].mxu0 %v1497
      %v1659 = vpop.f32.mrb[0].mxu0
      %v1660 = vadd.f32 0.0, %v1659
      %v1661 = vpop.f32.mrb[0].mxu0
      %v1662 = vpop.f32.mrb[0].mxu0
      %v1663 = vadd.f32 0.0, %v1662
      %v1664 = vpop.f32.mrb[0].mxu0
      %1665 = vmatprep.mubr.bf16.mxu0 %v1500
      %1666 = vmatmul.mubr.bf16.gmra.mrb[0].mxu0 %v1499
      %v1667 = vpop.f32.mrb[0].mxu0
      %v1668 = vadd.f32 0.0, %v1667
      %v1669 = vpop.f32.mrb[0].mxu0
      %v1670 = vpop.f32.mrb[0].mxu0
      %v1671 = vadd.f32 0.0, %v1670
      %v1672 = vpop.f32.mrb[0].mxu0
      %1673 = vmatprep.mubr.bf16.mxu0 %v1502
      %1674 = vmatmul.mubr.bf16.gmra.mrb[0].mxu0 %v1501
      %v1675 = vpop.f32.mrb[0].mxu0
      %v1676 = vadd.f32 0.0, %v1675
      %v1677 = vpop.f32.mrb[0].mxu0
      %v1678 = vpop.f32.mrb[0].mxu0
      %v1679 = vadd.f32 0.0, %v1678
      %v1680 = vpop.f32.mrb[0].mxu0
      %1681 = vmatprep.mubr.bf16.mxu0 %v1504
      %1682 = vmatmul.mubr.bf16.gmra.mrb[0].mxu0 %v1503
      %v1683 = vpop.f32.mrb[0].mxu0
      %v1684 = vadd.f32 0.0, %v1683
      %v1685 = vpop.f32.mrb[0].mxu0
      %v1686 = vpop.f32.mrb[0].mxu0
      %v1687 = vadd.f32 0.0, %v1686
      %v1688 = vpop.f32.mrb[0].mxu0
      %1689 = vmatprep.mubr.bf16.mxu0 %v1506
      %1690 = vmatmul.mubr.bf16.gmra.mrb[0].mxu0 %v1505
      %v1691 = vpop.f32.mrb[0].mxu0
      %v1692 = vadd.f32 0.0, %v1691
      %v1693 = vpop.f32.mrb[0].mxu0
      %v1694 = vpop.f32.mrb[0].mxu0
      %v1695 = vadd.f32 0.0, %v1694
      %v1696 = vpop.f32.mrb[0].mxu0
      %1697 = vmatprep.mubr.bf16.mxu0 %v1508
      %1698 = vmatmul.mubr.bf16.gmra.mrb[0].mxu0 %v1507
      %v1699 = vpop.f32.mrb[0].mxu0
      %v1700 = vadd.f32 0.0, %v1699
      %v1701 = vpop.f32.mrb[0].mxu0
      %v1702 = vpop.f32.mrb[0].mxu0
      %v1703 = vadd.f32 0.0, %v1702
      %v1704 = vpop.f32.mrb[0].mxu0
      %1705 = vmatprep.mubr.bf16.mxu0 %v1510
      %1706 = vmatmul.mubr.bf16.gmra.mrb[0].mxu0 %v1509
      %v1707 = vpop.f32.mrb[0].mxu0
      %v1708 = vadd.f32 0.0, %v1707
      %v1709 = vpop.f32.mrb[0].mxu0
      %v1710 = vpop.f32.mrb[0].mxu0
      %v1711 = vadd.f32 0.0, %v1710
      %v1712 = vpop.f32.mrb[0].mxu0
      %1713 = vmatprep.mubr.bf16.mxu0 %v1512
      %1714 = vmatmul.mubr.bf16.gmra.mrb[0].mxu0 %v1511
      %v1715 = vpop.f32.mrb[0].mxu0
      %v1716 = vadd.f32 0.0, %v1715
      %v1717 = vpop.f32.mrb[0].mxu0
      %v1718 = vpop.f32.mrb[0].mxu0
      %v1719 = vadd.f32 0.0, %v1718
      %v1720 = vpop.f32.mrb[0].mxu0
      %1721 = vdwg.mxu0
      %v1722 = vadd.f32 %v1372, %v1660
      %v1723 = vadd.f32 %v1373, %v1663
      %v1724 = vadd.f32 %v1374, %v1668
      %v1725 = vadd.f32 %v1375, %v1671
      %v1726 = vadd.f32 %v1376, %v1676
      %v1727 = vadd.f32 %v1377, %v1679
      %v1728 = vadd.f32 %v1378, %v1684
      %v1729 = vadd.f32 %v1379, %v1687
      %v1730 = vadd.f32 %v1380, %v1692
      %v1731 = vadd.f32 %v1381, %v1695
      %v1732 = vadd.f32 %v1382, %v1700
      %v1733 = vadd.f32 %v1383, %v1703
      %v1734 = vadd.f32 %v1384, %v1708
      %v1735 = vadd.f32 %v1385, %v1711
      %v1736 = vadd.f32 %v1386, %v1716
      %v1737 = vadd.f32 %v1387, %v1719
      %v1739 = vshrl.u32 %v1392, 16
      %v1741 = vrot.slane %v1739, 4
      %v1742 = vshll.u32 %v1392, 16
      %v1744 = vrot.slane %v1742, 5
      %v1745 = vor.u32 %v1741, %v1744
      %v1746 = vrot.slane %v1745, 4
      %v1748 = vshll.u32 %v1393, 16
      %v1750 = vrot.slane %v1748, 5
      %v1751 = vsel %vm259, %v1746, %v1750
      %v1752 = vshrl.u32 %v1393, 16
      %v1754 = vrot.slane %v1752, 4
      %v1755 = vor.u32 %v1754, %v1750
      %v1756 = vrot.slane %v1755, 4
      %v1758 = vshll.u32 %v1394, 16
      %v1760 = vrot.slane %v1758, 5
      %v1761 = vsel %vm259, %v1756, %v1760
      %v1763 = vshrl.u32 %v1395, 16
      %v1765 = vrot.slane %v1763, 4
      %v1766 = vshll.u32 %v1395, 16
      %v1768 = vrot.slane %v1766, 5
      %v1769 = vor.u32 %v1765, %v1768
      %v1770 = vrot.slane %v1769, 4
      %v1772 = vshll.u32 %v1396, 16
      %v1774 = vrot.slane %v1772, 5
      %v1775 = vsel %vm259, %v1770, %v1774
      %v1776 = vshrl.u32 %v1396, 16
      %v1778 = vrot.slane %v1776, 4
      %v1779 = vor.u32 %v1778, %v1774
      %v1780 = vrot.slane %v1779, 4
      %v1782 = vshll.u32 %v1397, 16
      %v1784 = vrot.slane %v1782, 5
      %v1785 = vsel %vm259, %v1780, %v1784
      %v1787 = vshrl.u32 %v1398, 16
      %v1789 = vrot.slane %v1787, 4
      %v1790 = vshll.u32 %v1398, 16
      %v1792 = vrot.slane %v1790, 5
      %v1793 = vor.u32 %v1789, %v1792
      %v1794 = vrot.slane %v1793, 4
      %v1796 = vshll.u32 %v1399, 16
      %v1798 = vrot.slane %v1796, 5
      %v1799 = vsel %vm259, %v1794, %v1798
      %v1800 = vshrl.u32 %v1399, 16
      %v1802 = vrot.slane %v1800, 4
      %v1803 = vor.u32 %v1802, %v1798
      %v1804 = vrot.slane %v1803, 4
      %v1806 = vshll.u32 %v1400, 16
      %v1808 = vrot.slane %v1806, 5
      %v1809 = vsel %vm259, %v1804, %v1808
      %v1811 = vshrl.u32 %v1401, 16
      %v1813 = vrot.slane %v1811, 4
      %v1814 = vshll.u32 %v1401, 16
      %v1816 = vrot.slane %v1814, 5
      %v1817 = vor.u32 %v1813, %v1816
      %v1818 = vrot.slane %v1817, 4
      %v1820 = vshll.u32 %v1402, 16
      %v1822 = vrot.slane %v1820, 5
      %v1823 = vsel %vm259, %v1818, %v1822
      %v1824 = vshrl.u32 %v1402, 16
      %v1826 = vrot.slane %v1824, 4
      %v1827 = vor.u32 %v1826, %v1822
      %v1828 = vrot.slane %v1827, 4
      %v1830 = vshll.u32 %v1403, 16
      %v1832 = vrot.slane %v1830, 5
      %v1833 = vsel %vm259, %v1828, %v1832
      %v1835 = vshrl.u32 %v1404, 16
      %v1837 = vrot.slane %v1835, 4
      %v1838 = vshll.u32 %v1404, 16
      %v1840 = vrot.slane %v1838, 5
      %v1841 = vor.u32 %v1837, %v1840
      %v1842 = vrot.slane %v1841, 4
      %v1844 = vshll.u32 %v1405, 16
      %v1846 = vrot.slane %v1844, 5
      %v1847 = vsel %vm259, %v1842, %v1846
      %v1848 = vshrl.u32 %v1405, 16
      %v1850 = vrot.slane %v1848, 4
      %v1851 = vor.u32 %v1850, %v1846
      %v1852 = vrot.slane %v1851, 4
      %v1854 = vshll.u32 %v1406, 16
      %v1856 = vrot.slane %v1854, 5
      %v1857 = vsel %vm259, %v1852, %v1856
      %v1859 = vshrl.u32 %v1407, 16
      %v1861 = vrot.slane %v1859, 4
      %v1862 = vshll.u32 %v1407, 16
      %v1864 = vrot.slane %v1862, 5
      %v1865 = vor.u32 %v1861, %v1864
      %v1866 = vrot.slane %v1865, 4
      %v1868 = vshll.u32 %v1408, 16
      %v1870 = vrot.slane %v1868, 5
      %v1871 = vsel %vm259, %v1866, %v1870
      %v1872 = vshrl.u32 %v1408, 16
      %v1874 = vrot.slane %v1872, 4
      %v1875 = vor.u32 %v1874, %v1870
      %v1876 = vrot.slane %v1875, 4
      %v1878 = vshll.u32 %v1409, 16
      %v1880 = vrot.slane %v1878, 5
      %v1881 = vsel %vm259, %v1876, %v1880
      %v1883 = vshrl.u32 %v1410, 16
      %v1885 = vrot.slane %v1883, 4
      %v1886 = vshll.u32 %v1410, 16
      %v1888 = vrot.slane %v1886, 5
      %v1889 = vor.u32 %v1885, %v1888
      %v1890 = vrot.slane %v1889, 4
      %v1892 = vshll.u32 %v1411, 16
      %v1894 = vrot.slane %v1892, 5
      %v1895 = vsel %vm259, %v1890, %v1894
      %v1896 = vshrl.u32 %v1411, 16
      %v1898 = vrot.slane %v1896, 4
      %v1899 = vor.u32 %v1898, %v1894
      %v1900 = vrot.slane %v1899, 4
      %v1902 = vshll.u32 %v1412, 16
      %v1904 = vrot.slane %v1902, 5
      %v1905 = vsel %vm259, %v1900, %v1904
      %v1907 = vshrl.u32 %v1413, 16
      %v1909 = vrot.slane %v1907, 4
      %v1910 = vshll.u32 %v1413, 16
      %v1912 = vrot.slane %v1910, 5
      %v1913 = vor.u32 %v1909, %v1912
      %v1914 = vrot.slane %v1913, 4
      %v1916 = vshll.u32 %v1414, 16
      %v1918 = vrot.slane %v1916, 5
      %v1919 = vsel %vm259, %v1914, %v1918
      %v1920 = vshrl.u32 %v1414, 16
      %v1922 = vrot.slane %v1920, 4
      %v1923 = vor.u32 %v1922, %v1918
      %v1924 = vrot.slane %v1923, 4
      %v1926 = vshll.u32 %v1415, 16
      %v1928 = vrot.slane %v1926, 5
      %v1929 = vsel %vm259, %v1924, %v1928
      %s1930 = scalar_lea.vmem %s1, 512
      %v1931 = vld [vmem:[%s1930] sm:$0xf]
      %v1932 = vld [vmem:[%s1930 + $0x4] sm:$0xf]
      %v1933 = vld [vmem:[%s1930 + $0x8] sm:$0xf]
      %v1934 = vld [vmem:[%s1930 + $0xc] sm:$0xf]
      %v1935 = vld [vmem:[%s1930 + $0x10] sm:$0xf]
      %v1936 = vld [vmem:[%s1930 + $0x14] sm:$0xf]
      %v1937 = vld [vmem:[%s1930 + $0x18] sm:$0xf]
      %v1938 = vld [vmem:[%s1930 + $0x1c] sm:$0xf]
      %v1939 = vld [vmem:[%s1930 + $0x20] sm:$0xf]
      %v1940 = vld [vmem:[%s1930 + $0x24] sm:$0xf]
      %v1941 = vld [vmem:[%s1930 + $0x28] sm:$0xf]
      %v1942 = vld [vmem:[%s1930 + $0x2c] sm:$0xf]
      %v1943 = vld [vmem:[%s1930 + $0x30] sm:$0xf]
      %v1944 = vld [vmem:[%s1930 + $0x34] sm:$0xf]
      %v1945 = vld [vmem:[%s1930 + $0x38] sm:$0xf]
      %v1946 = vld [vmem:[%s1930 + $0x3c] sm:$0xf]
      %v1947 = vld [vmem:[%s1930 + $0x40] sm:$0xf]
      %v1948 = vld [vmem:[%s1930 + $0x44] sm:$0xf]
      %v1949 = vld [vmem:[%s1930 + $0x48] sm:$0xf]
      %v1950 = vld [vmem:[%s1930 + $0x4c] sm:$0xf]
      %v1951 = vld [vmem:[%s1930 + $0x50] sm:$0xf]
      %v1952 = vld [vmem:[%s1930 + $0x54] sm:$0xf]
      %v1953 = vld [vmem:[%s1930 + $0x58] sm:$0xf]
      %v1954 = vld [vmem:[%s1930 + $0x5c] sm:$0xf]
      %v1955 = vld [vmem:[%s1930 + $0x60] sm:$0xf]
      %v1956 = vld [vmem:[%s1930 + $0x64] sm:$0xf]
      %v1957 = vld [vmem:[%s1930 + $0x68] sm:$0xf]
      %v1958 = vld [vmem:[%s1930 + $0x6c] sm:$0xf]
      %v1959 = vld [vmem:[%s1930 + $0x70] sm:$0xf]
      %v1960 = vld [vmem:[%s1930 + $0x74] sm:$0xf]
      %v1961 = vld [vmem:[%s1930 + $0x78] sm:$0xf]
      %v1962 = vld [vmem:[%s1930 + $0x7c] sm:$0xf]
      %v1963 = vunpack.c.l.b16 %v1751
      %v1964 = vunpack.c.h.b16 %v1751
      %v1965 = vunpack.c.l.b16 %v1761
      %v1966 = vunpack.c.h.b16 %v1761
      %v1967 = vunpack.c.l.b16 %v1775
      %v1968 = vunpack.c.h.b16 %v1775
      %v1969 = vunpack.c.l.b16 %v1785
      %v1970 = vunpack.c.h.b16 %v1785
      %v1971 = vunpack.c.l.b16 %v1799
      %v1972 = vunpack.c.h.b16 %v1799
      %v1973 = vunpack.c.l.b16 %v1809
      %v1974 = vunpack.c.h.b16 %v1809
      %v1975 = vunpack.c.l.b16 %v1823
      %v1976 = vunpack.c.h.b16 %v1823
      %v1977 = vunpack.c.l.b16 %v1833
      %v1978 = vunpack.c.h.b16 %v1833
      %v1979 = vunpack.c.l.b16 %v1847
      %v1980 = vunpack.c.h.b16 %v1847
      %v1981 = vunpack.c.l.b16 %v1857
      %v1982 = vunpack.c.h.b16 %v1857
      %v1983 = vunpack.c.l.b16 %v1871
      %v1984 = vunpack.c.h.b16 %v1871
      %v1985 = vunpack.c.l.b16 %v1881
      %v1986 = vunpack.c.h.b16 %v1881
      %v1987 = vunpack.c.l.b16 %v1895
      %v1988 = vunpack.c.h.b16 %v1895
      %v1989 = vunpack.c.l.b16 %v1905
      %v1990 = vunpack.c.h.b16 %v1905
      %v1991 = vunpack.c.l.b16 %v1919
      %v1992 = vunpack.c.h.b16 %v1919
      %v1993 = vunpack.c.l.b16 %v1929
      %v1994 = vunpack.c.h.b16 %v1929
      %v1995 = vpack.c.b16 %v1965, %v1963
      %v1996 = vpack.c.b16 %v1966, %v1964
      %v1997 = vpack.c.b16 %v1969, %v1967
      %v1998 = vpack.c.b16 %v1970, %v1968
      %v1999 = vpack.c.b16 %v1973, %v1971
      %v2000 = vpack.c.b16 %v1974, %v1972
      %v2001 = vpack.c.b16 %v1977, %v1975
      %v2002 = vpack.c.b16 %v1978, %v1976
      %v2003 = vpack.c.b16 %v1981, %v1979
      %v2004 = vpack.c.b16 %v1982, %v1980
      %v2005 = vpack.c.b16 %v1985, %v1983
      %v2006 = vpack.c.b16 %v1986, %v1984
      %v2007 = vpack.c.b16 %v1989, %v1987
      %v2008 = vpack.c.b16 %v1990, %v1988
      %v2009 = vpack.c.b16 %v1993, %v1991
      %v2010 = vpack.c.b16 %v1994, %v1992
      %v2059 = vunpack.c.l.b16 %v1931
      %v2060 = vunpack.c.l.b16 %v1932
      %v2061 = vunpack.c.l.b16 %v1933
      %v2062 = vunpack.c.l.b16 %v1934
      %v2063 = vunpack.c.l.b16 %v1935
      %v2064 = vunpack.c.l.b16 %v1936
      %v2065 = vunpack.c.l.b16 %v1937
      %v2066 = vunpack.c.l.b16 %v1938
      %v2067 = vunpack.c.l.b16 %v1939
      %v2068 = vunpack.c.l.b16 %v1940
      %v2069 = vunpack.c.l.b16 %v1941
      %v2070 = vunpack.c.l.b16 %v1942
      %v2071 = vunpack.c.l.b16 %v1943
      %v2072 = vunpack.c.l.b16 %v1944
      %v2073 = vunpack.c.l.b16 %v1945
      %v2074 = vunpack.c.l.b16 %v1946
      %v2075 = vunpack.c.l.b16 %v1947
      %v2076 = vunpack.c.l.b16 %v1948
      %v2077 = vunpack.c.l.b16 %v1949
      %v2078 = vunpack.c.l.b16 %v1950
      %v2079 = vunpack.c.l.b16 %v1951
      %v2080 = vunpack.c.l.b16 %v1952
      %v2081 = vunpack.c.l.b16 %v1953
      %v2082 = vunpack.c.l.b16 %v1954
      %v2083 = vunpack.c.l.b16 %v1955
      %v2084 = vunpack.c.l.b16 %v1956
      %v2085 = vunpack.c.l.b16 %v1957
      %v2086 = vunpack.c.l.b16 %v1958
      %v2087 = vunpack.c.l.b16 %v1959
      %v2088 = vunpack.c.l.b16 %v1960
      %v2089 = vunpack.c.l.b16 %v1961
      %v2090 = vunpack.c.l.b16 %v1962
      %v2091 = vpack.c.b16 %v2060, %v2059
      %v2092 = vpack.c.b16 %v2062, %v2061
      %v2093 = vpack.c.b16 %v2064, %v2063
      %v2094 = vpack.c.b16 %v2066, %v2065
      %v2095 = vpack.c.b16 %v2068, %v2067
      %v2096 = vpack.c.b16 %v2070, %v2069
      %v2097 = vpack.c.b16 %v2072, %v2071
      %v2098 = vpack.c.b16 %v2074, %v2073
      %v2099 = vpack.c.b16 %v2076, %v2075
      %v2100 = vpack.c.b16 %v2078, %v2077
      %v2101 = vpack.c.b16 %v2080, %v2079
      %v2102 = vpack.c.b16 %v2082, %v2081
      %v2103 = vpack.c.b16 %v2084, %v2083
      %v2104 = vpack.c.b16 %v2086, %v2085
      %v2105 = vpack.c.b16 %v2088, %v2087
      %v2106 = vpack.c.b16 %v2090, %v2089
      %2123 = vmatprep.subr.bf16.mxu0 0
      %2124 = vmatpush1.bf16.msra.mxu0 %v2091
      %2125 = vmatprep.subr.bf16.mxu0 0
      %2126 = vmatpush1.bf16.msra.mxu0 %v2092
      %2127 = vmatprep.subr.bf16.mxu0 0
      %2128 = vmatpush1.bf16.msra.mxu0 %v2093
      %2129 = vmatprep.subr.bf16.mxu0 0
      %2130 = vmatpush1.bf16.msra.mxu0 %v2094
      %2131 = vmatprep.subr.bf16.mxu0 0
      %2132 = vmatpush1.bf16.msra.mxu0 %v2095
      %2133 = vmatprep.subr.bf16.mxu0 0
      %2134 = vmatpush1.bf16.msra.mxu0 %v2096
      %2135 = vmatprep.subr.bf16.mxu0 0
      %2136 = vmatpush1.bf16.msra.mxu0 %v2097
      %2137 = vmatprep.subr.bf16.mxu0 0
      %2138 = vmatpush1.bf16.msra.mxu0 %v2098
      %2139 = vmatprep.subr.bf16.mxu0 0
      %2140 = vmatpush1.bf16.msra.mxu0 %v2099
      %2141 = vmatprep.subr.bf16.mxu0 0
      %2142 = vmatpush1.bf16.msra.mxu0 %v2100
      %2143 = vmatprep.subr.bf16.mxu0 0
      %2144 = vmatpush1.bf16.msra.mxu0 %v2101
      %2145 = vmatprep.subr.bf16.mxu0 0
      %2146 = vmatpush1.bf16.msra.mxu0 %v2102
      %2147 = vmatprep.subr.bf16.mxu0 0
      %2148 = vmatpush1.bf16.msra.mxu0 %v2103
      %2149 = vmatprep.subr.bf16.mxu0 0
      %2150 = vmatpush1.bf16.msra.mxu0 %v2104
      %2151 = vmatprep.subr.bf16.mxu0 0
      %2152 = vmatpush1.bf16.msra.mxu0 %v2105
      %2153 = vmatprep.subr.bf16.mxu0 0
      %2154 = vmatpush1.bf16.msra.mxu0 %v2106
      %2155 = vmatprep.mubr.bf16.mxu0 %v1996
      %2156 = vmatmul.mubr.bf16.gmra.mrb[0].mxu0 %v1995
      %v2157 = vpop.f32.mrb[0].mxu0
      %v2158 = vadd.f32 0.0, %v2157
      %v2159 = vpop.f32.mrb[0].mxu0
      %v2160 = vpop.f32.mrb[0].mxu0
      %v2161 = vadd.f32 0.0, %v2160
      %v2162 = vpop.f32.mrb[0].mxu0
      %2163 = vmatprep.mubr.bf16.mxu0 %v1998
      %2164 = vmatmul.mubr.bf16.gmra.mrb[0].mxu0 %v1997
      %v2165 = vpop.f32.mrb[0].mxu0
      %v2166 = vadd.f32 0.0, %v2165
      %v2167 = vpop.f32.mrb[0].mxu0
      %v2168 = vpop.f32.mrb[0].mxu0
      %v2169 = vadd.f32 0.0, %v2168
      %v2170 = vpop.f32.mrb[0].mxu0
      %2171 = vmatprep.mubr.bf16.mxu0 %v2000
      %2172 = vmatmul.mubr.bf16.gmra.mrb[0].mxu0 %v1999
      %v2173 = vpop.f32.mrb[0].mxu0
      %v2174 = vadd.f32 0.0, %v2173
      %v2175 = vpop.f32.mrb[0].mxu0
      %v2176 = vpop.f32.mrb[0].mxu0
      %v2177 = vadd.f32 0.0, %v2176
      %v2178 = vpop.f32.mrb[0].mxu0
      %2179 = vmatprep.mubr.bf16.mxu0 %v2002
      %2180 = vmatmul.mubr.bf16.gmra.mrb[0].mxu0 %v2001
      %v2181 = vpop.f32.mrb[0].mxu0
      %v2182 = vadd.f32 0.0, %v2181
      %v2183 = vpop.f32.mrb[0].mxu0
      %v2184 = vpop.f32.mrb[0].mxu0
      %v2185 = vadd.f32 0.0, %v2184
      %v2186 = vpop.f32.mrb[0].mxu0
      %2187 = vmatprep.mubr.bf16.mxu0 %v2004
      %2188 = vmatmul.mubr.bf16.gmra.mrb[0].mxu0 %v2003
      %v2189 = vpop.f32.mrb[0].mxu0
      %v2190 = vadd.f32 0.0, %v2189
      %v2191 = vpop.f32.mrb[0].mxu0
      %v2192 = vpop.f32.mrb[0].mxu0
      %v2193 = vadd.f32 0.0, %v2192
      %v2194 = vpop.f32.mrb[0].mxu0
      %2195 = vmatprep.mubr.bf16.mxu0 %v2006
      %2196 = vmatmul.mubr.bf16.gmra.mrb[0].mxu0 %v2005
      %v2197 = vpop.f32.mrb[0].mxu0
      %v2198 = vadd.f32 0.0, %v2197
      %v2199 = vpop.f32.mrb[0].mxu0
      %v2200 = vpop.f32.mrb[0].mxu0
      %v2201 = vadd.f32 0.0, %v2200
      %v2202 = vpop.f32.mrb[0].mxu0
      %2203 = vmatprep.mubr.bf16.mxu0 %v2008
      %2204 = vmatmul.mubr.bf16.gmra.mrb[0].mxu0 %v2007
      %v2205 = vpop.f32.mrb[0].mxu0
      %v2206 = vadd.f32 0.0, %v2205
      %v2207 = vpop.f32.mrb[0].mxu0
      %v2208 = vpop.f32.mrb[0].mxu0
      %v2209 = vadd.f32 0.0, %v2208
      %v2210 = vpop.f32.mrb[0].mxu0
      %2211 = vmatprep.mubr.bf16.mxu0 %v2010
      %2212 = vmatmul.mubr.bf16.gmra.mrb[0].mxu0 %v2009
      %v2213 = vpop.f32.mrb[0].mxu0
      %v2214 = vadd.f32 0.0, %v2213
      %v2215 = vpop.f32.mrb[0].mxu0
      %v2216 = vpop.f32.mrb[0].mxu0
      %v2217 = vadd.f32 0.0, %v2216
      %v2218 = vpop.f32.mrb[0].mxu0
      %2219 = vdwg.mxu0
      %v2220 = vadd.f32 %v1722, %v2158
      %v2221 = vadd.f32 %v1723, %v2161
      %v2222 = vadd.f32 %v1724, %v2166
      %v2223 = vadd.f32 %v1725, %v2169
      %v2224 = vadd.f32 %v1726, %v2174
      %v2225 = vadd.f32 %v1727, %v2177
      %v2226 = vadd.f32 %v1728, %v2182
      %v2227 = vadd.f32 %v1729, %v2185
      %v2228 = vadd.f32 %v1730, %v2190
      %v2229 = vadd.f32 %v1731, %v2193
      %v2230 = vadd.f32 %v1732, %v2198
      %v2231 = vadd.f32 %v1733, %v2201
      %v2232 = vadd.f32 %v1734, %v2206
      %v2233 = vadd.f32 %v1735, %v2209
      %v2234 = vadd.f32 %v1736, %v2214
      %v2235 = vadd.f32 %v1737, %v2217
      %v2244 = vrot.slane %v1392, 5
      %v2245 = vrot.slane %v2244, 4
      %v2246 = vrot.slane %v1393, 5
      %v2247 = vsel %vm1025, %v2245, %v2246
      %v2248 = vrot.slane %v2246, 4
      %v2249 = vrot.slane %v1394, 5
      %v2250 = vsel %vm1025, %v2248, %v2249
      %v2251 = vrot.slane %v1395, 5
      %v2252 = vrot.slane %v2251, 4
      %v2253 = vrot.slane %v1396, 5
      %v2254 = vsel %vm1025, %v2252, %v2253
      %v2255 = vrot.slane %v2253, 4
      %v2256 = vrot.slane %v1397, 5
      %v2257 = vsel %vm1025, %v2255, %v2256
      %v2258 = vrot.slane %v1398, 5
      %v2259 = vrot.slane %v2258, 4
      %v2260 = vrot.slane %v1399, 5
      %v2261 = vsel %vm1025, %v2259, %v2260
      %v2262 = vrot.slane %v2260, 4
      %v2263 = vrot.slane %v1400, 5
      %v2264 = vsel %vm1025, %v2262, %v2263
      %v2265 = vrot.slane %v1401, 5
      %v2266 = vrot.slane %v2265, 4
      %v2267 = vrot.slane %v1402, 5
      %v2268 = vsel %vm1025, %v2266, %v2267
      %v2269 = vrot.slane %v2267, 4
      %v2270 = vrot.slane %v1403, 5
      %v2271 = vsel %vm1025, %v2269, %v2270
      %v2272 = vrot.slane %v1404, 5
      %v2273 = vrot.slane %v2272, 4
      %v2274 = vrot.slane %v1405, 5
      %v2275 = vsel %vm1025, %v2273, %v2274
      %v2276 = vrot.slane %v2274, 4
      %v2277 = vrot.slane %v1406, 5
      %v2278 = vsel %vm1025, %v2276, %v2277
      %v2279 = vrot.slane %v1407, 5
      %v2280 = vrot.slane %v2279, 4
      %v2281 = vrot.slane %v1408, 5
      %v2282 = vsel %vm1025, %v2280, %v2281
      %v2283 = vrot.slane %v2281, 4
      %v2284 = vrot.slane %v1409, 5
      %v2285 = vsel %vm1025, %v2283, %v2284
      %v2286 = vrot.slane %v1410, 5
      %v2287 = vrot.slane %v2286, 4
      %v2288 = vrot.slane %v1411, 5
      %v2289 = vsel %vm1025, %v2287, %v2288
      %v2290 = vrot.slane %v2288, 4
      %v2291 = vrot.slane %v1412, 5
      %v2292 = vsel %vm1025, %v2290, %v2291
      %v2293 = vrot.slane %v1413, 5
      %v2294 = vrot.slane %v2293, 4
      %v2295 = vrot.slane %v1414, 5
      %v2296 = vsel %vm1025, %v2294, %v2295
      %v2297 = vrot.slane %v2295, 4
      %v2298 = vrot.slane %v1415, 5
      %v2299 = vsel %vm1025, %v2297, %v2298
      %s2300 = scalar_lea.vmem %s1, 640
      %v2301 = vld [vmem:[%s2300] sm:$0xf]
      %v2302 = vld [vmem:[%s2300 + $0x4] sm:$0xf]
      %v2303 = vld [vmem:[%s2300 + $0x8] sm:$0xf]
      %v2304 = vld [vmem:[%s2300 + $0xc] sm:$0xf]
      %v2305 = vld [vmem:[%s2300 + $0x10] sm:$0xf]
      %v2306 = vld [vmem:[%s2300 + $0x14] sm:$0xf]
      %v2307 = vld [vmem:[%s2300 + $0x18] sm:$0xf]
      %v2308 = vld [vmem:[%s2300 + $0x1c] sm:$0xf]
      %v2309 = vld [vmem:[%s2300 + $0x20] sm:$0xf]
      %v2310 = vld [vmem:[%s2300 + $0x24] sm:$0xf]
      %v2311 = vld [vmem:[%s2300 + $0x28] sm:$0xf]
      %v2312 = vld [vmem:[%s2300 + $0x2c] sm:$0xf]
      %v2313 = vld [vmem:[%s2300 + $0x30] sm:$0xf]
      %v2314 = vld [vmem:[%s2300 + $0x34] sm:$0xf]
      %v2315 = vld [vmem:[%s2300 + $0x38] sm:$0xf]
      %v2316 = vld [vmem:[%s2300 + $0x3c] sm:$0xf]
      %v2317 = vld [vmem:[%s2300 + $0x40] sm:$0xf]
      %v2318 = vld [vmem:[%s2300 + $0x44] sm:$0xf]
      %v2319 = vld [vmem:[%s2300 + $0x48] sm:$0xf]
      %v2320 = vld [vmem:[%s2300 + $0x4c] sm:$0xf]
      %v2321 = vld [vmem:[%s2300 + $0x50] sm:$0xf]
      %v2322 = vld [vmem:[%s2300 + $0x54] sm:$0xf]
      %v2323 = vld [vmem:[%s2300 + $0x58] sm:$0xf]
      %v2324 = vld [vmem:[%s2300 + $0x5c] sm:$0xf]
      %v2325 = vld [vmem:[%s2300 + $0x60] sm:$0xf]
      %v2326 = vld [vmem:[%s2300 + $0x64] sm:$0xf]
      %v2327 = vld [vmem:[%s2300 + $0x68] sm:$0xf]
      %v2328 = vld [vmem:[%s2300 + $0x6c] sm:$0xf]
      %v2329 = vld [vmem:[%s2300 + $0x70] sm:$0xf]
      %v2330 = vld [vmem:[%s2300 + $0x74] sm:$0xf]
      %v2331 = vld [vmem:[%s2300 + $0x78] sm:$0xf]
      %v2332 = vld [vmem:[%s2300 + $0x7c] sm:$0xf]
      %v2333 = vunpack.c.l.b16 %v2247
      %v2334 = vunpack.c.h.b16 %v2247
      %v2335 = vunpack.c.l.b16 %v2250
      %v2336 = vunpack.c.h.b16 %v2250
      %v2337 = vunpack.c.l.b16 %v2254
      %v2338 = vunpack.c.h.b16 %v2254
      %v2339 = vunpack.c.l.b16 %v2257
      %v2340 = vunpack.c.h.b16 %v2257
      %v2341 = vunpack.c.l.b16 %v2261
      %v2342 = vunpack.c.h.b16 %v2261
      %v2343 = vunpack.c.l.b16 %v2264
      %v2344 = vunpack.c.h.b16 %v2264
      %v2345 = vunpack.c.l.b16 %v2268
      %v2346 = vunpack.c.h.b16 %v2268
      %v2347 = vunpack.c.l.b16 %v2271
      %v2348 = vunpack.c.h.b16 %v2271
      %v2349 = vunpack.c.l.b16 %v2275
      %v2350 = vunpack.c.h.b16 %v2275
      %v2351 = vunpack.c.l.b16 %v2278
      %v2352 = vunpack.c.h.b16 %v2278
      %v2353 = vunpack.c.l.b16 %v2282
      %v2354 = vunpack.c.h.b16 %v2282
      %v2355 = vunpack.c.l.b16 %v2285
      %v2356 = vunpack.c.h.b16 %v2285
      %v2357 = vunpack.c.l.b16 %v2289
      %v2358 = vunpack.c.h.b16 %v2289
      %v2359 = vunpack.c.l.b16 %v2292
      %v2360 = vunpack.c.h.b16 %v2292
      %v2361 = vunpack.c.l.b16 %v2296
      %v2362 = vunpack.c.h.b16 %v2296
      %v2363 = vunpack.c.l.b16 %v2299
      %v2364 = vunpack.c.h.b16 %v2299
      %v2365 = vpack.c.b16 %v2335, %v2333
      %v2366 = vpack.c.b16 %v2336, %v2334
      %v2367 = vpack.c.b16 %v2339, %v2337
      %v2368 = vpack.c.b16 %v2340, %v2338
      %v2369 = vpack.c.b16 %v2343, %v2341
      %v2370 = vpack.c.b16 %v2344, %v2342
      %v2371 = vpack.c.b16 %v2347, %v2345
      %v2372 = vpack.c.b16 %v2348, %v2346
      %v2373 = vpack.c.b16 %v2351, %v2349
      %v2374 = vpack.c.b16 %v2352, %v2350
      %v2375 = vpack.c.b16 %v2355, %v2353
      %v2376 = vpack.c.b16 %v2356, %v2354
      %v2377 = vpack.c.b16 %v2359, %v2357
      %v2378 = vpack.c.b16 %v2360, %v2358
      %v2379 = vpack.c.b16 %v2363, %v2361
      %v2380 = vpack.c.b16 %v2364, %v2362
      %v2429 = vunpack.c.l.b16 %v2301
      %v2430 = vunpack.c.l.b16 %v2302
      %v2431 = vunpack.c.l.b16 %v2303
      %v2432 = vunpack.c.l.b16 %v2304
      %v2433 = vunpack.c.l.b16 %v2305
      %v2434 = vunpack.c.l.b16 %v2306
      %v2435 = vunpack.c.l.b16 %v2307
      %v2436 = vunpack.c.l.b16 %v2308
      %v2437 = vunpack.c.l.b16 %v2309
      %v2438 = vunpack.c.l.b16 %v2310
      %v2439 = vunpack.c.l.b16 %v2311
      %v2440 = vunpack.c.l.b16 %v2312
      %v2441 = vunpack.c.l.b16 %v2313
      %v2442 = vunpack.c.l.b16 %v2314
      %v2443 = vunpack.c.l.b16 %v2315
      %v2444 = vunpack.c.l.b16 %v2316
      %v2445 = vunpack.c.l.b16 %v2317
      %v2446 = vunpack.c.l.b16 %v2318
      %v2447 = vunpack.c.l.b16 %v2319
      %v2448 = vunpack.c.l.b16 %v2320
      %v2449 = vunpack.c.l.b16 %v2321
      %v2450 = vunpack.c.l.b16 %v2322
      %v2451 = vunpack.c.l.b16 %v2323
      %v2452 = vunpack.c.l.b16 %v2324
      %v2453 = vunpack.c.l.b16 %v2325
      %v2454 = vunpack.c.l.b16 %v2326
      %v2455 = vunpack.c.l.b16 %v2327
      %v2456 = vunpack.c.l.b16 %v2328
      %v2457 = vunpack.c.l.b16 %v2329
      %v2458 = vunpack.c.l.b16 %v2330
      %v2459 = vunpack.c.l.b16 %v2331
      %v2460 = vunpack.c.l.b16 %v2332
      %v2461 = vpack.c.b16 %v2430, %v2429
      %v2462 = vpack.c.b16 %v2432, %v2431
      %v2463 = vpack.c.b16 %v2434, %v2433
      %v2464 = vpack.c.b16 %v2436, %v2435
      %v2465 = vpack.c.b16 %v2438, %v2437
      %v2466 = vpack.c.b16 %v2440, %v2439
      %v2467 = vpack.c.b16 %v2442, %v2441
      %v2468 = vpack.c.b16 %v2444, %v2443
      %v2469 = vpack.c.b16 %v2446, %v2445
      %v2470 = vpack.c.b16 %v2448, %v2447
      %v2471 = vpack.c.b16 %v2450, %v2449
      %v2472 = vpack.c.b16 %v2452, %v2451
      %v2473 = vpack.c.b16 %v2454, %v2453
      %v2474 = vpack.c.b16 %v2456, %v2455
      %v2475 = vpack.c.b16 %v2458, %v2457
      %v2476 = vpack.c.b16 %v2460, %v2459
      %2493 = vmatprep.subr.bf16.mxu0 0
      %2494 = vmatpush1.bf16.msra.mxu0 %v2461
      %2495 = vmatprep.subr.bf16.mxu0 0
      %2496 = vmatpush1.bf16.msra.mxu0 %v2462
      %2497 = vmatprep.subr.bf16.mxu0 0
      %2498 = vmatpush1.bf16.msra.mxu0 %v2463
      %2499 = vmatprep.subr.bf16.mxu0 0
      %2500 = vmatpush1.bf16.msra.mxu0 %v2464
      %2501 = vmatprep.subr.bf16.mxu0 0
      %2502 = vmatpush1.bf16.msra.mxu0 %v2465
      %2503 = vmatprep.subr.bf16.mxu0 0
      %2504 = vmatpush1.bf16.msra.mxu0 %v2466
      %2505 = vmatprep.subr.bf16.mxu0 0
      %2506 = vmatpush1.bf16.msra.mxu0 %v2467
      %2507 = vmatprep.subr.bf16.mxu0 0
      %2508 = vmatpush1.bf16.msra.mxu0 %v2468
      %2509 = vmatprep.subr.bf16.mxu0 0
      %2510 = vmatpush1.bf16.msra.mxu0 %v2469
      %2511 = vmatprep.subr.bf16.mxu0 0
      %2512 = vmatpush1.bf16.msra.mxu0 %v2470
      %2513 = vmatprep.subr.bf16.mxu0 0
      %2514 = vmatpush1.bf16.msra.mxu0 %v2471
      %2515 = vmatprep.subr.bf16.mxu0 0
      %2516 = vmatpush1.bf16.msra.mxu0 %v2472
      %2517 = vmatprep.subr.bf16.mxu0 0
      %2518 = vmatpush1.bf16.msra.mxu0 %v2473
      %2519 = vmatprep.subr.bf16.mxu0 0
      %2520 = vmatpush1.bf16.msra.mxu0 %v2474
      %2521 = vmatprep.subr.bf16.mxu0 0
      %2522 = vmatpush1.bf16.msra.mxu0 %v2475
      %2523 = vmatprep.subr.bf16.mxu0 0
      %2524 = vmatpush1.bf16.msra.mxu0 %v2476
      %2525 = vmatprep.mubr.bf16.mxu0 %v2366
      %2526 = vmatmul.mubr.bf16.gmra.mrb[0].mxu0 %v2365
      %v2527 = vpop.f32.mrb[0].mxu0
      %v2528 = vadd.f32 0.0, %v2527
      %v2529 = vpop.f32.mrb[0].mxu0
      %v2530 = vpop.f32.mrb[0].mxu0
      %v2531 = vadd.f32 0.0, %v2530
      %v2532 = vpop.f32.mrb[0].mxu0
      %2533 = vmatprep.mubr.bf16.mxu0 %v2368
      %2534 = vmatmul.mubr.bf16.gmra.mrb[0].mxu0 %v2367
      %v2535 = vpop.f32.mrb[0].mxu0
      %v2536 = vadd.f32 0.0, %v2535
      %v2537 = vpop.f32.mrb[0].mxu0
      %v2538 = vpop.f32.mrb[0].mxu0
      %v2539 = vadd.f32 0.0, %v2538
      %v2540 = vpop.f32.mrb[0].mxu0
      %2541 = vmatprep.mubr.bf16.mxu0 %v2370
      %2542 = vmatmul.mubr.bf16.gmra.mrb[0].mxu0 %v2369
      %v2543 = vpop.f32.mrb[0].mxu0
      %v2544 = vadd.f32 0.0, %v2543
      %v2545 = vpop.f32.mrb[0].mxu0
      %v2546 = vpop.f32.mrb[0].mxu0
      %v2547 = vadd.f32 0.0, %v2546
      %v2548 = vpop.f32.mrb[0].mxu0
      %2549 = vmatprep.mubr.bf16.mxu0 %v2372
      %2550 = vmatmul.mubr.bf16.gmra.mrb[0].mxu0 %v2371
      %v2551 = vpop.f32.mrb[0].mxu0
      %v2552 = vadd.f32 0.0, %v2551
      %v2553 = vpop.f32.mrb[0].mxu0
      %v2554 = vpop.f32.mrb[0].mxu0
      %v2555 = vadd.f32 0.0, %v2554
      %v2556 = vpop.f32.mrb[0].mxu0
      %2557 = vmatprep.mubr.bf16.mxu0 %v2374
      %2558 = vmatmul.mubr.bf16.gmra.mrb[0].mxu0 %v2373
      %v2559 = vpop.f32.mrb[0].mxu0
      %v2560 = vadd.f32 0.0, %v2559
      %v2561 = vpop.f32.mrb[0].mxu0
      %v2562 = vpop.f32.mrb[0].mxu0
      %v2563 = vadd.f32 0.0, %v2562
      %v2564 = vpop.f32.mrb[0].mxu0
      %2565 = vmatprep.mubr.bf16.mxu0 %v2376
      %2566 = vmatmul.mubr.bf16.gmra.mrb[0].mxu0 %v2375
      %v2567 = vpop.f32.mrb[0].mxu0
      %v2568 = vadd.f32 0.0, %v2567
      %v2569 = vpop.f32.mrb[0].mxu0
      %v2570 = vpop.f32.mrb[0].mxu0
      %v2571 = vadd.f32 0.0, %v2570
      %v2572 = vpop.f32.mrb[0].mxu0
      %2573 = vmatprep.mubr.bf16.mxu0 %v2378
      %2574 = vmatmul.mubr.bf16.gmra.mrb[0].mxu0 %v2377
      %v2575 = vpop.f32.mrb[0].mxu0
      %v2576 = vadd.f32 0.0, %v2575
      %v2577 = vpop.f32.mrb[0].mxu0
      %v2578 = vpop.f32.mrb[0].mxu0
      %v2579 = vadd.f32 0.0, %v2578
      %v2580 = vpop.f32.mrb[0].mxu0
      %2581 = vmatprep.mubr.bf16.mxu0 %v2380
      %2582 = vmatmul.mubr.bf16.gmra.mrb[0].mxu0 %v2379
      %v2583 = vpop.f32.mrb[0].mxu0
      %v2584 = vadd.f32 0.0, %v2583
      %v2585 = vpop.f32.mrb[0].mxu0
      %v2586 = vpop.f32.mrb[0].mxu0
      %v2587 = vadd.f32 0.0, %v2586
      %v2588 = vpop.f32.mrb[0].mxu0
      %2589 = vdwg.mxu0
      %v2590 = vadd.f32 %v2220, %v2528
      %v2591 = vadd.f32 %v2221, %v2531
      %v2592 = vadd.f32 %v2222, %v2536
      %v2593 = vadd.f32 %v2223, %v2539
      %v2594 = vadd.f32 %v2224, %v2544
      %v2595 = vadd.f32 %v2225, %v2547
      %v2596 = vadd.f32 %v2226, %v2552
      %v2597 = vadd.f32 %v2227, %v2555
      %v2598 = vadd.f32 %v2228, %v2560
      %v2599 = vadd.f32 %v2229, %v2563
      %v2600 = vadd.f32 %v2230, %v2568
      %v2601 = vadd.f32 %v2231, %v2571
      %v2602 = vadd.f32 %v2232, %v2576
      %v2603 = vadd.f32 %v2233, %v2579
      %v2604 = vadd.f32 %v2234, %v2584
      %v2605 = vadd.f32 %v2235, %v2587
      %s2606 = sadd.s32 %s197, 2
      %s2607 = smul.u32 %s2606, 6
      %s2608 = smul.addr %s2607, 4
      %s2609 = scalar_lea.vmem %s184, %s2608
      %v2610 = vld [vmem:[%s2609] sm:$0xff]
      %v2611 = vld [vmem:[%s2609 + $0x8] sm:$0xff]
      %v2612 = vld [vmem:[%s2609 + $0x10] sm:$0x11]
      %v2613 = vld [vmem:[%s2609 + $0x18] sm:$0xff]
      %v2614 = vld [vmem:[%s2609 + $0x20] sm:$0xff]
      %v2615 = vld [vmem:[%s2609 + $0x28] sm:$0x11]
      %v2616 = vld [vmem:[%s2609 + $0x30] sm:$0xff]
      %v2617 = vld [vmem:[%s2609 + $0x38] sm:$0xff]
      %v2618 = vld [vmem:[%s2609 + $0x40] sm:$0x11]
      %v2619 = vld [vmem:[%s2609 + $0x48] sm:$0xff]
      %v2620 = vld [vmem:[%s2609 + $0x50] sm:$0xff]
      %v2621 = vld [vmem:[%s2609 + $0x58] sm:$0x11]
      %v2622 = vld [vmem:[%s2609 + $0x60] sm:$0xff]
      %v2623 = vld [vmem:[%s2609 + $0x68] sm:$0xff]
      %v2624 = vld [vmem:[%s2609 + $0x70] sm:$0x11]
      %v2625 = vld [vmem:[%s2609 + $0x78] sm:$0xff]
      %v2626 = vld [vmem:[%s2609 + $0x80] sm:$0xff]
      %v2627 = vld [vmem:[%s2609 + $0x88] sm:$0x11]
      %v2628 = vld [vmem:[%s2609 + $0x90] sm:$0xff]
      %v2629 = vld [vmem:[%s2609 + $0x98] sm:$0xff]
      %v2630 = vld [vmem:[%s2609 + $0xa0] sm:$0x11]
      %v2631 = vld [vmem:[%s2609 + $0xa8] sm:$0xff]
      %v2632 = vld [vmem:[%s2609 + $0xb0] sm:$0xff]
      %v2633 = vld [vmem:[%s2609 + $0xb8] sm:$0x11]
      %s2634 = scalar_lea.vmem %s1, 768
      %v2635 = vld [vmem:[%s2634] sm:$0xf]
      %v2636 = vld [vmem:[%s2634 + $0x4] sm:$0xf]
      %v2637 = vld [vmem:[%s2634 + $0x8] sm:$0xf]
      %v2638 = vld [vmem:[%s2634 + $0xc] sm:$0xf]
      %v2639 = vld [vmem:[%s2634 + $0x10] sm:$0xf]
      %v2640 = vld [vmem:[%s2634 + $0x14] sm:$0xf]
      %v2641 = vld [vmem:[%s2634 + $0x18] sm:$0xf]
      %v2642 = vld [vmem:[%s2634 + $0x1c] sm:$0xf]
      %v2643 = vld [vmem:[%s2634 + $0x20] sm:$0xf]
      %v2644 = vld [vmem:[%s2634 + $0x24] sm:$0xf]
      %v2645 = vld [vmem:[%s2634 + $0x28] sm:$0xf]
      %v2646 = vld [vmem:[%s2634 + $0x2c] sm:$0xf]
      %v2647 = vld [vmem:[%s2634 + $0x30] sm:$0xf]
      %v2648 = vld [vmem:[%s2634 + $0x34] sm:$0xf]
      %v2649 = vld [vmem:[%s2634 + $0x38] sm:$0xf]
      %v2650 = vld [vmem:[%s2634 + $0x3c] sm:$0xf]
      %v2651 = vld [vmem:[%s2634 + $0x40] sm:$0xf]
      %v2652 = vld [vmem:[%s2634 + $0x44] sm:$0xf]
      %v2653 = vld [vmem:[%s2634 + $0x48] sm:$0xf]
      %v2654 = vld [vmem:[%s2634 + $0x4c] sm:$0xf]
      %v2655 = vld [vmem:[%s2634 + $0x50] sm:$0xf]
      %v2656 = vld [vmem:[%s2634 + $0x54] sm:$0xf]
      %v2657 = vld [vmem:[%s2634 + $0x58] sm:$0xf]
      %v2658 = vld [vmem:[%s2634 + $0x5c] sm:$0xf]
      %v2659 = vld [vmem:[%s2634 + $0x60] sm:$0xf]
      %v2660 = vld [vmem:[%s2634 + $0x64] sm:$0xf]
      %v2661 = vld [vmem:[%s2634 + $0x68] sm:$0xf]
      %v2662 = vld [vmem:[%s2634 + $0x6c] sm:$0xf]
      %v2663 = vld [vmem:[%s2634 + $0x70] sm:$0xf]
      %v2664 = vld [vmem:[%s2634 + $0x74] sm:$0xf]
      %v2665 = vld [vmem:[%s2634 + $0x78] sm:$0xf]
      %v2666 = vld [vmem:[%s2634 + $0x7c] sm:$0xf]
      %v2683 = vunpack.c.l.b16 %v2610
      %v2684 = vunpack.c.h.b16 %v2610
      %v2685 = vunpack.c.l.b16 %v2611
      %v2686 = vunpack.c.h.b16 %v2611
      %v2687 = vunpack.c.l.b16 %v2613
      %v2688 = vunpack.c.h.b16 %v2613
      %v2689 = vunpack.c.l.b16 %v2614
      %v2690 = vunpack.c.h.b16 %v2614
      %v2691 = vunpack.c.l.b16 %v2616
      %v2692 = vunpack.c.h.b16 %v2616
      %v2693 = vunpack.c.l.b16 %v2617
      %v2694 = vunpack.c.h.b16 %v2617
      %v2695 = vunpack.c.l.b16 %v2619
      %v2696 = vunpack.c.h.b16 %v2619
      %v2697 = vunpack.c.l.b16 %v2620
      %v2698 = vunpack.c.h.b16 %v2620
      %v2699 = vunpack.c.l.b16 %v2622
      %v2700 = vunpack.c.h.b16 %v2622
      %v2701 = vunpack.c.l.b16 %v2623
      %v2702 = vunpack.c.h.b16 %v2623
      %v2703 = vunpack.c.l.b16 %v2625
      %v2704 = vunpack.c.h.b16 %v2625
      %v2705 = vunpack.c.l.b16 %v2626
      %v2706 = vunpack.c.h.b16 %v2626
      %v2707 = vunpack.c.l.b16 %v2628
      %v2708 = vunpack.c.h.b16 %v2628
      %v2709 = vunpack.c.l.b16 %v2629
      %v2710 = vunpack.c.h.b16 %v2629
      %v2711 = vunpack.c.l.b16 %v2631
      %v2712 = vunpack.c.h.b16 %v2631
      %v2713 = vunpack.c.l.b16 %v2632
      %v2714 = vunpack.c.h.b16 %v2632
      %v2715 = vpack.c.b16 %v2685, %v2683
      %v2716 = vpack.c.b16 %v2686, %v2684
      %v2717 = vpack.c.b16 %v2689, %v2687
      %v2718 = vpack.c.b16 %v2690, %v2688
      %v2719 = vpack.c.b16 %v2693, %v2691
      %v2720 = vpack.c.b16 %v2694, %v2692
      %v2721 = vpack.c.b16 %v2697, %v2695
      %v2722 = vpack.c.b16 %v2698, %v2696
      %v2723 = vpack.c.b16 %v2701, %v2699
      %v2724 = vpack.c.b16 %v2702, %v2700
      %v2725 = vpack.c.b16 %v2705, %v2703
      %v2726 = vpack.c.b16 %v2706, %v2704
      %v2727 = vpack.c.b16 %v2709, %v2707
      %v2728 = vpack.c.b16 %v2710, %v2708
      %v2729 = vpack.c.b16 %v2713, %v2711
      %v2730 = vpack.c.b16 %v2714, %v2712
      %v2779 = vunpack.c.l.b16 %v2635
      %v2780 = vunpack.c.l.b16 %v2636
      %v2781 = vunpack.c.l.b16 %v2637
      %v2782 = vunpack.c.l.b16 %v2638
      %v2783 = vunpack.c.l.b16 %v2639
      %v2784 = vunpack.c.l.b16 %v2640
      %v2785 = vunpack.c.l.b16 %v2641
      %v2786 = vunpack.c.l.b16 %v2642
      %v2787 = vunpack.c.l.b16 %v2643
      %v2788 = vunpack.c.l.b16 %v2644
      %v2789 = vunpack.c.l.b16 %v2645
      %v2790 = vunpack.c.l.b16 %v2646
      %v2791 = vunpack.c.l.b16 %v2647
      %v2792 = vunpack.c.l.b16 %v2648
      %v2793 = vunpack.c.l.b16 %v2649
      %v2794 = vunpack.c.l.b16 %v2650
      %v2795 = vunpack.c.l.b16 %v2651
      %v2796 = vunpack.c.l.b16 %v2652
      %v2797 = vunpack.c.l.b16 %v2653
      %v2798 = vunpack.c.l.b16 %v2654
      %v2799 = vunpack.c.l.b16 %v2655
      %v2800 = vunpack.c.l.b16 %v2656
      %v2801 = vunpack.c.l.b16 %v2657
      %v2802 = vunpack.c.l.b16 %v2658
      %v2803 = vunpack.c.l.b16 %v2659
      %v2804 = vunpack.c.l.b16 %v2660
      %v2805 = vunpack.c.l.b16 %v2661
      %v2806 = vunpack.c.l.b16 %v2662
      %v2807 = vunpack.c.l.b16 %v2663
      %v2808 = vunpack.c.l.b16 %v2664
      %v2809 = vunpack.c.l.b16 %v2665
      %v2810 = vunpack.c.l.b16 %v2666
      %v2811 = vpack.c.b16 %v2780, %v2779
      %v2812 = vpack.c.b16 %v2782, %v2781
      %v2813 = vpack.c.b16 %v2784, %v2783
      %v2814 = vpack.c.b16 %v2786, %v2785
      %v2815 = vpack.c.b16 %v2788, %v2787
      %v2816 = vpack.c.b16 %v2790, %v2789
      %v2817 = vpack.c.b16 %v2792, %v2791
      %v2818 = vpack.c.b16 %v2794, %v2793
      %v2819 = vpack.c.b16 %v2796, %v2795
      %v2820 = vpack.c.b16 %v2798, %v2797
      %v2821 = vpack.c.b16 %v2800, %v2799
      %v2822 = vpack.c.b16 %v2802, %v2801
      %v2823 = vpack.c.b16 %v2804, %v2803
      %v2824 = vpack.c.b16 %v2806, %v2805
      %v2825 = vpack.c.b16 %v2808, %v2807
      %v2826 = vpack.c.b16 %v2810, %v2809
      %2843 = vmatprep.subr.bf16.mxu0 0
      %2844 = vmatpush1.bf16.msra.mxu0 %v2811
      %2845 = vmatprep.subr.bf16.mxu0 0
      %2846 = vmatpush1.bf16.msra.mxu0 %v2812
      %2847 = vmatprep.subr.bf16.mxu0 0
      %2848 = vmatpush1.bf16.msra.mxu0 %v2813
      %2849 = vmatprep.subr.bf16.mxu0 0
      %2850 = vmatpush1.bf16.msra.mxu0 %v2814
      %2851 = vmatprep.subr.bf16.mxu0 0
      %2852 = vmatpush1.bf16.msra.mxu0 %v2815
      %2853 = vmatprep.subr.bf16.mxu0 0
      %2854 = vmatpush1.bf16.msra.mxu0 %v2816
      %2855 = vmatprep.subr.bf16.mxu0 0
      %2856 = vmatpush1.bf16.msra.mxu0 %v2817
      %2857 = vmatprep.subr.bf16.mxu0 0
      %2858 = vmatpush1.bf16.msra.mxu0 %v2818
      %2859 = vmatprep.subr.bf16.mxu0 0
      %2860 = vmatpush1.bf16.msra.mxu0 %v2819
      %2861 = vmatprep.subr.bf16.mxu0 0
      %2862 = vmatpush1.bf16.msra.mxu0 %v2820
      %2863 = vmatprep.subr.bf16.mxu0 0
      %2864 = vmatpush1.bf16.msra.mxu0 %v2821
      %2865 = vmatprep.subr.bf16.mxu0 0
      %2866 = vmatpush1.bf16.msra.mxu0 %v2822
      %2867 = vmatprep.subr.bf16.mxu0 0
      %2868 = vmatpush1.bf16.msra.mxu0 %v2823
      %2869 = vmatprep.subr.bf16.mxu0 0
      %2870 = vmatpush1.bf16.msra.mxu0 %v2824
      %2871 = vmatprep.subr.bf16.mxu0 0
      %2872 = vmatpush1.bf16.msra.mxu0 %v2825
      %2873 = vmatprep.subr.bf16.mxu0 0
      %2874 = vmatpush1.bf16.msra.mxu0 %v2826
      %2875 = vmatprep.mubr.bf16.mxu0 %v2716
      %2876 = vmatmul.mubr.bf16.gmra.mrb[0].mxu0 %v2715
      %v2877 = vpop.f32.mrb[0].mxu0
      %v2878 = vadd.f32 0.0, %v2877
      %v2879 = vpop.f32.mrb[0].mxu0
      %v2880 = vpop.f32.mrb[0].mxu0
      %v2881 = vadd.f32 0.0, %v2880
      %v2882 = vpop.f32.mrb[0].mxu0
      %2883 = vmatprep.mubr.bf16.mxu0 %v2718
      %2884 = vmatmul.mubr.bf16.gmra.mrb[0].mxu0 %v2717
      %v2885 = vpop.f32.mrb[0].mxu0
      %v2886 = vadd.f32 0.0, %v2885
      %v2887 = vpop.f32.mrb[0].mxu0
      %v2888 = vpop.f32.mrb[0].mxu0
      %v2889 = vadd.f32 0.0, %v2888
      %v2890 = vpop.f32.mrb[0].mxu0
      %2891 = vmatprep.mubr.bf16.mxu0 %v2720
      %2892 = vmatmul.mubr.bf16.gmra.mrb[0].mxu0 %v2719
      %v2893 = vpop.f32.mrb[0].mxu0
      %v2894 = vadd.f32 0.0, %v2893
      %v2895 = vpop.f32.mrb[0].mxu0
      %v2896 = vpop.f32.mrb[0].mxu0
      %v2897 = vadd.f32 0.0, %v2896
      %v2898 = vpop.f32.mrb[0].mxu0
      %2899 = vmatprep.mubr.bf16.mxu0 %v2722
      %2900 = vmatmul.mubr.bf16.gmra.mrb[0].mxu0 %v2721
      %v2901 = vpop.f32.mrb[0].mxu0
      %v2902 = vadd.f32 0.0, %v2901
      %v2903 = vpop.f32.mrb[0].mxu0
      %v2904 = vpop.f32.mrb[0].mxu0
      %v2905 = vadd.f32 0.0, %v2904
      %v2906 = vpop.f32.mrb[0].mxu0
      %2907 = vmatprep.mubr.bf16.mxu0 %v2724
      %2908 = vmatmul.mubr.bf16.gmra.mrb[0].mxu0 %v2723
      %v2909 = vpop.f32.mrb[0].mxu0
      %v2910 = vadd.f32 0.0, %v2909
      %v2911 = vpop.f32.mrb[0].mxu0
      %v2912 = vpop.f32.mrb[0].mxu0
      %v2913 = vadd.f32 0.0, %v2912
      %v2914 = vpop.f32.mrb[0].mxu0
      %2915 = vmatprep.mubr.bf16.mxu0 %v2726
      %2916 = vmatmul.mubr.bf16.gmra.mrb[0].mxu0 %v2725
      %v2917 = vpop.f32.mrb[0].mxu0
      %v2918 = vadd.f32 0.0, %v2917
      %v2919 = vpop.f32.mrb[0].mxu0
      %v2920 = vpop.f32.mrb[0].mxu0
      %v2921 = vadd.f32 0.0, %v2920
      %v2922 = vpop.f32.mrb[0].mxu0
      %2923 = vmatprep.mubr.bf16.mxu0 %v2728
      %2924 = vmatmul.mubr.bf16.gmra.mrb[0].mxu0 %v2727
      %v2925 = vpop.f32.mrb[0].mxu0
      %v2926 = vadd.f32 0.0, %v2925
      %v2927 = vpop.f32.mrb[0].mxu0
      %v2928 = vpop.f32.mrb[0].mxu0
      %v2929 = vadd.f32 0.0, %v2928
      %v2930 = vpop.f32.mrb[0].mxu0
      %2931 = vmatprep.mubr.bf16.mxu0 %v2730
      %2932 = vmatmul.mubr.bf16.gmra.mrb[0].mxu0 %v2729
      %v2933 = vpop.f32.mrb[0].mxu0
      %v2934 = vadd.f32 0.0, %v2933
      %v2935 = vpop.f32.mrb[0].mxu0
      %v2936 = vpop.f32.mrb[0].mxu0
      %v2937 = vadd.f32 0.0, %v2936
      %v2938 = vpop.f32.mrb[0].mxu0
      %2939 = vdwg.mxu0
      %v2940 = vadd.f32 %v2590, %v2878
      %v2941 = vadd.f32 %v2591, %v2881
      %v2942 = vadd.f32 %v2592, %v2886
      %v2943 = vadd.f32 %v2593, %v2889
      %v2944 = vadd.f32 %v2594, %v2894
      %v2945 = vadd.f32 %v2595, %v2897
      %v2946 = vadd.f32 %v2596, %v2902
      %v2947 = vadd.f32 %v2597, %v2905
      %v2948 = vadd.f32 %v2598, %v2910
      %v2949 = vadd.f32 %v2599, %v2913
      %v2950 = vadd.f32 %v2600, %v2918
      %v2951 = vadd.f32 %v2601, %v2921
      %v2952 = vadd.f32 %v2602, %v2926
      %v2953 = vadd.f32 %v2603, %v2929
      %v2954 = vadd.f32 %v2604, %v2934
      %v2955 = vadd.f32 %v2605, %v2937
      %v2957 = vshrl.u32 %v2610, 16
      %v2959 = vrot.slane %v2957, 4
      %v2960 = vshll.u32 %v2610, 16
      %v2962 = vrot.slane %v2960, 5
      %v2963 = vor.u32 %v2959, %v2962
      %v2964 = vrot.slane %v2963, 4
      %v2966 = vshll.u32 %v2611, 16
      %v2968 = vrot.slane %v2966, 5
      %v2969 = vsel %vm259, %v2964, %v2968
      %v2970 = vshrl.u32 %v2611, 16
      %v2972 = vrot.slane %v2970, 4
      %v2973 = vor.u32 %v2972, %v2968
      %v2974 = vrot.slane %v2973, 4
      %v2976 = vshll.u32 %v2612, 16
      %v2978 = vrot.slane %v2976, 5
      %v2979 = vsel %vm259, %v2974, %v2978
      %v2981 = vshrl.u32 %v2613, 16
      %v2983 = vrot.slane %v2981, 4
      %v2984 = vshll.u32 %v2613, 16
      %v2986 = vrot.slane %v2984, 5
      %v2987 = vor.u32 %v2983, %v2986
      %v2988 = vrot.slane %v2987, 4
      %v2990 = vshll.u32 %v2614, 16
      %v2992 = vrot.slane %v2990, 5
      %v2993 = vsel %vm259, %v2988, %v2992
      %v2994 = vshrl.u32 %v2614, 16
      %v2996 = vrot.slane %v2994, 4
      %v2997 = vor.u32 %v2996, %v2992
      %v2998 = vrot.slane %v2997, 4
      %v3000 = vshll.u32 %v2615, 16
      %v3002 = vrot.slane %v3000, 5
      %v3003 = vsel %vm259, %v2998, %v3002
      %v3005 = vshrl.u32 %v2616, 16
      %v3007 = vrot.slane %v3005, 4
      %v3008 = vshll.u32 %v2616, 16
      %v3010 = vrot.slane %v3008, 5
      %v3011 = vor.u32 %v3007, %v3010
      %v3012 = vrot.slane %v3011, 4
      %v3014 = vshll.u32 %v2617, 16
      %v3016 = vrot.slane %v3014, 5
      %v3017 = vsel %vm259, %v3012, %v3016
      %v3018 = vshrl.u32 %v2617, 16
      %v3020 = vrot.slane %v3018, 4
      %v3021 = vor.u32 %v3020, %v3016
      %v3022 = vrot.slane %v3021, 4
      %v3024 = vshll.u32 %v2618, 16
      %v3026 = vrot.slane %v3024, 5
      %v3027 = vsel %vm259, %v3022, %v3026
      %v3029 = vshrl.u32 %v2619, 16
      %v3031 = vrot.slane %v3029, 4
      %v3032 = vshll.u32 %v2619, 16
      %v3034 = vrot.slane %v3032, 5
      %v3035 = vor.u32 %v3031, %v3034
      %v3036 = vrot.slane %v3035, 4
      %v3038 = vshll.u32 %v2620, 16
      %v3040 = vrot.slane %v3038, 5
      %v3041 = vsel %vm259, %v3036, %v3040
      %v3042 = vshrl.u32 %v2620, 16
      %v3044 = vrot.slane %v3042, 4
      %v3045 = vor.u32 %v3044, %v3040
      %v3046 = vrot.slane %v3045, 4
      %v3048 = vshll.u32 %v2621, 16
      %v3050 = vrot.slane %v3048, 5
      %v3051 = vsel %vm259, %v3046, %v3050
      %v3053 = vshrl.u32 %v2622, 16
      %v3055 = vrot.slane %v3053, 4
      %v3056 = vshll.u32 %v2622, 16
      %v3058 = vrot.slane %v3056, 5
      %v3059 = vor.u32 %v3055, %v3058
      %v3060 = vrot.slane %v3059, 4
      %v3062 = vshll.u32 %v2623, 16
      %v3064 = vrot.slane %v3062, 5
      %v3065 = vsel %vm259, %v3060, %v3064
      %v3066 = vshrl.u32 %v2623, 16
      %v3068 = vrot.slane %v3066, 4
      %v3069 = vor.u32 %v3068, %v3064
      %v3070 = vrot.slane %v3069, 4
      %v3072 = vshll.u32 %v2624, 16
      %v3074 = vrot.slane %v3072, 5
      %v3075 = vsel %vm259, %v3070, %v3074
      %v3077 = vshrl.u32 %v2625, 16
      %v3079 = vrot.slane %v3077, 4
      %v3080 = vshll.u32 %v2625, 16
      %v3082 = vrot.slane %v3080, 5
      %v3083 = vor.u32 %v3079, %v3082
      %v3084 = vrot.slane %v3083, 4
      %v3086 = vshll.u32 %v2626, 16
      %v3088 = vrot.slane %v3086, 5
      %v3089 = vsel %vm259, %v3084, %v3088
      %v3090 = vshrl.u32 %v2626, 16
      %v3092 = vrot.slane %v3090, 4
      %v3093 = vor.u32 %v3092, %v3088
      %v3094 = vrot.slane %v3093, 4
      %v3096 = vshll.u32 %v2627, 16
      %v3098 = vrot.slane %v3096, 5
      %v3099 = vsel %vm259, %v3094, %v3098
      %v3101 = vshrl.u32 %v2628, 16
      %v3103 = vrot.slane %v3101, 4
      %v3104 = vshll.u32 %v2628, 16
      %v3106 = vrot.slane %v3104, 5
      %v3107 = vor.u32 %v3103, %v3106
      %v3108 = vrot.slane %v3107, 4
      %v3110 = vshll.u32 %v2629, 16
      %v3112 = vrot.slane %v3110, 5
      %v3113 = vsel %vm259, %v3108, %v3112
      %v3114 = vshrl.u32 %v2629, 16
      %v3116 = vrot.slane %v3114, 4
      %v3117 = vor.u32 %v3116, %v3112
      %v3118 = vrot.slane %v3117, 4
      %v3120 = vshll.u32 %v2630, 16
      %v3122 = vrot.slane %v3120, 5
      %v3123 = vsel %vm259, %v3118, %v3122
      %v3125 = vshrl.u32 %v2631, 16
      %v3127 = vrot.slane %v3125, 4
      %v3128 = vshll.u32 %v2631, 16
      %v3130 = vrot.slane %v3128, 5
      %v3131 = vor.u32 %v3127, %v3130
      %v3132 = vrot.slane %v3131, 4
      %v3134 = vshll.u32 %v2632, 16
      %v3136 = vrot.slane %v3134, 5
      %v3137 = vsel %vm259, %v3132, %v3136
      %v3138 = vshrl.u32 %v2632, 16
      %v3140 = vrot.slane %v3138, 4
      %v3141 = vor.u32 %v3140, %v3136
      %v3142 = vrot.slane %v3141, 4
      %v3144 = vshll.u32 %v2633, 16
      %v3146 = vrot.slane %v3144, 5
      %v3147 = vsel %vm259, %v3142, %v3146
      %s3148 = scalar_lea.vmem %s1, 896
      %v3149 = vld [vmem:[%s3148] sm:$0xf]
      %v3150 = vld [vmem:[%s3148 + $0x4] sm:$0xf]
      %v3151 = vld [vmem:[%s3148 + $0x8] sm:$0xf]
      %v3152 = vld [vmem:[%s3148 + $0xc] sm:$0xf]
      %v3153 = vld [vmem:[%s3148 + $0x10] sm:$0xf]
      %v3154 = vld [vmem:[%s3148 + $0x14] sm:$0xf]
      %v3155 = vld [vmem:[%s3148 + $0x18] sm:$0xf]
      %v3156 = vld [vmem:[%s3148 + $0x1c] sm:$0xf]
      %v3157 = vld [vmem:[%s3148 + $0x20] sm:$0xf]
      %v3158 = vld [vmem:[%s3148 + $0x24] sm:$0xf]
      %v3159 = vld [vmem:[%s3148 + $0x28] sm:$0xf]
      %v3160 = vld [vmem:[%s3148 + $0x2c] sm:$0xf]
      %v3161 = vld [vmem:[%s3148 + $0x30] sm:$0xf]
      %v3162 = vld [vmem:[%s3148 + $0x34] sm:$0xf]
      %v3163 = vld [vmem:[%s3148 + $0x38] sm:$0xf]
      %v3164 = vld [vmem:[%s3148 + $0x3c] sm:$0xf]
      %v3165 = vld [vmem:[%s3148 + $0x40] sm:$0xf]
      %v3166 = vld [vmem:[%s3148 + $0x44] sm:$0xf]
      %v3167 = vld [vmem:[%s3148 + $0x48] sm:$0xf]
      %v3168 = vld [vmem:[%s3148 + $0x4c] sm:$0xf]
      %v3169 = vld [vmem:[%s3148 + $0x50] sm:$0xf]
      %v3170 = vld [vmem:[%s3148 + $0x54] sm:$0xf]
      %v3171 = vld [vmem:[%s3148 + $0x58] sm:$0xf]
      %v3172 = vld [vmem:[%s3148 + $0x5c] sm:$0xf]
      %v3173 = vld [vmem:[%s3148 + $0x60] sm:$0xf]
      %v3174 = vld [vmem:[%s3148 + $0x64] sm:$0xf]
      %v3175 = vld [vmem:[%s3148 + $0x68] sm:$0xf]
      %v3176 = vld [vmem:[%s3148 + $0x6c] sm:$0xf]
      %v3177 = vld [vmem:[%s3148 + $0x70] sm:$0xf]
      %v3178 = vld [vmem:[%s3148 + $0x74] sm:$0xf]
      %v3179 = vld [vmem:[%s3148 + $0x78] sm:$0xf]
      %v3180 = vld [vmem:[%s3148 + $0x7c] sm:$0xf]
      %v3181 = vunpack.c.l.b16 %v2969
      %v3182 = vunpack.c.h.b16 %v2969
      %v3183 = vunpack.c.l.b16 %v2979
      %v3184 = vunpack.c.h.b16 %v2979
      %v3185 = vunpack.c.l.b16 %v2993
      %v3186 = vunpack.c.h.b16 %v2993
      %v3187 = vunpack.c.l.b16 %v3003
      %v3188 = vunpack.c.h.b16 %v3003
      %v3189 = vunpack.c.l.b16 %v3017
      %v3190 = vunpack.c.h.b16 %v3017
      %v3191 = vunpack.c.l.b16 %v3027
      %v3192 = vunpack.c.h.b16 %v3027
      %v3193 = vunpack.c.l.b16 %v3041
      %v3194 = vunpack.c.h.b16 %v3041
      %v3195 = vunpack.c.l.b16 %v3051
      %v3196 = vunpack.c.h.b16 %v3051
      %v3197 = vunpack.c.l.b16 %v3065
      %v3198 = vunpack.c.h.b16 %v3065
      %v3199 = vunpack.c.l.b16 %v3075
      %v3200 = vunpack.c.h.b16 %v3075
      %v3201 = vunpack.c.l.b16 %v3089
      %v3202 = vunpack.c.h.b16 %v3089
      %v3203 = vunpack.c.l.b16 %v3099
      %v3204 = vunpack.c.h.b16 %v3099
      %v3205 = vunpack.c.l.b16 %v3113
      %v3206 = vunpack.c.h.b16 %v3113
      %v3207 = vunpack.c.l.b16 %v3123
      %v3208 = vunpack.c.h.b16 %v3123
      %v3209 = vunpack.c.l.b16 %v3137
      %v3210 = vunpack.c.h.b16 %v3137
      %v3211 = vunpack.c.l.b16 %v3147
      %v3212 = vunpack.c.h.b16 %v3147
      %v3213 = vpack.c.b16 %v3183, %v3181
      %v3214 = vpack.c.b16 %v3184, %v3182
      %v3215 = vpack.c.b16 %v3187, %v3185
      %v3216 = vpack.c.b16 %v3188, %v3186
      %v3217 = vpack.c.b16 %v3191, %v3189
      %v3218 = vpack.c.b16 %v3192, %v3190
      %v3219 = vpack.c.b16 %v3195, %v3193
      %v3220 = vpack.c.b16 %v3196, %v3194
      %v3221 = vpack.c.b16 %v3199, %v3197
      %v3222 = vpack.c.b16 %v3200, %v3198
      %v3223 = vpack.c.b16 %v3203, %v3201
      %v3224 = vpack.c.b16 %v3204, %v3202
      %v3225 = vpack.c.b16 %v3207, %v3205
      %v3226 = vpack.c.b16 %v3208, %v3206
      %v3227 = vpack.c.b16 %v3211, %v3209
      %v3228 = vpack.c.b16 %v3212, %v3210
      %v3277 = vunpack.c.l.b16 %v3149
      %v3278 = vunpack.c.l.b16 %v3150
      %v3279 = vunpack.c.l.b16 %v3151
      %v3280 = vunpack.c.l.b16 %v3152
      %v3281 = vunpack.c.l.b16 %v3153
      %v3282 = vunpack.c.l.b16 %v3154
      %v3283 = vunpack.c.l.b16 %v3155
      %v3284 = vunpack.c.l.b16 %v3156
      %v3285 = vunpack.c.l.b16 %v3157
      %v3286 = vunpack.c.l.b16 %v3158
      %v3287 = vunpack.c.l.b16 %v3159
      %v3288 = vunpack.c.l.b16 %v3160
      %v3289 = vunpack.c.l.b16 %v3161
      %v3290 = vunpack.c.l.b16 %v3162
      %v3291 = vunpack.c.l.b16 %v3163
      %v3292 = vunpack.c.l.b16 %v3164
      %v3293 = vunpack.c.l.b16 %v3165
      %v3294 = vunpack.c.l.b16 %v3166
      %v3295 = vunpack.c.l.b16 %v3167
      %v3296 = vunpack.c.l.b16 %v3168
      %v3297 = vunpack.c.l.b16 %v3169
      %v3298 = vunpack.c.l.b16 %v3170
      %v3299 = vunpack.c.l.b16 %v3171
      %v3300 = vunpack.c.l.b16 %v3172
      %v3301 = vunpack.c.l.b16 %v3173
      %v3302 = vunpack.c.l.b16 %v3174
      %v3303 = vunpack.c.l.b16 %v3175
      %v3304 = vunpack.c.l.b16 %v3176
      %v3305 = vunpack.c.l.b16 %v3177
      %v3306 = vunpack.c.l.b16 %v3178
      %v3307 = vunpack.c.l.b16 %v3179
      %v3308 = vunpack.c.l.b16 %v3180
      %v3309 = vpack.c.b16 %v3278, %v3277
      %v3310 = vpack.c.b16 %v3280, %v3279
      %v3311 = vpack.c.b16 %v3282, %v3281
      %v3312 = vpack.c.b16 %v3284, %v3283
      %v3313 = vpack.c.b16 %v3286, %v3285
      %v3314 = vpack.c.b16 %v3288, %v3287
      %v3315 = vpack.c.b16 %v3290, %v3289
      %v3316 = vpack.c.b16 %v3292, %v3291
      %v3317 = vpack.c.b16 %v3294, %v3293
      %v3318 = vpack.c.b16 %v3296, %v3295
      %v3319 = vpack.c.b16 %v3298, %v3297
      %v3320 = vpack.c.b16 %v3300, %v3299
      %v3321 = vpack.c.b16 %v3302, %v3301
      %v3322 = vpack.c.b16 %v3304, %v3303
      %v3323 = vpack.c.b16 %v3306, %v3305
      %v3324 = vpack.c.b16 %v3308, %v3307
      %3341 = vmatprep.subr.bf16.mxu0 0
      %3342 = vmatpush1.bf16.msra.mxu0 %v3309
      %3343 = vmatprep.subr.bf16.mxu0 0
      %3344 = vmatpush1.bf16.msra.mxu0 %v3310
      %3345 = vmatprep.subr.bf16.mxu0 0
      %3346 = vmatpush1.bf16.msra.mxu0 %v3311
      %3347 = vmatprep.subr.bf16.mxu0 0
      %3348 = vmatpush1.bf16.msra.mxu0 %v3312
      %3349 = vmatprep.subr.bf16.mxu0 0
      %3350 = vmatpush1.bf16.msra.mxu0 %v3313
      %3351 = vmatprep.subr.bf16.mxu0 0
      %3352 = vmatpush1.bf16.msra.mxu0 %v3314
      %3353 = vmatprep.subr.bf16.mxu0 0
      %3354 = vmatpush1.bf16.msra.mxu0 %v3315
      %3355 = vmatprep.subr.bf16.mxu0 0
      %3356 = vmatpush1.bf16.msra.mxu0 %v3316
      %3357 = vmatprep.subr.bf16.mxu0 0
      %3358 = vmatpush1.bf16.msra.mxu0 %v3317
      %3359 = vmatprep.subr.bf16.mxu0 0
      %3360 = vmatpush1.bf16.msra.mxu0 %v3318
      %3361 = vmatprep.subr.bf16.mxu0 0
      %3362 = vmatpush1.bf16.msra.mxu0 %v3319
      %3363 = vmatprep.subr.bf16.mxu0 0
      %3364 = vmatpush1.bf16.msra.mxu0 %v3320
      %3365 = vmatprep.subr.bf16.mxu0 0
      %3366 = vmatpush1.bf16.msra.mxu0 %v3321
      %3367 = vmatprep.subr.bf16.mxu0 0
      %3368 = vmatpush1.bf16.msra.mxu0 %v3322
      %3369 = vmatprep.subr.bf16.mxu0 0
      %3370 = vmatpush1.bf16.msra.mxu0 %v3323
      %3371 = vmatprep.subr.bf16.mxu0 0
      %3372 = vmatpush1.bf16.msra.mxu0 %v3324
      %3373 = vmatprep.mubr.bf16.mxu0 %v3214
      %3374 = vmatmul.mubr.bf16.gmra.mrb[0].mxu0 %v3213
      %v3375 = vpop.f32.mrb[0].mxu0
      %v3376 = vadd.f32 0.0, %v3375
      %v3377 = vpop.f32.mrb[0].mxu0
      %v3378 = vpop.f32.mrb[0].mxu0
      %v3379 = vadd.f32 0.0, %v3378
      %v3380 = vpop.f32.mrb[0].mxu0
      %3381 = vmatprep.mubr.bf16.mxu0 %v3216
      %3382 = vmatmul.mubr.bf16.gmra.mrb[0].mxu0 %v3215
      %v3383 = vpop.f32.mrb[0].mxu0
      %v3384 = vadd.f32 0.0, %v3383
      %v3385 = vpop.f32.mrb[0].mxu0
      %v3386 = vpop.f32.mrb[0].mxu0
      %v3387 = vadd.f32 0.0, %v3386
      %v3388 = vpop.f32.mrb[0].mxu0
      %3389 = vmatprep.mubr.bf16.mxu0 %v3218
      %3390 = vmatmul.mubr.bf16.gmra.mrb[0].mxu0 %v3217
      %v3391 = vpop.f32.mrb[0].mxu0
      %v3392 = vadd.f32 0.0, %v3391
      %v3393 = vpop.f32.mrb[0].mxu0
      %v3394 = vpop.f32.mrb[0].mxu0
      %v3395 = vadd.f32 0.0, %v3394
      %v3396 = vpop.f32.mrb[0].mxu0
      %3397 = vmatprep.mubr.bf16.mxu0 %v3220
      %3398 = vmatmul.mubr.bf16.gmra.mrb[0].mxu0 %v3219
      %v3399 = vpop.f32.mrb[0].mxu0
      %v3400 = vadd.f32 0.0, %v3399
      %v3401 = vpop.f32.mrb[0].mxu0
      %v3402 = vpop.f32.mrb[0].mxu0
      %v3403 = vadd.f32 0.0, %v3402
      %v3404 = vpop.f32.mrb[0].mxu0
      %3405 = vmatprep.mubr.bf16.mxu0 %v3222
      %3406 = vmatmul.mubr.bf16.gmra.mrb[0].mxu0 %v3221
      %v3407 = vpop.f32.mrb[0].mxu0
      %v3408 = vadd.f32 0.0, %v3407
      %v3409 = vpop.f32.mrb[0].mxu0
      %v3410 = vpop.f32.mrb[0].mxu0
      %v3411 = vadd.f32 0.0, %v3410
      %v3412 = vpop.f32.mrb[0].mxu0
      %3413 = vmatprep.mubr.bf16.mxu0 %v3224
      %3414 = vmatmul.mubr.bf16.gmra.mrb[0].mxu0 %v3223
      %v3415 = vpop.f32.mrb[0].mxu0
      %v3416 = vadd.f32 0.0, %v3415
      %v3417 = vpop.f32.mrb[0].mxu0
      %v3418 = vpop.f32.mrb[0].mxu0
      %v3419 = vadd.f32 0.0, %v3418
      %v3420 = vpop.f32.mrb[0].mxu0
      %3421 = vmatprep.mubr.bf16.mxu0 %v3226
      %3422 = vmatmul.mubr.bf16.gmra.mrb[0].mxu0 %v3225
      %v3423 = vpop.f32.mrb[0].mxu0
      %v3424 = vadd.f32 0.0, %v3423
      %v3425 = vpop.f32.mrb[0].mxu0
      %v3426 = vpop.f32.mrb[0].mxu0
      %v3427 = vadd.f32 0.0, %v3426
      %v3428 = vpop.f32.mrb[0].mxu0
      %3429 = vmatprep.mubr.bf16.mxu0 %v3228
      %3430 = vmatmul.mubr.bf16.gmra.mrb[0].mxu0 %v3227
      %v3431 = vpop.f32.mrb[0].mxu0
      %v3432 = vadd.f32 0.0, %v3431
      %v3433 = vpop.f32.mrb[0].mxu0
      %v3434 = vpop.f32.mrb[0].mxu0
      %v3435 = vadd.f32 0.0, %v3434
      %v3436 = vpop.f32.mrb[0].mxu0
      %3437 = vdwg.mxu0
      %v3438 = vadd.f32 %v2940, %v3376
      %v3439 = vadd.f32 %v2941, %v3379
      %v3440 = vadd.f32 %v2942, %v3384
      %v3441 = vadd.f32 %v2943, %v3387
      %v3442 = vadd.f32 %v2944, %v3392
      %v3443 = vadd.f32 %v2945, %v3395
      %v3444 = vadd.f32 %v2946, %v3400
      %v3445 = vadd.f32 %v2947, %v3403
      %v3446 = vadd.f32 %v2948, %v3408
      %v3447 = vadd.f32 %v2949, %v3411
      %v3448 = vadd.f32 %v2950, %v3416
      %v3449 = vadd.f32 %v2951, %v3419
      %v3450 = vadd.f32 %v2952, %v3424
      %v3451 = vadd.f32 %v2953, %v3427
      %v3452 = vadd.f32 %v2954, %v3432
      %v3453 = vadd.f32 %v2955, %v3435
      %v3462 = vrot.slane %v2610, 5
      %v3463 = vrot.slane %v3462, 4
      %v3464 = vrot.slane %v2611, 5
      %v3465 = vsel %vm1025, %v3463, %v3464
      %v3466 = vrot.slane %v3464, 4
      %v3467 = vrot.slane %v2612, 5
      %v3468 = vsel %vm1025, %v3466, %v3467
      %v3469 = vrot.slane %v2613, 5
      %v3470 = vrot.slane %v3469, 4
      %v3471 = vrot.slane %v2614, 5
      %v3472 = vsel %vm1025, %v3470, %v3471
      %v3473 = vrot.slane %v3471, 4
      %v3474 = vrot.slane %v2615, 5
      %v3475 = vsel %vm1025, %v3473, %v3474
      %v3476 = vrot.slane %v2616, 5
      %v3477 = vrot.slane %v3476, 4
      %v3478 = vrot.slane %v2617, 5
      %v3479 = vsel %vm1025, %v3477, %v3478
      %v3480 = vrot.slane %v3478, 4
      %v3481 = vrot.slane %v2618, 5
      %v3482 = vsel %vm1025, %v3480, %v3481
      %v3483 = vrot.slane %v2619, 5
      %v3484 = vrot.slane %v3483, 4
      %v3485 = vrot.slane %v2620, 5
      %v3486 = vsel %vm1025, %v3484, %v3485
      %v3487 = vrot.slane %v3485, 4
      %v3488 = vrot.slane %v2621, 5
      %v3489 = vsel %vm1025, %v3487, %v3488
      %v3490 = vrot.slane %v2622, 5
      %v3491 = vrot.slane %v3490, 4
      %v3492 = vrot.slane %v2623, 5
      %v3493 = vsel %vm1025, %v3491, %v3492
      %v3494 = vrot.slane %v3492, 4
      %v3495 = vrot.slane %v2624, 5
      %v3496 = vsel %vm1025, %v3494, %v3495
      %v3497 = vrot.slane %v2625, 5
      %v3498 = vrot.slane %v3497, 4
      %v3499 = vrot.slane %v2626, 5
      %v3500 = vsel %vm1025, %v3498, %v3499
      %v3501 = vrot.slane %v3499, 4
      %v3502 = vrot.slane %v2627, 5
      %v3503 = vsel %vm1025, %v3501, %v3502
      %v3504 = vrot.slane %v2628, 5
      %v3505 = vrot.slane %v3504, 4
      %v3506 = vrot.slane %v2629, 5
      %v3507 = vsel %vm1025, %v3505, %v3506
      %v3508 = vrot.slane %v3506, 4
      %v3509 = vrot.slane %v2630, 5
      %v3510 = vsel %vm1025, %v3508, %v3509
      %v3511 = vrot.slane %v2631, 5
      %v3512 = vrot.slane %v3511, 4
      %v3513 = vrot.slane %v2632, 5
      %v3514 = vsel %vm1025, %v3512, %v3513
      %v3515 = vrot.slane %v3513, 4
      %v3516 = vrot.slane %v2633, 5
      %v3517 = vsel %vm1025, %v3515, %v3516
      %s3518 = scalar_lea.vmem %s1, 1024
      %v3519 = vld [vmem:[%s3518] sm:$0xf]
      %v3520 = vld [vmem:[%s3518 + $0x4] sm:$0xf]
      %v3521 = vld [vmem:[%s3518 + $0x8] sm:$0xf]
      %v3522 = vld [vmem:[%s3518 + $0xc] sm:$0xf]
      %v3523 = vld [vmem:[%s3518 + $0x10] sm:$0xf]
      %v3524 = vld [vmem:[%s3518 + $0x14] sm:$0xf]
      %v3525 = vld [vmem:[%s3518 + $0x18] sm:$0xf]
      %v3526 = vld [vmem:[%s3518 + $0x1c] sm:$0xf]
      %v3527 = vld [vmem:[%s3518 + $0x20] sm:$0xf]
      %v3528 = vld [vmem:[%s3518 + $0x24] sm:$0xf]
      %v3529 = vld [vmem:[%s3518 + $0x28] sm:$0xf]
      %v3530 = vld [vmem:[%s3518 + $0x2c] sm:$0xf]
      %v3531 = vld [vmem:[%s3518 + $0x30] sm:$0xf]
      %v3532 = vld [vmem:[%s3518 + $0x34] sm:$0xf]
      %v3533 = vld [vmem:[%s3518 + $0x38] sm:$0xf]
      %v3534 = vld [vmem:[%s3518 + $0x3c] sm:$0xf]
      %v3535 = vld [vmem:[%s3518 + $0x40] sm:$0xf]
      %v3536 = vld [vmem:[%s3518 + $0x44] sm:$0xf]
      %v3537 = vld [vmem:[%s3518 + $0x48] sm:$0xf]
      %v3538 = vld [vmem:[%s3518 + $0x4c] sm:$0xf]
      %v3539 = vld [vmem:[%s3518 + $0x50] sm:$0xf]
      %v3540 = vld [vmem:[%s3518 + $0x54] sm:$0xf]
      %v3541 = vld [vmem:[%s3518 + $0x58] sm:$0xf]
      %v3542 = vld [vmem:[%s3518 + $0x5c] sm:$0xf]
      %v3543 = vld [vmem:[%s3518 + $0x60] sm:$0xf]
      %v3544 = vld [vmem:[%s3518 + $0x64] sm:$0xf]
      %v3545 = vld [vmem:[%s3518 + $0x68] sm:$0xf]
      %v3546 = vld [vmem:[%s3518 + $0x6c] sm:$0xf]
      %v3547 = vld [vmem:[%s3518 + $0x70] sm:$0xf]
      %v3548 = vld [vmem:[%s3518 + $0x74] sm:$0xf]
      %v3549 = vld [vmem:[%s3518 + $0x78] sm:$0xf]
      %v3550 = vld [vmem:[%s3518 + $0x7c] sm:$0xf]
      %v3551 = vunpack.c.l.b16 %v3465
      %v3552 = vunpack.c.h.b16 %v3465
      %v3553 = vunpack.c.l.b16 %v3468
      %v3554 = vunpack.c.h.b16 %v3468
      %v3555 = vunpack.c.l.b16 %v3472
      %v3556 = vunpack.c.h.b16 %v3472
      %v3557 = vunpack.c.l.b16 %v3475
      %v3558 = vunpack.c.h.b16 %v3475
      %v3559 = vunpack.c.l.b16 %v3479
      %v3560 = vunpack.c.h.b16 %v3479
      %v3561 = vunpack.c.l.b16 %v3482
      %v3562 = vunpack.c.h.b16 %v3482
      %v3563 = vunpack.c.l.b16 %v3486
      %v3564 = vunpack.c.h.b16 %v3486
      %v3565 = vunpack.c.l.b16 %v3489
      %v3566 = vunpack.c.h.b16 %v3489
      %v3567 = vunpack.c.l.b16 %v3493
      %v3568 = vunpack.c.h.b16 %v3493
      %v3569 = vunpack.c.l.b16 %v3496
      %v3570 = vunpack.c.h.b16 %v3496
      %v3571 = vunpack.c.l.b16 %v3500
      %v3572 = vunpack.c.h.b16 %v3500
      %v3573 = vunpack.c.l.b16 %v3503
      %v3574 = vunpack.c.h.b16 %v3503
      %v3575 = vunpack.c.l.b16 %v3507
      %v3576 = vunpack.c.h.b16 %v3507
      %v3577 = vunpack.c.l.b16 %v3510
      %v3578 = vunpack.c.h.b16 %v3510
      %v3579 = vunpack.c.l.b16 %v3514
      %v3580 = vunpack.c.h.b16 %v3514
      %v3581 = vunpack.c.l.b16 %v3517
      %v3582 = vunpack.c.h.b16 %v3517
      %v3583 = vpack.c.b16 %v3553, %v3551
      %v3584 = vpack.c.b16 %v3554, %v3552
      %v3585 = vpack.c.b16 %v3557, %v3555
      %v3586 = vpack.c.b16 %v3558, %v3556
      %v3587 = vpack.c.b16 %v3561, %v3559
      %v3588 = vpack.c.b16 %v3562, %v3560
      %v3589 = vpack.c.b16 %v3565, %v3563
      %v3590 = vpack.c.b16 %v3566, %v3564
      %v3591 = vpack.c.b16 %v3569, %v3567
      %v3592 = vpack.c.b16 %v3570, %v3568
      %v3593 = vpack.c.b16 %v3573, %v3571
      %v3594 = vpack.c.b16 %v3574, %v3572
      %v3595 = vpack.c.b16 %v3577, %v3575
      %v3596 = vpack.c.b16 %v3578, %v3576
      %v3597 = vpack.c.b16 %v3581, %v3579
      %v3598 = vpack.c.b16 %v3582, %v3580
      %v3647 = vunpack.c.l.b16 %v3519
      %v3648 = vunpack.c.l.b16 %v3520
      %v3649 = vunpack.c.l.b16 %v3521
      %v3650 = vunpack.c.l.b16 %v3522
      %v3651 = vunpack.c.l.b16 %v3523
      %v3652 = vunpack.c.l.b16 %v3524
      %v3653 = vunpack.c.l.b16 %v3525
      %v3654 = vunpack.c.l.b16 %v3526
      %v3655 = vunpack.c.l.b16 %v3527
      %v3656 = vunpack.c.l.b16 %v3528
      %v3657 = vunpack.c.l.b16 %v3529
      %v3658 = vunpack.c.l.b16 %v3530
      %v3659 = vunpack.c.l.b16 %v3531
      %v3660 = vunpack.c.l.b16 %v3532
      %v3661 = vunpack.c.l.b16 %v3533
      %v3662 = vunpack.c.l.b16 %v3534
      %v3663 = vunpack.c.l.b16 %v3535
      %v3664 = vunpack.c.l.b16 %v3536
      %v3665 = vunpack.c.l.b16 %v3537
      %v3666 = vunpack.c.l.b16 %v3538
      %v3667 = vunpack.c.l.b16 %v3539
      %v3668 = vunpack.c.l.b16 %v3540
      %v3669 = vunpack.c.l.b16 %v3541
      %v3670 = vunpack.c.l.b16 %v3542
      %v3671 = vunpack.c.l.b16 %v3543
      %v3672 = vunpack.c.l.b16 %v3544
      %v3673 = vunpack.c.l.b16 %v3545
      %v3674 = vunpack.c.l.b16 %v3546
      %v3675 = vunpack.c.l.b16 %v3547
      %v3676 = vunpack.c.l.b16 %v3548
      %v3677 = vunpack.c.l.b16 %v3549
      %v3678 = vunpack.c.l.b16 %v3550
      %v3679 = vpack.c.b16 %v3648, %v3647
      %v3680 = vpack.c.b16 %v3650, %v3649
      %v3681 = vpack.c.b16 %v3652, %v3651
      %v3682 = vpack.c.b16 %v3654, %v3653
      %v3683 = vpack.c.b16 %v3656, %v3655
      %v3684 = vpack.c.b16 %v3658, %v3657
      %v3685 = vpack.c.b16 %v3660, %v3659
      %v3686 = vpack.c.b16 %v3662, %v3661
      %v3687 = vpack.c.b16 %v3664, %v3663
      %v3688 = vpack.c.b16 %v3666, %v3665
      %v3689 = vpack.c.b16 %v3668, %v3667
      %v3690 = vpack.c.b16 %v3670, %v3669
      %v3691 = vpack.c.b16 %v3672, %v3671
      %v3692 = vpack.c.b16 %v3674, %v3673
      %v3693 = vpack.c.b16 %v3676, %v3675
      %v3694 = vpack.c.b16 %v3678, %v3677
      %3711 = vmatprep.subr.bf16.mxu0 0
      %3712 = vmatpush1.bf16.msra.mxu0 %v3679
      %3713 = vmatprep.subr.bf16.mxu0 0
      %3714 = vmatpush1.bf16.msra.mxu0 %v3680
      %3715 = vmatprep.subr.bf16.mxu0 0
      %3716 = vmatpush1.bf16.msra.mxu0 %v3681
      %3717 = vmatprep.subr.bf16.mxu0 0
      %3718 = vmatpush1.bf16.msra.mxu0 %v3682
      %3719 = vmatprep.subr.bf16.mxu0 0
      %3720 = vmatpush1.bf16.msra.mxu0 %v3683
      %3721 = vmatprep.subr.bf16.mxu0 0
      %3722 = vmatpush1.bf16.msra.mxu0 %v3684
      %3723 = vmatprep.subr.bf16.mxu0 0
      %3724 = vmatpush1.bf16.msra.mxu0 %v3685
      %3725 = vmatprep.subr.bf16.mxu0 0
      %3726 = vmatpush1.bf16.msra.mxu0 %v3686
      %3727 = vmatprep.subr.bf16.mxu0 0
      %3728 = vmatpush1.bf16.msra.mxu0 %v3687
      %3729 = vmatprep.subr.bf16.mxu0 0
      %3730 = vmatpush1.bf16.msra.mxu0 %v3688
      %3731 = vmatprep.subr.bf16.mxu0 0
      %3732 = vmatpush1.bf16.msra.mxu0 %v3689
      %3733 = vmatprep.subr.bf16.mxu0 0
      %3734 = vmatpush1.bf16.msra.mxu0 %v3690
      %3735 = vmatprep.subr.bf16.mxu0 0
      %3736 = vmatpush1.bf16.msra.mxu0 %v3691
      %3737 = vmatprep.subr.bf16.mxu0 0
      %3738 = vmatpush1.bf16.msra.mxu0 %v3692
      %3739 = vmatprep.subr.bf16.mxu0 0
      %3740 = vmatpush1.bf16.msra.mxu0 %v3693
      %3741 = vmatprep.subr.bf16.mxu0 0
      %3742 = vmatpush1.bf16.msra.mxu0 %v3694
      %3743 = vmatprep.mubr.bf16.mxu0 %v3584
      %3744 = vmatmul.mubr.bf16.gmra.mrb[0].mxu0 %v3583
      %v3745 = vpop.f32.mrb[0].mxu0
      %v3746 = vadd.f32 0.0, %v3745
      %v3747 = vpop.f32.mrb[0].mxu0
      %v3748 = vpop.f32.mrb[0].mxu0
      %v3749 = vadd.f32 0.0, %v3748
      %v3750 = vpop.f32.mrb[0].mxu0
      %3751 = vmatprep.mubr.bf16.mxu0 %v3586
      %3752 = vmatmul.mubr.bf16.gmra.mrb[0].mxu0 %v3585
      %v3753 = vpop.f32.mrb[0].mxu0
      %v3754 = vadd.f32 0.0, %v3753
      %v3755 = vpop.f32.mrb[0].mxu0
      %v3756 = vpop.f32.mrb[0].mxu0
      %v3757 = vadd.f32 0.0, %v3756
      %v3758 = vpop.f32.mrb[0].mxu0
      %3759 = vmatprep.mubr.bf16.mxu0 %v3588
      %3760 = vmatmul.mubr.bf16.gmra.mrb[0].mxu0 %v3587
      %v3761 = vpop.f32.mrb[0].mxu0
      %v3762 = vadd.f32 0.0, %v3761
      %v3763 = vpop.f32.mrb[0].mxu0
      %v3764 = vpop.f32.mrb[0].mxu0
      %v3765 = vadd.f32 0.0, %v3764
      %v3766 = vpop.f32.mrb[0].mxu0
      %3767 = vmatprep.mubr.bf16.mxu0 %v3590
      %3768 = vmatmul.mubr.bf16.gmra.mrb[0].mxu0 %v3589
      %v3769 = vpop.f32.mrb[0].mxu0
      %v3770 = vadd.f32 0.0, %v3769
      %v3771 = vpop.f32.mrb[0].mxu0
      %v3772 = vpop.f32.mrb[0].mxu0
      %v3773 = vadd.f32 0.0, %v3772
      %v3774 = vpop.f32.mrb[0].mxu0
      %3775 = vmatprep.mubr.bf16.mxu0 %v3592
      %3776 = vmatmul.mubr.bf16.gmra.mrb[0].mxu0 %v3591
      %v3777 = vpop.f32.mrb[0].mxu0
      %v3778 = vadd.f32 0.0, %v3777
      %v3779 = vpop.f32.mrb[0].mxu0
      %v3780 = vpop.f32.mrb[0].mxu0
      %v3781 = vadd.f32 0.0, %v3780
      %v3782 = vpop.f32.mrb[0].mxu0
      %3783 = vmatprep.mubr.bf16.mxu0 %v3594
      %3784 = vmatmul.mubr.bf16.gmra.mrb[0].mxu0 %v3593
      %v3785 = vpop.f32.mrb[0].mxu0
      %v3786 = vadd.f32 0.0, %v3785
      %v3787 = vpop.f32.mrb[0].mxu0
      %v3788 = vpop.f32.mrb[0].mxu0
      %v3789 = vadd.f32 0.0, %v3788
      %v3790 = vpop.f32.mrb[0].mxu0
      %3791 = vmatprep.mubr.bf16.mxu0 %v3596
      %3792 = vmatmul.mubr.bf16.gmra.mrb[0].mxu0 %v3595
      %v3793 = vpop.f32.mrb[0].mxu0
      %v3794 = vadd.f32 0.0, %v3793
      %v3795 = vpop.f32.mrb[0].mxu0
      %v3796 = vpop.f32.mrb[0].mxu0
      %v3797 = vadd.f32 0.0, %v3796
      %v3798 = vpop.f32.mrb[0].mxu0
      %3799 = vmatprep.mubr.bf16.mxu0 %v3598
      %3800 = vmatmul.mubr.bf16.gmra.mrb[0].mxu0 %v3597
      %v3801 = vpop.f32.mrb[0].mxu0
      %v3802 = vadd.f32 0.0, %v3801
      %v3803 = vpop.f32.mrb[0].mxu0
      %v3804 = vpop.f32.mrb[0].mxu0
      %v3805 = vadd.f32 0.0, %v3804
      %v3806 = vpop.f32.mrb[0].mxu0
      %3807 = vdwg.mxu0
      %v3808 = vadd.f32 %v3438, %v3746
      %v3809 = vadd.f32 %v3439, %v3749
      %v3810 = vadd.f32 %v3440, %v3754
      %v3811 = vadd.f32 %v3441, %v3757
      %v3812 = vadd.f32 %v3442, %v3762
      %v3813 = vadd.f32 %v3443, %v3765
      %v3814 = vadd.f32 %v3444, %v3770
      %v3815 = vadd.f32 %v3445, %v3773
      %v3816 = vadd.f32 %v3446, %v3778
      %v3817 = vadd.f32 %v3447, %v3781
      %v3818 = vadd.f32 %v3448, %v3786
      %v3819 = vadd.f32 %v3449, %v3789
      %v3820 = vadd.f32 %v3450, %v3794
      %v3821 = vadd.f32 %v3451, %v3797
      %v3822 = vadd.f32 %v3452, %v3802
      %v3823 = vadd.f32 %v3453, %v3805
      %v3824 = vld [vmem:[%s2] sm:$0x1]
      %v3826 = vlaneseq
      %v3827 = vshrl.u32 %v3826, 7
      %v3828 = vsub.s32 0, %v3827
      %v3829 = vrot.slane %v3824, %v3828
      %v3831 = vadd.f32 %v3808, %v3829
      %v3832 = vadd.f32 %v3809, %v3829
      %v3833 = vadd.f32 %v3810, %v3829
      %v3834 = vadd.f32 %v3811, %v3829
      %v3835 = vadd.f32 %v3812, %v3829
      %v3836 = vadd.f32 %v3813, %v3829
      %v3837 = vadd.f32 %v3814, %v3829
      %v3838 = vadd.f32 %v3815, %v3829
      %v3839 = vadd.f32 %v3816, %v3829
      %v3840 = vadd.f32 %v3817, %v3829
      %v3841 = vadd.f32 %v3818, %v3829
      %v3842 = vadd.f32 %v3819, %v3829
      %v3843 = vadd.f32 %v3820, %v3829
      %v3844 = vadd.f32 %v3821, %v3829
      %v3845 = vadd.f32 %v3822, %v3829
      %v3846 = vadd.f32 %v3823, %v3829
      %v3847 = vmax.f32 %v3831, 0.0
      %v3848 = vmax.f32 %v3832, 0.0
      %v3849 = vmax.f32 %v3833, 0.0
      %v3850 = vmax.f32 %v3834, 0.0
      %v3851 = vmax.f32 %v3835, 0.0
      %v3852 = vmax.f32 %v3836, 0.0
      %v3853 = vmax.f32 %v3837, 0.0
      %v3854 = vmax.f32 %v3838, 0.0
      %v3855 = vmax.f32 %v3839, 0.0
      %v3856 = vmax.f32 %v3840, 0.0
      %v3857 = vmax.f32 %v3841, 0.0
      %v3858 = vmax.f32 %v3842, 0.0
      %v3859 = vmax.f32 %v3843, 0.0
      %v3860 = vmax.f32 %v3844, 0.0
      %v3861 = vmax.f32 %v3845, 0.0
      %v3862 = vmax.f32 %v3846, 0.0
      %3863 = vst [vmem:[%s194] sm:$0xff] %v3847
      %3864 = vst [vmem:[%s194 + $0x8] sm:$0xff] %v3848
      %3865 = vst [vmem:[%s194 + $0x10] sm:$0xff] %v3849
      %3866 = vst [vmem:[%s194 + $0x18] sm:$0xff] %v3850
      %3867 = vst [vmem:[%s194 + $0x20] sm:$0xff] %v3851
      %3868 = vst [vmem:[%s194 + $0x28] sm:$0xff] %v3852
      %3869 = vst [vmem:[%s194 + $0x30] sm:$0xff] %v3853
      %3870 = vst [vmem:[%s194 + $0x38] sm:$0xff] %v3854
      %3871 = vst [vmem:[%s194 + $0x40] sm:$0xff] %v3855
      %3872 = vst [vmem:[%s194 + $0x48] sm:$0xff] %v3856
      %3873 = vst [vmem:[%s194 + $0x50] sm:$0xff] %v3857
      %3874 = vst [vmem:[%s194 + $0x58] sm:$0xff] %v3858
      %3875 = vst [vmem:[%s194 + $0x60] sm:$0xff] %v3859
      %3876 = vst [vmem:[%s194 + $0x68] sm:$0xff] %v3860
      %3877 = vst [vmem:[%s194 + $0x70] sm:$0xff] %v3861
      %3878 = vst [vmem:[%s194 + $0x78] sm:$0xff] %v3862
      %s3879 = smul.u32 8, %s19
      %p3880 = scmp.lt.s32.totalorder %s18, 1
      %s3881 = scalar_select %p3880, %s18, 1
      %p3882 = scmp.lt.s32.totalorder %s3879, 15
      %s3883 = scalar_select %p3882, %s3879, 15
      %s3884 = smul.addr %s3883, 2
      %s3885 = smul.addr %s3881, 32
      %s3886 = sadd.s32 %s3884, %s3885
      %s3887 = smul.addr %s3886, 8
      %s3888 = scalar_lea.vmem %s3, %s3887
      // Predicated region
      $region33: #{density_regressor_forward.5} parent=31 // pred_check
        %p3889 = pneg %p114
      $region34: #{density_regressor_forward.5} parent=31 // pred_check_branch
        %3891 = sbr.rel (%p3889) target = $region36
      $region35: #{density_regressor_forward.5} parent=31 // pred_region
        %s3892 = smul.u32 8, %s19
      $region36: #{density_regressor_forward.5} parent=31 // pred_fallthru
        _
    $region32: #{density_regressor_forward.5} parent=5 // pred_fallthru
      _
    %p3893 = scmp.le.s32.totalorder 2, %s9
    // Predicated region
    $region37: #{density_regressor_forward.5} parent=5 // pred_check
      %p3894 = pneg %p3893
    $region38: #{density_regressor_forward.5} parent=5 // pred_check_branch
      %3896 = sbr.rel (%p3894) target = $region40
    $region39: #{density_regressor_forward.5} parent=5 // pred_region
      %s3897 = ssub.s32 %s9, 2
      // Predicated region
      $region41: #{density_regressor_forward.5} parent=39 // pred_check
        %p3898 = pneg %p120
      $region42: #{density_regressor_forward.5} parent=39 // pred_check_branch
        %3900 = sbr.rel (%p3898) target = $region44
      $region43: #{density_regressor_forward.5} parent=39 // pred_region
        %s3901 = smul.u32 8, %s21
        %p3902 = scmp.lt.s32.totalorder %s20, 1
        %s3903 = scalar_select %p3902, %s20, 1
        %p3904 = scmp.lt.s32.totalorder %s3901, 15
        %s3905 = scalar_select %p3904, %s3901, 15
        %s3906 = smul.addr %s3905, 2
        %s3907 = smul.addr %s3903, 32
        %s3908 = sadd.s32 %s3906, %s3907
        %s3909 = smul.addr %s3908, 8
        %s3910 = scalar_lea.vmem %s3, %s3909
      $region44: #{density_regressor_forward.5} parent=39 // pred_fallthru
        _
    $region40: #{density_regressor_forward.5} parent=5 // pred_fallthru
      _
  $region6: #{density_regressor_forward.5} parent=0 // loop_footer
    %s13 = sadd.s32 1, %s9
  $region7: #{density_regressor_forward.5} parent=0 // loop_footer_branch
    %8 = sbr.rel target = $region3
  $region8: #{density_regressor_forward.5} parent=0 // loop_exit
    _

</llo_original>
